<compile_context>
chip_gen: v5e
topology: v5e:2x2
jax: 0.10.0
libtpu: 0.0.40
codegen_flags: <defaults>
</compile_context>

<pallas_src>
import functools

import jax
import jax.numpy as jnp
from jax import lax
from jax.experimental import pallas as pl
from jax.experimental.pallas import tpu as pltpu

# ---------------------------------------------------------------------------
# Model hyper-parameters (from the module) and synthetic sizes.
# ---------------------------------------------------------------------------
LSTM_SIZE = 128          # hidden size H
EMBED_DIM = 128          # embedding dim D (== input_size of the LSTM)
NUM_LAYERS = 3
N_PITCHES = 64           # vocab size V (placeholder in the torch code)
V_PAD = 128              # vocab padded to a full 128-lane width in-kernel
SEQ_LEN = 8              # T (small example)
BATCH = 2                # B (small example)
SUBLANE = 8              # f32 sublane quantum -> batch padding target
PARAM_DTYPE = jnp.bfloat16   # MXU-native weight / matmul-input dtype


def _round_up(x, m):
    return (x + m - 1) // m * m


def _reorder_gates(w, axis=0):
    """PyTorch gate order [i, f, g, o] -> kernel order [i, f, o, g]."""
    i, f, g, o = jnp.split(w, 4, axis=axis)
    return jnp.concatenate([i, f, o, g], axis=axis)


# ---------------------------------------------------------------------------
# Fused Pallas kernel: embedding -> 3 LSTM layers -> FC head, one invocation.
# ---------------------------------------------------------------------------
def _fused_pitch_lstm_kernel(
        tok_ref, embwih0_ref,
        whh0_ref, b0_ref,
        wih1_ref, whh1_ref, b1_ref,
        wih2_ref, whh2_ref, b2_ref,
        h0_ref, c0_ref, fcw_ref, fcb_ref,
        logits_ref, hT_ref, cT_ref,
        seq_buf, xproj_buf,
        *, T, B, H):
    TB = T * B

    # ---- One-hot tokens (embedding is folded into embwih0_ref) -------------
    tok = tok_ref[...]                                            # (TB, 1) i32
    col = lax.broadcasted_iota(jnp.int32, (TB, embwih0_ref.shape[0]), 1)
    onehot = jnp.where(tok == col, 1.0, 0.0).astype(PARAM_DTYPE)  # (TB, Vpad)

    layers = ((embwih0_ref, whh0_ref, b0_ref),      # layer 0: emb @ W_ih0^T
              (wih1_ref, whh1_ref, b1_ref),
              (wih2_ref, whh2_ref, b2_ref))

    for l, (wih_ref, whh_ref, b_ref) in enumerate(layers):
        # Full-sequence input projection, hoisted off the serial path, with
        # the (b_ih + b_hh) bias folded in.  (TB, Din) @ (Din, 4H) -> (TB, 4H).
        if l == 0:
            x_in = onehot                                          # (TB, Vpad)
        else:
            x_in = seq_buf[...].astype(PARAM_DTYPE)                # (TB, H)
        xproj_buf[...] = (
            jnp.dot(x_in, wih_ref[...], preferred_element_type=jnp.float32)
            + b_ref[...])

        h = h0_ref[l].astype(jnp.float32)                          # (B, H)
        c = c0_ref[l].astype(jnp.float32)

        # T is small & static -> fully unrolled recurrence; per step only
        # h @ W_hh^T plus elementwise gate math (f32 on the VPU/EUP).
        for t in range(T):
            gates = (xproj_buf[t * B:(t + 1) * B, :]
                     + jnp.dot(h.astype(PARAM_DTYPE), whh_ref[...],
                               preferred_element_type=jnp.float32))
            # Kernel gate layout [i | f | o | g]: one fused sigmoid over 3H.
            ifo = jax.nn.sigmoid(gates[:, :3 * H])
            g_g = jnp.tanh(gates[:, 3 * H:])
            i_g = ifo[:, 0 * H:1 * H]
            f_g = ifo[:, 1 * H:2 * H]
            o_g = ifo[:, 2 * H:3 * H]
            c = f_g * c + i_g * g_g
            h = o_g * jnp.tanh(c)
            # This layer's output sequence (input-side info already captured
            # in xproj_buf, so overwriting is safe for layer 0 too).
            seq_buf[t * B:(t + 1) * B, :] = h

        hT_ref[l] = h.astype(hT_ref.dtype)
        cT_ref[l] = c.astype(cT_ref.dtype)

    # ---- FC head over all time steps / batch rows (lane-dense V_PAD=128) ---
    logits_ref[...] = (
        jnp.dot(seq_buf[...].astype(PARAM_DTYPE), fcw_ref[...],
                preferred_element_type=jnp.float32)
        + fcb_ref[...]).astype(logits_ref.dtype)


def _full_spec(shape):
    """Whole-array VMEM block (no grid)."""
    zeros = (0,) * len(shape)
    return pl.BlockSpec(shape, lambda: zeros)


def fused_pitch_lstm(tokens_pad, params, h0_pad, c0_pad):
    """tokens_pad: [T, B_pad] int32 (batch already padded to a sublane multiple)."""
    T, B_pad = tokens_pad.shape
    H = LSTM_SIZE
    TB = T * B_pad
    tok_col = tokens_pad.reshape(TB, 1)

    l0, l1, l2 = params["lstm"]
    in_arrays = [
        tok_col, params["emb_wih0_t"],
        l0["w_hh_t"], l0["bias"],
        l1["w_ih_t"], l1["w_hh_t"], l1["bias"],
        l2["w_ih_t"], l2["w_hh_t"], l2["bias"],
        h0_pad, c0_pad, params["fc_w_t"], params["fc_b"],
    ]

    out_shapes = (
        jax.ShapeDtypeStruct((TB, V_PAD), jnp.float32),             # logits
        jax.ShapeDtypeStruct((NUM_LAYERS, B_pad, H), jnp.float32),  # h_T
        jax.ShapeDtypeStruct((NUM_LAYERS, B_pad, H), jnp.float32),  # c_T
    )

    kernel = functools.partial(_fused_pitch_lstm_kernel, T=T, B=B_pad, H=H)

    return pl.pallas_call(
        kernel,
        out_shape=out_shapes,
        in_specs=[_full_spec(a.shape) for a in in_arrays],
        out_specs=tuple(_full_spec(s.shape) for s in out_shapes),
        scratch_shapes=[
            pltpu.VMEM((TB, H), jnp.float32),        # layer activations (f32)
            pltpu.VMEM((TB, 4 * H), jnp.float32),    # hoisted input projection
        ],
    )(*in_arrays)


# ---------------------------------------------------------------------------
# Parameters (deterministic init) and the full forward pass.
# ---------------------------------------------------------------------------
def init_params(key):
    keys = jax.random.split(key, 16)
    ki = iter(keys)
    scale = 1.0 / jnp.sqrt(LSTM_SIZE)

    emb = jax.random.normal(next(ki), (N_PITCHES, EMBED_DIM), jnp.float32) * 0.1
    emb_pad = jnp.zeros((V_PAD, EMBED_DIM), jnp.float32).at[:N_PITCHES].set(emb)

    params = {"embedding": emb_pad.astype(PARAM_DTYPE), "lstm": []}
    for layer in range(NUM_LAYERS):
        in_dim = EMBED_DIM if layer == 0 else LSTM_SIZE
        w_ih = jax.random.uniform(next(ki), (4 * LSTM_SIZE, in_dim),
                                  jnp.float32, -scale, scale)
        w_hh = jax.random.uniform(next(ki), (4 * LSTM_SIZE, LSTM_SIZE),
                                  jnp.float32, -scale, scale)
        b_ih = jax.random.uniform(next(ki), (4 * LSTM_SIZE,),
                                  jnp.float32, -scale, scale)
        b_hh = jax.random.uniform(next(ki), (4 * LSTM_SIZE,),
                                  jnp.float32, -scale, scale)

        # PyTorch gate order [i,f,g,o] -> kernel order [i,f,o,g] (fused sigmoid).
        w_ih = _reorder_gates(w_ih, 0)
        w_hh = _reorder_gates(w_hh, 0)
        bias = _reorder_gates(b_ih + b_hh, 0).reshape(1, 4 * LSTM_SIZE)  # f32

        entry = {
            # pre-transposed for the kernel: [H, 4H], bf16
            "w_hh_t": jnp.transpose(w_hh).astype(PARAM_DTYPE),
            "bias": bias,
        }
        if layer == 0:
            # Fold the embedding lookup into layer-0's input projection:
            # onehot @ emb @ W_ih0^T == onehot @ (emb @ W_ih0^T).  [V_PAD, 4H]
            params["emb_wih0_t"] = jnp.dot(
                emb_pad, jnp.transpose(w_ih)).astype(PARAM_DTYPE)
        else:
            entry["w_ih_t"] = jnp.transpose(w_ih).astype(PARAM_DTYPE)  # [H,4H]
        params["lstm"].append(entry)

    fc_w = jax.random.uniform(next(ki), (N_PITCHES, LSTM_SIZE),
                              jnp.float32, -scale, scale)
    fc_b = jax.random.uniform(next(ki), (N_PITCHES,),
                              jnp.float32, -scale, scale)
    fc_w_t = jnp.zeros((LSTM_SIZE, V_PAD), jnp.float32).at[:, :N_PITCHES].set(
        jnp.transpose(fc_w))
    fc_b_p = jnp.zeros((1, V_PAD), jnp.float32).at[:, :N_PITCHES].set(fc_b)
    params["fc_w_t"] = fc_w_t.astype(PARAM_DTYPE)                  # [H, V_PAD]
    params["fc_b"] = fc_b_p                                        # [1, V_PAD]
    return params


def init_state(batch):
    """Analog of Pitch_lstm.init_state (zeros h0 / c0 per layer)."""
    z = jnp.zeros((NUM_LAYERS, batch, LSTM_SIZE), jnp.float32)
    return (z, z)


@jax.jit
def pitch_lstm_forward(params, x_tokens, prev_state):
    """x_tokens: [T, B] int32; prev_state: (h0, c0) each [num_layers, B, H]."""
    h0_all, c0_all = prev_state
    T, B = x_tokens.shape
    B_pad = _round_up(B, SUBLANE)
    pad = B_pad - B

    tok_pad = jnp.zeros((T, B_pad), jnp.int32).at[:, :B].set(x_tokens)
    h0_pad = jnp.pad(h0_all, ((0, 0), (0, pad), (0, 0)))
    c0_pad = jnp.pad(c0_all, ((0, 0), (0, pad), (0, 0)))

    logits_pad, hT_pad, cT_pad = fused_pitch_lstm(tok_pad, params,
                                                  h0_pad, c0_pad)

    logits = logits_pad.reshape(T, B_pad, V_PAD)[:, :B, :N_PITCHES]
    state = (hT_pad[:, :B, :], cT_pad[:, :B, :])
    return logits, state


if __name__ == "__main__":
    key = jax.random.PRNGKey(0)
    pkey, xkey = jax.random.split(key)

    params = init_params(pkey)
    x_tokens = jax.random.randint(xkey, (SEQ_LEN, BATCH), 0, N_PITCHES,
                                  dtype=jnp.int32)
    prev_state = init_state(BATCH)

    logits, (h_n, c_n) = pitch_lstm_forward(params, x_tokens, prev_state)
    jax.block_until_ready((logits, h_n, c_n))

    assert logits.shape == (SEQ_LEN, BATCH, N_PITCHES)
    assert h_n.shape == (NUM_LAYERS, BATCH, LSTM_SIZE)
    assert c_n.shape == (NUM_LAYERS, BATCH, LSTM_SIZE)
    print("KERNEL_OK")
</pallas_src>

<mosaic_0001>
module attributes {stable_mosaic.version = 11 : i64} {
  func.func @_fused_pitch_lstm_kernel(%arg0: memref<64x1xi32, #tpu.memory_space<vmem>>, %arg1: memref<128x512xbf16, #tpu.memory_space<vmem>>, %arg2: memref<128x512xbf16, #tpu.memory_space<vmem>>, %arg3: memref<1x512xf32, #tpu.memory_space<vmem>>, %arg4: memref<128x512xbf16, #tpu.memory_space<vmem>>, %arg5: memref<128x512xbf16, #tpu.memory_space<vmem>>, %arg6: memref<1x512xf32, #tpu.memory_space<vmem>>, %arg7: memref<128x512xbf16, #tpu.memory_space<vmem>>, %arg8: memref<128x512xbf16, #tpu.memory_space<vmem>>, %arg9: memref<1x512xf32, #tpu.memory_space<vmem>>, %arg10: memref<3x8x128xf32, #tpu.memory_space<vmem>>, %arg11: memref<3x8x128xf32, #tpu.memory_space<vmem>>, %arg12: memref<128x128xbf16, #tpu.memory_space<vmem>>, %arg13: memref<1x128xf32, #tpu.memory_space<vmem>>, %arg14: memref<64x128xf32, #tpu.memory_space<vmem>>, %arg15: memref<3x8x128xf32, #tpu.memory_space<vmem>>, %arg16: memref<3x8x128xf32, #tpu.memory_space<vmem>>, %arg17: memref<64x128xf32, #tpu.memory_space<vmem>>, %arg18: memref<64x512xf32, #tpu.memory_space<vmem>>) attributes {dimension_semantics = [], scalar_prefetch = 0 : i64, scratch_operands = 2 : i64, tpu.core_type = #tpu.core_type<tc>} {
    %c0 = arith.constant 0 : index
    %c0_0 = arith.constant 0 : index
    %0 = vector.load %arg0[%c0, %c0_0] : memref<64x1xi32, #tpu.memory_space<vmem>>, vector<64x1xi32>
    %1 = tpu.iota {dimensions = array<i32: 1>} : vector<64x128xi32>
    %2 = vector.broadcast %0 : vector<64x1xi32> to vector<64x128xi32>
    %3 = arith.cmpi eq, %2, %1 : vector<64x128xi32>
    %cst = arith.constant 1.000000e+00 : f32
    %cst_1 = arith.constant 0.000000e+00 : f32
    %4 = vector.broadcast %cst : f32 to vector<64x128xf32>
    %5 = vector.broadcast %cst_1 : f32 to vector<64x128xf32>
    %6 = arith.select %3, %4, %5 : vector<64x128xi1>, vector<64x128xf32>
    %7 = arith.truncf %6 : vector<64x128xf32> to vector<64x128xbf16>
    %c0_2 = arith.constant 0 : index
    %c0_3 = arith.constant 0 : index
    %8 = vector.load %arg1[%c0_2, %c0_3] : memref<128x512xbf16, #tpu.memory_space<vmem>>, vector<128x512xbf16>
    %cst_4 = arith.constant dense<0.000000e+00> : vector<64x512xf32>
    %9 = tpu.matmul %7, %8, %cst_4 {dimension_numbers = #tpu.dot_dimension_numbers<[1], [0], [0], [1], [0, 0, 1, 1], [], []>} : vector<64x128xbf16>, vector<128x512xbf16>, vector<64x512xf32> -> vector<64x512xf32>
    %c0_5 = arith.constant 0 : index
    %c0_6 = arith.constant 0 : index
    %10 = vector.load %arg3[%c0_5, %c0_6] : memref<1x512xf32, #tpu.memory_space<vmem>>, vector<1x512xf32>
    %11 = vector.broadcast %10 : vector<1x512xf32> to vector<64x512xf32>
    %12 = arith.addf %9, %11 : vector<64x512xf32>
    %c0_7 = arith.constant 0 : index
    %c0_8 = arith.constant 0 : index
    %13 = vector.load %arg18[%c0_7, %c0_8] : memref<64x512xf32, #tpu.memory_space<vmem>>, vector<64x512xf32>
    tpu.vector_store %arg18[%c0_7, %c0_8], %12 {strides = array<i32>} : memref<64x512xf32, #tpu.memory_space<vmem>>, vector<64x512xf32>,
    %c0_9 = arith.constant 0 : index
    %c0_10 = arith.constant 0 : index
    %c0_11 = arith.constant 0 : index
    %14 = vector.load %arg10[%c0_9, %c0_10, %c0_11] : memref<3x8x128xf32, #tpu.memory_space<vmem>>, vector<1x8x128xf32>
    %15 = vector.shape_cast %14 : vector<1x8x128xf32> to vector<8x128xf32>
    %c0_12 = arith.constant 0 : index
    %c0_13 = arith.constant 0 : index
    %c0_14 = arith.constant 0 : index
    %16 = vector.load %arg11[%c0_12, %c0_13, %c0_14] : memref<3x8x128xf32, #tpu.memory_space<vmem>>, vector<1x8x128xf32>
    %17 = vector.shape_cast %16 : vector<1x8x128xf32> to vector<8x128xf32>
    %c0_15 = arith.constant 0 : index
    %c0_16 = arith.constant 0 : index
    %18 = vector.load %arg18[%c0_15, %c0_16] : memref<64x512xf32, #tpu.memory_space<vmem>>, vector<8x512xf32>
    %19 = arith.truncf %15 : vector<8x128xf32> to vector<8x128xbf16>
    %c0_17 = arith.constant 0 : index
    %c0_18 = arith.constant 0 : index
    %20 = vector.load %arg2[%c0_17, %c0_18] : memref<128x512xbf16, #tpu.memory_space<vmem>>, vector<128x512xbf16>
    %cst_19 = arith.constant dense<0.000000e+00> : vector<8x512xf32>
    %21 = tpu.matmul %19, %20, %cst_19 {dimension_numbers = #tpu.dot_dimension_numbers<[1], [0], [0], [1], [0, 0, 1, 1], [], []>} : vector<8x128xbf16>, vector<128x512xbf16>, vector<8x512xf32> -> vector<8x512xf32>
    %22 = arith.addf %18, %21 : vector<8x512xf32>
    %23 = vector.extract_strided_slice %22 {offsets = [0, 0], sizes = [8, 384], strides = [1, 1]} : vector<8x512xf32> to vector<8x384xf32>
    %24 = arith.negf %23 : vector<8x384xf32>
    %25 = math.exp %24 : vector<8x384xf32>
    %cst_20 = arith.constant 1.000000e+00 : f32
    %26 = vector.broadcast %cst_20 : f32 to vector<8x384xf32>
    %27 = arith.addf %26, %25 : vector<8x384xf32>
    %28 = arith.divf %26, %27 : vector<8x384xf32>
    %29 = vector.extract_strided_slice %22 {offsets = [0, 384], sizes = [8, 128], strides = [1, 1]} : vector<8x512xf32> to vector<8x128xf32>
    %30 = math.tanh %29 : vector<8x128xf32>
    %31 = vector.extract_strided_slice %28 {offsets = [0, 0], sizes = [8, 128], strides = [1, 1]} : vector<8x384xf32> to vector<8x128xf32>
    %32 = vector.extract_strided_slice %28 {offsets = [0, 128], sizes = [8, 128], strides = [1, 1]} : vector<8x384xf32> to vector<8x128xf32>
    %33 = vector.extract_strided_slice %28 {offsets = [0, 256], sizes = [8, 128], strides = [1, 1]} : vector<8x384xf32> to vector<8x128xf32>
    %34 = arith.mulf %32, %17 : vector<8x128xf32>
    %35 = arith.mulf %31, %30 : vector<8x128xf32>
    %36 = arith.addf %34, %35 : vector<8x128xf32>
    %37 = math.tanh %36 : vector<8x128xf32>
    %38 = arith.mulf %33, %37 : vector<8x128xf32>
    %c0_21 = arith.constant 0 : index
    %c0_22 = arith.constant 0 : index
    %39 = vector.load %arg17[%c0_21, %c0_22] : memref<64x128xf32, #tpu.memory_space<vmem>>, vector<8x128xf32>
    tpu.vector_store %arg17[%c0_21, %c0_22], %38 {strides = array<i32>} : memref<64x128xf32, #tpu.memory_space<vmem>>, vector<8x128xf32>,
    %c8 = arith.constant 8 : index
    %c0_23 = arith.constant 0 : index
    %40 = vector.load %arg18[%c8, %c0_23] : memref<64x512xf32, #tpu.memory_space<vmem>>, vector<8x512xf32>
    %41 = arith.truncf %38 : vector<8x128xf32> to vector<8x128xbf16>
    %c0_24 = arith.constant 0 : index
    %c0_25 = arith.constant 0 : index
    %42 = vector.load %arg2[%c0_24, %c0_25] : memref<128x512xbf16, #tpu.memory_space<vmem>>, vector<128x512xbf16>
    %cst_26 = arith.constant dense<0.000000e+00> : vector<8x512xf32>
    %43 = tpu.matmul %41, %42, %cst_26 {dimension_numbers = #tpu.dot_dimension_numbers<[1], [0], [0], [1], [0, 0, 1, 1], [], []>} : vector<8x128xbf16>, vector<128x512xbf16>, vector<8x512xf32> -> vector<8x512xf32>
    %44 = arith.addf %40, %43 : vector<8x512xf32>
    %45 = vector.extract_strided_slice %44 {offsets = [0, 0], sizes = [8, 384], strides = [1, 1]} : vector<8x512xf32> to vector<8x384xf32>
    %46 = arith.negf %45 : vector<8x384xf32>
    %47 = math.exp %46 : vector<8x384xf32>
    %cst_27 = arith.constant 1.000000e+00 : f32
    %48 = vector.broadcast %cst_27 : f32 to vector<8x384xf32>
    %49 = arith.addf %48, %47 : vector<8x384xf32>
    %50 = arith.divf %48, %49 : vector<8x384xf32>
    %51 = vector.extract_strided_slice %44 {offsets = [0, 384], sizes = [8, 128], strides = [1, 1]} : vector<8x512xf32> to vector<8x128xf32>
    %52 = math.tanh %51 : vector<8x128xf32>
    %53 = vector.extract_strided_slice %50 {offsets = [0, 0], sizes = [8, 128], strides = [1, 1]} : vector<8x384xf32> to vector<8x128xf32>
    %54 = vector.extract_strided_slice %50 {offsets = [0, 128], sizes = [8, 128], strides = [1, 1]} : vector<8x384xf32> to vector<8x128xf32>
    %55 = vector.extract_strided_slice %50 {offsets = [0, 256], sizes = [8, 128], strides = [1, 1]} : vector<8x384xf32> to vector<8x128xf32>
    %56 = arith.mulf %54, %36 : vector<8x128xf32>
    %57 = arith.mulf %53, %52 : vector<8x128xf32>
    %58 = arith.addf %56, %57 : vector<8x128xf32>
    %59 = math.tanh %58 : vector<8x128xf32>
    %60 = arith.mulf %55, %59 : vector<8x128xf32>
    %c8_28 = arith.constant 8 : index
    %c0_29 = arith.constant 0 : index
    %61 = vector.load %arg17[%c8_28, %c0_29] : memref<64x128xf32, #tpu.memory_space<vmem>>, vector<8x128xf32>
    tpu.vector_store %arg17[%c8_28, %c0_29], %60 {strides = array<i32>} : memref<64x128xf32, #tpu.memory_space<vmem>>, vector<8x128xf32>,
    %c16 = arith.constant 16 : index
    %c0_30 = arith.constant 0 : index
    %62 = vector.load %arg18[%c16, %c0_30] : memref<64x512xf32, #tpu.memory_space<vmem>>, vector<8x512xf32>
    %63 = arith.truncf %60 : vector<8x128xf32> to vector<8x128xbf16>
    %c0_31 = arith.constant 0 : index
    %c0_32 = arith.constant 0 : index
    %64 = vector.load %arg2[%c0_31, %c0_32] : memref<128x512xbf16, #tpu.memory_space<vmem>>, vector<128x512xbf16>
    %cst_33 = arith.constant dense<0.000000e+00> : vector<8x512xf32>
    %65 = tpu.matmul %63, %64, %cst_33 {dimension_numbers = #tpu.dot_dimension_numbers<[1], [0], [0], [1], [0, 0, 1, 1], [], []>} : vector<8x128xbf16>, vector<128x512xbf16>, vector<8x512xf32> -> vector<8x512xf32>
    %66 = arith.addf %62, %65 : vector<8x512xf32>
    %67 = vector.extract_strided_slice %66 {offsets = [0, 0], sizes = [8, 384], strides = [1, 1]} : vector<8x512xf32> to vector<8x384xf32>
    %68 = arith.negf %67 : vector<8x384xf32>
    %69 = math.exp %68 : vector<8x384xf32>
    %cst_34 = arith.constant 1.000000e+00 : f32
    %70 = vector.broadcast %cst_34 : f32 to vector<8x384xf32>
    %71 = arith.addf %70, %69 : vector<8x384xf32>
    %72 = arith.divf %70, %71 : vector<8x384xf32>
    %73 = vector.extract_strided_slice %66 {offsets = [0, 384], sizes = [8, 128], strides = [1, 1]} : vector<8x512xf32> to vector<8x128xf32>
    %74 = math.tanh %73 : vector<8x128xf32>
    %75 = vector.extract_strided_slice %72 {offsets = [0, 0], sizes = [8, 128], strides = [1, 1]} : vector<8x384xf32> to vector<8x128xf32>
    %76 = vector.extract_strided_slice %72 {offsets = [0, 128], sizes = [8, 128], strides = [1, 1]} : vector<8x384xf32> to vector<8x128xf32>
    %77 = vector.extract_strided_slice %72 {offsets = [0, 256], sizes = [8, 128], strides = [1, 1]} : vector<8x384xf32> to vector<8x128xf32>
    %78 = arith.mulf %76, %58 : vector<8x128xf32>
    %79 = arith.mulf %75, %74 : vector<8x128xf32>
    %80 = arith.addf %78, %79 : vector<8x128xf32>
    %81 = math.tanh %80 : vector<8x128xf32>
    %82 = arith.mulf %77, %81 : vector<8x128xf32>
    %c16_35 = arith.constant 16 : index
    %c0_36 = arith.constant 0 : index
    %83 = vector.load %arg17[%c16_35, %c0_36] : memref<64x128xf32, #tpu.memory_space<vmem>>, vector<8x128xf32>
    tpu.vector_store %arg17[%c16_35, %c0_36], %82 {strides = array<i32>} : memref<64x128xf32, #tpu.memory_space<vmem>>, vector<8x128xf32>,
    %c24 = arith.constant 24 : index
    %c0_37 = arith.constant 0 : index
    %84 = vector.load %arg18[%c24, %c0_37] : memref<64x512xf32, #tpu.memory_space<vmem>>, vector<8x512xf32>
    %85 = arith.truncf %82 : vector<8x128xf32> to vector<8x128xbf16>
    %c0_38 = arith.constant 0 : index
    %c0_39 = arith.constant 0 : index
    %86 = vector.load %arg2[%c0_38, %c0_39] : memref<128x512xbf16, #tpu.memory_space<vmem>>, vector<128x512xbf16>
    %cst_40 = arith.constant dense<0.000000e+00> : vector<8x512xf32>
    %87 = tpu.matmul %85, %86, %cst_40 {dimension_numbers = #tpu.dot_dimension_numbers<[1], [0], [0], [1], [0, 0, 1, 1], [], []>} : vector<8x128xbf16>, vector<128x512xbf16>, vector<8x512xf32> -> vector<8x512xf32>
    %88 = arith.addf %84, %87 : vector<8x512xf32>
    %89 = vector.extract_strided_slice %88 {offsets = [0, 0], sizes = [8, 384], strides = [1, 1]} : vector<8x512xf32> to vector<8x384xf32>
    %90 = arith.negf %89 : vector<8x384xf32>
    %91 = math.exp %90 : vector<8x384xf32>
    %cst_41 = arith.constant 1.000000e+00 : f32
    %92 = vector.broadcast %cst_41 : f32 to vector<8x384xf32>
    %93 = arith.addf %92, %91 : vector<8x384xf32>
    %94 = arith.divf %92, %93 : vector<8x384xf32>
    %95 = vector.extract_strided_slice %88 {offsets = [0, 384], sizes = [8, 128], strides = [1, 1]} : vector<8x512xf32> to vector<8x128xf32>
    %96 = math.tanh %95 : vector<8x128xf32>
    %97 = vector.extract_strided_slice %94 {offsets = [0, 0], sizes = [8, 128], strides = [1, 1]} : vector<8x384xf32> to vector<8x128xf32>
    %98 = vector.extract_strided_slice %94 {offsets = [0, 128], sizes = [8, 128], strides = [1, 1]} : vector<8x384xf32> to vector<8x128xf32>
    %99 = vector.extract_strided_slice %94 {offsets = [0, 256], sizes = [8, 128], strides = [1, 1]} : vector<8x384xf32> to vector<8x128xf32>
    %100 = arith.mulf %98, %80 : vector<8x128xf32>
    %101 = arith.mulf %97, %96 : vector<8x128xf32>
    %102 = arith.addf %100, %101 : vector<8x128xf32>
    %103 = math.tanh %102 : vector<8x128xf32>
    %104 = arith.mulf %99, %103 : vector<8x128xf32>
    %c24_42 = arith.constant 24 : index
    %c0_43 = arith.constant 0 : index
    %105 = vector.load %arg17[%c24_42, %c0_43] : memref<64x128xf32, #tpu.memory_space<vmem>>, vector<8x128xf32>
    tpu.vector_store %arg17[%c24_42, %c0_43], %104 {strides = array<i32>} : memref<64x128xf32, #tpu.memory_space<vmem>>, vector<8x128xf32>,
    %c32 = arith.constant 32 : index
    %c0_44 = arith.constant 0 : index
    %106 = vector.load %arg18[%c32, %c0_44] : memref<64x512xf32, #tpu.memory_space<vmem>>, vector<8x512xf32>
    %107 = arith.truncf %104 : vector<8x128xf32> to vector<8x128xbf16>
    %c0_45 = arith.constant 0 : index
    %c0_46 = arith.constant 0 : index
    %108 = vector.load %arg2[%c0_45, %c0_46] : memref<128x512xbf16, #tpu.memory_space<vmem>>, vector<128x512xbf16>
    %cst_47 = arith.constant dense<0.000000e+00> : vector<8x512xf32>
    %109 = tpu.matmul %107, %108, %cst_47 {dimension_numbers = #tpu.dot_dimension_numbers<[1], [0], [0], [1], [0, 0, 1, 1], [], []>} : vector<8x128xbf16>, vector<128x512xbf16>, vector<8x512xf32> -> vector<8x512xf32>
    %110 = arith.addf %106, %109 : vector<8x512xf32>
    %111 = vector.extract_strided_slice %110 {offsets = [0, 0], sizes = [8, 384], strides = [1, 1]} : vector<8x512xf32> to vector<8x384xf32>
    %112 = arith.negf %111 : vector<8x384xf32>
    %113 = math.exp %112 : vector<8x384xf32>
    %cst_48 = arith.constant 1.000000e+00 : f32
    %114 = vector.broadcast %cst_48 : f32 to vector<8x384xf32>
    %115 = arith.addf %114, %113 : vector<8x384xf32>
    %116 = arith.divf %114, %115 : vector<8x384xf32>
    %117 = vector.extract_strided_slice %110 {offsets = [0, 384], sizes = [8, 128], strides = [1, 1]} : vector<8x512xf32> to vector<8x128xf32>
    %118 = math.tanh %117 : vector<8x128xf32>
    %119 = vector.extract_strided_slice %116 {offsets = [0, 0], sizes = [8, 128], strides = [1, 1]} : vector<8x384xf32> to vector<8x128xf32>
    %120 = vector.extract_strided_slice %116 {offsets = [0, 128], sizes = [8, 128], strides = [1, 1]} : vector<8x384xf32> to vector<8x128xf32>
    %121 = vector.extract_strided_slice %116 {offsets = [0, 256], sizes = [8, 128], strides = [1, 1]} : vector<8x384xf32> to vector<8x128xf32>
    %122 = arith.mulf %120, %102 : vector<8x128xf32>
    %123 = arith.mulf %119, %118 : vector<8x128xf32>
    %124 = arith.addf %122, %123 : vector<8x128xf32>
    %125 = math.tanh %124 : vector<8x128xf32>
    %126 = arith.mulf %121, %125 : vector<8x128xf32>
    %c32_49 = arith.constant 32 : index
    %c0_50 = arith.constant 0 : index
    %127 = vector.load %arg17[%c32_49, %c0_50] : memref<64x128xf32, #tpu.memory_space<vmem>>, vector<8x128xf32>
    tpu.vector_store %arg17[%c32_49, %c0_50], %126 {strides = array<i32>} : memref<64x128xf32, #tpu.memory_space<vmem>>, vector<8x128xf32>,
    %c40 = arith.constant 40 : index
    %c0_51 = arith.constant 0 : index
    %128 = vector.load %arg18[%c40, %c0_51] : memref<64x512xf32, #tpu.memory_space<vmem>>, vector<8x512xf32>
    %129 = arith.truncf %126 : vector<8x128xf32> to vector<8x128xbf16>
    %c0_52 = arith.constant 0 : index
    %c0_53 = arith.constant 0 : index
    %130 = vector.load %arg2[%c0_52, %c0_53] : memref<128x512xbf16, #tpu.memory_space<vmem>>, vector<128x512xbf16>
    %cst_54 = arith.constant dense<0.000000e+00> : vector<8x512xf32>
    %131 = tpu.matmul %129, %130, %cst_54 {dimension_numbers = #tpu.dot_dimension_numbers<[1], [0], [0], [1], [0, 0, 1, 1], [], []>} : vector<8x128xbf16>, vector<128x512xbf16>, vector<8x512xf32> -> vector<8x512xf32>
    %132 = arith.addf %128, %131 : vector<8x512xf32>
    %133 = vector.extract_strided_slice %132 {offsets = [0, 0], sizes = [8, 384], strides = [1, 1]} : vector<8x512xf32> to vector<8x384xf32>
    %134 = arith.negf %133 : vector<8x384xf32>
    %135 = math.exp %134 : vector<8x384xf32>
    %cst_55 = arith.constant 1.000000e+00 : f32
    %136 = vector.broadcast %cst_55 : f32 to vector<8x384xf32>
    %137 = arith.addf %136, %135 : vector<8x384xf32>
    %138 = arith.divf %136, %137 : vector<8x384xf32>
    %139 = vector.extract_strided_slice %132 {offsets = [0, 384], sizes = [8, 128], strides = [1, 1]} : vector<8x512xf32> to vector<8x128xf32>
    %140 = math.tanh %139 : vector<8x128xf32>
    %141 = vector.extract_strided_slice %138 {offsets = [0, 0], sizes = [8, 128], strides = [1, 1]} : vector<8x384xf32> to vector<8x128xf32>
    %142 = vector.extract_strided_slice %138 {offsets = [0, 128], sizes = [8, 128], strides = [1, 1]} : vector<8x384xf32> to vector<8x128xf32>
    %143 = vector.extract_strided_slice %138 {offsets = [0, 256], sizes = [8, 128], strides = [1, 1]} : vector<8x384xf32> to vector<8x128xf32>
    %144 = arith.mulf %142, %124 : vector<8x128xf32>
    %145 = arith.mulf %141, %140 : vector<8x128xf32>
    %146 = arith.addf %144, %145 : vector<8x128xf32>
    %147 = math.tanh %146 : vector<8x128xf32>
    %148 = arith.mulf %143, %147 : vector<8x128xf32>
    %c40_56 = arith.constant 40 : index
    %c0_57 = arith.constant 0 : index
    %149 = vector.load %arg17[%c40_56, %c0_57] : memref<64x128xf32, #tpu.memory_space<vmem>>, vector<8x128xf32>
    tpu.vector_store %arg17[%c40_56, %c0_57], %148 {strides = array<i32>} : memref<64x128xf32, #tpu.memory_space<vmem>>, vector<8x128xf32>,
    %c48 = arith.constant 48 : index
    %c0_58 = arith.constant 0 : index
    %150 = vector.load %arg18[%c48, %c0_58] : memref<64x512xf32, #tpu.memory_space<vmem>>, vector<8x512xf32>
    %151 = arith.truncf %148 : vector<8x128xf32> to vector<8x128xbf16>
    %c0_59 = arith.constant 0 : index
    %c0_60 = arith.constant 0 : index
    %152 = vector.load %arg2[%c0_59, %c0_60] : memref<128x512xbf16, #tpu.memory_space<vmem>>, vector<128x512xbf16>
    %cst_61 = arith.constant dense<0.000000e+00> : vector<8x512xf32>
    %153 = tpu.matmul %151, %152, %cst_61 {dimension_numbers = #tpu.dot_dimension_numbers<[1], [0], [0], [1], [0, 0, 1, 1], [], []>} : vector<8x128xbf16>, vector<128x512xbf16>, vector<8x512xf32> -> vector<8x512xf32>
    %154 = arith.addf %150, %153 : vector<8x512xf32>
    %155 = vector.extract_strided_slice %154 {offsets = [0, 0], sizes = [8, 384], strides = [1, 1]} : vector<8x512xf32> to vector<8x384xf32>
    %156 = arith.negf %155 : vector<8x384xf32>
    %157 = math.exp %156 : vector<8x384xf32>
    %cst_62 = arith.constant 1.000000e+00 : f32
    %158 = vector.broadcast %cst_62 : f32 to vector<8x384xf32>
    %159 = arith.addf %158, %157 : vector<8x384xf32>
    %160 = arith.divf %158, %159 : vector<8x384xf32>
    %161 = vector.extract_strided_slice %154 {offsets = [0, 384], sizes = [8, 128], strides = [1, 1]} : vector<8x512xf32> to vector<8x128xf32>
    %162 = math.tanh %161 : vector<8x128xf32>
    %163 = vector.extract_strided_slice %160 {offsets = [0, 0], sizes = [8, 128], strides = [1, 1]} : vector<8x384xf32> to vector<8x128xf32>
    %164 = vector.extract_strided_slice %160 {offsets = [0, 128], sizes = [8, 128], strides = [1, 1]} : vector<8x384xf32> to vector<8x128xf32>
    %165 = vector.extract_strided_slice %160 {offsets = [0, 256], sizes = [8, 128], strides = [1, 1]} : vector<8x384xf32> to vector<8x128xf32>
    %166 = arith.mulf %164, %146 : vector<8x128xf32>
    %167 = arith.mulf %163, %162 : vector<8x128xf32>
    %168 = arith.addf %166, %167 : vector<8x128xf32>
    %169 = math.tanh %168 : vector<8x128xf32>
    %170 = arith.mulf %165, %169 : vector<8x128xf32>
    %c48_63 = arith.constant 48 : index
    %c0_64 = arith.constant 0 : index
    %171 = vector.load %arg17[%c48_63, %c0_64] : memref<64x128xf32, #tpu.memory_space<vmem>>, vector<8x128xf32>
    tpu.vector_store %arg17[%c48_63, %c0_64], %170 {strides = array<i32>} : memref<64x128xf32, #tpu.memory_space<vmem>>, vector<8x128xf32>,
    %c56 = arith.constant 56 : index
    %c0_65 = arith.constant 0 : index
    %172 = vector.load %arg18[%c56, %c0_65] : memref<64x512xf32, #tpu.memory_space<vmem>>, vector<8x512xf32>
    %173 = arith.truncf %170 : vector<8x128xf32> to vector<8x128xbf16>
    %c0_66 = arith.constant 0 : index
    %c0_67 = arith.constant 0 : index
    %174 = vector.load %arg2[%c0_66, %c0_67] : memref<128x512xbf16, #tpu.memory_space<vmem>>, vector<128x512xbf16>
    %cst_68 = arith.constant dense<0.000000e+00> : vector<8x512xf32>
    %175 = tpu.matmul %173, %174, %cst_68 {dimension_numbers = #tpu.dot_dimension_numbers<[1], [0], [0], [1], [0, 0, 1, 1], [], []>} : vector<8x128xbf16>, vector<128x512xbf16>, vector<8x512xf32> -> vector<8x512xf32>
    %176 = arith.addf %172, %175 : vector<8x512xf32>
    %177 = vector.extract_strided_slice %176 {offsets = [0, 0], sizes = [8, 384], strides = [1, 1]} : vector<8x512xf32> to vector<8x384xf32>
    %178 = arith.negf %177 : vector<8x384xf32>
    %179 = math.exp %178 : vector<8x384xf32>
    %cst_69 = arith.constant 1.000000e+00 : f32
    %180 = vector.broadcast %cst_69 : f32 to vector<8x384xf32>
    %181 = arith.addf %180, %179 : vector<8x384xf32>
    %182 = arith.divf %180, %181 : vector<8x384xf32>
    %183 = vector.extract_strided_slice %176 {offsets = [0, 384], sizes = [8, 128], strides = [1, 1]} : vector<8x512xf32> to vector<8x128xf32>
    %184 = math.tanh %183 : vector<8x128xf32>
    %185 = vector.extract_strided_slice %182 {offsets = [0, 0], sizes = [8, 128], strides = [1, 1]} : vector<8x384xf32> to vector<8x128xf32>
    %186 = vector.extract_strided_slice %182 {offsets = [0, 128], sizes = [8, 128], strides = [1, 1]} : vector<8x384xf32> to vector<8x128xf32>
    %187 = vector.extract_strided_slice %182 {offsets = [0, 256], sizes = [8, 128], strides = [1, 1]} : vector<8x384xf32> to vector<8x128xf32>
    %188 = arith.mulf %186, %168 : vector<8x128xf32>
    %189 = arith.mulf %185, %184 : vector<8x128xf32>
    %190 = arith.addf %188, %189 : vector<8x128xf32>
    %191 = math.tanh %190 : vector<8x128xf32>
    %192 = arith.mulf %187, %191 : vector<8x128xf32>
    %c56_70 = arith.constant 56 : index
    %c0_71 = arith.constant 0 : index
    %193 = vector.load %arg17[%c56_70, %c0_71] : memref<64x128xf32, #tpu.memory_space<vmem>>, vector<8x128xf32>
    tpu.vector_store %arg17[%c56_70, %c0_71], %192 {strides = array<i32>} : memref<64x128xf32, #tpu.memory_space<vmem>>, vector<8x128xf32>,
    %c0_72 = arith.constant 0 : index
    %c0_73 = arith.constant 0 : index
    %c0_74 = arith.constant 0 : index
    %194 = vector.load %arg15[%c0_72, %c0_73, %c0_74] : memref<3x8x128xf32, #tpu.memory_space<vmem>>, vector<1x8x128xf32>
    %195 = vector.shape_cast %194 : vector<1x8x128xf32> to vector<8x128xf32>
    %196 = vector.shape_cast %192 : vector<8x128xf32> to vector<1x8x128xf32>
    tpu.vector_store %arg15[%c0_72, %c0_73, %c0_74], %196 {strides = array<i32>} : memref<3x8x128xf32, #tpu.memory_space<vmem>>, vector<1x8x128xf32>,
    %c0_75 = arith.constant 0 : index
    %c0_76 = arith.constant 0 : index
    %c0_77 = arith.constant 0 : index
    %197 = vector.load %arg16[%c0_75, %c0_76, %c0_77] : memref<3x8x128xf32, #tpu.memory_space<vmem>>, vector<1x8x128xf32>
    %198 = vector.shape_cast %197 : vector<1x8x128xf32> to vector<8x128xf32>
    %199 = vector.shape_cast %190 : vector<8x128xf32> to vector<1x8x128xf32>
    tpu.vector_store %arg16[%c0_75, %c0_76, %c0_77], %199 {strides = array<i32>} : memref<3x8x128xf32, #tpu.memory_space<vmem>>, vector<1x8x128xf32>,
    %c0_78 = arith.constant 0 : index
    %c0_79 = arith.constant 0 : index
    %200 = vector.load %arg17[%c0_78, %c0_79] : memref<64x128xf32, #tpu.memory_space<vmem>>, vector<64x128xf32>
    %201 = arith.truncf %200 : vector<64x128xf32> to vector<64x128xbf16>
    %c0_80 = arith.constant 0 : index
    %c0_81 = arith.constant 0 : index
    %202 = vector.load %arg4[%c0_80, %c0_81] : memref<128x512xbf16, #tpu.memory_space<vmem>>, vector<128x512xbf16>
    %cst_82 = arith.constant dense<0.000000e+00> : vector<64x512xf32>
    %203 = tpu.matmul %201, %202, %cst_82 {dimension_numbers = #tpu.dot_dimension_numbers<[1], [0], [0], [1], [0, 0, 1, 1], [], []>} : vector<64x128xbf16>, vector<128x512xbf16>, vector<64x512xf32> -> vector<64x512xf32>
    %c0_83 = arith.constant 0 : index
    %c0_84 = arith.constant 0 : index
    %204 = vector.load %arg6[%c0_83, %c0_84] : memref<1x512xf32, #tpu.memory_space<vmem>>, vector<1x512xf32>
    %205 = vector.broadcast %204 : vector<1x512xf32> to vector<64x512xf32>
    %206 = arith.addf %203, %205 : vector<64x512xf32>
    %c0_85 = arith.constant 0 : index
    %c0_86 = arith.constant 0 : index
    %207 = vector.load %arg18[%c0_85, %c0_86] : memref<64x512xf32, #tpu.memory_space<vmem>>, vector<64x512xf32>
    tpu.vector_store %arg18[%c0_85, %c0_86], %206 {strides = array<i32>} : memref<64x512xf32, #tpu.memory_space<vmem>>, vector<64x512xf32>,
    %c1 = arith.constant 1 : index
    %c0_87 = arith.constant 0 : index
    %c0_88 = arith.constant 0 : index
    %208 = vector.load %arg10[%c1, %c0_87, %c0_88] : memref<3x8x128xf32, #tpu.memory_space<vmem>>, vector<1x8x128xf32>
    %209 = vector.shape_cast %208 : vector<1x8x128xf32> to vector<8x128xf32>
    %c1_89 = arith.constant 1 : index
    %c0_90 = arith.constant 0 : index
    %c0_91 = arith.constant 0 : index
    %210 = vector.load %arg11[%c1_89, %c0_90, %c0_91] : memref<3x8x128xf32, #tpu.memory_space<vmem>>, vector<1x8x128xf32>
    %211 = vector.shape_cast %210 : vector<1x8x128xf32> to vector<8x128xf32>
    %c0_92 = arith.constant 0 : index
    %c0_93 = arith.constant 0 : index
    %212 = vector.load %arg18[%c0_92, %c0_93] : memref<64x512xf32, #tpu.memory_space<vmem>>, vector<8x512xf32>
    %213 = arith.truncf %209 : vector<8x128xf32> to vector<8x128xbf16>
    %c0_94 = arith.constant 0 : index
    %c0_95 = arith.constant 0 : index
    %214 = vector.load %arg5[%c0_94, %c0_95] : memref<128x512xbf16, #tpu.memory_space<vmem>>, vector<128x512xbf16>
    %cst_96 = arith.constant dense<0.000000e+00> : vector<8x512xf32>
    %215 = tpu.matmul %213, %214, %cst_96 {dimension_numbers = #tpu.dot_dimension_numbers<[1], [0], [0], [1], [0, 0, 1, 1], [], []>} : vector<8x128xbf16>, vector<128x512xbf16>, vector<8x512xf32> -> vector<8x512xf32>
    %216 = arith.addf %212, %215 : vector<8x512xf32>
    %217 = vector.extract_strided_slice %216 {offsets = [0, 0], sizes = [8, 384], strides = [1, 1]} : vector<8x512xf32> to vector<8x384xf32>
    %218 = arith.negf %217 : vector<8x384xf32>
    %219 = math.exp %218 : vector<8x384xf32>
    %cst_97 = arith.constant 1.000000e+00 : f32
    %220 = vector.broadcast %cst_97 : f32 to vector<8x384xf32>
    %221 = arith.addf %220, %219 : vector<8x384xf32>
    %222 = arith.divf %220, %221 : vector<8x384xf32>
    %223 = vector.extract_strided_slice %216 {offsets = [0, 384], sizes = [8, 128], strides = [1, 1]} : vector<8x512xf32> to vector<8x128xf32>
    %224 = math.tanh %223 : vector<8x128xf32>
    %225 = vector.extract_strided_slice %222 {offsets = [0, 0], sizes = [8, 128], strides = [1, 1]} : vector<8x384xf32> to vector<8x128xf32>
    %226 = vector.extract_strided_slice %222 {offsets = [0, 128], sizes = [8, 128], strides = [1, 1]} : vector<8x384xf32> to vector<8x128xf32>
    %227 = vector.extract_strided_slice %222 {offsets = [0, 256], sizes = [8, 128], strides = [1, 1]} : vector<8x384xf32> to vector<8x128xf32>
    %228 = arith.mulf %226, %211 : vector<8x128xf32>
    %229 = arith.mulf %225, %224 : vector<8x128xf32>
    %230 = arith.addf %228, %229 : vector<8x128xf32>
    %231 = math.tanh %230 : vector<8x128xf32>
    %232 = arith.mulf %227, %231 : vector<8x128xf32>
    %c0_98 = arith.constant 0 : index
    %c0_99 = arith.constant 0 : index
    %233 = vector.load %arg17[%c0_98, %c0_99] : memref<64x128xf32, #tpu.memory_space<vmem>>, vector<8x128xf32>
    tpu.vector_store %arg17[%c0_98, %c0_99], %232 {strides = array<i32>} : memref<64x128xf32, #tpu.memory_space<vmem>>, vector<8x128xf32>,
    %c8_100 = arith.constant 8 : index
    %c0_101 = arith.constant 0 : index
    %234 = vector.load %arg18[%c8_100, %c0_101] : memref<64x512xf32, #tpu.memory_space<vmem>>, vector<8x512xf32>
    %235 = arith.truncf %232 : vector<8x128xf32> to vector<8x128xbf16>
    %c0_102 = arith.constant 0 : index
    %c0_103 = arith.constant 0 : index
    %236 = vector.load %arg5[%c0_102, %c0_103] : memref<128x512xbf16, #tpu.memory_space<vmem>>, vector<128x512xbf16>
    %cst_104 = arith.constant dense<0.000000e+00> : vector<8x512xf32>
    %237 = tpu.matmul %235, %236, %cst_104 {dimension_numbers = #tpu.dot_dimension_numbers<[1], [0], [0], [1], [0, 0, 1, 1], [], []>} : vector<8x128xbf16>, vector<128x512xbf16>, vector<8x512xf32> -> vector<8x512xf32>
    %238 = arith.addf %234, %237 : vector<8x512xf32>
    %239 = vector.extract_strided_slice %238 {offsets = [0, 0], sizes = [8, 384], strides = [1, 1]} : vector<8x512xf32> to vector<8x384xf32>
    %240 = arith.negf %239 : vector<8x384xf32>
    %241 = math.exp %240 : vector<8x384xf32>
    %cst_105 = arith.constant 1.000000e+00 : f32
    %242 = vector.broadcast %cst_105 : f32 to vector<8x384xf32>
    %243 = arith.addf %242, %241 : vector<8x384xf32>
    %244 = arith.divf %242, %243 : vector<8x384xf32>
    %245 = vector.extract_strided_slice %238 {offsets = [0, 384], sizes = [8, 128], strides = [1, 1]} : vector<8x512xf32> to vector<8x128xf32>
    %246 = math.tanh %245 : vector<8x128xf32>
    %247 = vector.extract_strided_slice %244 {offsets = [0, 0], sizes = [8, 128], strides = [1, 1]} : vector<8x384xf32> to vector<8x128xf32>
    %248 = vector.extract_strided_slice %244 {offsets = [0, 128], sizes = [8, 128], strides = [1, 1]} : vector<8x384xf32> to vector<8x128xf32>
    %249 = vector.extract_strided_slice %244 {offsets = [0, 256], sizes = [8, 128], strides = [1, 1]} : vector<8x384xf32> to vector<8x128xf32>
    %250 = arith.mulf %248, %230 : vector<8x128xf32>
    %251 = arith.mulf %247, %246 : vector<8x128xf32>
    %252 = arith.addf %250, %251 : vector<8x128xf32>
    %253 = math.tanh %252 : vector<8x128xf32>
    %254 = arith.mulf %249, %253 : vector<8x128xf32>
    %c8_106 = arith.constant 8 : index
    %c0_107 = arith.constant 0 : index
    %255 = vector.load %arg17[%c8_106, %c0_107] : memref<64x128xf32, #tpu.memory_space<vmem>>, vector<8x128xf32>
    tpu.vector_store %arg17[%c8_106, %c0_107], %254 {strides = array<i32>} : memref<64x128xf32, #tpu.memory_space<vmem>>, vector<8x128xf32>,
    %c16_108 = arith.constant 16 : index
    %c0_109 = arith.constant 0 : index
    %256 = vector.load %arg18[%c16_108, %c0_109] : memref<64x512xf32, #tpu.memory_space<vmem>>, vector<8x512xf32>
    %257 = arith.truncf %254 : vector<8x128xf32> to vector<8x128xbf16>
    %c0_110 = arith.constant 0 : index
    %c0_111 = arith.constant 0 : index
    %258 = vector.load %arg5[%c0_110, %c0_111] : memref<128x512xbf16, #tpu.memory_space<vmem>>, vector<128x512xbf16>
    %cst_112 = arith.constant dense<0.000000e+00> : vector<8x512xf32>
    %259 = tpu.matmul %257, %258, %cst_112 {dimension_numbers = #tpu.dot_dimension_numbers<[1], [0], [0], [1], [0, 0, 1, 1], [], []>} : vector<8x128xbf16>, vector<128x512xbf16>, vector<8x512xf32> -> vector<8x512xf32>
    %260 = arith.addf %256, %259 : vector<8x512xf32>
    %261 = vector.extract_strided_slice %260 {offsets = [0, 0], sizes = [8, 384], strides = [1, 1]} : vector<8x512xf32> to vector<8x384xf32>
    %262 = arith.negf %261 : vector<8x384xf32>
    %263 = math.exp %262 : vector<8x384xf32>
    %cst_113 = arith.constant 1.000000e+00 : f32
    %264 = vector.broadcast %cst_113 : f32 to vector<8x384xf32>
    %265 = arith.addf %264, %263 : vector<8x384xf32>
    %266 = arith.divf %264, %265 : vector<8x384xf32>
    %267 = vector.extract_strided_slice %260 {offsets = [0, 384], sizes = [8, 128], strides = [1, 1]} : vector<8x512xf32> to vector<8x128xf32>
    %268 = math.tanh %267 : vector<8x128xf32>
    %269 = vector.extract_strided_slice %266 {offsets = [0, 0], sizes = [8, 128], strides = [1, 1]} : vector<8x384xf32> to vector<8x128xf32>
    %270 = vector.extract_strided_slice %266 {offsets = [0, 128], sizes = [8, 128], strides = [1, 1]} : vector<8x384xf32> to vector<8x128xf32>
    %271 = vector.extract_strided_slice %266 {offsets = [0, 256], sizes = [8, 128], strides = [1, 1]} : vector<8x384xf32> to vector<8x128xf32>
    %272 = arith.mulf %270, %252 : vector<8x128xf32>
    %273 = arith.mulf %269, %268 : vector<8x128xf32>
    %274 = arith.addf %272, %273 : vector<8x128xf32>
    %275 = math.tanh %274 : vector<8x128xf32>
    %276 = arith.mulf %271, %275 : vector<8x128xf32>
    %c16_114 = arith.constant 16 : index
    %c0_115 = arith.constant 0 : index
    %277 = vector.load %arg17[%c16_114, %c0_115] : memref<64x128xf32, #tpu.memory_space<vmem>>, vector<8x128xf32>
    tpu.vector_store %arg17[%c16_114, %c0_115], %276 {strides = array<i32>} : memref<64x128xf32, #tpu.memory_space<vmem>>, vector<8x128xf32>,
    %c24_116 = arith.constant 24 : index
    %c0_117 = arith.constant 0 : index
    %278 = vector.load %arg18[%c24_116, %c0_117] : memref<64x512xf32, #tpu.memory_space<vmem>>, vector<8x512xf32>
    %279 = arith.truncf %276 : vector<8x128xf32> to vector<8x128xbf16>
    %c0_118 = arith.constant 0 : index
    %c0_119 = arith.constant 0 : index
    %280 = vector.load %arg5[%c0_118, %c0_119] : memref<128x512xbf16, #tpu.memory_space<vmem>>, vector<128x512xbf16>
    %cst_120 = arith.constant dense<0.000000e+00> : vector<8x512xf32>
    %281 = tpu.matmul %279, %280, %cst_120 {dimension_numbers = #tpu.dot_dimension_numbers<[1], [0], [0], [1], [0, 0, 1, 1], [], []>} : vector<8x128xbf16>, vector<128x512xbf16>, vector<8x512xf32> -> vector<8x512xf32>
    %282 = arith.addf %278, %281 : vector<8x512xf32>
    %283 = vector.extract_strided_slice %282 {offsets = [0, 0], sizes = [8, 384], strides = [1, 1]} : vector<8x512xf32> to vector<8x384xf32>
    %284 = arith.negf %283 : vector<8x384xf32>
    %285 = math.exp %284 : vector<8x384xf32>
    %cst_121 = arith.constant 1.000000e+00 : f32
    %286 = vector.broadcast %cst_121 : f32 to vector<8x384xf32>
    %287 = arith.addf %286, %285 : vector<8x384xf32>
    %288 = arith.divf %286, %287 : vector<8x384xf32>
    %289 = vector.extract_strided_slice %282 {offsets = [0, 384], sizes = [8, 128], strides = [1, 1]} : vector<8x512xf32> to vector<8x128xf32>
    %290 = math.tanh %289 : vector<8x128xf32>
    %291 = vector.extract_strided_slice %288 {offsets = [0, 0], sizes = [8, 128], strides = [1, 1]} : vector<8x384xf32> to vector<8x128xf32>
    %292 = vector.extract_strided_slice %288 {offsets = [0, 128], sizes = [8, 128], strides = [1, 1]} : vector<8x384xf32> to vector<8x128xf32>
    %293 = vector.extract_strided_slice %288 {offsets = [0, 256], sizes = [8, 128], strides = [1, 1]} : vector<8x384xf32> to vector<8x128xf32>
    %294 = arith.mulf %292, %274 : vector<8x128xf32>
    %295 = arith.mulf %291, %290 : vector<8x128xf32>
    %296 = arith.addf %294, %295 : vector<8x128xf32>
    %297 = math.tanh %296 : vector<8x128xf32>
    %298 = arith.mulf %293, %297 : vector<8x128xf32>
    %c24_122 = arith.constant 24 : index
    %c0_123 = arith.constant 0 : index
    %299 = vector.load %arg17[%c24_122, %c0_123] : memref<64x128xf32, #tpu.memory_space<vmem>>, vector<8x128xf32>
    tpu.vector_store %arg17[%c24_122, %c0_123], %298 {strides = array<i32>} : memref<64x128xf32, #tpu.memory_space<vmem>>, vector<8x128xf32>,
    %c32_124 = arith.constant 32 : index
    %c0_125 = arith.constant 0 : index
    %300 = vector.load %arg18[%c32_124, %c0_125] : memref<64x512xf32, #tpu.memory_space<vmem>>, vector<8x512xf32>
    %301 = arith.truncf %298 : vector<8x128xf32> to vector<8x128xbf16>
    %c0_126 = arith.constant 0 : index
    %c0_127 = arith.constant 0 : index
    %302 = vector.load %arg5[%c0_126, %c0_127] : memref<128x512xbf16, #tpu.memory_space<vmem>>, vector<128x512xbf16>
    %cst_128 = arith.constant dense<0.000000e+00> : vector<8x512xf32>
    %303 = tpu.matmul %301, %302, %cst_128 {dimension_numbers = #tpu.dot_dimension_numbers<[1], [0], [0], [1], [0, 0, 1, 1], [], []>} : vector<8x128xbf16>, vector<128x512xbf16>, vector<8x512xf32> -> vector<8x512xf32>
    %304 = arith.addf %300, %303 : vector<8x512xf32>
    %305 = vector.extract_strided_slice %304 {offsets = [0, 0], sizes = [8, 384], strides = [1, 1]} : vector<8x512xf32> to vector<8x384xf32>
    %306 = arith.negf %305 : vector<8x384xf32>
    %307 = math.exp %306 : vector<8x384xf32>
    %cst_129 = arith.constant 1.000000e+00 : f32
    %308 = vector.broadcast %cst_129 : f32 to vector<8x384xf32>
    %309 = arith.addf %308, %307 : vector<8x384xf32>
    %310 = arith.divf %308, %309 : vector<8x384xf32>
    %311 = vector.extract_strided_slice %304 {offsets = [0, 384], sizes = [8, 128], strides = [1, 1]} : vector<8x512xf32> to vector<8x128xf32>
    %312 = math.tanh %311 : vector<8x128xf32>
    %313 = vector.extract_strided_slice %310 {offsets = [0, 0], sizes = [8, 128], strides = [1, 1]} : vector<8x384xf32> to vector<8x128xf32>
    %314 = vector.extract_strided_slice %310 {offsets = [0, 128], sizes = [8, 128], strides = [1, 1]} : vector<8x384xf32> to vector<8x128xf32>
    %315 = vector.extract_strided_slice %310 {offsets = [0, 256], sizes = [8, 128], strides = [1, 1]} : vector<8x384xf32> to vector<8x128xf32>
    %316 = arith.mulf %314, %296 : vector<8x128xf32>
    %317 = arith.mulf %313, %312 : vector<8x128xf32>
    %318 = arith.addf %316, %317 : vector<8x128xf32>
    %319 = math.tanh %318 : vector<8x128xf32>
    %320 = arith.mulf %315, %319 : vector<8x128xf32>
    %c32_130 = arith.constant 32 : index
    %c0_131 = arith.constant 0 : index
    %321 = vector.load %arg17[%c32_130, %c0_131] : memref<64x128xf32, #tpu.memory_space<vmem>>, vector<8x128xf32>
    tpu.vector_store %arg17[%c32_130, %c0_131], %320 {strides = array<i32>} : memref<64x128xf32, #tpu.memory_space<vmem>>, vector<8x128xf32>,
    %c40_132 = arith.constant 40 : index
    %c0_133 = arith.constant 0 : index
    %322 = vector.load %arg18[%c40_132, %c0_133] : memref<64x512xf32, #tpu.memory_space<vmem>>, vector<8x512xf32>
    %323 = arith.truncf %320 : vector<8x128xf32> to vector<8x128xbf16>
    %c0_134 = arith.constant 0 : index
    %c0_135 = arith.constant 0 : index
    %324 = vector.load %arg5[%c0_134, %c0_135] : memref<128x512xbf16, #tpu.memory_space<vmem>>, vector<128x512xbf16>
    %cst_136 = arith.constant dense<0.000000e+00> : vector<8x512xf32>
    %325 = tpu.matmul %323, %324, %cst_136 {dimension_numbers = #tpu.dot_dimension_numbers<[1], [0], [0], [1], [0, 0, 1, 1], [], []>} : vector<8x128xbf16>, vector<128x512xbf16>, vector<8x512xf32> -> vector<8x512xf32>
    %326 = arith.addf %322, %325 : vector<8x512xf32>
    %327 = vector.extract_strided_slice %326 {offsets = [0, 0], sizes = [8, 384], strides = [1, 1]} : vector<8x512xf32> to vector<8x384xf32>
    %328 = arith.negf %327 : vector<8x384xf32>
    %329 = math.exp %328 : vector<8x384xf32>
    %cst_137 = arith.constant 1.000000e+00 : f32
    %330 = vector.broadcast %cst_137 : f32 to vector<8x384xf32>
    %331 = arith.addf %330, %329 : vector<8x384xf32>
    %332 = arith.divf %330, %331 : vector<8x384xf32>
    %333 = vector.extract_strided_slice %326 {offsets = [0, 384], sizes = [8, 128], strides = [1, 1]} : vector<8x512xf32> to vector<8x128xf32>
    %334 = math.tanh %333 : vector<8x128xf32>
    %335 = vector.extract_strided_slice %332 {offsets = [0, 0], sizes = [8, 128], strides = [1, 1]} : vector<8x384xf32> to vector<8x128xf32>
    %336 = vector.extract_strided_slice %332 {offsets = [0, 128], sizes = [8, 128], strides = [1, 1]} : vector<8x384xf32> to vector<8x128xf32>
    %337 = vector.extract_strided_slice %332 {offsets = [0, 256], sizes = [8, 128], strides = [1, 1]} : vector<8x384xf32> to vector<8x128xf32>
    %338 = arith.mulf %336, %318 : vector<8x128xf32>
    %339 = arith.mulf %335, %334 : vector<8x128xf32>
    %340 = arith.addf %338, %339 : vector<8x128xf32>
    %341 = math.tanh %340 : vector<8x128xf32>
    %342 = arith.mulf %337, %341 : vector<8x128xf32>
    %c40_138 = arith.constant 40 : index
    %c0_139 = arith.constant 0 : index
    %343 = vector.load %arg17[%c40_138, %c0_139] : memref<64x128xf32, #tpu.memory_space<vmem>>, vector<8x128xf32>
    tpu.vector_store %arg17[%c40_138, %c0_139], %342 {strides = array<i32>} : memref<64x128xf32, #tpu.memory_space<vmem>>, vector<8x128xf32>,
    %c48_140 = arith.constant 48 : index
    %c0_141 = arith.constant 0 : index
    %344 = vector.load %arg18[%c48_140, %c0_141] : memref<64x512xf32, #tpu.memory_space<vmem>>, vector<8x512xf32>
    %345 = arith.truncf %342 : vector<8x128xf32> to vector<8x128xbf16>
    %c0_142 = arith.constant 0 : index
    %c0_143 = arith.constant 0 : index
    %346 = vector.load %arg5[%c0_142, %c0_143] : memref<128x512xbf16, #tpu.memory_space<vmem>>, vector<128x512xbf16>
    %cst_144 = arith.constant dense<0.000000e+00> : vector<8x512xf32>
    %347 = tpu.matmul %345, %346, %cst_144 {dimension_numbers = #tpu.dot_dimension_numbers<[1], [0], [0], [1], [0, 0, 1, 1], [], []>} : vector<8x128xbf16>, vector<128x512xbf16>, vector<8x512xf32> -> vector<8x512xf32>
    %348 = arith.addf %344, %347 : vector<8x512xf32>
    %349 = vector.extract_strided_slice %348 {offsets = [0, 0], sizes = [8, 384], strides = [1, 1]} : vector<8x512xf32> to vector<8x384xf32>
    %350 = arith.negf %349 : vector<8x384xf32>
    %351 = math.exp %350 : vector<8x384xf32>
    %cst_145 = arith.constant 1.000000e+00 : f32
    %352 = vector.broadcast %cst_145 : f32 to vector<8x384xf32>
    %353 = arith.addf %352, %351 : vector<8x384xf32>
    %354 = arith.divf %352, %353 : vector<8x384xf32>
    %355 = vector.extract_strided_slice %348 {offsets = [0, 384], sizes = [8, 128], strides = [1, 1]} : vector<8x512xf32> to vector<8x128xf32>
    %356 = math.tanh %355 : vector<8x128xf32>
    %357 = vector.extract_strided_slice %354 {offsets = [0, 0], sizes = [8, 128], strides = [1, 1]} : vector<8x384xf32> to vector<8x128xf32>
    %358 = vector.extract_strided_slice %354 {offsets = [0, 128], sizes = [8, 128], strides = [1, 1]} : vector<8x384xf32> to vector<8x128xf32>
    %359 = vector.extract_strided_slice %354 {offsets = [0, 256], sizes = [8, 128], strides = [1, 1]} : vector<8x384xf32> to vector<8x128xf32>
    %360 = arith.mulf %358, %340 : vector<8x128xf32>
    %361 = arith.mulf %357, %356 : vector<8x128xf32>
    %362 = arith.addf %360, %361 : vector<8x128xf32>
    %363 = math.tanh %362 : vector<8x128xf32>
    %364 = arith.mulf %359, %363 : vector<8x128xf32>
    %c48_146 = arith.constant 48 : index
    %c0_147 = arith.constant 0 : index
    %365 = vector.load %arg17[%c48_146, %c0_147] : memref<64x128xf32, #tpu.memory_space<vmem>>, vector<8x128xf32>
    tpu.vector_store %arg17[%c48_146, %c0_147], %364 {strides = array<i32>} : memref<64x128xf32, #tpu.memory_space<vmem>>, vector<8x128xf32>,
    %c56_148 = arith.constant 56 : index
    %c0_149 = arith.constant 0 : index
    %366 = vector.load %arg18[%c56_148, %c0_149] : memref<64x512xf32, #tpu.memory_space<vmem>>, vector<8x512xf32>
    %367 = arith.truncf %364 : vector<8x128xf32> to vector<8x128xbf16>
    %c0_150 = arith.constant 0 : index
    %c0_151 = arith.constant 0 : index
    %368 = vector.load %arg5[%c0_150, %c0_151] : memref<128x512xbf16, #tpu.memory_space<vmem>>, vector<128x512xbf16>
    %cst_152 = arith.constant dense<0.000000e+00> : vector<8x512xf32>
    %369 = tpu.matmul %367, %368, %cst_152 {dimension_numbers = #tpu.dot_dimension_numbers<[1], [0], [0], [1], [0, 0, 1, 1], [], []>} : vector<8x128xbf16>, vector<128x512xbf16>, vector<8x512xf32> -> vector<8x512xf32>
    %370 = arith.addf %366, %369 : vector<8x512xf32>
    %371 = vector.extract_strided_slice %370 {offsets = [0, 0], sizes = [8, 384], strides = [1, 1]} : vector<8x512xf32> to vector<8x384xf32>
    %372 = arith.negf %371 : vector<8x384xf32>
    %373 = math.exp %372 : vector<8x384xf32>
    %cst_153 = arith.constant 1.000000e+00 : f32
    %374 = vector.broadcast %cst_153 : f32 to vector<8x384xf32>
    %375 = arith.addf %374, %373 : vector<8x384xf32>
    %376 = arith.divf %374, %375 : vector<8x384xf32>
    %377 = vector.extract_strided_slice %370 {offsets = [0, 384], sizes = [8, 128], strides = [1, 1]} : vector<8x512xf32> to vector<8x128xf32>
    %378 = math.tanh %377 : vector<8x128xf32>
    %379 = vector.extract_strided_slice %376 {offsets = [0, 0], sizes = [8, 128], strides = [1, 1]} : vector<8x384xf32> to vector<8x128xf32>
    %380 = vector.extract_strided_slice %376 {offsets = [0, 128], sizes = [8, 128], strides = [1, 1]} : vector<8x384xf32> to vector<8x128xf32>
    %381 = vector.extract_strided_slice %376 {offsets = [0, 256], sizes = [8, 128], strides = [1, 1]} : vector<8x384xf32> to vector<8x128xf32>
    %382 = arith.mulf %380, %362 : vector<8x128xf32>
    %383 = arith.mulf %379, %378 : vector<8x128xf32>
    %384 = arith.addf %382, %383 : vector<8x128xf32>
    %385 = math.tanh %384 : vector<8x128xf32>
    %386 = arith.mulf %381, %385 : vector<8x128xf32>
    %c56_154 = arith.constant 56 : index
    %c0_155 = arith.constant 0 : index
    %387 = vector.load %arg17[%c56_154, %c0_155] : memref<64x128xf32, #tpu.memory_space<vmem>>, vector<8x128xf32>
    tpu.vector_store %arg17[%c56_154, %c0_155], %386 {strides = array<i32>} : memref<64x128xf32, #tpu.memory_space<vmem>>, vector<8x128xf32>,
    %c1_156 = arith.constant 1 : index
    %c0_157 = arith.constant 0 : index
    %c0_158 = arith.constant 0 : index
    %388 = vector.load %arg15[%c1_156, %c0_157, %c0_158] : memref<3x8x128xf32, #tpu.memory_space<vmem>>, vector<1x8x128xf32>
    %389 = vector.shape_cast %388 : vector<1x8x128xf32> to vector<8x128xf32>
    %390 = vector.shape_cast %386 : vector<8x128xf32> to vector<1x8x128xf32>
    tpu.vector_store %arg15[%c1_156, %c0_157, %c0_158], %390 {strides = array<i32>} : memref<3x8x128xf32, #tpu.memory_space<vmem>>, vector<1x8x128xf32>,
    %c1_159 = arith.constant 1 : index
    %c0_160 = arith.constant 0 : index
    %c0_161 = arith.constant 0 : index
    %391 = vector.load %arg16[%c1_159, %c0_160, %c0_161] : memref<3x8x128xf32, #tpu.memory_space<vmem>>, vector<1x8x128xf32>
    %392 = vector.shape_cast %391 : vector<1x8x128xf32> to vector<8x128xf32>
    %393 = vector.shape_cast %384 : vector<8x128xf32> to vector<1x8x128xf32>
    tpu.vector_store %arg16[%c1_159, %c0_160, %c0_161], %393 {strides = array<i32>} : memref<3x8x128xf32, #tpu.memory_space<vmem>>, vector<1x8x128xf32>,
    %c0_162 = arith.constant 0 : index
    %c0_163 = arith.constant 0 : index
    %394 = vector.load %arg17[%c0_162, %c0_163] : memref<64x128xf32, #tpu.memory_space<vmem>>, vector<64x128xf32>
    %395 = arith.truncf %394 : vector<64x128xf32> to vector<64x128xbf16>
    %c0_164 = arith.constant 0 : index
    %c0_165 = arith.constant 0 : index
    %396 = vector.load %arg7[%c0_164, %c0_165] : memref<128x512xbf16, #tpu.memory_space<vmem>>, vector<128x512xbf16>
    %cst_166 = arith.constant dense<0.000000e+00> : vector<64x512xf32>
    %397 = tpu.matmul %395, %396, %cst_166 {dimension_numbers = #tpu.dot_dimension_numbers<[1], [0], [0], [1], [0, 0, 1, 1], [], []>} : vector<64x128xbf16>, vector<128x512xbf16>, vector<64x512xf32> -> vector<64x512xf32>
    %c0_167 = arith.constant 0 : index
    %c0_168 = arith.constant 0 : index
    %398 = vector.load %arg9[%c0_167, %c0_168] : memref<1x512xf32, #tpu.memory_space<vmem>>, vector<1x512xf32>
    %399 = vector.broadcast %398 : vector<1x512xf32> to vector<64x512xf32>
    %400 = arith.addf %397, %399 : vector<64x512xf32>
    %c0_169 = arith.constant 0 : index
    %c0_170 = arith.constant 0 : index
    %401 = vector.load %arg18[%c0_169, %c0_170] : memref<64x512xf32, #tpu.memory_space<vmem>>, vector<64x512xf32>
    tpu.vector_store %arg18[%c0_169, %c0_170], %400 {strides = array<i32>} : memref<64x512xf32, #tpu.memory_space<vmem>>, vector<64x512xf32>,
    %c2 = arith.constant 2 : index
    %c0_171 = arith.constant 0 : index
    %c0_172 = arith.constant 0 : index
    %402 = vector.load %arg10[%c2, %c0_171, %c0_172] : memref<3x8x128xf32, #tpu.memory_space<vmem>>, vector<1x8x128xf32>
    %403 = vector.shape_cast %402 : vector<1x8x128xf32> to vector<8x128xf32>
    %c2_173 = arith.constant 2 : index
    %c0_174 = arith.constant 0 : index
    %c0_175 = arith.constant 0 : index
    %404 = vector.load %arg11[%c2_173, %c0_174, %c0_175] : memref<3x8x128xf32, #tpu.memory_space<vmem>>, vector<1x8x128xf32>
    %405 = vector.shape_cast %404 : vector<1x8x128xf32> to vector<8x128xf32>
    %c0_176 = arith.constant 0 : index
    %c0_177 = arith.constant 0 : index
    %406 = vector.load %arg18[%c0_176, %c0_177] : memref<64x512xf32, #tpu.memory_space<vmem>>, vector<8x512xf32>
    %407 = arith.truncf %403 : vector<8x128xf32> to vector<8x128xbf16>
    %c0_178 = arith.constant 0 : index
    %c0_179 = arith.constant 0 : index
    %408 = vector.load %arg8[%c0_178, %c0_179] : memref<128x512xbf16, #tpu.memory_space<vmem>>, vector<128x512xbf16>
    %cst_180 = arith.constant dense<0.000000e+00> : vector<8x512xf32>
    %409 = tpu.matmul %407, %408, %cst_180 {dimension_numbers = #tpu.dot_dimension_numbers<[1], [0], [0], [1], [0, 0, 1, 1], [], []>} : vector<8x128xbf16>, vector<128x512xbf16>, vector<8x512xf32> -> vector<8x512xf32>
    %410 = arith.addf %406, %409 : vector<8x512xf32>
    %411 = vector.extract_strided_slice %410 {offsets = [0, 0], sizes = [8, 384], strides = [1, 1]} : vector<8x512xf32> to vector<8x384xf32>
    %412 = arith.negf %411 : vector<8x384xf32>
    %413 = math.exp %412 : vector<8x384xf32>
    %cst_181 = arith.constant 1.000000e+00 : f32
    %414 = vector.broadcast %cst_181 : f32 to vector<8x384xf32>
    %415 = arith.addf %414, %413 : vector<8x384xf32>
    %416 = arith.divf %414, %415 : vector<8x384xf32>
    %417 = vector.extract_strided_slice %410 {offsets = [0, 384], sizes = [8, 128], strides = [1, 1]} : vector<8x512xf32> to vector<8x128xf32>
    %418 = math.tanh %417 : vector<8x128xf32>
    %419 = vector.extract_strided_slice %416 {offsets = [0, 0], sizes = [8, 128], strides = [1, 1]} : vector<8x384xf32> to vector<8x128xf32>
    %420 = vector.extract_strided_slice %416 {offsets = [0, 128], sizes = [8, 128], strides = [1, 1]} : vector<8x384xf32> to vector<8x128xf32>
    %421 = vector.extract_strided_slice %416 {offsets = [0, 256], sizes = [8, 128], strides = [1, 1]} : vector<8x384xf32> to vector<8x128xf32>
    %422 = arith.mulf %420, %405 : vector<8x128xf32>
    %423 = arith.mulf %419, %418 : vector<8x128xf32>
    %424 = arith.addf %422, %423 : vector<8x128xf32>
    %425 = math.tanh %424 : vector<8x128xf32>
    %426 = arith.mulf %421, %425 : vector<8x128xf32>
    %c0_182 = arith.constant 0 : index
    %c0_183 = arith.constant 0 : index
    %427 = vector.load %arg17[%c0_182, %c0_183] : memref<64x128xf32, #tpu.memory_space<vmem>>, vector<8x128xf32>
    tpu.vector_store %arg17[%c0_182, %c0_183], %426 {strides = array<i32>} : memref<64x128xf32, #tpu.memory_space<vmem>>, vector<8x128xf32>,
    %c8_184 = arith.constant 8 : index
    %c0_185 = arith.constant 0 : index
    %428 = vector.load %arg18[%c8_184, %c0_185] : memref<64x512xf32, #tpu.memory_space<vmem>>, vector<8x512xf32>
    %429 = arith.truncf %426 : vector<8x128xf32> to vector<8x128xbf16>
    %c0_186 = arith.constant 0 : index
    %c0_187 = arith.constant 0 : index
    %430 = vector.load %arg8[%c0_186, %c0_187] : memref<128x512xbf16, #tpu.memory_space<vmem>>, vector<128x512xbf16>
    %cst_188 = arith.constant dense<0.000000e+00> : vector<8x512xf32>
    %431 = tpu.matmul %429, %430, %cst_188 {dimension_numbers = #tpu.dot_dimension_numbers<[1], [0], [0], [1], [0, 0, 1, 1], [], []>} : vector<8x128xbf16>, vector<128x512xbf16>, vector<8x512xf32> -> vector<8x512xf32>
    %432 = arith.addf %428, %431 : vector<8x512xf32>
    %433 = vector.extract_strided_slice %432 {offsets = [0, 0], sizes = [8, 384], strides = [1, 1]} : vector<8x512xf32> to vector<8x384xf32>
    %434 = arith.negf %433 : vector<8x384xf32>
    %435 = math.exp %434 : vector<8x384xf32>
    %cst_189 = arith.constant 1.000000e+00 : f32
    %436 = vector.broadcast %cst_189 : f32 to vector<8x384xf32>
    %437 = arith.addf %436, %435 : vector<8x384xf32>
    %438 = arith.divf %436, %437 : vector<8x384xf32>
    %439 = vector.extract_strided_slice %432 {offsets = [0, 384], sizes = [8, 128], strides = [1, 1]} : vector<8x512xf32> to vector<8x128xf32>
    %440 = math.tanh %439 : vector<8x128xf32>
    %441 = vector.extract_strided_slice %438 {offsets = [0, 0], sizes = [8, 128], strides = [1, 1]} : vector<8x384xf32> to vector<8x128xf32>
    %442 = vector.extract_strided_slice %438 {offsets = [0, 128], sizes = [8, 128], strides = [1, 1]} : vector<8x384xf32> to vector<8x128xf32>
    %443 = vector.extract_strided_slice %438 {offsets = [0, 256], sizes = [8, 128], strides = [1, 1]} : vector<8x384xf32> to vector<8x128xf32>
    %444 = arith.mulf %442, %424 : vector<8x128xf32>
    %445 = arith.mulf %441, %440 : vector<8x128xf32>
    %446 = arith.addf %444, %445 : vector<8x128xf32>
    %447 = math.tanh %446 : vector<8x128xf32>
    %448 = arith.mulf %443, %447 : vector<8x128xf32>
    %c8_190 = arith.constant 8 : index
    %c0_191 = arith.constant 0 : index
    %449 = vector.load %arg17[%c8_190, %c0_191] : memref<64x128xf32, #tpu.memory_space<vmem>>, vector<8x128xf32>
    tpu.vector_store %arg17[%c8_190, %c0_191], %448 {strides = array<i32>} : memref<64x128xf32, #tpu.memory_space<vmem>>, vector<8x128xf32>,
    %c16_192 = arith.constant 16 : index
    %c0_193 = arith.constant 0 : index
    %450 = vector.load %arg18[%c16_192, %c0_193] : memref<64x512xf32, #tpu.memory_space<vmem>>, vector<8x512xf32>
    %451 = arith.truncf %448 : vector<8x128xf32> to vector<8x128xbf16>
    %c0_194 = arith.constant 0 : index
    %c0_195 = arith.constant 0 : index
    %452 = vector.load %arg8[%c0_194, %c0_195] : memref<128x512xbf16, #tpu.memory_space<vmem>>, vector<128x512xbf16>
    %cst_196 = arith.constant dense<0.000000e+00> : vector<8x512xf32>
    %453 = tpu.matmul %451, %452, %cst_196 {dimension_numbers = #tpu.dot_dimension_numbers<[1], [0], [0], [1], [0, 0, 1, 1], [], []>} : vector<8x128xbf16>, vector<128x512xbf16>, vector<8x512xf32> -> vector<8x512xf32>
    %454 = arith.addf %450, %453 : vector<8x512xf32>
    %455 = vector.extract_strided_slice %454 {offsets = [0, 0], sizes = [8, 384], strides = [1, 1]} : vector<8x512xf32> to vector<8x384xf32>
    %456 = arith.negf %455 : vector<8x384xf32>
    %457 = math.exp %456 : vector<8x384xf32>
    %cst_197 = arith.constant 1.000000e+00 : f32
    %458 = vector.broadcast %cst_197 : f32 to vector<8x384xf32>
    %459 = arith.addf %458, %457 : vector<8x384xf32>
    %460 = arith.divf %458, %459 : vector<8x384xf32>
    %461 = vector.extract_strided_slice %454 {offsets = [0, 384], sizes = [8, 128], strides = [1, 1]} : vector<8x512xf32> to vector<8x128xf32>
    %462 = math.tanh %461 : vector<8x128xf32>
    %463 = vector.extract_strided_slice %460 {offsets = [0, 0], sizes = [8, 128], strides = [1, 1]} : vector<8x384xf32> to vector<8x128xf32>
    %464 = vector.extract_strided_slice %460 {offsets = [0, 128], sizes = [8, 128], strides = [1, 1]} : vector<8x384xf32> to vector<8x128xf32>
    %465 = vector.extract_strided_slice %460 {offsets = [0, 256], sizes = [8, 128], strides = [1, 1]} : vector<8x384xf32> to vector<8x128xf32>
    %466 = arith.mulf %464, %446 : vector<8x128xf32>
    %467 = arith.mulf %463, %462 : vector<8x128xf32>
    %468 = arith.addf %466, %467 : vector<8x128xf32>
    %469 = math.tanh %468 : vector<8x128xf32>
    %470 = arith.mulf %465, %469 : vector<8x128xf32>
    %c16_198 = arith.constant 16 : index
    %c0_199 = arith.constant 0 : index
    %471 = vector.load %arg17[%c16_198, %c0_199] : memref<64x128xf32, #tpu.memory_space<vmem>>, vector<8x128xf32>
    tpu.vector_store %arg17[%c16_198, %c0_199], %470 {strides = array<i32>} : memref<64x128xf32, #tpu.memory_space<vmem>>, vector<8x128xf32>,
    %c24_200 = arith.constant 24 : index
    %c0_201 = arith.constant 0 : index
    %472 = vector.load %arg18[%c24_200, %c0_201] : memref<64x512xf32, #tpu.memory_space<vmem>>, vector<8x512xf32>
    %473 = arith.truncf %470 : vector<8x128xf32> to vector<8x128xbf16>
    %c0_202 = arith.constant 0 : index
    %c0_203 = arith.constant 0 : index
    %474 = vector.load %arg8[%c0_202, %c0_203] : memref<128x512xbf16, #tpu.memory_space<vmem>>, vector<128x512xbf16>
    %cst_204 = arith.constant dense<0.000000e+00> : vector<8x512xf32>
    %475 = tpu.matmul %473, %474, %cst_204 {dimension_numbers = #tpu.dot_dimension_numbers<[1], [0], [0], [1], [0, 0, 1, 1], [], []>} : vector<8x128xbf16>, vector<128x512xbf16>, vector<8x512xf32> -> vector<8x512xf32>
    %476 = arith.addf %472, %475 : vector<8x512xf32>
    %477 = vector.extract_strided_slice %476 {offsets = [0, 0], sizes = [8, 384], strides = [1, 1]} : vector<8x512xf32> to vector<8x384xf32>
    %478 = arith.negf %477 : vector<8x384xf32>
    %479 = math.exp %478 : vector<8x384xf32>
    %cst_205 = arith.constant 1.000000e+00 : f32
    %480 = vector.broadcast %cst_205 : f32 to vector<8x384xf32>
    %481 = arith.addf %480, %479 : vector<8x384xf32>
    %482 = arith.divf %480, %481 : vector<8x384xf32>
    %483 = vector.extract_strided_slice %476 {offsets = [0, 384], sizes = [8, 128], strides = [1, 1]} : vector<8x512xf32> to vector<8x128xf32>
    %484 = math.tanh %483 : vector<8x128xf32>
    %485 = vector.extract_strided_slice %482 {offsets = [0, 0], sizes = [8, 128], strides = [1, 1]} : vector<8x384xf32> to vector<8x128xf32>
    %486 = vector.extract_strided_slice %482 {offsets = [0, 128], sizes = [8, 128], strides = [1, 1]} : vector<8x384xf32> to vector<8x128xf32>
    %487 = vector.extract_strided_slice %482 {offsets = [0, 256], sizes = [8, 128], strides = [1, 1]} : vector<8x384xf32> to vector<8x128xf32>
    %488 = arith.mulf %486, %468 : vector<8x128xf32>
    %489 = arith.mulf %485, %484 : vector<8x128xf32>
    %490 = arith.addf %488, %489 : vector<8x128xf32>
    %491 = math.tanh %490 : vector<8x128xf32>
    %492 = arith.mulf %487, %491 : vector<8x128xf32>
    %c24_206 = arith.constant 24 : index
    %c0_207 = arith.constant 0 : index
    %493 = vector.load %arg17[%c24_206, %c0_207] : memref<64x128xf32, #tpu.memory_space<vmem>>, vector<8x128xf32>
    tpu.vector_store %arg17[%c24_206, %c0_207], %492 {strides = array<i32>} : memref<64x128xf32, #tpu.memory_space<vmem>>, vector<8x128xf32>,
    %c32_208 = arith.constant 32 : index
    %c0_209 = arith.constant 0 : index
    %494 = vector.load %arg18[%c32_208, %c0_209] : memref<64x512xf32, #tpu.memory_space<vmem>>, vector<8x512xf32>
    %495 = arith.truncf %492 : vector<8x128xf32> to vector<8x128xbf16>
    %c0_210 = arith.constant 0 : index
    %c0_211 = arith.constant 0 : index
    %496 = vector.load %arg8[%c0_210, %c0_211] : memref<128x512xbf16, #tpu.memory_space<vmem>>, vector<128x512xbf16>
    %cst_212 = arith.constant dense<0.000000e+00> : vector<8x512xf32>
    %497 = tpu.matmul %495, %496, %cst_212 {dimension_numbers = #tpu.dot_dimension_numbers<[1], [0], [0], [1], [0, 0, 1, 1], [], []>} : vector<8x128xbf16>, vector<128x512xbf16>, vector<8x512xf32> -> vector<8x512xf32>
    %498 = arith.addf %494, %497 : vector<8x512xf32>
    %499 = vector.extract_strided_slice %498 {offsets = [0, 0], sizes = [8, 384], strides = [1, 1]} : vector<8x512xf32> to vector<8x384xf32>
    %500 = arith.negf %499 : vector<8x384xf32>
    %501 = math.exp %500 : vector<8x384xf32>
    %cst_213 = arith.constant 1.000000e+00 : f32
    %502 = vector.broadcast %cst_213 : f32 to vector<8x384xf32>
    %503 = arith.addf %502, %501 : vector<8x384xf32>
    %504 = arith.divf %502, %503 : vector<8x384xf32>
    %505 = vector.extract_strided_slice %498 {offsets = [0, 384], sizes = [8, 128], strides = [1, 1]} : vector<8x512xf32> to vector<8x128xf32>
    %506 = math.tanh %505 : vector<8x128xf32>
    %507 = vector.extract_strided_slice %504 {offsets = [0, 0], sizes = [8, 128], strides = [1, 1]} : vector<8x384xf32> to vector<8x128xf32>
    %508 = vector.extract_strided_slice %504 {offsets = [0, 128], sizes = [8, 128], strides = [1, 1]} : vector<8x384xf32> to vector<8x128xf32>
    %509 = vector.extract_strided_slice %504 {offsets = [0, 256], sizes = [8, 128], strides = [1, 1]} : vector<8x384xf32> to vector<8x128xf32>
    %510 = arith.mulf %508, %490 : vector<8x128xf32>
    %511 = arith.mulf %507, %506 : vector<8x128xf32>
    %512 = arith.addf %510, %511 : vector<8x128xf32>
    %513 = math.tanh %512 : vector<8x128xf32>
    %514 = arith.mulf %509, %513 : vector<8x128xf32>
    %c32_214 = arith.constant 32 : index
    %c0_215 = arith.constant 0 : index
    %515 = vector.load %arg17[%c32_214, %c0_215] : memref<64x128xf32, #tpu.memory_space<vmem>>, vector<8x128xf32>
    tpu.vector_store %arg17[%c32_214, %c0_215], %514 {strides = array<i32>} : memref<64x128xf32, #tpu.memory_space<vmem>>, vector<8x128xf32>,
    %c40_216 = arith.constant 40 : index
    %c0_217 = arith.constant 0 : index
    %516 = vector.load %arg18[%c40_216, %c0_217] : memref<64x512xf32, #tpu.memory_space<vmem>>, vector<8x512xf32>
    %517 = arith.truncf %514 : vector<8x128xf32> to vector<8x128xbf16>
    %c0_218 = arith.constant 0 : index
    %c0_219 = arith.constant 0 : index
    %518 = vector.load %arg8[%c0_218, %c0_219] : memref<128x512xbf16, #tpu.memory_space<vmem>>, vector<128x512xbf16>
    %cst_220 = arith.constant dense<0.000000e+00> : vector<8x512xf32>
    %519 = tpu.matmul %517, %518, %cst_220 {dimension_numbers = #tpu.dot_dimension_numbers<[1], [0], [0], [1], [0, 0, 1, 1], [], []>} : vector<8x128xbf16>, vector<128x512xbf16>, vector<8x512xf32> -> vector<8x512xf32>
    %520 = arith.addf %516, %519 : vector<8x512xf32>
    %521 = vector.extract_strided_slice %520 {offsets = [0, 0], sizes = [8, 384], strides = [1, 1]} : vector<8x512xf32> to vector<8x384xf32>
    %522 = arith.negf %521 : vector<8x384xf32>
    %523 = math.exp %522 : vector<8x384xf32>
    %cst_221 = arith.constant 1.000000e+00 : f32
    %524 = vector.broadcast %cst_221 : f32 to vector<8x384xf32>
    %525 = arith.addf %524, %523 : vector<8x384xf32>
    %526 = arith.divf %524, %525 : vector<8x384xf32>
    %527 = vector.extract_strided_slice %520 {offsets = [0, 384], sizes = [8, 128], strides = [1, 1]} : vector<8x512xf32> to vector<8x128xf32>
    %528 = math.tanh %527 : vector<8x128xf32>
    %529 = vector.extract_strided_slice %526 {offsets = [0, 0], sizes = [8, 128], strides = [1, 1]} : vector<8x384xf32> to vector<8x128xf32>
    %530 = vector.extract_strided_slice %526 {offsets = [0, 128], sizes = [8, 128], strides = [1, 1]} : vector<8x384xf32> to vector<8x128xf32>
    %531 = vector.extract_strided_slice %526 {offsets = [0, 256], sizes = [8, 128], strides = [1, 1]} : vector<8x384xf32> to vector<8x128xf32>
    %532 = arith.mulf %530, %512 : vector<8x128xf32>
    %533 = arith.mulf %529, %528 : vector<8x128xf32>
    %534 = arith.addf %532, %533 : vector<8x128xf32>
    %535 = math.tanh %534 : vector<8x128xf32>
    %536 = arith.mulf %531, %535 : vector<8x128xf32>
    %c40_222 = arith.constant 40 : index
    %c0_223 = arith.constant 0 : index
    %537 = vector.load %arg17[%c40_222, %c0_223] : memref<64x128xf32, #tpu.memory_space<vmem>>, vector<8x128xf32>
    tpu.vector_store %arg17[%c40_222, %c0_223], %536 {strides = array<i32>} : memref<64x128xf32, #tpu.memory_space<vmem>>, vector<8x128xf32>,
    %c48_224 = arith.constant 48 : index
    %c0_225 = arith.constant 0 : index
    %538 = vector.load %arg18[%c48_224, %c0_225] : memref<64x512xf32, #tpu.memory_space<vmem>>, vector<8x512xf32>
    %539 = arith.truncf %536 : vector<8x128xf32> to vector<8x128xbf16>
    %c0_226 = arith.constant 0 : index
    %c0_227 = arith.constant 0 : index
    %540 = vector.load %arg8[%c0_226, %c0_227] : memref<128x512xbf16, #tpu.memory_space<vmem>>, vector<128x512xbf16>
    %cst_228 = arith.constant dense<0.000000e+00> : vector<8x512xf32>
    %541 = tpu.matmul %539, %540, %cst_228 {dimension_numbers = #tpu.dot_dimension_numbers<[1], [0], [0], [1], [0, 0, 1, 1], [], []>} : vector<8x128xbf16>, vector<128x512xbf16>, vector<8x512xf32> -> vector<8x512xf32>
    %542 = arith.addf %538, %541 : vector<8x512xf32>
    %543 = vector.extract_strided_slice %542 {offsets = [0, 0], sizes = [8, 384], strides = [1, 1]} : vector<8x512xf32> to vector<8x384xf32>
    %544 = arith.negf %543 : vector<8x384xf32>
    %545 = math.exp %544 : vector<8x384xf32>
    %cst_229 = arith.constant 1.000000e+00 : f32
    %546 = vector.broadcast %cst_229 : f32 to vector<8x384xf32>
    %547 = arith.addf %546, %545 : vector<8x384xf32>
    %548 = arith.divf %546, %547 : vector<8x384xf32>
    %549 = vector.extract_strided_slice %542 {offsets = [0, 384], sizes = [8, 128], strides = [1, 1]} : vector<8x512xf32> to vector<8x128xf32>
    %550 = math.tanh %549 : vector<8x128xf32>
    %551 = vector.extract_strided_slice %548 {offsets = [0, 0], sizes = [8, 128], strides = [1, 1]} : vector<8x384xf32> to vector<8x128xf32>
    %552 = vector.extract_strided_slice %548 {offsets = [0, 128], sizes = [8, 128], strides = [1, 1]} : vector<8x384xf32> to vector<8x128xf32>
    %553 = vector.extract_strided_slice %548 {offsets = [0, 256], sizes = [8, 128], strides = [1, 1]} : vector<8x384xf32> to vector<8x128xf32>
    %554 = arith.mulf %552, %534 : vector<8x128xf32>
    %555 = arith.mulf %551, %550 : vector<8x128xf32>
    %556 = arith.addf %554, %555 : vector<8x128xf32>
    %557 = math.tanh %556 : vector<8x128xf32>
    %558 = arith.mulf %553, %557 : vector<8x128xf32>
    %c48_230 = arith.constant 48 : index
    %c0_231 = arith.constant 0 : index
    %559 = vector.load %arg17[%c48_230, %c0_231] : memref<64x128xf32, #tpu.memory_space<vmem>>, vector<8x128xf32>
    tpu.vector_store %arg17[%c48_230, %c0_231], %558 {strides = array<i32>} : memref<64x128xf32, #tpu.memory_space<vmem>>, vector<8x128xf32>,
    %c56_232 = arith.constant 56 : index
    %c0_233 = arith.constant 0 : index
    %560 = vector.load %arg18[%c56_232, %c0_233] : memref<64x512xf32, #tpu.memory_space<vmem>>, vector<8x512xf32>
    %561 = arith.truncf %558 : vector<8x128xf32> to vector<8x128xbf16>
    %c0_234 = arith.constant 0 : index
    %c0_235 = arith.constant 0 : index
    %562 = vector.load %arg8[%c0_234, %c0_235] : memref<128x512xbf16, #tpu.memory_space<vmem>>, vector<128x512xbf16>
    %cst_236 = arith.constant dense<0.000000e+00> : vector<8x512xf32>
    %563 = tpu.matmul %561, %562, %cst_236 {dimension_numbers = #tpu.dot_dimension_numbers<[1], [0], [0], [1], [0, 0, 1, 1], [], []>} : vector<8x128xbf16>, vector<128x512xbf16>, vector<8x512xf32> -> vector<8x512xf32>
    %564 = arith.addf %560, %563 : vector<8x512xf32>
    %565 = vector.extract_strided_slice %564 {offsets = [0, 0], sizes = [8, 384], strides = [1, 1]} : vector<8x512xf32> to vector<8x384xf32>
    %566 = arith.negf %565 : vector<8x384xf32>
    %567 = math.exp %566 : vector<8x384xf32>
    %cst_237 = arith.constant 1.000000e+00 : f32
    %568 = vector.broadcast %cst_237 : f32 to vector<8x384xf32>
    %569 = arith.addf %568, %567 : vector<8x384xf32>
    %570 = arith.divf %568, %569 : vector<8x384xf32>
    %571 = vector.extract_strided_slice %564 {offsets = [0, 384], sizes = [8, 128], strides = [1, 1]} : vector<8x512xf32> to vector<8x128xf32>
    %572 = math.tanh %571 : vector<8x128xf32>
    %573 = vector.extract_strided_slice %570 {offsets = [0, 0], sizes = [8, 128], strides = [1, 1]} : vector<8x384xf32> to vector<8x128xf32>
    %574 = vector.extract_strided_slice %570 {offsets = [0, 128], sizes = [8, 128], strides = [1, 1]} : vector<8x384xf32> to vector<8x128xf32>
    %575 = vector.extract_strided_slice %570 {offsets = [0, 256], sizes = [8, 128], strides = [1, 1]} : vector<8x384xf32> to vector<8x128xf32>
    %576 = arith.mulf %574, %556 : vector<8x128xf32>
    %577 = arith.mulf %573, %572 : vector<8x128xf32>
    %578 = arith.addf %576, %577 : vector<8x128xf32>
    %579 = math.tanh %578 : vector<8x128xf32>
    %580 = arith.mulf %575, %579 : vector<8x128xf32>
    %c56_238 = arith.constant 56 : index
    %c0_239 = arith.constant 0 : index
    %581 = vector.load %arg17[%c56_238, %c0_239] : memref<64x128xf32, #tpu.memory_space<vmem>>, vector<8x128xf32>
    tpu.vector_store %arg17[%c56_238, %c0_239], %580 {strides = array<i32>} : memref<64x128xf32, #tpu.memory_space<vmem>>, vector<8x128xf32>,
    %c2_240 = arith.constant 2 : index
    %c0_241 = arith.constant 0 : index
    %c0_242 = arith.constant 0 : index
    %582 = vector.load %arg15[%c2_240, %c0_241, %c0_242] : memref<3x8x128xf32, #tpu.memory_space<vmem>>, vector<1x8x128xf32>
    %583 = vector.shape_cast %582 : vector<1x8x128xf32> to vector<8x128xf32>
    %584 = vector.shape_cast %580 : vector<8x128xf32> to vector<1x8x128xf32>
    tpu.vector_store %arg15[%c2_240, %c0_241, %c0_242], %584 {strides = array<i32>} : memref<3x8x128xf32, #tpu.memory_space<vmem>>, vector<1x8x128xf32>,
    %c2_243 = arith.constant 2 : index
    %c0_244 = arith.constant 0 : index
    %c0_245 = arith.constant 0 : index
    %585 = vector.load %arg16[%c2_243, %c0_244, %c0_245] : memref<3x8x128xf32, #tpu.memory_space<vmem>>, vector<1x8x128xf32>
    %586 = vector.shape_cast %585 : vector<1x8x128xf32> to vector<8x128xf32>
    %587 = vector.shape_cast %578 : vector<8x128xf32> to vector<1x8x128xf32>
    tpu.vector_store %arg16[%c2_243, %c0_244, %c0_245], %587 {strides = array<i32>} : memref<3x8x128xf32, #tpu.memory_space<vmem>>, vector<1x8x128xf32>,
    %c0_246 = arith.constant 0 : index
    %c0_247 = arith.constant 0 : index
    %588 = vector.load %arg17[%c0_246, %c0_247] : memref<64x128xf32, #tpu.memory_space<vmem>>, vector<64x128xf32>
    %589 = arith.truncf %588 : vector<64x128xf32> to vector<64x128xbf16>
    %c0_248 = arith.constant 0 : index
    %c0_249 = arith.constant 0 : index
    %590 = vector.load %arg12[%c0_248, %c0_249] : memref<128x128xbf16, #tpu.memory_space<vmem>>, vector<128x128xbf16>
    %cst_250 = arith.constant dense<0.000000e+00> : vector<64x128xf32>
    %591 = tpu.matmul %589, %590, %cst_250 {dimension_numbers = #tpu.dot_dimension_numbers<[1], [0], [0], [1], [0, 0, 1, 1], [], []>} : vector<64x128xbf16>, vector<128x128xbf16>, vector<64x128xf32> -> vector<64x128xf32>
    %c0_251 = arith.constant 0 : index
    %c0_252 = arith.constant 0 : index
    %592 = vector.load %arg13[%c0_251, %c0_252] : memref<1x128xf32, #tpu.memory_space<vmem>>, vector<1x128xf32>
    %593 = vector.broadcast %592 : vector<1x128xf32> to vector<64x128xf32>
    %594 = arith.addf %591, %593 : vector<64x128xf32>
    %c0_253 = arith.constant 0 : index
    %c0_254 = arith.constant 0 : index
    %595 = vector.load %arg14[%c0_253, %c0_254] : memref<64x128xf32, #tpu.memory_space<vmem>>, vector<64x128xf32>
    tpu.vector_store %arg14[%c0_253, %c0_254], %594 {strides = array<i32>} : memref<64x128xf32, #tpu.memory_space<vmem>>, vector<64x128xf32>,
    return
  }
}

</mosaic_0001>

<llo_original>
// kernel: pitch_lstm_forward.1
$region0: #{pitch_lstm_forward.1}
  #allocation0 [shape = 'u32[]', space=smem, size = 0x4, offset = 0x4, fixed_abs, tag = 'smem constant byte address 0x4 - core index']
  #allocation1 [shape = 'u32[72,128]{1,0:T(1,128)}', space=vmem, size = 0x9000, scoped, tag = 'internal scratch']
  #allocation2 [shape = 'f32[64,128]{1,0:T(8,128)}', space=vmem, size = 0x8000, scoped, tag = 'scratch operand']
  #allocation3 [shape = 'f32[64,512]{1,0:T(8,128)}', space=vmem, size = 0x20000, scoped, tag = 'scratch operand']
  %s0 = inlined_call_operand.vmem [shape: s32[64,1], index: 0, kind: input, shape index: {}]
  %s1 = inlined_call_operand.hbm [shape: bf16[128,512], index: 1, kind: input, shape index: {}]
  %s2 = inlined_call_operand.hbm [shape: bf16[128,512], index: 2, kind: input, shape index: {}]
  %s3 = inlined_call_operand.vmem [shape: f32[1,512], index: 3, kind: input, shape index: {}]
  %s4 = inlined_call_operand.hbm [shape: bf16[128,512], index: 4, kind: input, shape index: {}]
  %s5 = inlined_call_operand.hbm [shape: bf16[128,512], index: 5, kind: input, shape index: {}]
  %s6 = inlined_call_operand.vmem [shape: f32[1,512], index: 6, kind: input, shape index: {}]
  %s7 = inlined_call_operand.hbm [shape: bf16[128,512], index: 7, kind: input, shape index: {}]
  %s8 = inlined_call_operand.hbm [shape: bf16[128,512], index: 8, kind: input, shape index: {}]
  %s9 = inlined_call_operand.vmem [shape: f32[1,512], index: 9, kind: input, shape index: {}]
  %s10 = inlined_call_operand.vmem [shape: f32[3,8,128], index: 10, kind: input, shape index: {}]
  %s11 = inlined_call_operand.vmem [shape: f32[3,8,128], index: 11, kind: input, shape index: {}]
  %s12 = inlined_call_operand.vmem [shape: bf16[128,128], index: 12, kind: input, shape index: {}]
  %s13 = inlined_call_operand.vmem [shape: f32[1,128], index: 13, kind: input, shape index: {}]
  %s14 = inlined_call_operand.vmem [shape: f32[64,128], index: 14, kind: output, shape index: {0}]
  %s15 = inlined_call_operand.vmem [shape: f32[3,8,128], index: 15, kind: output, shape index: {1}]
  %s16 = inlined_call_operand.vmem [shape: f32[3,8,128], index: 16, kind: output, shape index: {2}]
  %17 = xla_tuple %s14, %s15, %s16
  %s18 = sld [smem:[#allocation0]]
  $region106: #{pitch_lstm_forward.1} parent=0
    _
  %s20 = ssub.s32 1, %s18
  %s21 = scalar_select 0, %s20, %s18
  $region1: #{pitch_lstm_forward.1} parent=0
    #allocation4 [shape = 'u8[131072]{0}', space=vmem, size = 0x20000, scoped, tag = 'input window, operand 1, single buffered']
    #allocation5 [shape = 's32[1]{0}', space=sflag, size = 0x4, scoped, tag = 'scoped memory for pitch_lstm_forward.1']
    #allocation6 [shape = 'u8[131072]{0}', space=vmem, size = 0x20000, scoped, tag = 'input window, operand 2, single buffered']
    #allocation7 [shape = 's32[1]{0}', space=sflag, size = 0x4, scoped, tag = 'scoped memory for pitch_lstm_forward.1']
    #allocation8 [shape = 'u8[131072]{0}', space=vmem, size = 0x20000, scoped, tag = 'input window, operand 4, single buffered']
    #allocation9 [shape = 'u8[131072]{0}', space=vmem, size = 0x20000, scoped, tag = 'input window, operand 5, single buffered']
    #allocation10 [shape = 's32[1]{0}', space=sflag, size = 0x4, scoped, tag = 'scoped memory for pitch_lstm_forward.1']
    #allocation11 [shape = 'u8[131072]{0}', space=vmem, size = 0x20000, scoped, tag = 'input window, operand 7, single buffered']
    #allocation12 [shape = 'u8[131072]{0}', space=vmem, size = 0x20000, scoped, tag = 'input window, operand 8, single buffered']
    #allocation13 [shape = 's32[1]{0}', space=sflag, size = 0x4, scoped, tag = 'scoped memory for pitch_lstm_forward.1']
    %22 = vsyncpa [#allocation5], 0
    %23 = vsyncpa [#allocation7], 0
    %24 = vsyncpa [#allocation10], 0
    %25 = vsyncpa [#allocation13], 0
    // Predicated region
    $region2: #{pitch_lstm_forward.1} parent=1 // pred_check
      _
    $region3: #{pitch_lstm_forward.1} parent=1 // pred_check_branch
      %27 = sbr.rel (0) target = $region5
    $region4: #{pitch_lstm_forward.1} parent=1 // pred_region
      _
    $region5: #{pitch_lstm_forward.1} parent=1 // pred_fallthru
      _
    // Predicated region
    $region6: #{pitch_lstm_forward.1} parent=1 // pred_check
      _
    $region7: #{pitch_lstm_forward.1} parent=1 // pred_check_branch
      %29 = sbr.rel (0) target = $region9
    $region8: #{pitch_lstm_forward.1} parent=1 // pred_region
      %31 = vsyncadd [#allocation5], 0
      %s32 = sshll.u32 %s1, 4
      %s33 = int_to_ptr.hbm [resolvable:$true] %s32
      %s34 = sshll.u32 [#allocation4], 4
      %s35 = int_to_ptr.vmem [resolvable:$true] %s34
      %40 = dma.hbm_to_vmem [thread:$0]  %s33, 4096, %s35, [#allocation5], 256, 256, 16
    $region9: #{pitch_lstm_forward.1} parent=1 // pred_fallthru
      _
    // Predicated region
    $region10: #{pitch_lstm_forward.1} parent=1 // pred_check
      _
    $region11: #{pitch_lstm_forward.1} parent=1 // pred_check_branch
      %42 = sbr.rel (0) target = $region13
    $region12: #{pitch_lstm_forward.1} parent=1 // pred_region
      %44 = vsyncadd [#allocation7], 0
      %s45 = sshll.u32 %s2, 4
      %s46 = int_to_ptr.hbm [resolvable:$true] %s45
      %s47 = sshll.u32 [#allocation6], 4
      %s48 = int_to_ptr.vmem [resolvable:$true] %s47
      %53 = dma.hbm_to_vmem [thread:$0]  %s46, 4096, %s48, [#allocation7], 256, 256, 16
    $region13: #{pitch_lstm_forward.1} parent=1 // pred_fallthru
      _
    // Predicated region
    $region14: #{pitch_lstm_forward.1} parent=1 // pred_check
      _
    $region15: #{pitch_lstm_forward.1} parent=1 // pred_check_branch
      %55 = sbr.rel (0) target = $region17
    $region16: #{pitch_lstm_forward.1} parent=1 // pred_region
      _
    $region17: #{pitch_lstm_forward.1} parent=1 // pred_fallthru
      _
    // Predicated region
    $region18: #{pitch_lstm_forward.1} parent=1 // pred_check
      _
    $region19: #{pitch_lstm_forward.1} parent=1 // pred_check_branch
      %57 = sbr.rel (0) target = $region21
    $region20: #{pitch_lstm_forward.1} parent=1 // pred_region
      %59 = vsyncadd [#allocation7], 0
      %s60 = sshll.u32 %s4, 4
      %s61 = int_to_ptr.hbm [resolvable:$true] %s60
      %s62 = sshll.u32 [#allocation8], 4
      %s63 = int_to_ptr.vmem [resolvable:$true] %s62
      %68 = dma.hbm_to_vmem [thread:$0]  %s61, 4096, %s63, [#allocation7], 256, 256, 16
    $region21: #{pitch_lstm_forward.1} parent=1 // pred_fallthru
      _
    // Predicated region
    $region22: #{pitch_lstm_forward.1} parent=1 // pred_check
      _
    $region23: #{pitch_lstm_forward.1} parent=1 // pred_check_branch
      %70 = sbr.rel (0) target = $region25
    $region24: #{pitch_lstm_forward.1} parent=1 // pred_region
      %72 = vsyncadd [#allocation10], 0
      %s73 = sshll.u32 %s5, 4
      %s74 = int_to_ptr.hbm [resolvable:$true] %s73
      %s75 = sshll.u32 [#allocation9], 4
      %s76 = int_to_ptr.vmem [resolvable:$true] %s75
      %81 = dma.hbm_to_vmem [thread:$0]  %s74, 4096, %s76, [#allocation10], 256, 256, 16
    $region25: #{pitch_lstm_forward.1} parent=1 // pred_fallthru
      _
    // Predicated region
    $region26: #{pitch_lstm_forward.1} parent=1 // pred_check
      _
    $region27: #{pitch_lstm_forward.1} parent=1 // pred_check_branch
      %83 = sbr.rel (0) target = $region29
    $region28: #{pitch_lstm_forward.1} parent=1 // pred_region
      _
    $region29: #{pitch_lstm_forward.1} parent=1 // pred_fallthru
      _
    // Predicated region
    $region30: #{pitch_lstm_forward.1} parent=1 // pred_check
      _
    $region31: #{pitch_lstm_forward.1} parent=1 // pred_check_branch
      %85 = sbr.rel (0) target = $region33
    $region32: #{pitch_lstm_forward.1} parent=1 // pred_region
      %87 = vsyncadd [#allocation10], 0
      %s88 = sshll.u32 %s7, 4
      %s89 = int_to_ptr.hbm [resolvable:$true] %s88
      %s90 = sshll.u32 [#allocation11], 4
      %s91 = int_to_ptr.vmem [resolvable:$true] %s90
      %96 = dma.hbm_to_vmem [thread:$0]  %s89, 4096, %s91, [#allocation10], 256, 256, 16
    $region33: #{pitch_lstm_forward.1} parent=1 // pred_fallthru
      _
    // Predicated region
    $region34: #{pitch_lstm_forward.1} parent=1 // pred_check
      _
    $region35: #{pitch_lstm_forward.1} parent=1 // pred_check_branch
      %98 = sbr.rel (0) target = $region37
    $region36: #{pitch_lstm_forward.1} parent=1 // pred_region
      %100 = vsyncadd [#allocation13], 0
      %s101 = sshll.u32 %s8, 4
      %s102 = int_to_ptr.hbm [resolvable:$true] %s101
      %s103 = sshll.u32 [#allocation12], 4
      %s104 = int_to_ptr.vmem [resolvable:$true] %s103
      %109 = dma.hbm_to_vmem [thread:$0]  %s102, 4096, %s104, [#allocation13], 256, 256, 16
    $region37: #{pitch_lstm_forward.1} parent=1 // pred_fallthru
      _
    // Predicated region
    $region38: #{pitch_lstm_forward.1} parent=1 // pred_check
      _
    $region39: #{pitch_lstm_forward.1} parent=1 // pred_check_branch
      %111 = sbr.rel (0) target = $region41
    $region40: #{pitch_lstm_forward.1} parent=1 // pred_region
      _
    $region41: #{pitch_lstm_forward.1} parent=1 // pred_fallthru
      _
    // Predicated region
    $region42: #{pitch_lstm_forward.1} parent=1 // pred_check
      _
    $region43: #{pitch_lstm_forward.1} parent=1 // pred_check_branch
      %113 = sbr.rel (0) target = $region45
    $region44: #{pitch_lstm_forward.1} parent=1 // pred_region
      _
    $region45: #{pitch_lstm_forward.1} parent=1 // pred_fallthru
      _
    // Predicated region
    $region46: #{pitch_lstm_forward.1} parent=1 // pred_check
      _
    $region47: #{pitch_lstm_forward.1} parent=1 // pred_check_branch
      %115 = sbr.rel (0) target = $region49
    $region48: #{pitch_lstm_forward.1} parent=1 // pred_region
      _
    $region49: #{pitch_lstm_forward.1} parent=1 // pred_fallthru
      _
    // Predicated region
    $region50: #{pitch_lstm_forward.1} parent=1 // pred_check
      _
    $region51: #{pitch_lstm_forward.1} parent=1 // pred_check_branch
      %117 = sbr.rel (0) target = $region53
    $region52: #{pitch_lstm_forward.1} parent=1 // pred_region
      _
    $region53: #{pitch_lstm_forward.1} parent=1 // pred_fallthru
      _
    // Predicated region
    $region54: #{pitch_lstm_forward.1} parent=1 // pred_check
      _
    $region55: #{pitch_lstm_forward.1} parent=1 // pred_check_branch
      %119 = sbr.rel (0) target = $region57
    $region56: #{pitch_lstm_forward.1} parent=1 // pred_region
      _
    $region57: #{pitch_lstm_forward.1} parent=1 // pred_fallthru
      _
    // Predicated region
    $region58: #{pitch_lstm_forward.1} parent=1 // pred_check
      _
    $region59: #{pitch_lstm_forward.1} parent=1 // pred_check_branch
      %121 = sbr.rel (0) target = $region61
    $region60: #{pitch_lstm_forward.1} parent=1 // pred_region
      %123 = dma.done [#allocation5], 4096
    $region61: #{pitch_lstm_forward.1} parent=1 // pred_fallthru
      _
    // Predicated region
    $region62: #{pitch_lstm_forward.1} parent=1 // pred_check
      _
    $region63: #{pitch_lstm_forward.1} parent=1 // pred_check_branch
      %125 = sbr.rel (0) target = $region65
    $region64: #{pitch_lstm_forward.1} parent=1 // pred_region
      %127 = dma.done [#allocation7], 4096
    $region65: #{pitch_lstm_forward.1} parent=1 // pred_fallthru
      _
    // Predicated region
    $region66: #{pitch_lstm_forward.1} parent=1 // pred_check
      _
    $region67: #{pitch_lstm_forward.1} parent=1 // pred_check_branch
      %129 = sbr.rel (0) target = $region69
    $region68: #{pitch_lstm_forward.1} parent=1 // pred_region
      %131 = dma.done [#allocation7], 4096
    $region69: #{pitch_lstm_forward.1} parent=1 // pred_fallthru
      _
    // Predicated region
    $region70: #{pitch_lstm_forward.1} parent=1 // pred_check
      _
    $region71: #{pitch_lstm_forward.1} parent=1 // pred_check_branch
      %133 = sbr.rel (0) target = $region73
    $region72: #{pitch_lstm_forward.1} parent=1 // pred_region
      %135 = dma.done [#allocation10], 4096
    $region73: #{pitch_lstm_forward.1} parent=1 // pred_fallthru
      _
    // Predicated region
    $region74: #{pitch_lstm_forward.1} parent=1 // pred_check
      _
    $region75: #{pitch_lstm_forward.1} parent=1 // pred_check_branch
      %137 = sbr.rel (0) target = $region77
    $region76: #{pitch_lstm_forward.1} parent=1 // pred_region
      %139 = dma.done [#allocation10], 4096
    $region77: #{pitch_lstm_forward.1} parent=1 // pred_fallthru
      _
    // Predicated region
    $region78: #{pitch_lstm_forward.1} parent=1 // pred_check
      _
    $region79: #{pitch_lstm_forward.1} parent=1 // pred_check_branch
      %141 = sbr.rel (0) target = $region81
    $region80: #{pitch_lstm_forward.1} parent=1 // pred_region
      %143 = dma.done [#allocation13], 4096
    $region81: #{pitch_lstm_forward.1} parent=1 // pred_fallthru
      _
    %v144 = vld [vmem:[%s0] sm:$0xff]
    %v145 = vld [vmem:[%s0 + $0x8] sm:$0xff]
    %v146 = vld [vmem:[%s0 + $0x10] sm:$0xff]
    %v147 = vld [vmem:[%s0 + $0x18] sm:$0xff]
    %v148 = vld [vmem:[%s0 + $0x20] sm:$0xff]
    %v149 = vld [vmem:[%s0 + $0x28] sm:$0xff]
    %v150 = vld [vmem:[%s0 + $0x30] sm:$0xff]
    %v151 = vld [vmem:[%s0 + $0x38] sm:$0xff]
    %v152 = vlaneseq
    %v153 = vand.u32 %v152, 127
    %154 = vset.pattern.permute.xlu0 0
    %155 = vperm.xlu0 %154, %v144
    %v156 = vpop.permute.xlu0 %155
    %157 = vset.pattern.permute.xlu0 0
    %158 = vperm.xlu0 %157, %v145
    %v159 = vpop.permute.xlu0 %158
    %160 = vset.pattern.permute.xlu0 0
    %161 = vperm.xlu0 %160, %v146
    %v162 = vpop.permute.xlu0 %161
    %163 = vset.pattern.permute.xlu0 0
    %164 = vperm.xlu0 %163, %v147
    %v165 = vpop.permute.xlu0 %164
    %166 = vset.pattern.permute.xlu0 0
    %167 = vperm.xlu0 %166, %v148
    %v168 = vpop.permute.xlu0 %167
    %169 = vset.pattern.permute.xlu0 0
    %170 = vperm.xlu0 %169, %v149
    %v171 = vpop.permute.xlu0 %170
    %172 = vset.pattern.permute.xlu0 0
    %173 = vperm.xlu0 %172, %v150
    %v174 = vpop.permute.xlu0 %173
    %175 = vset.pattern.permute.xlu0 0
    %176 = vperm.xlu0 %175, %v151
    %v177 = vpop.permute.xlu0 %176
    %vm178 = vcmp.eq.s32.totalorder %v156, %v153
    %vm179 = vcmp.eq.s32.totalorder %v159, %v153
    %vm180 = vcmp.eq.s32.totalorder %v162, %v153
    %vm181 = vcmp.eq.s32.totalorder %v165, %v153
    %vm182 = vcmp.eq.s32.totalorder %v168, %v153
    %vm183 = vcmp.eq.s32.totalorder %v171, %v153
    %vm184 = vcmp.eq.s32.totalorder %v174, %v153
    %vm185 = vcmp.eq.s32.totalorder %v177, %v153
    %v186 = vsel %vm178, 1.0, 0.0
    %v187 = vsel %vm179, 1.0, 0.0
    %v188 = vsel %vm180, 1.0, 0.0
    %v189 = vsel %vm181, 1.0, 0.0
    %v190 = vsel %vm182, 1.0, 0.0
    %v191 = vsel %vm183, 1.0, 0.0
    %v192 = vsel %vm184, 1.0, 0.0
    %v193 = vsel %vm185, 1.0, 0.0
    %v194 = vpack.c.bf16 %v187, %v186
    %v195 = vpack.c.bf16 %v189, %v188
    %v196 = vpack.c.bf16 %v191, %v190
    %v197 = vpack.c.bf16 %v193, %v192
    %v198 = vld [vmem:[#allocation4] sm:$0xff]
    %v199 = vld [vmem:[#allocation4 + $0x8] sm:$0xff]
    %v200 = vld [vmem:[#allocation4 + $0x10] sm:$0xff]
    %v201 = vld [vmem:[#allocation4 + $0x18] sm:$0xff]
    %v202 = vld [vmem:[#allocation4 + $0x20] sm:$0xff]
    %v203 = vld [vmem:[#allocation4 + $0x28] sm:$0xff]
    %v204 = vld [vmem:[#allocation4 + $0x30] sm:$0xff]
    %v205 = vld [vmem:[#allocation4 + $0x38] sm:$0xff]
    %v206 = vld [vmem:[#allocation4 + $0x40] sm:$0xff]
    %v207 = vld [vmem:[#allocation4 + $0x48] sm:$0xff]
    %v208 = vld [vmem:[#allocation4 + $0x50] sm:$0xff]
    %v209 = vld [vmem:[#allocation4 + $0x58] sm:$0xff]
    %v210 = vld [vmem:[#allocation4 + $0x60] sm:$0xff]
    %v211 = vld [vmem:[#allocation4 + $0x68] sm:$0xff]
    %v212 = vld [vmem:[#allocation4 + $0x70] sm:$0xff]
    %v213 = vld [vmem:[#allocation4 + $0x78] sm:$0xff]
    %v214 = vld [vmem:[#allocation4 + $0x80] sm:$0xff]
    %v215 = vld [vmem:[#allocation4 + $0x88] sm:$0xff]
    %v216 = vld [vmem:[#allocation4 + $0x90] sm:$0xff]
    %v217 = vld [vmem:[#allocation4 + $0x98] sm:$0xff]
    %v218 = vld [vmem:[#allocation4 + $0xa0] sm:$0xff]
    %v219 = vld [vmem:[#allocation4 + $0xa8] sm:$0xff]
    %v220 = vld [vmem:[#allocation4 + $0xb0] sm:$0xff]
    %v221 = vld [vmem:[#allocation4 + $0xb8] sm:$0xff]
    %v222 = vld [vmem:[#allocation4 + $0xc0] sm:$0xff]
    %v223 = vld [vmem:[#allocation4 + $0xc8] sm:$0xff]
    %v224 = vld [vmem:[#allocation4 + $0xd0] sm:$0xff]
    %v225 = vld [vmem:[#allocation4 + $0xd8] sm:$0xff]
    %v226 = vld [vmem:[#allocation4 + $0xe0] sm:$0xff]
    %v227 = vld [vmem:[#allocation4 + $0xe8] sm:$0xff]
    %v228 = vld [vmem:[#allocation4 + $0xf0] sm:$0xff]
    %v229 = vld [vmem:[#allocation4 + $0xf8] sm:$0xff]
    %v230 = vld [vmem:[%s3] sm:$0xf]
    %v232 = vperm.slane %v230, 0
    %v233 = vperm.slane %v230, 1
    %v234 = vperm.slane %v230, 2
    %v235 = vperm.slane %v230, 3
    %v272 = vunpack.c.l.b16 %v198
    %v273 = vunpack.c.h.b16 %v198
    %v274 = vunpack.c.l.b16 %v199
    %v275 = vunpack.c.h.b16 %v199
    %v276 = vunpack.c.l.b16 %v200
    %v277 = vunpack.c.h.b16 %v200
    %v278 = vunpack.c.l.b16 %v201
    %v279 = vunpack.c.h.b16 %v201
    %v280 = vunpack.c.l.b16 %v202
    %v281 = vunpack.c.h.b16 %v202
    %v282 = vunpack.c.l.b16 %v203
    %v283 = vunpack.c.h.b16 %v203
    %v284 = vunpack.c.l.b16 %v204
    %v285 = vunpack.c.h.b16 %v204
    %v286 = vunpack.c.l.b16 %v205
    %v287 = vunpack.c.h.b16 %v205
    %v288 = vunpack.c.l.b16 %v206
    %v289 = vunpack.c.h.b16 %v206
    %v290 = vunpack.c.l.b16 %v207
    %v291 = vunpack.c.h.b16 %v207
    %v292 = vunpack.c.l.b16 %v208
    %v293 = vunpack.c.h.b16 %v208
    %v294 = vunpack.c.l.b16 %v209
    %v295 = vunpack.c.h.b16 %v209
    %v296 = vunpack.c.l.b16 %v210
    %v297 = vunpack.c.h.b16 %v210
    %v298 = vunpack.c.l.b16 %v211
    %v299 = vunpack.c.h.b16 %v211
    %v300 = vunpack.c.l.b16 %v212
    %v301 = vunpack.c.h.b16 %v212
    %v302 = vunpack.c.l.b16 %v213
    %v303 = vunpack.c.h.b16 %v213
    %v304 = vunpack.c.l.b16 %v214
    %v305 = vunpack.c.h.b16 %v214
    %v306 = vunpack.c.l.b16 %v215
    %v307 = vunpack.c.h.b16 %v215
    %v308 = vunpack.c.l.b16 %v216
    %v309 = vunpack.c.h.b16 %v216
    %v310 = vunpack.c.l.b16 %v217
    %v311 = vunpack.c.h.b16 %v217
    %v312 = vunpack.c.l.b16 %v218
    %v313 = vunpack.c.h.b16 %v218
    %v314 = vunpack.c.l.b16 %v219
    %v315 = vunpack.c.h.b16 %v219
    %v316 = vunpack.c.l.b16 %v220
    %v317 = vunpack.c.h.b16 %v220
    %v318 = vunpack.c.l.b16 %v221
    %v319 = vunpack.c.h.b16 %v221
    %v320 = vunpack.c.l.b16 %v222
    %v321 = vunpack.c.h.b16 %v222
    %v322 = vunpack.c.l.b16 %v223
    %v323 = vunpack.c.h.b16 %v223
    %v324 = vunpack.c.l.b16 %v224
    %v325 = vunpack.c.h.b16 %v224
    %v326 = vunpack.c.l.b16 %v225
    %v327 = vunpack.c.h.b16 %v225
    %v328 = vunpack.c.l.b16 %v226
    %v329 = vunpack.c.h.b16 %v226
    %v330 = vunpack.c.l.b16 %v227
    %v331 = vunpack.c.h.b16 %v227
    %v332 = vunpack.c.l.b16 %v228
    %v333 = vunpack.c.h.b16 %v228
    %v334 = vunpack.c.l.b16 %v229
    %v335 = vunpack.c.h.b16 %v229
    %v336 = vpack.c.b16 %v276, %v272
    %v337 = vpack.c.b16 %v277, %v273
    %v338 = vpack.c.b16 %v278, %v274
    %v339 = vpack.c.b16 %v279, %v275
    %v340 = vpack.c.b16 %v284, %v280
    %v341 = vpack.c.b16 %v285, %v281
    %v342 = vpack.c.b16 %v286, %v282
    %v343 = vpack.c.b16 %v287, %v283
    %v344 = vpack.c.b16 %v292, %v288
    %v345 = vpack.c.b16 %v293, %v289
    %v346 = vpack.c.b16 %v294, %v290
    %v347 = vpack.c.b16 %v295, %v291
    %v348 = vpack.c.b16 %v300, %v296
    %v349 = vpack.c.b16 %v301, %v297
    %v350 = vpack.c.b16 %v302, %v298
    %v351 = vpack.c.b16 %v303, %v299
    %v352 = vpack.c.b16 %v308, %v304
    %v353 = vpack.c.b16 %v309, %v305
    %v354 = vpack.c.b16 %v310, %v306
    %v355 = vpack.c.b16 %v311, %v307
    %v356 = vpack.c.b16 %v316, %v312
    %v357 = vpack.c.b16 %v317, %v313
    %v358 = vpack.c.b16 %v318, %v314
    %v359 = vpack.c.b16 %v319, %v315
    %v360 = vpack.c.b16 %v324, %v320
    %v361 = vpack.c.b16 %v325, %v321
    %v362 = vpack.c.b16 %v326, %v322
    %v363 = vpack.c.b16 %v327, %v323
    %v364 = vpack.c.b16 %v332, %v328
    %v365 = vpack.c.b16 %v333, %v329
    %v366 = vpack.c.b16 %v334, %v330
    %v367 = vpack.c.b16 %v335, %v331
    %400 = vmatpush.bf16.msra.mxu0 %v364
    %401 = vmatpush.bf16.msra.mxu0 %v360
    %402 = vmatpush.bf16.msra.mxu0 %v356
    %403 = vmatpush.bf16.msra.mxu0 %v352
    %404 = vmatpush.bf16.msra.mxu0 %v348
    %405 = vmatpush.bf16.msra.mxu0 %v344
    %406 = vmatpush.bf16.msra.mxu0 %v340
    %407 = vmatpush.bf16.msra.mxu0 %v336
    %408 = vmatmul.bf16.gmra.mxu0 %v194
    %v409 = vpop.f32.mrf.mxu0
    %v410 = vadd.f32 %v232, %v409
    %v411 = vpop.f32.mrf.mxu0
    %v412 = vadd.f32 %v232, %v411
    %413 = vmatmul.bf16.gmra.mxu0 %v195
    %v414 = vpop.f32.mrf.mxu0
    %v415 = vadd.f32 %v232, %v414
    %v416 = vpop.f32.mrf.mxu0
    %v417 = vadd.f32 %v232, %v416
    %418 = vmatmul.bf16.gmra.mxu0 %v196
    %v419 = vpop.f32.mrf.mxu0
    %v420 = vadd.f32 %v232, %v419
    %v421 = vpop.f32.mrf.mxu0
    %v422 = vadd.f32 %v232, %v421
    %423 = vmatmul.bf16.gmra.mxu0 %v197
    %v424 = vpop.f32.mrf.mxu0
    %v425 = vadd.f32 %v232, %v424
    %v426 = vpop.f32.mrf.mxu0
    %v427 = vadd.f32 %v232, %v426
    %428 = vdwg.mxu0
    %429 = vmatpush.bf16.msra.mxu0 %v365
    %430 = vmatpush.bf16.msra.mxu0 %v361
    %431 = vmatpush.bf16.msra.mxu0 %v357
    %432 = vmatpush.bf16.msra.mxu0 %v353
    %433 = vmatpush.bf16.msra.mxu0 %v349
    %434 = vmatpush.bf16.msra.mxu0 %v345
    %435 = vmatpush.bf16.msra.mxu0 %v341
    %436 = vmatpush.bf16.msra.mxu0 %v337
    %437 = vmatmul.bf16.gmra.mxu0 %v194
    %v438 = vpop.f32.mrf.mxu0
    %v439 = vadd.f32 %v233, %v438
    %v440 = vpop.f32.mrf.mxu0
    %v441 = vadd.f32 %v233, %v440
    %442 = vmatmul.bf16.gmra.mxu0 %v195
    %v443 = vpop.f32.mrf.mxu0
    %v444 = vadd.f32 %v233, %v443
    %v445 = vpop.f32.mrf.mxu0
    %v446 = vadd.f32 %v233, %v445
    %447 = vmatmul.bf16.gmra.mxu0 %v196
    %v448 = vpop.f32.mrf.mxu0
    %v449 = vadd.f32 %v233, %v448
    %v450 = vpop.f32.mrf.mxu0
    %v451 = vadd.f32 %v233, %v450
    %452 = vmatmul.bf16.gmra.mxu0 %v197
    %v453 = vpop.f32.mrf.mxu0
    %v454 = vadd.f32 %v233, %v453
    %v455 = vpop.f32.mrf.mxu0
    %v456 = vadd.f32 %v233, %v455
    %457 = vdwg.mxu0
    %458 = vmatpush.bf16.msra.mxu0 %v366
    %459 = vmatpush.bf16.msra.mxu0 %v362
    %460 = vmatpush.bf16.msra.mxu0 %v358
    %461 = vmatpush.bf16.msra.mxu0 %v354
    %462 = vmatpush.bf16.msra.mxu0 %v350
    %463 = vmatpush.bf16.msra.mxu0 %v346
    %464 = vmatpush.bf16.msra.mxu0 %v342
    %465 = vmatpush.bf16.msra.mxu0 %v338
    %466 = vmatmul.bf16.gmra.mxu0 %v194
    %v467 = vpop.f32.mrf.mxu0
    %v468 = vadd.f32 %v234, %v467
    %v469 = vpop.f32.mrf.mxu0
    %v470 = vadd.f32 %v234, %v469
    %471 = vmatmul.bf16.gmra.mxu0 %v195
    %v472 = vpop.f32.mrf.mxu0
    %v473 = vadd.f32 %v234, %v472
    %v474 = vpop.f32.mrf.mxu0
    %v475 = vadd.f32 %v234, %v474
    %476 = vmatmul.bf16.gmra.mxu0 %v196
    %v477 = vpop.f32.mrf.mxu0
    %v478 = vadd.f32 %v234, %v477
    %v479 = vpop.f32.mrf.mxu0
    %v480 = vadd.f32 %v234, %v479
    %481 = vmatmul.bf16.gmra.mxu0 %v197
    %v482 = vpop.f32.mrf.mxu0
    %v483 = vadd.f32 %v234, %v482
    %v484 = vpop.f32.mrf.mxu0
    %v485 = vadd.f32 %v234, %v484
    %486 = vdwg.mxu0
    %487 = vmatpush.bf16.msra.mxu0 %v367
    %488 = vmatpush.bf16.msra.mxu0 %v363
    %489 = vmatpush.bf16.msra.mxu0 %v359
    %490 = vmatpush.bf16.msra.mxu0 %v355
    %491 = vmatpush.bf16.msra.mxu0 %v351
    %492 = vmatpush.bf16.msra.mxu0 %v347
    %493 = vmatpush.bf16.msra.mxu0 %v343
    %494 = vmatpush.bf16.msra.mxu0 %v339
    %495 = vmatmul.bf16.gmra.mxu0 %v194
    %v496 = vpop.f32.mrf.mxu0
    %v497 = vadd.f32 %v235, %v496
    %v498 = vpop.f32.mrf.mxu0
    %v499 = vadd.f32 %v235, %v498
    %500 = vmatmul.bf16.gmra.mxu0 %v195
    %v501 = vpop.f32.mrf.mxu0
    %v502 = vadd.f32 %v235, %v501
    %v503 = vpop.f32.mrf.mxu0
    %v504 = vadd.f32 %v235, %v503
    %505 = vmatmul.bf16.gmra.mxu0 %v196
    %v506 = vpop.f32.mrf.mxu0
    %v507 = vadd.f32 %v235, %v506
    %v508 = vpop.f32.mrf.mxu0
    %v509 = vadd.f32 %v235, %v508
    %510 = vmatmul.bf16.gmra.mxu0 %v197
    %v511 = vpop.f32.mrf.mxu0
    %v512 = vadd.f32 %v235, %v511
    %v513 = vpop.f32.mrf.mxu0
    %v514 = vadd.f32 %v235, %v513
    %515 = vdwg.mxu0
    %516 = vst [vmem:[#allocation3] sm:$0xff] %v410
    %517 = vst [vmem:[#allocation3 + $0x8] sm:$0xff] %v439
    %518 = vst [vmem:[#allocation3 + $0x10] sm:$0xff] %v468
    %519 = vst [vmem:[#allocation3 + $0x18] sm:$0xff] %v497
    %520 = vst [vmem:[#allocation3 + $0x20] sm:$0xff] %v412
    %521 = vst [vmem:[#allocation3 + $0x28] sm:$0xff] %v441
    %522 = vst [vmem:[#allocation3 + $0x30] sm:$0xff] %v470
    %523 = vst [vmem:[#allocation3 + $0x38] sm:$0xff] %v499
    %524 = vst [vmem:[#allocation3 + $0x40] sm:$0xff] %v415
    %525 = vst [vmem:[#allocation3 + $0x48] sm:$0xff] %v444
    %526 = vst [vmem:[#allocation3 + $0x50] sm:$0xff] %v473
    %527 = vst [vmem:[#allocation3 + $0x58] sm:$0xff] %v502
    %528 = vst [vmem:[#allocation3 + $0x60] sm:$0xff] %v417
    %529 = vst [vmem:[#allocation3 + $0x68] sm:$0xff] %v446
    %530 = vst [vmem:[#allocation3 + $0x70] sm:$0xff] %v475
    %531 = vst [vmem:[#allocation3 + $0x78] sm:$0xff] %v504
    %532 = vst [vmem:[#allocation3 + $0x80] sm:$0xff] %v420
    %533 = vst [vmem:[#allocation3 + $0x88] sm:$0xff] %v449
    %534 = vst [vmem:[#allocation3 + $0x90] sm:$0xff] %v478
    %535 = vst [vmem:[#allocation3 + $0x98] sm:$0xff] %v507
    %536 = vst [vmem:[#allocation3 + $0xa0] sm:$0xff] %v422
    %537 = vst [vmem:[#allocation3 + $0xa8] sm:$0xff] %v451
    %538 = vst [vmem:[#allocation3 + $0xb0] sm:$0xff] %v480
    %539 = vst [vmem:[#allocation3 + $0xb8] sm:$0xff] %v509
    %540 = vst [vmem:[#allocation3 + $0xc0] sm:$0xff] %v425
    %541 = vst [vmem:[#allocation3 + $0xc8] sm:$0xff] %v454
    %542 = vst [vmem:[#allocation3 + $0xd0] sm:$0xff] %v483
    %543 = vst [vmem:[#allocation3 + $0xd8] sm:$0xff] %v512
    %544 = vst [vmem:[#allocation3 + $0xe0] sm:$0xff] %v427
    %545 = vst [vmem:[#allocation3 + $0xe8] sm:$0xff] %v456
    %546 = vst [vmem:[#allocation3 + $0xf0] sm:$0xff] %v485
    %547 = vst [vmem:[#allocation3 + $0xf8] sm:$0xff] %v514
    %v548 = vld [vmem:[%s10] sm:$0xff]
    %v549 = vld [vmem:[%s11] sm:$0xff]
    %v550 = vld [vmem:[#allocation3] sm:$0xff]
    %v551 = vld [vmem:[#allocation3 + $0x8] sm:$0xff]
    %v552 = vld [vmem:[#allocation3 + $0x10] sm:$0xff]
    %v553 = vld [vmem:[#allocation3 + $0x18] sm:$0xff]
    %v554 = vpack.c.bf16 %v548, %v548
    %v555 = vld [vmem:[#allocation6] sm:$0xff]
    %v556 = vld [vmem:[#allocation6 + $0x8] sm:$0xff]
    %v557 = vld [vmem:[#allocation6 + $0x10] sm:$0xff]
    %v558 = vld [vmem:[#allocation6 + $0x18] sm:$0xff]
    %v559 = vld [vmem:[#allocation6 + $0x20] sm:$0xff]
    %v560 = vld [vmem:[#allocation6 + $0x28] sm:$0xff]
    %v561 = vld [vmem:[#allocation6 + $0x30] sm:$0xff]
    %v562 = vld [vmem:[#allocation6 + $0x38] sm:$0xff]
    %v563 = vld [vmem:[#allocation6 + $0x40] sm:$0xff]
    %v564 = vld [vmem:[#allocation6 + $0x48] sm:$0xff]
    %v565 = vld [vmem:[#allocation6 + $0x50] sm:$0xff]
    %v566 = vld [vmem:[#allocation6 + $0x58] sm:$0xff]
    %v567 = vld [vmem:[#allocation6 + $0x60] sm:$0xff]
    %v568 = vld [vmem:[#allocation6 + $0x68] sm:$0xff]
    %v569 = vld [vmem:[#allocation6 + $0x70] sm:$0xff]
    %v570 = vld [vmem:[#allocation6 + $0x78] sm:$0xff]
    %v571 = vld [vmem:[#allocation6 + $0x80] sm:$0xff]
    %v572 = vld [vmem:[#allocation6 + $0x88] sm:$0xff]
    %v573 = vld [vmem:[#allocation6 + $0x90] sm:$0xff]
    %v574 = vld [vmem:[#allocation6 + $0x98] sm:$0xff]
    %v575 = vld [vmem:[#allocation6 + $0xa0] sm:$0xff]
    %v576 = vld [vmem:[#allocation6 + $0xa8] sm:$0xff]
    %v577 = vld [vmem:[#allocation6 + $0xb0] sm:$0xff]
    %v578 = vld [vmem:[#allocation6 + $0xb8] sm:$0xff]
    %v579 = vld [vmem:[#allocation6 + $0xc0] sm:$0xff]
    %v580 = vld [vmem:[#allocation6 + $0xc8] sm:$0xff]
    %v581 = vld [vmem:[#allocation6 + $0xd0] sm:$0xff]
    %v582 = vld [vmem:[#allocation6 + $0xd8] sm:$0xff]
    %v583 = vld [vmem:[#allocation6 + $0xe0] sm:$0xff]
    %v584 = vld [vmem:[#allocation6 + $0xe8] sm:$0xff]
    %v585 = vld [vmem:[#allocation6 + $0xf0] sm:$0xff]
    %v586 = vld [vmem:[#allocation6 + $0xf8] sm:$0xff]
    %v619 = vunpack.c.l.b16 %v555
    %v620 = vunpack.c.h.b16 %v555
    %v621 = vunpack.c.l.b16 %v556
    %v622 = vunpack.c.h.b16 %v556
    %v623 = vunpack.c.l.b16 %v557
    %v624 = vunpack.c.h.b16 %v557
    %v625 = vunpack.c.l.b16 %v558
    %v626 = vunpack.c.h.b16 %v558
    %v627 = vunpack.c.l.b16 %v559
    %v628 = vunpack.c.h.b16 %v559
    %v629 = vunpack.c.l.b16 %v560
    %v630 = vunpack.c.h.b16 %v560
    %v631 = vunpack.c.l.b16 %v561
    %v632 = vunpack.c.h.b16 %v561
    %v633 = vunpack.c.l.b16 %v562
    %v634 = vunpack.c.h.b16 %v562
    %v635 = vunpack.c.l.b16 %v563
    %v636 = vunpack.c.h.b16 %v563
    %v637 = vunpack.c.l.b16 %v564
    %v638 = vunpack.c.h.b16 %v564
    %v639 = vunpack.c.l.b16 %v565
    %v640 = vunpack.c.h.b16 %v565
    %v641 = vunpack.c.l.b16 %v566
    %v642 = vunpack.c.h.b16 %v566
    %v643 = vunpack.c.l.b16 %v567
    %v644 = vunpack.c.h.b16 %v567
    %v645 = vunpack.c.l.b16 %v568
    %v646 = vunpack.c.h.b16 %v568
    %v647 = vunpack.c.l.b16 %v569
    %v648 = vunpack.c.h.b16 %v569
    %v649 = vunpack.c.l.b16 %v570
    %v650 = vunpack.c.h.b16 %v570
    %v651 = vunpack.c.l.b16 %v571
    %v652 = vunpack.c.h.b16 %v571
    %v653 = vunpack.c.l.b16 %v572
    %v654 = vunpack.c.h.b16 %v572
    %v655 = vunpack.c.l.b16 %v573
    %v656 = vunpack.c.h.b16 %v573
    %v657 = vunpack.c.l.b16 %v574
    %v658 = vunpack.c.h.b16 %v574
    %v659 = vunpack.c.l.b16 %v575
    %v660 = vunpack.c.h.b16 %v575
    %v661 = vunpack.c.l.b16 %v576
    %v662 = vunpack.c.h.b16 %v576
    %v663 = vunpack.c.l.b16 %v577
    %v664 = vunpack.c.h.b16 %v577
    %v665 = vunpack.c.l.b16 %v578
    %v666 = vunpack.c.h.b16 %v578
    %v667 = vunpack.c.l.b16 %v579
    %v668 = vunpack.c.h.b16 %v579
    %v669 = vunpack.c.l.b16 %v580
    %v670 = vunpack.c.h.b16 %v580
    %v671 = vunpack.c.l.b16 %v581
    %v672 = vunpack.c.h.b16 %v581
    %v673 = vunpack.c.l.b16 %v582
    %v674 = vunpack.c.h.b16 %v582
    %v675 = vunpack.c.l.b16 %v583
    %v676 = vunpack.c.h.b16 %v583
    %v677 = vunpack.c.l.b16 %v584
    %v678 = vunpack.c.h.b16 %v584
    %v679 = vunpack.c.l.b16 %v585
    %v680 = vunpack.c.h.b16 %v585
    %v681 = vunpack.c.l.b16 %v586
    %v682 = vunpack.c.h.b16 %v586
    %v683 = vpack.c.b16 %v623, %v619
    %v684 = vpack.c.b16 %v624, %v620
    %v685 = vpack.c.b16 %v625, %v621
    %v686 = vpack.c.b16 %v626, %v622
    %v687 = vpack.c.b16 %v631, %v627
    %v688 = vpack.c.b16 %v632, %v628
    %v689 = vpack.c.b16 %v633, %v629
    %v690 = vpack.c.b16 %v634, %v630
    %v691 = vpack.c.b16 %v639, %v635
    %v692 = vpack.c.b16 %v640, %v636
    %v693 = vpack.c.b16 %v641, %v637
    %v694 = vpack.c.b16 %v642, %v638
    %v695 = vpack.c.b16 %v647, %v643
    %v696 = vpack.c.b16 %v648, %v644
    %v697 = vpack.c.b16 %v649, %v645
    %v698 = vpack.c.b16 %v650, %v646
    %v699 = vpack.c.b16 %v655, %v651
    %v700 = vpack.c.b16 %v656, %v652
    %v701 = vpack.c.b16 %v657, %v653
    %v702 = vpack.c.b16 %v658, %v654
    %v703 = vpack.c.b16 %v663, %v659
    %v704 = vpack.c.b16 %v664, %v660
    %v705 = vpack.c.b16 %v665, %v661
    %v706 = vpack.c.b16 %v666, %v662
    %v707 = vpack.c.b16 %v671, %v667
    %v708 = vpack.c.b16 %v672, %v668
    %v709 = vpack.c.b16 %v673, %v669
    %v710 = vpack.c.b16 %v674, %v670
    %v711 = vpack.c.b16 %v679, %v675
    %v712 = vpack.c.b16 %v680, %v676
    %v713 = vpack.c.b16 %v681, %v677
    %v714 = vpack.c.b16 %v682, %v678
    %747 = vmatpush.bf16.msra.mxu0 %v711
    %748 = vmatpush.bf16.msra.mxu0 %v707
    %749 = vmatpush.bf16.msra.mxu0 %v703
    %750 = vmatpush.bf16.msra.mxu0 %v699
    %751 = vmatpush.bf16.msra.mxu0 %v695
    %752 = vmatpush.bf16.msra.mxu0 %v691
    %753 = vmatpush.bf16.msra.mxu0 %v687
    %754 = vmatpush.bf16.msra.mxu0 %v683
    %755 = vmatmul.bf16.gmra.mxu0 %v554
    %v756 = vpop.f32.mrf.mxu0
    %v757 = vadd.f32 0.0, %v756
    %v758 = vpop.f32.mrf.mxu0
    %759 = vdwg.mxu0
    %760 = vmatpush.bf16.msra.mxu0 %v712
    %761 = vmatpush.bf16.msra.mxu0 %v708
    %762 = vmatpush.bf16.msra.mxu0 %v704
    %763 = vmatpush.bf16.msra.mxu0 %v700
    %764 = vmatpush.bf16.msra.mxu0 %v696
    %765 = vmatpush.bf16.msra.mxu0 %v692
    %766 = vmatpush.bf16.msra.mxu0 %v688
    %767 = vmatpush.bf16.msra.mxu0 %v684
    %768 = vmatmul.bf16.gmra.mxu0 %v554
    %v769 = vpop.f32.mrf.mxu0
    %v770 = vadd.f32 0.0, %v769
    %v771 = vpop.f32.mrf.mxu0
    %772 = vdwg.mxu0
    %773 = vmatpush.bf16.msra.mxu0 %v713
    %774 = vmatpush.bf16.msra.mxu0 %v709
    %775 = vmatpush.bf16.msra.mxu0 %v705
    %776 = vmatpush.bf16.msra.mxu0 %v701
    %777 = vmatpush.bf16.msra.mxu0 %v697
    %778 = vmatpush.bf16.msra.mxu0 %v693
    %779 = vmatpush.bf16.msra.mxu0 %v689
    %780 = vmatpush.bf16.msra.mxu0 %v685
    %781 = vmatmul.bf16.gmra.mxu0 %v554
    %v782 = vpop.f32.mrf.mxu0
    %v783 = vadd.f32 0.0, %v782
    %v784 = vpop.f32.mrf.mxu0
    %785 = vdwg.mxu0
    %786 = vmatpush.bf16.msra.mxu0 %v714
    %787 = vmatpush.bf16.msra.mxu0 %v710
    %788 = vmatpush.bf16.msra.mxu0 %v706
    %789 = vmatpush.bf16.msra.mxu0 %v702
    %790 = vmatpush.bf16.msra.mxu0 %v698
    %791 = vmatpush.bf16.msra.mxu0 %v694
    %792 = vmatpush.bf16.msra.mxu0 %v690
    %793 = vmatpush.bf16.msra.mxu0 %v686
    %794 = vmatmul.bf16.gmra.mxu0 %v554
    %v795 = vpop.f32.mrf.mxu0
    %v796 = vadd.f32 0.0, %v795
    %v797 = vpop.f32.mrf.mxu0
    %798 = vdwg.mxu0
    %v799 = vadd.f32 %v550, %v757
    %v800 = vadd.f32 %v551, %v770
    %v801 = vadd.f32 %v552, %v783
    %v802 = vadd.f32 %v553, %v796
    %v803 = vxor.u32 %v799, 2147483648
    %v804 = vxor.u32 %v800, 2147483648
    %v805 = vxor.u32 %v801, 2147483648
    %v806 = vmul.f32 %v803, 1.442695
    %v807 = vpow.pop %v806
    %v808 = vmul.f32 %v804, 1.442695
    %v809 = vpow.pop %v808
    %v810 = vmul.f32 %v805, 1.442695
    %v811 = vpow.pop %v810
    %v812 = vadd.f32 %v807, 1.0
    %v813 = vadd.f32 %v809, 1.0
    %v814 = vadd.f32 %v811, 1.0
    %v815 = vrcp.pop %v812
    %v816 = vmul.f32 %v812, %v815
    %v817 = vsub.f32 1.0, %v816
    %v818 = vmul.f32 %v815, %v817
    %v819 = vadd.f32 %v815, %v818
    %vm820 = vweird.f32 %v812
    %vm821 = vweird.f32 %v815
    %vm822 = vmor %vm820, %vm821
    %v823 = vsel %vm822, %v815, %v819
    %v824 = vand.u32 2147483647, %v812
    %vm825 = vcmp.eq.f32.partialorder %v824, 8.507059e+37
    %v826 = vand.u32 %v812, 2147483648
    %v827 = vor.u32 1.1754944e-38, %v826
    %v828 = vsel %vm825, %v827, %v823
    %v829 = vmul.f32 1.0, %v828
    %v830 = vrcp.pop %v813
    %v831 = vmul.f32 %v813, %v830
    %v832 = vsub.f32 1.0, %v831
    %v833 = vmul.f32 %v830, %v832
    %v834 = vadd.f32 %v830, %v833
    %vm835 = vweird.f32 %v813
    %vm836 = vweird.f32 %v830
    %vm837 = vmor %vm835, %vm836
    %v838 = vsel %vm837, %v830, %v834
    %v839 = vand.u32 2147483647, %v813
    %vm840 = vcmp.eq.f32.partialorder %v839, 8.507059e+37
    %v841 = vand.u32 %v813, 2147483648
    %v842 = vor.u32 1.1754944e-38, %v841
    %v843 = vsel %vm840, %v842, %v838
    %v844 = vmul.f32 1.0, %v843
    %v845 = vrcp.pop %v814
    %v846 = vmul.f32 %v814, %v845
    %v847 = vsub.f32 1.0, %v846
    %v848 = vmul.f32 %v845, %v847
    %v849 = vadd.f32 %v845, %v848
    %vm850 = vweird.f32 %v814
    %vm851 = vweird.f32 %v845
    %vm852 = vmor %vm850, %vm851
    %v853 = vsel %vm852, %v845, %v849
    %v854 = vand.u32 2147483647, %v814
    %vm855 = vcmp.eq.f32.partialorder %v854, 8.507059e+37
    %v856 = vand.u32 %v814, 2147483648
    %v857 = vor.u32 1.1754944e-38, %v856
    %v858 = vsel %vm855, %v857, %v853
    %v859 = vmul.f32 1.0, %v858
    %v860 = vtanh.pop %v802
    %v861 = vmul.f32 %v844, %v549
    %v862 = vmul.f32 %v829, %v860
    %v863 = vadd.f32 %v861, %v862
    %v864 = vtanh.pop %v863
    %v865 = vmul.f32 %v859, %v864
    %866 = vst [vmem:[#allocation2] sm:$0xff] %v865
    %v867 = vld [vmem:[#allocation3 + $0x20] sm:$0xff]
    %v868 = vld [vmem:[#allocation3 + $0x28] sm:$0xff]
    %v869 = vld [vmem:[#allocation3 + $0x30] sm:$0xff]
    %v870 = vld [vmem:[#allocation3 + $0x38] sm:$0xff]
    %v871 = vpack.c.bf16 %v865, %v865
    %v872 = vld [vmem:[#allocation6] sm:$0xff]
    %v873 = vld [vmem:[#allocation6 + $0x8] sm:$0xff]
    %v874 = vld [vmem:[#allocation6 + $0x10] sm:$0xff]
    %v875 = vld [vmem:[#allocation6 + $0x18] sm:$0xff]
    %v876 = vld [vmem:[#allocation6 + $0x20] sm:$0xff]
    %v877 = vld [vmem:[#allocation6 + $0x28] sm:$0xff]
    %v878 = vld [vmem:[#allocation6 + $0x30] sm:$0xff]
    %v879 = vld [vmem:[#allocation6 + $0x38] sm:$0xff]
    %v880 = vld [vmem:[#allocation6 + $0x40] sm:$0xff]
    %v881 = vld [vmem:[#allocation6 + $0x48] sm:$0xff]
    %v882 = vld [vmem:[#allocation6 + $0x50] sm:$0xff]
    %v883 = vld [vmem:[#allocation6 + $0x58] sm:$0xff]
    %v884 = vld [vmem:[#allocation6 + $0x60] sm:$0xff]
    %v885 = vld [vmem:[#allocation6 + $0x68] sm:$0xff]
    %v886 = vld [vmem:[#allocation6 + $0x70] sm:$0xff]
    %v887 = vld [vmem:[#allocation6 + $0x78] sm:$0xff]
    %v888 = vld [vmem:[#allocation6 + $0x80] sm:$0xff]
    %v889 = vld [vmem:[#allocation6 + $0x88] sm:$0xff]
    %v890 = vld [vmem:[#allocation6 + $0x90] sm:$0xff]
    %v891 = vld [vmem:[#allocation6 + $0x98] sm:$0xff]
    %v892 = vld [vmem:[#allocation6 + $0xa0] sm:$0xff]
    %v893 = vld [vmem:[#allocation6 + $0xa8] sm:$0xff]
    %v894 = vld [vmem:[#allocation6 + $0xb0] sm:$0xff]
    %v895 = vld [vmem:[#allocation6 + $0xb8] sm:$0xff]
    %v896 = vld [vmem:[#allocation6 + $0xc0] sm:$0xff]
    %v897 = vld [vmem:[#allocation6 + $0xc8] sm:$0xff]
    %v898 = vld [vmem:[#allocation6 + $0xd0] sm:$0xff]
    %v899 = vld [vmem:[#allocation6 + $0xd8] sm:$0xff]
    %v900 = vld [vmem:[#allocation6 + $0xe0] sm:$0xff]
    %v901 = vld [vmem:[#allocation6 + $0xe8] sm:$0xff]
    %v902 = vld [vmem:[#allocation6 + $0xf0] sm:$0xff]
    %v903 = vld [vmem:[#allocation6 + $0xf8] sm:$0xff]
    %v936 = vunpack.c.l.b16 %v872
    %v937 = vunpack.c.h.b16 %v872
    %v938 = vunpack.c.l.b16 %v873
    %v939 = vunpack.c.h.b16 %v873
    %v940 = vunpack.c.l.b16 %v874
    %v941 = vunpack.c.h.b16 %v874
    %v942 = vunpack.c.l.b16 %v875
    %v943 = vunpack.c.h.b16 %v875
    %v944 = vunpack.c.l.b16 %v876
    %v945 = vunpack.c.h.b16 %v876
    %v946 = vunpack.c.l.b16 %v877
    %v947 = vunpack.c.h.b16 %v877
    %v948 = vunpack.c.l.b16 %v878
    %v949 = vunpack.c.h.b16 %v878
    %v950 = vunpack.c.l.b16 %v879
    %v951 = vunpack.c.h.b16 %v879
    %v952 = vunpack.c.l.b16 %v880
    %v953 = vunpack.c.h.b16 %v880
    %v954 = vunpack.c.l.b16 %v881
    %v955 = vunpack.c.h.b16 %v881
    %v956 = vunpack.c.l.b16 %v882
    %v957 = vunpack.c.h.b16 %v882
    %v958 = vunpack.c.l.b16 %v883
    %v959 = vunpack.c.h.b16 %v883
    %v960 = vunpack.c.l.b16 %v884
    %v961 = vunpack.c.h.b16 %v884
    %v962 = vunpack.c.l.b16 %v885
    %v963 = vunpack.c.h.b16 %v885
    %v964 = vunpack.c.l.b16 %v886
    %v965 = vunpack.c.h.b16 %v886
    %v966 = vunpack.c.l.b16 %v887
    %v967 = vunpack.c.h.b16 %v887
    %v968 = vunpack.c.l.b16 %v888
    %v969 = vunpack.c.h.b16 %v888
    %v970 = vunpack.c.l.b16 %v889
    %v971 = vunpack.c.h.b16 %v889
    %v972 = vunpack.c.l.b16 %v890
    %v973 = vunpack.c.h.b16 %v890
    %v974 = vunpack.c.l.b16 %v891
    %v975 = vunpack.c.h.b16 %v891
    %v976 = vunpack.c.l.b16 %v892
    %v977 = vunpack.c.h.b16 %v892
    %v978 = vunpack.c.l.b16 %v893
    %v979 = vunpack.c.h.b16 %v893
    %v980 = vunpack.c.l.b16 %v894
    %v981 = vunpack.c.h.b16 %v894
    %v982 = vunpack.c.l.b16 %v895
    %v983 = vunpack.c.h.b16 %v895
    %v984 = vunpack.c.l.b16 %v896
    %v985 = vunpack.c.h.b16 %v896
    %v986 = vunpack.c.l.b16 %v897
    %v987 = vunpack.c.h.b16 %v897
    %v988 = vunpack.c.l.b16 %v898
    %v989 = vunpack.c.h.b16 %v898
    %v990 = vunpack.c.l.b16 %v899
    %v991 = vunpack.c.h.b16 %v899
    %v992 = vunpack.c.l.b16 %v900
    %v993 = vunpack.c.h.b16 %v900
    %v994 = vunpack.c.l.b16 %v901
    %v995 = vunpack.c.h.b16 %v901
    %v996 = vunpack.c.l.b16 %v902
    %v997 = vunpack.c.h.b16 %v902
    %v998 = vunpack.c.l.b16 %v903
    %v999 = vunpack.c.h.b16 %v903
    %v1000 = vpack.c.b16 %v940, %v936
    %v1001 = vpack.c.b16 %v941, %v937
    %v1002 = vpack.c.b16 %v942, %v938
    %v1003 = vpack.c.b16 %v943, %v939
    %v1004 = vpack.c.b16 %v948, %v944
    %v1005 = vpack.c.b16 %v949, %v945
    %v1006 = vpack.c.b16 %v950, %v946
    %v1007 = vpack.c.b16 %v951, %v947
    %v1008 = vpack.c.b16 %v956, %v952
    %v1009 = vpack.c.b16 %v957, %v953
    %v1010 = vpack.c.b16 %v958, %v954
    %v1011 = vpack.c.b16 %v959, %v955
    %v1012 = vpack.c.b16 %v964, %v960
    %v1013 = vpack.c.b16 %v965, %v961
    %v1014 = vpack.c.b16 %v966, %v962
    %v1015 = vpack.c.b16 %v967, %v963
    %v1016 = vpack.c.b16 %v972, %v968
    %v1017 = vpack.c.b16 %v973, %v969
    %v1018 = vpack.c.b16 %v974, %v970
    %v1019 = vpack.c.b16 %v975, %v971
    %v1020 = vpack.c.b16 %v980, %v976
    %v1021 = vpack.c.b16 %v981, %v977
    %v1022 = vpack.c.b16 %v982, %v978
    %v1023 = vpack.c.b16 %v983, %v979
    %v1024 = vpack.c.b16 %v988, %v984
    %v1025 = vpack.c.b16 %v989, %v985
    %v1026 = vpack.c.b16 %v990, %v986
    %v1027 = vpack.c.b16 %v991, %v987
    %v1028 = vpack.c.b16 %v996, %v992
    %v1029 = vpack.c.b16 %v997, %v993
    %v1030 = vpack.c.b16 %v998, %v994
    %v1031 = vpack.c.b16 %v999, %v995
    %1064 = vmatpush.bf16.msra.mxu0 %v1028
    %1065 = vmatpush.bf16.msra.mxu0 %v1024
    %1066 = vmatpush.bf16.msra.mxu0 %v1020
    %1067 = vmatpush.bf16.msra.mxu0 %v1016
    %1068 = vmatpush.bf16.msra.mxu0 %v1012
    %1069 = vmatpush.bf16.msra.mxu0 %v1008
    %1070 = vmatpush.bf16.msra.mxu0 %v1004
    %1071 = vmatpush.bf16.msra.mxu0 %v1000
    %1072 = vmatmul.bf16.gmra.mxu0 %v871
    %v1073 = vpop.f32.mrf.mxu0
    %v1074 = vadd.f32 0.0, %v1073
    %v1075 = vpop.f32.mrf.mxu0
    %1076 = vdwg.mxu0
    %1077 = vmatpush.bf16.msra.mxu0 %v1029
    %1078 = vmatpush.bf16.msra.mxu0 %v1025
    %1079 = vmatpush.bf16.msra.mxu0 %v1021
    %1080 = vmatpush.bf16.msra.mxu0 %v1017
    %1081 = vmatpush.bf16.msra.mxu0 %v1013
    %1082 = vmatpush.bf16.msra.mxu0 %v1009
    %1083 = vmatpush.bf16.msra.mxu0 %v1005
    %1084 = vmatpush.bf16.msra.mxu0 %v1001
    %1085 = vmatmul.bf16.gmra.mxu0 %v871
    %v1086 = vpop.f32.mrf.mxu0
    %v1087 = vadd.f32 0.0, %v1086
    %v1088 = vpop.f32.mrf.mxu0
    %1089 = vdwg.mxu0
    %1090 = vmatpush.bf16.msra.mxu0 %v1030
    %1091 = vmatpush.bf16.msra.mxu0 %v1026
    %1092 = vmatpush.bf16.msra.mxu0 %v1022
    %1093 = vmatpush.bf16.msra.mxu0 %v1018
    %1094 = vmatpush.bf16.msra.mxu0 %v1014
    %1095 = vmatpush.bf16.msra.mxu0 %v1010
    %1096 = vmatpush.bf16.msra.mxu0 %v1006
    %1097 = vmatpush.bf16.msra.mxu0 %v1002
    %1098 = vmatmul.bf16.gmra.mxu0 %v871
    %v1099 = vpop.f32.mrf.mxu0
    %v1100 = vadd.f32 0.0, %v1099
    %v1101 = vpop.f32.mrf.mxu0
    %1102 = vdwg.mxu0
    %1103 = vmatpush.bf16.msra.mxu0 %v1031
    %1104 = vmatpush.bf16.msra.mxu0 %v1027
    %1105 = vmatpush.bf16.msra.mxu0 %v1023
    %1106 = vmatpush.bf16.msra.mxu0 %v1019
    %1107 = vmatpush.bf16.msra.mxu0 %v1015
    %1108 = vmatpush.bf16.msra.mxu0 %v1011
    %1109 = vmatpush.bf16.msra.mxu0 %v1007
    %1110 = vmatpush.bf16.msra.mxu0 %v1003
    %1111 = vmatmul.bf16.gmra.mxu0 %v871
    %v1112 = vpop.f32.mrf.mxu0
    %v1113 = vadd.f32 0.0, %v1112
    %v1114 = vpop.f32.mrf.mxu0
    %1115 = vdwg.mxu0
    %v1116 = vadd.f32 %v867, %v1074
    %v1117 = vadd.f32 %v868, %v1087
    %v1118 = vadd.f32 %v869, %v1100
    %v1119 = vadd.f32 %v870, %v1113
    %v1120 = vxor.u32 %v1116, 2147483648
    %v1121 = vxor.u32 %v1117, 2147483648
    %v1122 = vxor.u32 %v1118, 2147483648
    %v1123 = vmul.f32 %v1120, 1.442695
    %v1124 = vpow.pop %v1123
    %v1125 = vmul.f32 %v1121, 1.442695
    %v1126 = vpow.pop %v1125
    %v1127 = vmul.f32 %v1122, 1.442695
    %v1128 = vpow.pop %v1127
    %v1129 = vadd.f32 %v1124, 1.0
    %v1130 = vadd.f32 %v1126, 1.0
    %v1131 = vadd.f32 %v1128, 1.0
    %v1132 = vrcp.pop %v1129
    %v1133 = vmul.f32 %v1129, %v1132
    %v1134 = vsub.f32 1.0, %v1133
    %v1135 = vmul.f32 %v1132, %v1134
    %v1136 = vadd.f32 %v1132, %v1135
    %vm1137 = vweird.f32 %v1129
    %vm1138 = vweird.f32 %v1132
    %vm1139 = vmor %vm1137, %vm1138
    %v1140 = vsel %vm1139, %v1132, %v1136
    %v1141 = vand.u32 2147483647, %v1129
    %vm1142 = vcmp.eq.f32.partialorder %v1141, 8.507059e+37
    %v1143 = vand.u32 %v1129, 2147483648
    %v1144 = vor.u32 1.1754944e-38, %v1143
    %v1145 = vsel %vm1142, %v1144, %v1140
    %v1146 = vmul.f32 1.0, %v1145
    %v1147 = vrcp.pop %v1130
    %v1148 = vmul.f32 %v1130, %v1147
    %v1149 = vsub.f32 1.0, %v1148
    %v1150 = vmul.f32 %v1147, %v1149
    %v1151 = vadd.f32 %v1147, %v1150
    %vm1152 = vweird.f32 %v1130
    %vm1153 = vweird.f32 %v1147
    %vm1154 = vmor %vm1152, %vm1153
    %v1155 = vsel %vm1154, %v1147, %v1151
    %v1156 = vand.u32 2147483647, %v1130
    %vm1157 = vcmp.eq.f32.partialorder %v1156, 8.507059e+37
    %v1158 = vand.u32 %v1130, 2147483648
    %v1159 = vor.u32 1.1754944e-38, %v1158
    %v1160 = vsel %vm1157, %v1159, %v1155
    %v1161 = vmul.f32 1.0, %v1160
    %v1162 = vrcp.pop %v1131
    %v1163 = vmul.f32 %v1131, %v1162
    %v1164 = vsub.f32 1.0, %v1163
    %v1165 = vmul.f32 %v1162, %v1164
    %v1166 = vadd.f32 %v1162, %v1165
    %vm1167 = vweird.f32 %v1131
    %vm1168 = vweird.f32 %v1162
    %vm1169 = vmor %vm1167, %vm1168
    %v1170 = vsel %vm1169, %v1162, %v1166
    %v1171 = vand.u32 2147483647, %v1131
    %vm1172 = vcmp.eq.f32.partialorder %v1171, 8.507059e+37
    %v1173 = vand.u32 %v1131, 2147483648
    %v1174 = vor.u32 1.1754944e-38, %v1173
    %v1175 = vsel %vm1172, %v1174, %v1170
    %v1176 = vmul.f32 1.0, %v1175
    %v1177 = vtanh.pop %v1119
    %v1178 = vmul.f32 %v1161, %v863
    %v1179 = vmul.f32 %v1146, %v1177
    %v1180 = vadd.f32 %v1178, %v1179
    %v1181 = vtanh.pop %v1180
    %v1182 = vmul.f32 %v1176, %v1181
    %1183 = vst [vmem:[#allocation2 + $0x8] sm:$0xff] %v1182
    %v1184 = vld [vmem:[#allocation3 + $0x40] sm:$0xff]
    %v1185 = vld [vmem:[#allocation3 + $0x48] sm:$0xff]
    %v1186 = vld [vmem:[#allocation3 + $0x50] sm:$0xff]
    %v1187 = vld [vmem:[#allocation3 + $0x58] sm:$0xff]
    %v1188 = vpack.c.bf16 %v1182, %v1182
    %v1189 = vld [vmem:[#allocation6] sm:$0xff]
    %v1190 = vld [vmem:[#allocation6 + $0x8] sm:$0xff]
    %v1191 = vld [vmem:[#allocation6 + $0x10] sm:$0xff]
    %v1192 = vld [vmem:[#allocation6 + $0x18] sm:$0xff]
    %v1193 = vld [vmem:[#allocation6 + $0x20] sm:$0xff]
    %v1194 = vld [vmem:[#allocation6 + $0x28] sm:$0xff]
    %v1195 = vld [vmem:[#allocation6 + $0x30] sm:$0xff]
    %v1196 = vld [vmem:[#allocation6 + $0x38] sm:$0xff]
    %v1197 = vld [vmem:[#allocation6 + $0x40] sm:$0xff]
    %v1198 = vld [vmem:[#allocation6 + $0x48] sm:$0xff]
    %v1199 = vld [vmem:[#allocation6 + $0x50] sm:$0xff]
    %v1200 = vld [vmem:[#allocation6 + $0x58] sm:$0xff]
    %v1201 = vld [vmem:[#allocation6 + $0x60] sm:$0xff]
    %v1202 = vld [vmem:[#allocation6 + $0x68] sm:$0xff]
    %v1203 = vld [vmem:[#allocation6 + $0x70] sm:$0xff]
    %v1204 = vld [vmem:[#allocation6 + $0x78] sm:$0xff]
    %v1205 = vld [vmem:[#allocation6 + $0x80] sm:$0xff]
    %v1206 = vld [vmem:[#allocation6 + $0x88] sm:$0xff]
    %v1207 = vld [vmem:[#allocation6 + $0x90] sm:$0xff]
    %v1208 = vld [vmem:[#allocation6 + $0x98] sm:$0xff]
    %v1209 = vld [vmem:[#allocation6 + $0xa0] sm:$0xff]
    %v1210 = vld [vmem:[#allocation6 + $0xa8] sm:$0xff]
    %v1211 = vld [vmem:[#allocation6 + $0xb0] sm:$0xff]
    %v1212 = vld [vmem:[#allocation6 + $0xb8] sm:$0xff]
    %v1213 = vld [vmem:[#allocation6 + $0xc0] sm:$0xff]
    %v1214 = vld [vmem:[#allocation6 + $0xc8] sm:$0xff]
    %v1215 = vld [vmem:[#allocation6 + $0xd0] sm:$0xff]
    %v1216 = vld [vmem:[#allocation6 + $0xd8] sm:$0xff]
    %v1217 = vld [vmem:[#allocation6 + $0xe0] sm:$0xff]
    %v1218 = vld [vmem:[#allocation6 + $0xe8] sm:$0xff]
    %v1219 = vld [vmem:[#allocation6 + $0xf0] sm:$0xff]
    %v1220 = vld [vmem:[#allocation6 + $0xf8] sm:$0xff]
    %v1253 = vunpack.c.l.b16 %v1189
    %v1254 = vunpack.c.h.b16 %v1189
    %v1255 = vunpack.c.l.b16 %v1190
    %v1256 = vunpack.c.h.b16 %v1190
    %v1257 = vunpack.c.l.b16 %v1191
    %v1258 = vunpack.c.h.b16 %v1191
    %v1259 = vunpack.c.l.b16 %v1192
    %v1260 = vunpack.c.h.b16 %v1192
    %v1261 = vunpack.c.l.b16 %v1193
    %v1262 = vunpack.c.h.b16 %v1193
    %v1263 = vunpack.c.l.b16 %v1194
    %v1264 = vunpack.c.h.b16 %v1194
    %v1265 = vunpack.c.l.b16 %v1195
    %v1266 = vunpack.c.h.b16 %v1195
    %v1267 = vunpack.c.l.b16 %v1196
    %v1268 = vunpack.c.h.b16 %v1196
    %v1269 = vunpack.c.l.b16 %v1197
    %v1270 = vunpack.c.h.b16 %v1197
    %v1271 = vunpack.c.l.b16 %v1198
    %v1272 = vunpack.c.h.b16 %v1198
    %v1273 = vunpack.c.l.b16 %v1199
    %v1274 = vunpack.c.h.b16 %v1199
    %v1275 = vunpack.c.l.b16 %v1200
    %v1276 = vunpack.c.h.b16 %v1200
    %v1277 = vunpack.c.l.b16 %v1201
    %v1278 = vunpack.c.h.b16 %v1201
    %v1279 = vunpack.c.l.b16 %v1202
    %v1280 = vunpack.c.h.b16 %v1202
    %v1281 = vunpack.c.l.b16 %v1203
    %v1282 = vunpack.c.h.b16 %v1203
    %v1283 = vunpack.c.l.b16 %v1204
    %v1284 = vunpack.c.h.b16 %v1204
    %v1285 = vunpack.c.l.b16 %v1205
    %v1286 = vunpack.c.h.b16 %v1205
    %v1287 = vunpack.c.l.b16 %v1206
    %v1288 = vunpack.c.h.b16 %v1206
    %v1289 = vunpack.c.l.b16 %v1207
    %v1290 = vunpack.c.h.b16 %v1207
    %v1291 = vunpack.c.l.b16 %v1208
    %v1292 = vunpack.c.h.b16 %v1208
    %v1293 = vunpack.c.l.b16 %v1209
    %v1294 = vunpack.c.h.b16 %v1209
    %v1295 = vunpack.c.l.b16 %v1210
    %v1296 = vunpack.c.h.b16 %v1210
    %v1297 = vunpack.c.l.b16 %v1211
    %v1298 = vunpack.c.h.b16 %v1211
    %v1299 = vunpack.c.l.b16 %v1212
    %v1300 = vunpack.c.h.b16 %v1212
    %v1301 = vunpack.c.l.b16 %v1213
    %v1302 = vunpack.c.h.b16 %v1213
    %v1303 = vunpack.c.l.b16 %v1214
    %v1304 = vunpack.c.h.b16 %v1214
    %v1305 = vunpack.c.l.b16 %v1215
    %v1306 = vunpack.c.h.b16 %v1215
    %v1307 = vunpack.c.l.b16 %v1216
    %v1308 = vunpack.c.h.b16 %v1216
    %v1309 = vunpack.c.l.b16 %v1217
    %v1310 = vunpack.c.h.b16 %v1217
    %v1311 = vunpack.c.l.b16 %v1218
    %v1312 = vunpack.c.h.b16 %v1218
    %v1313 = vunpack.c.l.b16 %v1219
    %v1314 = vunpack.c.h.b16 %v1219
    %v1315 = vunpack.c.l.b16 %v1220
    %v1316 = vunpack.c.h.b16 %v1220
    %v1317 = vpack.c.b16 %v1257, %v1253
    %v1318 = vpack.c.b16 %v1258, %v1254
    %v1319 = vpack.c.b16 %v1259, %v1255
    %v1320 = vpack.c.b16 %v1260, %v1256
    %v1321 = vpack.c.b16 %v1265, %v1261
    %v1322 = vpack.c.b16 %v1266, %v1262
    %v1323 = vpack.c.b16 %v1267, %v1263
    %v1324 = vpack.c.b16 %v1268, %v1264
    %v1325 = vpack.c.b16 %v1273, %v1269
    %v1326 = vpack.c.b16 %v1274, %v1270
    %v1327 = vpack.c.b16 %v1275, %v1271
    %v1328 = vpack.c.b16 %v1276, %v1272
    %v1329 = vpack.c.b16 %v1281, %v1277
    %v1330 = vpack.c.b16 %v1282, %v1278
    %v1331 = vpack.c.b16 %v1283, %v1279
    %v1332 = vpack.c.b16 %v1284, %v1280
    %v1333 = vpack.c.b16 %v1289, %v1285
    %v1334 = vpack.c.b16 %v1290, %v1286
    %v1335 = vpack.c.b16 %v1291, %v1287
    %v1336 = vpack.c.b16 %v1292, %v1288
    %v1337 = vpack.c.b16 %v1297, %v1293
    %v1338 = vpack.c.b16 %v1298, %v1294
    %v1339 = vpack.c.b16 %v1299, %v1295
    %v1340 = vpack.c.b16 %v1300, %v1296
    %v1341 = vpack.c.b16 %v1305, %v1301
    %v1342 = vpack.c.b16 %v1306, %v1302
    %v1343 = vpack.c.b16 %v1307, %v1303
    %v1344 = vpack.c.b16 %v1308, %v1304
    %v1345 = vpack.c.b16 %v1313, %v1309
    %v1346 = vpack.c.b16 %v1314, %v1310
    %v1347 = vpack.c.b16 %v1315, %v1311
    %v1348 = vpack.c.b16 %v1316, %v1312
    %1381 = vmatpush.bf16.msra.mxu0 %v1345
    %1382 = vmatpush.bf16.msra.mxu0 %v1341
    %1383 = vmatpush.bf16.msra.mxu0 %v1337
    %1384 = vmatpush.bf16.msra.mxu0 %v1333
    %1385 = vmatpush.bf16.msra.mxu0 %v1329
    %1386 = vmatpush.bf16.msra.mxu0 %v1325
    %1387 = vmatpush.bf16.msra.mxu0 %v1321
    %1388 = vmatpush.bf16.msra.mxu0 %v1317
    %1389 = vmatmul.bf16.gmra.mxu0 %v1188
    %v1390 = vpop.f32.mrf.mxu0
    %v1391 = vadd.f32 0.0, %v1390
    %v1392 = vpop.f32.mrf.mxu0
    %1393 = vdwg.mxu0
    %1394 = vmatpush.bf16.msra.mxu0 %v1346
    %1395 = vmatpush.bf16.msra.mxu0 %v1342
    %1396 = vmatpush.bf16.msra.mxu0 %v1338
    %1397 = vmatpush.bf16.msra.mxu0 %v1334
    %1398 = vmatpush.bf16.msra.mxu0 %v1330
    %1399 = vmatpush.bf16.msra.mxu0 %v1326
    %1400 = vmatpush.bf16.msra.mxu0 %v1322
    %1401 = vmatpush.bf16.msra.mxu0 %v1318
    %1402 = vmatmul.bf16.gmra.mxu0 %v1188
    %v1403 = vpop.f32.mrf.mxu0
    %v1404 = vadd.f32 0.0, %v1403
    %v1405 = vpop.f32.mrf.mxu0
    %1406 = vdwg.mxu0
    %1407 = vmatpush.bf16.msra.mxu0 %v1347
    %1408 = vmatpush.bf16.msra.mxu0 %v1343
    %1409 = vmatpush.bf16.msra.mxu0 %v1339
    %1410 = vmatpush.bf16.msra.mxu0 %v1335
    %1411 = vmatpush.bf16.msra.mxu0 %v1331
    %1412 = vmatpush.bf16.msra.mxu0 %v1327
    %1413 = vmatpush.bf16.msra.mxu0 %v1323
    %1414 = vmatpush.bf16.msra.mxu0 %v1319
    %1415 = vmatmul.bf16.gmra.mxu0 %v1188
    %v1416 = vpop.f32.mrf.mxu0
    %v1417 = vadd.f32 0.0, %v1416
    %v1418 = vpop.f32.mrf.mxu0
    %1419 = vdwg.mxu0
    %1420 = vmatpush.bf16.msra.mxu0 %v1348
    %1421 = vmatpush.bf16.msra.mxu0 %v1344
    %1422 = vmatpush.bf16.msra.mxu0 %v1340
    %1423 = vmatpush.bf16.msra.mxu0 %v1336
    %1424 = vmatpush.bf16.msra.mxu0 %v1332
    %1425 = vmatpush.bf16.msra.mxu0 %v1328
    %1426 = vmatpush.bf16.msra.mxu0 %v1324
    %1427 = vmatpush.bf16.msra.mxu0 %v1320
    %1428 = vmatmul.bf16.gmra.mxu0 %v1188
    %v1429 = vpop.f32.mrf.mxu0
    %v1430 = vadd.f32 0.0, %v1429
    %v1431 = vpop.f32.mrf.mxu0
    %1432 = vdwg.mxu0
    %v1433 = vadd.f32 %v1184, %v1391
    %v1434 = vadd.f32 %v1185, %v1404
    %v1435 = vadd.f32 %v1186, %v1417
    %v1436 = vadd.f32 %v1187, %v1430
    %v1437 = vxor.u32 %v1433, 2147483648
    %v1438 = vxor.u32 %v1434, 2147483648
    %v1439 = vxor.u32 %v1435, 2147483648
    %v1440 = vmul.f32 %v1437, 1.442695
    %v1441 = vpow.pop %v1440
    %v1442 = vmul.f32 %v1438, 1.442695
    %v1443 = vpow.pop %v1442
    %v1444 = vmul.f32 %v1439, 1.442695
    %v1445 = vpow.pop %v1444
    %v1446 = vadd.f32 %v1441, 1.0
    %v1447 = vadd.f32 %v1443, 1.0
    %v1448 = vadd.f32 %v1445, 1.0
    %v1449 = vrcp.pop %v1446
    %v1450 = vmul.f32 %v1446, %v1449
    %v1451 = vsub.f32 1.0, %v1450
    %v1452 = vmul.f32 %v1449, %v1451
    %v1453 = vadd.f32 %v1449, %v1452
    %vm1454 = vweird.f32 %v1446
    %vm1455 = vweird.f32 %v1449
    %vm1456 = vmor %vm1454, %vm1455
    %v1457 = vsel %vm1456, %v1449, %v1453
    %v1458 = vand.u32 2147483647, %v1446
    %vm1459 = vcmp.eq.f32.partialorder %v1458, 8.507059e+37
    %v1460 = vand.u32 %v1446, 2147483648
    %v1461 = vor.u32 1.1754944e-38, %v1460
    %v1462 = vsel %vm1459, %v1461, %v1457
    %v1463 = vmul.f32 1.0, %v1462
    %v1464 = vrcp.pop %v1447
    %v1465 = vmul.f32 %v1447, %v1464
    %v1466 = vsub.f32 1.0, %v1465
    %v1467 = vmul.f32 %v1464, %v1466
    %v1468 = vadd.f32 %v1464, %v1467
    %vm1469 = vweird.f32 %v1447
    %vm1470 = vweird.f32 %v1464
    %vm1471 = vmor %vm1469, %vm1470
    %v1472 = vsel %vm1471, %v1464, %v1468
    %v1473 = vand.u32 2147483647, %v1447
    %vm1474 = vcmp.eq.f32.partialorder %v1473, 8.507059e+37
    %v1475 = vand.u32 %v1447, 2147483648
    %v1476 = vor.u32 1.1754944e-38, %v1475
    %v1477 = vsel %vm1474, %v1476, %v1472
    %v1478 = vmul.f32 1.0, %v1477
    %v1479 = vrcp.pop %v1448
    %v1480 = vmul.f32 %v1448, %v1479
    %v1481 = vsub.f32 1.0, %v1480
    %v1482 = vmul.f32 %v1479, %v1481
    %v1483 = vadd.f32 %v1479, %v1482
    %vm1484 = vweird.f32 %v1448
    %vm1485 = vweird.f32 %v1479
    %vm1486 = vmor %vm1484, %vm1485
    %v1487 = vsel %vm1486, %v1479, %v1483
    %v1488 = vand.u32 2147483647, %v1448
    %vm1489 = vcmp.eq.f32.partialorder %v1488, 8.507059e+37
    %v1490 = vand.u32 %v1448, 2147483648
    %v1491 = vor.u32 1.1754944e-38, %v1490
    %v1492 = vsel %vm1489, %v1491, %v1487
    %v1493 = vmul.f32 1.0, %v1492
    %v1494 = vtanh.pop %v1436
    %v1495 = vmul.f32 %v1478, %v1180
    %v1496 = vmul.f32 %v1463, %v1494
    %v1497 = vadd.f32 %v1495, %v1496
    %v1498 = vtanh.pop %v1497
    %v1499 = vmul.f32 %v1493, %v1498
    %1500 = vst [vmem:[#allocation2 + $0x10] sm:$0xff] %v1499
    %v1501 = vld [vmem:[#allocation3 + $0x60] sm:$0xff]
    %v1502 = vld [vmem:[#allocation3 + $0x68] sm:$0xff]
    %v1503 = vld [vmem:[#allocation3 + $0x70] sm:$0xff]
    %v1504 = vld [vmem:[#allocation3 + $0x78] sm:$0xff]
    %v1505 = vpack.c.bf16 %v1499, %v1499
    %v1506 = vld [vmem:[#allocation6] sm:$0xff]
    %v1507 = vld [vmem:[#allocation6 + $0x8] sm:$0xff]
    %v1508 = vld [vmem:[#allocation6 + $0x10] sm:$0xff]
    %v1509 = vld [vmem:[#allocation6 + $0x18] sm:$0xff]
    %v1510 = vld [vmem:[#allocation6 + $0x20] sm:$0xff]
    %v1511 = vld [vmem:[#allocation6 + $0x28] sm:$0xff]
    %v1512 = vld [vmem:[#allocation6 + $0x30] sm:$0xff]
    %v1513 = vld [vmem:[#allocation6 + $0x38] sm:$0xff]
    %v1514 = vld [vmem:[#allocation6 + $0x40] sm:$0xff]
    %v1515 = vld [vmem:[#allocation6 + $0x48] sm:$0xff]
    %v1516 = vld [vmem:[#allocation6 + $0x50] sm:$0xff]
    %v1517 = vld [vmem:[#allocation6 + $0x58] sm:$0xff]
    %v1518 = vld [vmem:[#allocation6 + $0x60] sm:$0xff]
    %v1519 = vld [vmem:[#allocation6 + $0x68] sm:$0xff]
    %v1520 = vld [vmem:[#allocation6 + $0x70] sm:$0xff]
    %v1521 = vld [vmem:[#allocation6 + $0x78] sm:$0xff]
    %v1522 = vld [vmem:[#allocation6 + $0x80] sm:$0xff]
    %v1523 = vld [vmem:[#allocation6 + $0x88] sm:$0xff]
    %v1524 = vld [vmem:[#allocation6 + $0x90] sm:$0xff]
    %v1525 = vld [vmem:[#allocation6 + $0x98] sm:$0xff]
    %v1526 = vld [vmem:[#allocation6 + $0xa0] sm:$0xff]
    %v1527 = vld [vmem:[#allocation6 + $0xa8] sm:$0xff]
    %v1528 = vld [vmem:[#allocation6 + $0xb0] sm:$0xff]
    %v1529 = vld [vmem:[#allocation6 + $0xb8] sm:$0xff]
    %v1530 = vld [vmem:[#allocation6 + $0xc0] sm:$0xff]
    %v1531 = vld [vmem:[#allocation6 + $0xc8] sm:$0xff]
    %v1532 = vld [vmem:[#allocation6 + $0xd0] sm:$0xff]
    %v1533 = vld [vmem:[#allocation6 + $0xd8] sm:$0xff]
    %v1534 = vld [vmem:[#allocation6 + $0xe0] sm:$0xff]
    %v1535 = vld [vmem:[#allocation6 + $0xe8] sm:$0xff]
    %v1536 = vld [vmem:[#allocation6 + $0xf0] sm:$0xff]
    %v1537 = vld [vmem:[#allocation6 + $0xf8] sm:$0xff]
    %v1570 = vunpack.c.l.b16 %v1506
    %v1571 = vunpack.c.h.b16 %v1506
    %v1572 = vunpack.c.l.b16 %v1507
    %v1573 = vunpack.c.h.b16 %v1507
    %v1574 = vunpack.c.l.b16 %v1508
    %v1575 = vunpack.c.h.b16 %v1508
    %v1576 = vunpack.c.l.b16 %v1509
    %v1577 = vunpack.c.h.b16 %v1509
    %v1578 = vunpack.c.l.b16 %v1510
    %v1579 = vunpack.c.h.b16 %v1510
    %v1580 = vunpack.c.l.b16 %v1511
    %v1581 = vunpack.c.h.b16 %v1511
    %v1582 = vunpack.c.l.b16 %v1512
    %v1583 = vunpack.c.h.b16 %v1512
    %v1584 = vunpack.c.l.b16 %v1513
    %v1585 = vunpack.c.h.b16 %v1513
    %v1586 = vunpack.c.l.b16 %v1514
    %v1587 = vunpack.c.h.b16 %v1514
    %v1588 = vunpack.c.l.b16 %v1515
    %v1589 = vunpack.c.h.b16 %v1515
    %v1590 = vunpack.c.l.b16 %v1516
    %v1591 = vunpack.c.h.b16 %v1516
    %v1592 = vunpack.c.l.b16 %v1517
    %v1593 = vunpack.c.h.b16 %v1517
    %v1594 = vunpack.c.l.b16 %v1518
    %v1595 = vunpack.c.h.b16 %v1518
    %v1596 = vunpack.c.l.b16 %v1519
    %v1597 = vunpack.c.h.b16 %v1519
    %v1598 = vunpack.c.l.b16 %v1520
    %v1599 = vunpack.c.h.b16 %v1520
    %v1600 = vunpack.c.l.b16 %v1521
    %v1601 = vunpack.c.h.b16 %v1521
    %v1602 = vunpack.c.l.b16 %v1522
    %v1603 = vunpack.c.h.b16 %v1522
    %v1604 = vunpack.c.l.b16 %v1523
    %v1605 = vunpack.c.h.b16 %v1523
    %v1606 = vunpack.c.l.b16 %v1524
    %v1607 = vunpack.c.h.b16 %v1524
    %v1608 = vunpack.c.l.b16 %v1525
    %v1609 = vunpack.c.h.b16 %v1525
    %v1610 = vunpack.c.l.b16 %v1526
    %v1611 = vunpack.c.h.b16 %v1526
    %v1612 = vunpack.c.l.b16 %v1527
    %v1613 = vunpack.c.h.b16 %v1527
    %v1614 = vunpack.c.l.b16 %v1528
    %v1615 = vunpack.c.h.b16 %v1528
    %v1616 = vunpack.c.l.b16 %v1529
    %v1617 = vunpack.c.h.b16 %v1529
    %v1618 = vunpack.c.l.b16 %v1530
    %v1619 = vunpack.c.h.b16 %v1530
    %v1620 = vunpack.c.l.b16 %v1531
    %v1621 = vunpack.c.h.b16 %v1531
    %v1622 = vunpack.c.l.b16 %v1532
    %v1623 = vunpack.c.h.b16 %v1532
    %v1624 = vunpack.c.l.b16 %v1533
    %v1625 = vunpack.c.h.b16 %v1533
    %v1626 = vunpack.c.l.b16 %v1534
    %v1627 = vunpack.c.h.b16 %v1534
    %v1628 = vunpack.c.l.b16 %v1535
    %v1629 = vunpack.c.h.b16 %v1535
    %v1630 = vunpack.c.l.b16 %v1536
    %v1631 = vunpack.c.h.b16 %v1536
    %v1632 = vunpack.c.l.b16 %v1537
    %v1633 = vunpack.c.h.b16 %v1537
    %v1634 = vpack.c.b16 %v1574, %v1570
    %v1635 = vpack.c.b16 %v1575, %v1571
    %v1636 = vpack.c.b16 %v1576, %v1572
    %v1637 = vpack.c.b16 %v1577, %v1573
    %v1638 = vpack.c.b16 %v1582, %v1578
    %v1639 = vpack.c.b16 %v1583, %v1579
    %v1640 = vpack.c.b16 %v1584, %v1580
    %v1641 = vpack.c.b16 %v1585, %v1581
    %v1642 = vpack.c.b16 %v1590, %v1586
    %v1643 = vpack.c.b16 %v1591, %v1587
    %v1644 = vpack.c.b16 %v1592, %v1588
    %v1645 = vpack.c.b16 %v1593, %v1589
    %v1646 = vpack.c.b16 %v1598, %v1594
    %v1647 = vpack.c.b16 %v1599, %v1595
    %v1648 = vpack.c.b16 %v1600, %v1596
    %v1649 = vpack.c.b16 %v1601, %v1597
    %v1650 = vpack.c.b16 %v1606, %v1602
    %v1651 = vpack.c.b16 %v1607, %v1603
    %v1652 = vpack.c.b16 %v1608, %v1604
    %v1653 = vpack.c.b16 %v1609, %v1605
    %v1654 = vpack.c.b16 %v1614, %v1610
    %v1655 = vpack.c.b16 %v1615, %v1611
    %v1656 = vpack.c.b16 %v1616, %v1612
    %v1657 = vpack.c.b16 %v1617, %v1613
    %v1658 = vpack.c.b16 %v1622, %v1618
    %v1659 = vpack.c.b16 %v1623, %v1619
    %v1660 = vpack.c.b16 %v1624, %v1620
    %v1661 = vpack.c.b16 %v1625, %v1621
    %v1662 = vpack.c.b16 %v1630, %v1626
    %v1663 = vpack.c.b16 %v1631, %v1627
    %v1664 = vpack.c.b16 %v1632, %v1628
    %v1665 = vpack.c.b16 %v1633, %v1629
    %1698 = vmatpush.bf16.msra.mxu0 %v1662
    %1699 = vmatpush.bf16.msra.mxu0 %v1658
    %1700 = vmatpush.bf16.msra.mxu0 %v1654
    %1701 = vmatpush.bf16.msra.mxu0 %v1650
    %1702 = vmatpush.bf16.msra.mxu0 %v1646
    %1703 = vmatpush.bf16.msra.mxu0 %v1642
    %1704 = vmatpush.bf16.msra.mxu0 %v1638
    %1705 = vmatpush.bf16.msra.mxu0 %v1634
    %1706 = vmatmul.bf16.gmra.mxu0 %v1505
    %v1707 = vpop.f32.mrf.mxu0
    %v1708 = vadd.f32 0.0, %v1707
    %v1709 = vpop.f32.mrf.mxu0
    %1710 = vdwg.mxu0
    %1711 = vmatpush.bf16.msra.mxu0 %v1663
    %1712 = vmatpush.bf16.msra.mxu0 %v1659
    %1713 = vmatpush.bf16.msra.mxu0 %v1655
    %1714 = vmatpush.bf16.msra.mxu0 %v1651
    %1715 = vmatpush.bf16.msra.mxu0 %v1647
    %1716 = vmatpush.bf16.msra.mxu0 %v1643
    %1717 = vmatpush.bf16.msra.mxu0 %v1639
    %1718 = vmatpush.bf16.msra.mxu0 %v1635
    %1719 = vmatmul.bf16.gmra.mxu0 %v1505
    %v1720 = vpop.f32.mrf.mxu0
    %v1721 = vadd.f32 0.0, %v1720
    %v1722 = vpop.f32.mrf.mxu0
    %1723 = vdwg.mxu0
    %1724 = vmatpush.bf16.msra.mxu0 %v1664
    %1725 = vmatpush.bf16.msra.mxu0 %v1660
    %1726 = vmatpush.bf16.msra.mxu0 %v1656
    %1727 = vmatpush.bf16.msra.mxu0 %v1652
    %1728 = vmatpush.bf16.msra.mxu0 %v1648
    %1729 = vmatpush.bf16.msra.mxu0 %v1644
    %1730 = vmatpush.bf16.msra.mxu0 %v1640
    %1731 = vmatpush.bf16.msra.mxu0 %v1636
    %1732 = vmatmul.bf16.gmra.mxu0 %v1505
    %v1733 = vpop.f32.mrf.mxu0
    %v1734 = vadd.f32 0.0, %v1733
    %v1735 = vpop.f32.mrf.mxu0
    %1736 = vdwg.mxu0
    %1737 = vmatpush.bf16.msra.mxu0 %v1665
    %1738 = vmatpush.bf16.msra.mxu0 %v1661
    %1739 = vmatpush.bf16.msra.mxu0 %v1657
    %1740 = vmatpush.bf16.msra.mxu0 %v1653
    %1741 = vmatpush.bf16.msra.mxu0 %v1649
    %1742 = vmatpush.bf16.msra.mxu0 %v1645
    %1743 = vmatpush.bf16.msra.mxu0 %v1641
    %1744 = vmatpush.bf16.msra.mxu0 %v1637
    %1745 = vmatmul.bf16.gmra.mxu0 %v1505
    %v1746 = vpop.f32.mrf.mxu0
    %v1747 = vadd.f32 0.0, %v1746
    %v1748 = vpop.f32.mrf.mxu0
    %1749 = vdwg.mxu0
    %v1750 = vadd.f32 %v1501, %v1708
    %v1751 = vadd.f32 %v1502, %v1721
    %v1752 = vadd.f32 %v1503, %v1734
    %v1753 = vadd.f32 %v1504, %v1747
    %v1754 = vxor.u32 %v1750, 2147483648
    %v1755 = vxor.u32 %v1751, 2147483648
    %v1756 = vxor.u32 %v1752, 2147483648
    %v1757 = vmul.f32 %v1754, 1.442695
    %v1758 = vpow.pop %v1757
    %v1759 = vmul.f32 %v1755, 1.442695
    %v1760 = vpow.pop %v1759
    %v1761 = vmul.f32 %v1756, 1.442695
    %v1762 = vpow.pop %v1761
    %v1763 = vadd.f32 %v1758, 1.0
    %v1764 = vadd.f32 %v1760, 1.0
    %v1765 = vadd.f32 %v1762, 1.0
    %v1766 = vrcp.pop %v1763
    %v1767 = vmul.f32 %v1763, %v1766
    %v1768 = vsub.f32 1.0, %v1767
    %v1769 = vmul.f32 %v1766, %v1768
    %v1770 = vadd.f32 %v1766, %v1769
    %vm1771 = vweird.f32 %v1763
    %vm1772 = vweird.f32 %v1766
    %vm1773 = vmor %vm1771, %vm1772
    %v1774 = vsel %vm1773, %v1766, %v1770
    %v1775 = vand.u32 2147483647, %v1763
    %vm1776 = vcmp.eq.f32.partialorder %v1775, 8.507059e+37
    %v1777 = vand.u32 %v1763, 2147483648
    %v1778 = vor.u32 1.1754944e-38, %v1777
    %v1779 = vsel %vm1776, %v1778, %v1774
    %v1780 = vmul.f32 1.0, %v1779
    %v1781 = vrcp.pop %v1764
    %v1782 = vmul.f32 %v1764, %v1781
    %v1783 = vsub.f32 1.0, %v1782
    %v1784 = vmul.f32 %v1781, %v1783
    %v1785 = vadd.f32 %v1781, %v1784
    %vm1786 = vweird.f32 %v1764
    %vm1787 = vweird.f32 %v1781
    %vm1788 = vmor %vm1786, %vm1787
    %v1789 = vsel %vm1788, %v1781, %v1785
    %v1790 = vand.u32 2147483647, %v1764
    %vm1791 = vcmp.eq.f32.partialorder %v1790, 8.507059e+37
    %v1792 = vand.u32 %v1764, 2147483648
    %v1793 = vor.u32 1.1754944e-38, %v1792
    %v1794 = vsel %vm1791, %v1793, %v1789
    %v1795 = vmul.f32 1.0, %v1794
    %v1796 = vrcp.pop %v1765
    %v1797 = vmul.f32 %v1765, %v1796
    %v1798 = vsub.f32 1.0, %v1797
    %v1799 = vmul.f32 %v1796, %v1798
    %v1800 = vadd.f32 %v1796, %v1799
    %vm1801 = vweird.f32 %v1765
    %vm1802 = vweird.f32 %v1796
    %vm1803 = vmor %vm1801, %vm1802
    %v1804 = vsel %vm1803, %v1796, %v1800
    %v1805 = vand.u32 2147483647, %v1765
    %vm1806 = vcmp.eq.f32.partialorder %v1805, 8.507059e+37
    %v1807 = vand.u32 %v1765, 2147483648
    %v1808 = vor.u32 1.1754944e-38, %v1807
    %v1809 = vsel %vm1806, %v1808, %v1804
    %v1810 = vmul.f32 1.0, %v1809
    %v1811 = vtanh.pop %v1753
    %v1812 = vmul.f32 %v1795, %v1497
    %v1813 = vmul.f32 %v1780, %v1811
    %v1814 = vadd.f32 %v1812, %v1813
    %v1815 = vtanh.pop %v1814
    %v1816 = vmul.f32 %v1810, %v1815
    %1817 = vst [vmem:[#allocation2 + $0x18] sm:$0xff] %v1816
    %v1818 = vld [vmem:[#allocation3 + $0x80] sm:$0xff]
    %v1819 = vld [vmem:[#allocation3 + $0x88] sm:$0xff]
    %v1820 = vld [vmem:[#allocation3 + $0x90] sm:$0xff]
    %v1821 = vld [vmem:[#allocation3 + $0x98] sm:$0xff]
    %v1822 = vpack.c.bf16 %v1816, %v1816
    %v1823 = vld [vmem:[#allocation6] sm:$0xff]
    %v1824 = vld [vmem:[#allocation6 + $0x8] sm:$0xff]
    %v1825 = vld [vmem:[#allocation6 + $0x10] sm:$0xff]
    %v1826 = vld [vmem:[#allocation6 + $0x18] sm:$0xff]
    %v1827 = vld [vmem:[#allocation6 + $0x20] sm:$0xff]
    %v1828 = vld [vmem:[#allocation6 + $0x28] sm:$0xff]
    %v1829 = vld [vmem:[#allocation6 + $0x30] sm:$0xff]
    %v1830 = vld [vmem:[#allocation6 + $0x38] sm:$0xff]
    %v1831 = vld [vmem:[#allocation6 + $0x40] sm:$0xff]
    %v1832 = vld [vmem:[#allocation6 + $0x48] sm:$0xff]
    %v1833 = vld [vmem:[#allocation6 + $0x50] sm:$0xff]
    %v1834 = vld [vmem:[#allocation6 + $0x58] sm:$0xff]
    %v1835 = vld [vmem:[#allocation6 + $0x60] sm:$0xff]
    %v1836 = vld [vmem:[#allocation6 + $0x68] sm:$0xff]
    %v1837 = vld [vmem:[#allocation6 + $0x70] sm:$0xff]
    %v1838 = vld [vmem:[#allocation6 + $0x78] sm:$0xff]
    %v1839 = vld [vmem:[#allocation6 + $0x80] sm:$0xff]
    %v1840 = vld [vmem:[#allocation6 + $0x88] sm:$0xff]
    %v1841 = vld [vmem:[#allocation6 + $0x90] sm:$0xff]
    %v1842 = vld [vmem:[#allocation6 + $0x98] sm:$0xff]
    %v1843 = vld [vmem:[#allocation6 + $0xa0] sm:$0xff]
    %v1844 = vld [vmem:[#allocation6 + $0xa8] sm:$0xff]
    %v1845 = vld [vmem:[#allocation6 + $0xb0] sm:$0xff]
    %v1846 = vld [vmem:[#allocation6 + $0xb8] sm:$0xff]
    %v1847 = vld [vmem:[#allocation6 + $0xc0] sm:$0xff]
    %v1848 = vld [vmem:[#allocation6 + $0xc8] sm:$0xff]
    %v1849 = vld [vmem:[#allocation6 + $0xd0] sm:$0xff]
    %v1850 = vld [vmem:[#allocation6 + $0xd8] sm:$0xff]
    %v1851 = vld [vmem:[#allocation6 + $0xe0] sm:$0xff]
    %v1852 = vld [vmem:[#allocation6 + $0xe8] sm:$0xff]
    %v1853 = vld [vmem:[#allocation6 + $0xf0] sm:$0xff]
    %v1854 = vld [vmem:[#allocation6 + $0xf8] sm:$0xff]
    %v1887 = vunpack.c.l.b16 %v1823
    %v1888 = vunpack.c.h.b16 %v1823
    %v1889 = vunpack.c.l.b16 %v1824
    %v1890 = vunpack.c.h.b16 %v1824
    %v1891 = vunpack.c.l.b16 %v1825
    %v1892 = vunpack.c.h.b16 %v1825
    %v1893 = vunpack.c.l.b16 %v1826
    %v1894 = vunpack.c.h.b16 %v1826
    %v1895 = vunpack.c.l.b16 %v1827
    %v1896 = vunpack.c.h.b16 %v1827
    %v1897 = vunpack.c.l.b16 %v1828
    %v1898 = vunpack.c.h.b16 %v1828
    %v1899 = vunpack.c.l.b16 %v1829
    %v1900 = vunpack.c.h.b16 %v1829
    %v1901 = vunpack.c.l.b16 %v1830
    %v1902 = vunpack.c.h.b16 %v1830
    %v1903 = vunpack.c.l.b16 %v1831
    %v1904 = vunpack.c.h.b16 %v1831
    %v1905 = vunpack.c.l.b16 %v1832
    %v1906 = vunpack.c.h.b16 %v1832
    %v1907 = vunpack.c.l.b16 %v1833
    %v1908 = vunpack.c.h.b16 %v1833
    %v1909 = vunpack.c.l.b16 %v1834
    %v1910 = vunpack.c.h.b16 %v1834
    %v1911 = vunpack.c.l.b16 %v1835
    %v1912 = vunpack.c.h.b16 %v1835
    %v1913 = vunpack.c.l.b16 %v1836
    %v1914 = vunpack.c.h.b16 %v1836
    %v1915 = vunpack.c.l.b16 %v1837
    %v1916 = vunpack.c.h.b16 %v1837
    %v1917 = vunpack.c.l.b16 %v1838
    %v1918 = vunpack.c.h.b16 %v1838
    %v1919 = vunpack.c.l.b16 %v1839
    %v1920 = vunpack.c.h.b16 %v1839
    %v1921 = vunpack.c.l.b16 %v1840
    %v1922 = vunpack.c.h.b16 %v1840
    %v1923 = vunpack.c.l.b16 %v1841
    %v1924 = vunpack.c.h.b16 %v1841
    %v1925 = vunpack.c.l.b16 %v1842
    %v1926 = vunpack.c.h.b16 %v1842
    %v1927 = vunpack.c.l.b16 %v1843
    %v1928 = vunpack.c.h.b16 %v1843
    %v1929 = vunpack.c.l.b16 %v1844
    %v1930 = vunpack.c.h.b16 %v1844
    %v1931 = vunpack.c.l.b16 %v1845
    %v1932 = vunpack.c.h.b16 %v1845
    %v1933 = vunpack.c.l.b16 %v1846
    %v1934 = vunpack.c.h.b16 %v1846
    %v1935 = vunpack.c.l.b16 %v1847
    %v1936 = vunpack.c.h.b16 %v1847
    %v1937 = vunpack.c.l.b16 %v1848
    %v1938 = vunpack.c.h.b16 %v1848
    %v1939 = vunpack.c.l.b16 %v1849
    %v1940 = vunpack.c.h.b16 %v1849
    %v1941 = vunpack.c.l.b16 %v1850
    %v1942 = vunpack.c.h.b16 %v1850
    %v1943 = vunpack.c.l.b16 %v1851
    %v1944 = vunpack.c.h.b16 %v1851
    %v1945 = vunpack.c.l.b16 %v1852
    %v1946 = vunpack.c.h.b16 %v1852
    %v1947 = vunpack.c.l.b16 %v1853
    %v1948 = vunpack.c.h.b16 %v1853
    %v1949 = vunpack.c.l.b16 %v1854
    %v1950 = vunpack.c.h.b16 %v1854
    %v1951 = vpack.c.b16 %v1891, %v1887
    %v1952 = vpack.c.b16 %v1892, %v1888
    %v1953 = vpack.c.b16 %v1893, %v1889
    %v1954 = vpack.c.b16 %v1894, %v1890
    %v1955 = vpack.c.b16 %v1899, %v1895
    %v1956 = vpack.c.b16 %v1900, %v1896
    %v1957 = vpack.c.b16 %v1901, %v1897
    %v1958 = vpack.c.b16 %v1902, %v1898
    %v1959 = vpack.c.b16 %v1907, %v1903
    %v1960 = vpack.c.b16 %v1908, %v1904
    %v1961 = vpack.c.b16 %v1909, %v1905
    %v1962 = vpack.c.b16 %v1910, %v1906
    %v1963 = vpack.c.b16 %v1915, %v1911
    %v1964 = vpack.c.b16 %v1916, %v1912
    %v1965 = vpack.c.b16 %v1917, %v1913
    %v1966 = vpack.c.b16 %v1918, %v1914
    %v1967 = vpack.c.b16 %v1923, %v1919
    %v1968 = vpack.c.b16 %v1924, %v1920
    %v1969 = vpack.c.b16 %v1925, %v1921
    %v1970 = vpack.c.b16 %v1926, %v1922
    %v1971 = vpack.c.b16 %v1931, %v1927
    %v1972 = vpack.c.b16 %v1932, %v1928
    %v1973 = vpack.c.b16 %v1933, %v1929
    %v1974 = vpack.c.b16 %v1934, %v1930
    %v1975 = vpack.c.b16 %v1939, %v1935
    %v1976 = vpack.c.b16 %v1940, %v1936
    %v1977 = vpack.c.b16 %v1941, %v1937
    %v1978 = vpack.c.b16 %v1942, %v1938
    %v1979 = vpack.c.b16 %v1947, %v1943
    %v1980 = vpack.c.b16 %v1948, %v1944
    %v1981 = vpack.c.b16 %v1949, %v1945
    %v1982 = vpack.c.b16 %v1950, %v1946
    %2015 = vmatpush.bf16.msra.mxu0 %v1979
    %2016 = vmatpush.bf16.msra.mxu0 %v1975
    %2017 = vmatpush.bf16.msra.mxu0 %v1971
    %2018 = vmatpush.bf16.msra.mxu0 %v1967
    %2019 = vmatpush.bf16.msra.mxu0 %v1963
    %2020 = vmatpush.bf16.msra.mxu0 %v1959
    %2021 = vmatpush.bf16.msra.mxu0 %v1955
    %2022 = vmatpush.bf16.msra.mxu0 %v1951
    %2023 = vmatmul.bf16.gmra.mxu0 %v1822
    %v2024 = vpop.f32.mrf.mxu0
    %v2025 = vadd.f32 0.0, %v2024
    %v2026 = vpop.f32.mrf.mxu0
    %2027 = vdwg.mxu0
    %2028 = vmatpush.bf16.msra.mxu0 %v1980
    %2029 = vmatpush.bf16.msra.mxu0 %v1976
    %2030 = vmatpush.bf16.msra.mxu0 %v1972
    %2031 = vmatpush.bf16.msra.mxu0 %v1968
    %2032 = vmatpush.bf16.msra.mxu0 %v1964
    %2033 = vmatpush.bf16.msra.mxu0 %v1960
    %2034 = vmatpush.bf16.msra.mxu0 %v1956
    %2035 = vmatpush.bf16.msra.mxu0 %v1952
    %2036 = vmatmul.bf16.gmra.mxu0 %v1822
    %v2037 = vpop.f32.mrf.mxu0
    %v2038 = vadd.f32 0.0, %v2037
    %v2039 = vpop.f32.mrf.mxu0
    %2040 = vdwg.mxu0
    %2041 = vmatpush.bf16.msra.mxu0 %v1981
    %2042 = vmatpush.bf16.msra.mxu0 %v1977
    %2043 = vmatpush.bf16.msra.mxu0 %v1973
    %2044 = vmatpush.bf16.msra.mxu0 %v1969
    %2045 = vmatpush.bf16.msra.mxu0 %v1965
    %2046 = vmatpush.bf16.msra.mxu0 %v1961
    %2047 = vmatpush.bf16.msra.mxu0 %v1957
    %2048 = vmatpush.bf16.msra.mxu0 %v1953
    %2049 = vmatmul.bf16.gmra.mxu0 %v1822
    %v2050 = vpop.f32.mrf.mxu0
    %v2051 = vadd.f32 0.0, %v2050
    %v2052 = vpop.f32.mrf.mxu0
    %2053 = vdwg.mxu0
    %2054 = vmatpush.bf16.msra.mxu0 %v1982
    %2055 = vmatpush.bf16.msra.mxu0 %v1978
    %2056 = vmatpush.bf16.msra.mxu0 %v1974
    %2057 = vmatpush.bf16.msra.mxu0 %v1970
    %2058 = vmatpush.bf16.msra.mxu0 %v1966
    %2059 = vmatpush.bf16.msra.mxu0 %v1962
    %2060 = vmatpush.bf16.msra.mxu0 %v1958
    %2061 = vmatpush.bf16.msra.mxu0 %v1954
    %2062 = vmatmul.bf16.gmra.mxu0 %v1822
    %v2063 = vpop.f32.mrf.mxu0
    %v2064 = vadd.f32 0.0, %v2063
    %v2065 = vpop.f32.mrf.mxu0
    %2066 = vdwg.mxu0
    %v2067 = vadd.f32 %v1818, %v2025
    %v2068 = vadd.f32 %v1819, %v2038
    %v2069 = vadd.f32 %v1820, %v2051
    %v2070 = vadd.f32 %v1821, %v2064
    %v2071 = vxor.u32 %v2067, 2147483648
    %v2072 = vxor.u32 %v2068, 2147483648
    %v2073 = vxor.u32 %v2069, 2147483648
    %v2074 = vmul.f32 %v2071, 1.442695
    %v2075 = vpow.pop %v2074
    %v2076 = vmul.f32 %v2072, 1.442695
    %v2077 = vpow.pop %v2076
    %v2078 = vmul.f32 %v2073, 1.442695
    %v2079 = vpow.pop %v2078
    %v2080 = vadd.f32 %v2075, 1.0
    %v2081 = vadd.f32 %v2077, 1.0
    %v2082 = vadd.f32 %v2079, 1.0
    %v2083 = vrcp.pop %v2080
    %v2084 = vmul.f32 %v2080, %v2083
    %v2085 = vsub.f32 1.0, %v2084
    %v2086 = vmul.f32 %v2083, %v2085
    %v2087 = vadd.f32 %v2083, %v2086
    %vm2088 = vweird.f32 %v2080
    %vm2089 = vweird.f32 %v2083
    %vm2090 = vmor %vm2088, %vm2089
    %v2091 = vsel %vm2090, %v2083, %v2087
    %v2092 = vand.u32 2147483647, %v2080
    %vm2093 = vcmp.eq.f32.partialorder %v2092, 8.507059e+37
    %v2094 = vand.u32 %v2080, 2147483648
    %v2095 = vor.u32 1.1754944e-38, %v2094
    %v2096 = vsel %vm2093, %v2095, %v2091
    %v2097 = vmul.f32 1.0, %v2096
    %v2098 = vrcp.pop %v2081
    %v2099 = vmul.f32 %v2081, %v2098
    %v2100 = vsub.f32 1.0, %v2099
    %v2101 = vmul.f32 %v2098, %v2100
    %v2102 = vadd.f32 %v2098, %v2101
    %vm2103 = vweird.f32 %v2081
    %vm2104 = vweird.f32 %v2098
    %vm2105 = vmor %vm2103, %vm2104
    %v2106 = vsel %vm2105, %v2098, %v2102
    %v2107 = vand.u32 2147483647, %v2081
    %vm2108 = vcmp.eq.f32.partialorder %v2107, 8.507059e+37
    %v2109 = vand.u32 %v2081, 2147483648
    %v2110 = vor.u32 1.1754944e-38, %v2109
    %v2111 = vsel %vm2108, %v2110, %v2106
    %v2112 = vmul.f32 1.0, %v2111
    %v2113 = vrcp.pop %v2082
    %v2114 = vmul.f32 %v2082, %v2113
    %v2115 = vsub.f32 1.0, %v2114
    %v2116 = vmul.f32 %v2113, %v2115
    %v2117 = vadd.f32 %v2113, %v2116
    %vm2118 = vweird.f32 %v2082
    %vm2119 = vweird.f32 %v2113
    %vm2120 = vmor %vm2118, %vm2119
    %v2121 = vsel %vm2120, %v2113, %v2117
    %v2122 = vand.u32 2147483647, %v2082
    %vm2123 = vcmp.eq.f32.partialorder %v2122, 8.507059e+37
    %v2124 = vand.u32 %v2082, 2147483648
    %v2125 = vor.u32 1.1754944e-38, %v2124
    %v2126 = vsel %vm2123, %v2125, %v2121
    %v2127 = vmul.f32 1.0, %v2126
    %v2128 = vtanh.pop %v2070
    %v2129 = vmul.f32 %v2112, %v1814
    %v2130 = vmul.f32 %v2097, %v2128
    %v2131 = vadd.f32 %v2129, %v2130
    %v2132 = vtanh.pop %v2131
    %v2133 = vmul.f32 %v2127, %v2132
    %2134 = vst [vmem:[#allocation2 + $0x20] sm:$0xff] %v2133
    %v2135 = vld [vmem:[#allocation3 + $0xa0] sm:$0xff]
    %v2136 = vld [vmem:[#allocation3 + $0xa8] sm:$0xff]
    %v2137 = vld [vmem:[#allocation3 + $0xb0] sm:$0xff]
    %v2138 = vld [vmem:[#allocation3 + $0xb8] sm:$0xff]
    %v2139 = vpack.c.bf16 %v2133, %v2133
    %v2140 = vld [vmem:[#allocation6] sm:$0xff]
    %v2141 = vld [vmem:[#allocation6 + $0x8] sm:$0xff]
    %v2142 = vld [vmem:[#allocation6 + $0x10] sm:$0xff]
    %v2143 = vld [vmem:[#allocation6 + $0x18] sm:$0xff]
    %v2144 = vld [vmem:[#allocation6 + $0x20] sm:$0xff]
    %v2145 = vld [vmem:[#allocation6 + $0x28] sm:$0xff]
    %v2146 = vld [vmem:[#allocation6 + $0x30] sm:$0xff]
    %v2147 = vld [vmem:[#allocation6 + $0x38] sm:$0xff]
    %v2148 = vld [vmem:[#allocation6 + $0x40] sm:$0xff]
    %v2149 = vld [vmem:[#allocation6 + $0x48] sm:$0xff]
    %v2150 = vld [vmem:[#allocation6 + $0x50] sm:$0xff]
    %v2151 = vld [vmem:[#allocation6 + $0x58] sm:$0xff]
    %v2152 = vld [vmem:[#allocation6 + $0x60] sm:$0xff]
    %v2153 = vld [vmem:[#allocation6 + $0x68] sm:$0xff]
    %v2154 = vld [vmem:[#allocation6 + $0x70] sm:$0xff]
    %v2155 = vld [vmem:[#allocation6 + $0x78] sm:$0xff]
    %v2156 = vld [vmem:[#allocation6 + $0x80] sm:$0xff]
    %v2157 = vld [vmem:[#allocation6 + $0x88] sm:$0xff]
    %v2158 = vld [vmem:[#allocation6 + $0x90] sm:$0xff]
    %v2159 = vld [vmem:[#allocation6 + $0x98] sm:$0xff]
    %v2160 = vld [vmem:[#allocation6 + $0xa0] sm:$0xff]
    %v2161 = vld [vmem:[#allocation6 + $0xa8] sm:$0xff]
    %v2162 = vld [vmem:[#allocation6 + $0xb0] sm:$0xff]
    %v2163 = vld [vmem:[#allocation6 + $0xb8] sm:$0xff]
    %v2164 = vld [vmem:[#allocation6 + $0xc0] sm:$0xff]
    %v2165 = vld [vmem:[#allocation6 + $0xc8] sm:$0xff]
    %v2166 = vld [vmem:[#allocation6 + $0xd0] sm:$0xff]
    %v2167 = vld [vmem:[#allocation6 + $0xd8] sm:$0xff]
    %v2168 = vld [vmem:[#allocation6 + $0xe0] sm:$0xff]
    %v2169 = vld [vmem:[#allocation6 + $0xe8] sm:$0xff]
    %v2170 = vld [vmem:[#allocation6 + $0xf0] sm:$0xff]
    %v2171 = vld [vmem:[#allocation6 + $0xf8] sm:$0xff]
    %v2204 = vunpack.c.l.b16 %v2140
    %v2205 = vunpack.c.h.b16 %v2140
    %v2206 = vunpack.c.l.b16 %v2141
    %v2207 = vunpack.c.h.b16 %v2141
    %v2208 = vunpack.c.l.b16 %v2142
    %v2209 = vunpack.c.h.b16 %v2142
    %v2210 = vunpack.c.l.b16 %v2143
    %v2211 = vunpack.c.h.b16 %v2143
    %v2212 = vunpack.c.l.b16 %v2144
    %v2213 = vunpack.c.h.b16 %v2144
    %v2214 = vunpack.c.l.b16 %v2145
    %v2215 = vunpack.c.h.b16 %v2145
    %v2216 = vunpack.c.l.b16 %v2146
    %v2217 = vunpack.c.h.b16 %v2146
    %v2218 = vunpack.c.l.b16 %v2147
    %v2219 = vunpack.c.h.b16 %v2147
    %v2220 = vunpack.c.l.b16 %v2148
    %v2221 = vunpack.c.h.b16 %v2148
    %v2222 = vunpack.c.l.b16 %v2149
    %v2223 = vunpack.c.h.b16 %v2149
    %v2224 = vunpack.c.l.b16 %v2150
    %v2225 = vunpack.c.h.b16 %v2150
    %v2226 = vunpack.c.l.b16 %v2151
    %v2227 = vunpack.c.h.b16 %v2151
    %v2228 = vunpack.c.l.b16 %v2152
    %v2229 = vunpack.c.h.b16 %v2152
    %v2230 = vunpack.c.l.b16 %v2153
    %v2231 = vunpack.c.h.b16 %v2153
    %v2232 = vunpack.c.l.b16 %v2154
    %v2233 = vunpack.c.h.b16 %v2154
    %v2234 = vunpack.c.l.b16 %v2155
    %v2235 = vunpack.c.h.b16 %v2155
    %v2236 = vunpack.c.l.b16 %v2156
    %v2237 = vunpack.c.h.b16 %v2156
    %v2238 = vunpack.c.l.b16 %v2157
    %v2239 = vunpack.c.h.b16 %v2157
    %v2240 = vunpack.c.l.b16 %v2158
    %v2241 = vunpack.c.h.b16 %v2158
    %v2242 = vunpack.c.l.b16 %v2159
    %v2243 = vunpack.c.h.b16 %v2159
    %v2244 = vunpack.c.l.b16 %v2160
    %v2245 = vunpack.c.h.b16 %v2160
    %v2246 = vunpack.c.l.b16 %v2161
    %v2247 = vunpack.c.h.b16 %v2161
    %v2248 = vunpack.c.l.b16 %v2162
    %v2249 = vunpack.c.h.b16 %v2162
    %v2250 = vunpack.c.l.b16 %v2163
    %v2251 = vunpack.c.h.b16 %v2163
    %v2252 = vunpack.c.l.b16 %v2164
    %v2253 = vunpack.c.h.b16 %v2164
    %v2254 = vunpack.c.l.b16 %v2165
    %v2255 = vunpack.c.h.b16 %v2165
    %v2256 = vunpack.c.l.b16 %v2166
    %v2257 = vunpack.c.h.b16 %v2166
    %v2258 = vunpack.c.l.b16 %v2167
    %v2259 = vunpack.c.h.b16 %v2167
    %v2260 = vunpack.c.l.b16 %v2168
    %v2261 = vunpack.c.h.b16 %v2168
    %v2262 = vunpack.c.l.b16 %v2169
    %v2263 = vunpack.c.h.b16 %v2169
    %v2264 = vunpack.c.l.b16 %v2170
    %v2265 = vunpack.c.h.b16 %v2170
    %v2266 = vunpack.c.l.b16 %v2171
    %v2267 = vunpack.c.h.b16 %v2171
    %v2268 = vpack.c.b16 %v2208, %v2204
    %v2269 = vpack.c.b16 %v2209, %v2205
    %v2270 = vpack.c.b16 %v2210, %v2206
    %v2271 = vpack.c.b16 %v2211, %v2207
    %v2272 = vpack.c.b16 %v2216, %v2212
    %v2273 = vpack.c.b16 %v2217, %v2213
    %v2274 = vpack.c.b16 %v2218, %v2214
    %v2275 = vpack.c.b16 %v2219, %v2215
    %v2276 = vpack.c.b16 %v2224, %v2220
    %v2277 = vpack.c.b16 %v2225, %v2221
    %v2278 = vpack.c.b16 %v2226, %v2222
    %v2279 = vpack.c.b16 %v2227, %v2223
    %v2280 = vpack.c.b16 %v2232, %v2228
    %v2281 = vpack.c.b16 %v2233, %v2229
    %v2282 = vpack.c.b16 %v2234, %v2230
    %v2283 = vpack.c.b16 %v2235, %v2231
    %v2284 = vpack.c.b16 %v2240, %v2236
    %v2285 = vpack.c.b16 %v2241, %v2237
    %v2286 = vpack.c.b16 %v2242, %v2238
    %v2287 = vpack.c.b16 %v2243, %v2239
    %v2288 = vpack.c.b16 %v2248, %v2244
    %v2289 = vpack.c.b16 %v2249, %v2245
    %v2290 = vpack.c.b16 %v2250, %v2246
    %v2291 = vpack.c.b16 %v2251, %v2247
    %v2292 = vpack.c.b16 %v2256, %v2252
    %v2293 = vpack.c.b16 %v2257, %v2253
    %v2294 = vpack.c.b16 %v2258, %v2254
    %v2295 = vpack.c.b16 %v2259, %v2255
    %v2296 = vpack.c.b16 %v2264, %v2260
    %v2297 = vpack.c.b16 %v2265, %v2261
    %v2298 = vpack.c.b16 %v2266, %v2262
    %v2299 = vpack.c.b16 %v2267, %v2263
    %2332 = vmatpush.bf16.msra.mxu0 %v2296
    %2333 = vmatpush.bf16.msra.mxu0 %v2292
    %2334 = vmatpush.bf16.msra.mxu0 %v2288
    %2335 = vmatpush.bf16.msra.mxu0 %v2284
    %2336 = vmatpush.bf16.msra.mxu0 %v2280
    %2337 = vmatpush.bf16.msra.mxu0 %v2276
    %2338 = vmatpush.bf16.msra.mxu0 %v2272
    %2339 = vmatpush.bf16.msra.mxu0 %v2268
    %2340 = vmatmul.bf16.gmra.mxu0 %v2139
    %v2341 = vpop.f32.mrf.mxu0
    %v2342 = vadd.f32 0.0, %v2341
    %v2343 = vpop.f32.mrf.mxu0
    %2344 = vdwg.mxu0
    %2345 = vmatpush.bf16.msra.mxu0 %v2297
    %2346 = vmatpush.bf16.msra.mxu0 %v2293
    %2347 = vmatpush.bf16.msra.mxu0 %v2289
    %2348 = vmatpush.bf16.msra.mxu0 %v2285
    %2349 = vmatpush.bf16.msra.mxu0 %v2281
    %2350 = vmatpush.bf16.msra.mxu0 %v2277
    %2351 = vmatpush.bf16.msra.mxu0 %v2273
    %2352 = vmatpush.bf16.msra.mxu0 %v2269
    %2353 = vmatmul.bf16.gmra.mxu0 %v2139
    %v2354 = vpop.f32.mrf.mxu0
    %v2355 = vadd.f32 0.0, %v2354
    %v2356 = vpop.f32.mrf.mxu0
    %2357 = vdwg.mxu0
    %2358 = vmatpush.bf16.msra.mxu0 %v2298
    %2359 = vmatpush.bf16.msra.mxu0 %v2294
    %2360 = vmatpush.bf16.msra.mxu0 %v2290
    %2361 = vmatpush.bf16.msra.mxu0 %v2286
    %2362 = vmatpush.bf16.msra.mxu0 %v2282
    %2363 = vmatpush.bf16.msra.mxu0 %v2278
    %2364 = vmatpush.bf16.msra.mxu0 %v2274
    %2365 = vmatpush.bf16.msra.mxu0 %v2270
    %2366 = vmatmul.bf16.gmra.mxu0 %v2139
    %v2367 = vpop.f32.mrf.mxu0
    %v2368 = vadd.f32 0.0, %v2367
    %v2369 = vpop.f32.mrf.mxu0
    %2370 = vdwg.mxu0
    %2371 = vmatpush.bf16.msra.mxu0 %v2299
    %2372 = vmatpush.bf16.msra.mxu0 %v2295
    %2373 = vmatpush.bf16.msra.mxu0 %v2291
    %2374 = vmatpush.bf16.msra.mxu0 %v2287
    %2375 = vmatpush.bf16.msra.mxu0 %v2283
    %2376 = vmatpush.bf16.msra.mxu0 %v2279
    %2377 = vmatpush.bf16.msra.mxu0 %v2275
    %2378 = vmatpush.bf16.msra.mxu0 %v2271
    %2379 = vmatmul.bf16.gmra.mxu0 %v2139
    %v2380 = vpop.f32.mrf.mxu0
    %v2381 = vadd.f32 0.0, %v2380
    %v2382 = vpop.f32.mrf.mxu0
    %2383 = vdwg.mxu0
    %v2384 = vadd.f32 %v2135, %v2342
    %v2385 = vadd.f32 %v2136, %v2355
    %v2386 = vadd.f32 %v2137, %v2368
    %v2387 = vadd.f32 %v2138, %v2381
    %v2388 = vxor.u32 %v2384, 2147483648
    %v2389 = vxor.u32 %v2385, 2147483648
    %v2390 = vxor.u32 %v2386, 2147483648
    %v2391 = vmul.f32 %v2388, 1.442695
    %v2392 = vpow.pop %v2391
    %v2393 = vmul.f32 %v2389, 1.442695
    %v2394 = vpow.pop %v2393
    %v2395 = vmul.f32 %v2390, 1.442695
    %v2396 = vpow.pop %v2395
    %v2397 = vadd.f32 %v2392, 1.0
    %v2398 = vadd.f32 %v2394, 1.0
    %v2399 = vadd.f32 %v2396, 1.0
    %v2400 = vrcp.pop %v2397
    %v2401 = vmul.f32 %v2397, %v2400
    %v2402 = vsub.f32 1.0, %v2401
    %v2403 = vmul.f32 %v2400, %v2402
    %v2404 = vadd.f32 %v2400, %v2403
    %vm2405 = vweird.f32 %v2397
    %vm2406 = vweird.f32 %v2400
    %vm2407 = vmor %vm2405, %vm2406
    %v2408 = vsel %vm2407, %v2400, %v2404
    %v2409 = vand.u32 2147483647, %v2397
    %vm2410 = vcmp.eq.f32.partialorder %v2409, 8.507059e+37
    %v2411 = vand.u32 %v2397, 2147483648
    %v2412 = vor.u32 1.1754944e-38, %v2411
    %v2413 = vsel %vm2410, %v2412, %v2408
    %v2414 = vmul.f32 1.0, %v2413
    %v2415 = vrcp.pop %v2398
    %v2416 = vmul.f32 %v2398, %v2415
    %v2417 = vsub.f32 1.0, %v2416
    %v2418 = vmul.f32 %v2415, %v2417
    %v2419 = vadd.f32 %v2415, %v2418
    %vm2420 = vweird.f32 %v2398
    %vm2421 = vweird.f32 %v2415
    %vm2422 = vmor %vm2420, %vm2421
    %v2423 = vsel %vm2422, %v2415, %v2419
    %v2424 = vand.u32 2147483647, %v2398
    %vm2425 = vcmp.eq.f32.partialorder %v2424, 8.507059e+37
    %v2426 = vand.u32 %v2398, 2147483648
    %v2427 = vor.u32 1.1754944e-38, %v2426
    %v2428 = vsel %vm2425, %v2427, %v2423
    %v2429 = vmul.f32 1.0, %v2428
    %v2430 = vrcp.pop %v2399
    %v2431 = vmul.f32 %v2399, %v2430
    %v2432 = vsub.f32 1.0, %v2431
    %v2433 = vmul.f32 %v2430, %v2432
    %v2434 = vadd.f32 %v2430, %v2433
    %vm2435 = vweird.f32 %v2399
    %vm2436 = vweird.f32 %v2430
    %vm2437 = vmor %vm2435, %vm2436
    %v2438 = vsel %vm2437, %v2430, %v2434
    %v2439 = vand.u32 2147483647, %v2399
    %vm2440 = vcmp.eq.f32.partialorder %v2439, 8.507059e+37
    %v2441 = vand.u32 %v2399, 2147483648
    %v2442 = vor.u32 1.1754944e-38, %v2441
    %v2443 = vsel %vm2440, %v2442, %v2438
    %v2444 = vmul.f32 1.0, %v2443
    %v2445 = vtanh.pop %v2387
    %v2446 = vmul.f32 %v2429, %v2131
    %v2447 = vmul.f32 %v2414, %v2445
    %v2448 = vadd.f32 %v2446, %v2447
    %v2449 = vtanh.pop %v2448
    %v2450 = vmul.f32 %v2444, %v2449
    %2451 = vst [vmem:[#allocation2 + $0x28] sm:$0xff] %v2450
    %v2452 = vld [vmem:[#allocation3 + $0xc0] sm:$0xff]
    %v2453 = vld [vmem:[#allocation3 + $0xc8] sm:$0xff]
    %v2454 = vld [vmem:[#allocation3 + $0xd0] sm:$0xff]
    %v2455 = vld [vmem:[#allocation3 + $0xd8] sm:$0xff]
    %v2456 = vpack.c.bf16 %v2450, %v2450
    %v2457 = vld [vmem:[#allocation6] sm:$0xff]
    %v2458 = vld [vmem:[#allocation6 + $0x8] sm:$0xff]
    %v2459 = vld [vmem:[#allocation6 + $0x10] sm:$0xff]
    %v2460 = vld [vmem:[#allocation6 + $0x18] sm:$0xff]
    %v2461 = vld [vmem:[#allocation6 + $0x20] sm:$0xff]
    %v2462 = vld [vmem:[#allocation6 + $0x28] sm:$0xff]
    %v2463 = vld [vmem:[#allocation6 + $0x30] sm:$0xff]
    %v2464 = vld [vmem:[#allocation6 + $0x38] sm:$0xff]
    %v2465 = vld [vmem:[#allocation6 + $0x40] sm:$0xff]
    %v2466 = vld [vmem:[#allocation6 + $0x48] sm:$0xff]
    %v2467 = vld [vmem:[#allocation6 + $0x50] sm:$0xff]
    %v2468 = vld [vmem:[#allocation6 + $0x58] sm:$0xff]
    %v2469 = vld [vmem:[#allocation6 + $0x60] sm:$0xff]
    %v2470 = vld [vmem:[#allocation6 + $0x68] sm:$0xff]
    %v2471 = vld [vmem:[#allocation6 + $0x70] sm:$0xff]
    %v2472 = vld [vmem:[#allocation6 + $0x78] sm:$0xff]
    %v2473 = vld [vmem:[#allocation6 + $0x80] sm:$0xff]
    %v2474 = vld [vmem:[#allocation6 + $0x88] sm:$0xff]
    %v2475 = vld [vmem:[#allocation6 + $0x90] sm:$0xff]
    %v2476 = vld [vmem:[#allocation6 + $0x98] sm:$0xff]
    %v2477 = vld [vmem:[#allocation6 + $0xa0] sm:$0xff]
    %v2478 = vld [vmem:[#allocation6 + $0xa8] sm:$0xff]
    %v2479 = vld [vmem:[#allocation6 + $0xb0] sm:$0xff]
    %v2480 = vld [vmem:[#allocation6 + $0xb8] sm:$0xff]
    %v2481 = vld [vmem:[#allocation6 + $0xc0] sm:$0xff]
    %v2482 = vld [vmem:[#allocation6 + $0xc8] sm:$0xff]
    %v2483 = vld [vmem:[#allocation6 + $0xd0] sm:$0xff]
    %v2484 = vld [vmem:[#allocation6 + $0xd8] sm:$0xff]
    %v2485 = vld [vmem:[#allocation6 + $0xe0] sm:$0xff]
    %v2486 = vld [vmem:[#allocation6 + $0xe8] sm:$0xff]
    %v2487 = vld [vmem:[#allocation6 + $0xf0] sm:$0xff]
    %v2488 = vld [vmem:[#allocation6 + $0xf8] sm:$0xff]
    %v2521 = vunpack.c.l.b16 %v2457
    %v2522 = vunpack.c.h.b16 %v2457
    %v2523 = vunpack.c.l.b16 %v2458
    %v2524 = vunpack.c.h.b16 %v2458
    %v2525 = vunpack.c.l.b16 %v2459
    %v2526 = vunpack.c.h.b16 %v2459
    %v2527 = vunpack.c.l.b16 %v2460
    %v2528 = vunpack.c.h.b16 %v2460
    %v2529 = vunpack.c.l.b16 %v2461
    %v2530 = vunpack.c.h.b16 %v2461
    %v2531 = vunpack.c.l.b16 %v2462
    %v2532 = vunpack.c.h.b16 %v2462
    %v2533 = vunpack.c.l.b16 %v2463
    %v2534 = vunpack.c.h.b16 %v2463
    %v2535 = vunpack.c.l.b16 %v2464
    %v2536 = vunpack.c.h.b16 %v2464
    %v2537 = vunpack.c.l.b16 %v2465
    %v2538 = vunpack.c.h.b16 %v2465
    %v2539 = vunpack.c.l.b16 %v2466
    %v2540 = vunpack.c.h.b16 %v2466
    %v2541 = vunpack.c.l.b16 %v2467
    %v2542 = vunpack.c.h.b16 %v2467
    %v2543 = vunpack.c.l.b16 %v2468
    %v2544 = vunpack.c.h.b16 %v2468
    %v2545 = vunpack.c.l.b16 %v2469
    %v2546 = vunpack.c.h.b16 %v2469
    %v2547 = vunpack.c.l.b16 %v2470
    %v2548 = vunpack.c.h.b16 %v2470
    %v2549 = vunpack.c.l.b16 %v2471
    %v2550 = vunpack.c.h.b16 %v2471
    %v2551 = vunpack.c.l.b16 %v2472
    %v2552 = vunpack.c.h.b16 %v2472
    %v2553 = vunpack.c.l.b16 %v2473
    %v2554 = vunpack.c.h.b16 %v2473
    %v2555 = vunpack.c.l.b16 %v2474
    %v2556 = vunpack.c.h.b16 %v2474
    %v2557 = vunpack.c.l.b16 %v2475
    %v2558 = vunpack.c.h.b16 %v2475
    %v2559 = vunpack.c.l.b16 %v2476
    %v2560 = vunpack.c.h.b16 %v2476
    %v2561 = vunpack.c.l.b16 %v2477
    %v2562 = vunpack.c.h.b16 %v2477
    %v2563 = vunpack.c.l.b16 %v2478
    %v2564 = vunpack.c.h.b16 %v2478
    %v2565 = vunpack.c.l.b16 %v2479
    %v2566 = vunpack.c.h.b16 %v2479
    %v2567 = vunpack.c.l.b16 %v2480
    %v2568 = vunpack.c.h.b16 %v2480
    %v2569 = vunpack.c.l.b16 %v2481
    %v2570 = vunpack.c.h.b16 %v2481
    %v2571 = vunpack.c.l.b16 %v2482
    %v2572 = vunpack.c.h.b16 %v2482
    %v2573 = vunpack.c.l.b16 %v2483
    %v2574 = vunpack.c.h.b16 %v2483
    %v2575 = vunpack.c.l.b16 %v2484
    %v2576 = vunpack.c.h.b16 %v2484
    %v2577 = vunpack.c.l.b16 %v2485
    %v2578 = vunpack.c.h.b16 %v2485
    %v2579 = vunpack.c.l.b16 %v2486
    %v2580 = vunpack.c.h.b16 %v2486
    %v2581 = vunpack.c.l.b16 %v2487
    %v2582 = vunpack.c.h.b16 %v2487
    %v2583 = vunpack.c.l.b16 %v2488
    %v2584 = vunpack.c.h.b16 %v2488
    %v2585 = vpack.c.b16 %v2525, %v2521
    %v2586 = vpack.c.b16 %v2526, %v2522
    %v2587 = vpack.c.b16 %v2527, %v2523
    %v2588 = vpack.c.b16 %v2528, %v2524
    %v2589 = vpack.c.b16 %v2533, %v2529
    %v2590 = vpack.c.b16 %v2534, %v2530
    %v2591 = vpack.c.b16 %v2535, %v2531
    %v2592 = vpack.c.b16 %v2536, %v2532
    %v2593 = vpack.c.b16 %v2541, %v2537
    %v2594 = vpack.c.b16 %v2542, %v2538
    %v2595 = vpack.c.b16 %v2543, %v2539
    %v2596 = vpack.c.b16 %v2544, %v2540
    %v2597 = vpack.c.b16 %v2549, %v2545
    %v2598 = vpack.c.b16 %v2550, %v2546
    %v2599 = vpack.c.b16 %v2551, %v2547
    %v2600 = vpack.c.b16 %v2552, %v2548
    %v2601 = vpack.c.b16 %v2557, %v2553
    %v2602 = vpack.c.b16 %v2558, %v2554
    %v2603 = vpack.c.b16 %v2559, %v2555
    %v2604 = vpack.c.b16 %v2560, %v2556
    %v2605 = vpack.c.b16 %v2565, %v2561
    %v2606 = vpack.c.b16 %v2566, %v2562
    %v2607 = vpack.c.b16 %v2567, %v2563
    %v2608 = vpack.c.b16 %v2568, %v2564
    %v2609 = vpack.c.b16 %v2573, %v2569
    %v2610 = vpack.c.b16 %v2574, %v2570
    %v2611 = vpack.c.b16 %v2575, %v2571
    %v2612 = vpack.c.b16 %v2576, %v2572
    %v2613 = vpack.c.b16 %v2581, %v2577
    %v2614 = vpack.c.b16 %v2582, %v2578
    %v2615 = vpack.c.b16 %v2583, %v2579
    %v2616 = vpack.c.b16 %v2584, %v2580
    %2649 = vmatpush.bf16.msra.mxu0 %v2613
    %2650 = vmatpush.bf16.msra.mxu0 %v2609
    %2651 = vmatpush.bf16.msra.mxu0 %v2605
    %2652 = vmatpush.bf16.msra.mxu0 %v2601
    %2653 = vmatpush.bf16.msra.mxu0 %v2597
    %2654 = vmatpush.bf16.msra.mxu0 %v2593
    %2655 = vmatpush.bf16.msra.mxu0 %v2589
    %2656 = vmatpush.bf16.msra.mxu0 %v2585
    %2657 = vmatmul.bf16.gmra.mxu0 %v2456
    %v2658 = vpop.f32.mrf.mxu0
    %v2659 = vadd.f32 0.0, %v2658
    %v2660 = vpop.f32.mrf.mxu0
    %2661 = vdwg.mxu0
    %2662 = vmatpush.bf16.msra.mxu0 %v2614
    %2663 = vmatpush.bf16.msra.mxu0 %v2610
    %2664 = vmatpush.bf16.msra.mxu0 %v2606
    %2665 = vmatpush.bf16.msra.mxu0 %v2602
    %2666 = vmatpush.bf16.msra.mxu0 %v2598
    %2667 = vmatpush.bf16.msra.mxu0 %v2594
    %2668 = vmatpush.bf16.msra.mxu0 %v2590
    %2669 = vmatpush.bf16.msra.mxu0 %v2586
    %2670 = vmatmul.bf16.gmra.mxu0 %v2456
    %v2671 = vpop.f32.mrf.mxu0
    %v2672 = vadd.f32 0.0, %v2671
    %v2673 = vpop.f32.mrf.mxu0
    %2674 = vdwg.mxu0
    %2675 = vmatpush.bf16.msra.mxu0 %v2615
    %2676 = vmatpush.bf16.msra.mxu0 %v2611
    %2677 = vmatpush.bf16.msra.mxu0 %v2607
    %2678 = vmatpush.bf16.msra.mxu0 %v2603
    %2679 = vmatpush.bf16.msra.mxu0 %v2599
    %2680 = vmatpush.bf16.msra.mxu0 %v2595
    %2681 = vmatpush.bf16.msra.mxu0 %v2591
    %2682 = vmatpush.bf16.msra.mxu0 %v2587
    %2683 = vmatmul.bf16.gmra.mxu0 %v2456
    %v2684 = vpop.f32.mrf.mxu0
    %v2685 = vadd.f32 0.0, %v2684
    %v2686 = vpop.f32.mrf.mxu0
    %2687 = vdwg.mxu0
    %2688 = vmatpush.bf16.msra.mxu0 %v2616
    %2689 = vmatpush.bf16.msra.mxu0 %v2612
    %2690 = vmatpush.bf16.msra.mxu0 %v2608
    %2691 = vmatpush.bf16.msra.mxu0 %v2604
    %2692 = vmatpush.bf16.msra.mxu0 %v2600
    %2693 = vmatpush.bf16.msra.mxu0 %v2596
    %2694 = vmatpush.bf16.msra.mxu0 %v2592
    %2695 = vmatpush.bf16.msra.mxu0 %v2588
    %2696 = vmatmul.bf16.gmra.mxu0 %v2456
    %v2697 = vpop.f32.mrf.mxu0
    %v2698 = vadd.f32 0.0, %v2697
    %v2699 = vpop.f32.mrf.mxu0
    %2700 = vdwg.mxu0
    %v2701 = vadd.f32 %v2452, %v2659
    %v2702 = vadd.f32 %v2453, %v2672
    %v2703 = vadd.f32 %v2454, %v2685
    %v2704 = vadd.f32 %v2455, %v2698
    %v2705 = vxor.u32 %v2701, 2147483648
    %v2706 = vxor.u32 %v2702, 2147483648
    %v2707 = vxor.u32 %v2703, 2147483648
    %v2708 = vmul.f32 %v2705, 1.442695
    %v2709 = vpow.pop %v2708
    %v2710 = vmul.f32 %v2706, 1.442695
    %v2711 = vpow.pop %v2710
    %v2712 = vmul.f32 %v2707, 1.442695
    %v2713 = vpow.pop %v2712
    %v2714 = vadd.f32 %v2709, 1.0
    %v2715 = vadd.f32 %v2711, 1.0
    %v2716 = vadd.f32 %v2713, 1.0
    %v2717 = vrcp.pop %v2714
    %v2718 = vmul.f32 %v2714, %v2717
    %v2719 = vsub.f32 1.0, %v2718
    %v2720 = vmul.f32 %v2717, %v2719
    %v2721 = vadd.f32 %v2717, %v2720
    %vm2722 = vweird.f32 %v2714
    %vm2723 = vweird.f32 %v2717
    %vm2724 = vmor %vm2722, %vm2723
    %v2725 = vsel %vm2724, %v2717, %v2721
    %v2726 = vand.u32 2147483647, %v2714
    %vm2727 = vcmp.eq.f32.partialorder %v2726, 8.507059e+37
    %v2728 = vand.u32 %v2714, 2147483648
    %v2729 = vor.u32 1.1754944e-38, %v2728
    %v2730 = vsel %vm2727, %v2729, %v2725
    %v2731 = vmul.f32 1.0, %v2730
    %v2732 = vrcp.pop %v2715
    %v2733 = vmul.f32 %v2715, %v2732
    %v2734 = vsub.f32 1.0, %v2733
    %v2735 = vmul.f32 %v2732, %v2734
    %v2736 = vadd.f32 %v2732, %v2735
    %vm2737 = vweird.f32 %v2715
    %vm2738 = vweird.f32 %v2732
    %vm2739 = vmor %vm2737, %vm2738
    %v2740 = vsel %vm2739, %v2732, %v2736
    %v2741 = vand.u32 2147483647, %v2715
    %vm2742 = vcmp.eq.f32.partialorder %v2741, 8.507059e+37
    %v2743 = vand.u32 %v2715, 2147483648
    %v2744 = vor.u32 1.1754944e-38, %v2743
    %v2745 = vsel %vm2742, %v2744, %v2740
    %v2746 = vmul.f32 1.0, %v2745
    %v2747 = vrcp.pop %v2716
    %v2748 = vmul.f32 %v2716, %v2747
    %v2749 = vsub.f32 1.0, %v2748
    %v2750 = vmul.f32 %v2747, %v2749
    %v2751 = vadd.f32 %v2747, %v2750
    %vm2752 = vweird.f32 %v2716
    %vm2753 = vweird.f32 %v2747
    %vm2754 = vmor %vm2752, %vm2753
    %v2755 = vsel %vm2754, %v2747, %v2751
    %v2756 = vand.u32 2147483647, %v2716
    %vm2757 = vcmp.eq.f32.partialorder %v2756, 8.507059e+37
    %v2758 = vand.u32 %v2716, 2147483648
    %v2759 = vor.u32 1.1754944e-38, %v2758
    %v2760 = vsel %vm2757, %v2759, %v2755
    %v2761 = vmul.f32 1.0, %v2760
    %v2762 = vtanh.pop %v2704
    %v2763 = vmul.f32 %v2746, %v2448
    %v2764 = vmul.f32 %v2731, %v2762
    %v2765 = vadd.f32 %v2763, %v2764
    %v2766 = vtanh.pop %v2765
    %v2767 = vmul.f32 %v2761, %v2766
    %2768 = vst [vmem:[#allocation2 + $0x30] sm:$0xff] %v2767
    %v2769 = vld [vmem:[#allocation3 + $0xe0] sm:$0xff]
    %v2770 = vld [vmem:[#allocation3 + $0xe8] sm:$0xff]
    %v2771 = vld [vmem:[#allocation3 + $0xf0] sm:$0xff]
    %v2772 = vld [vmem:[#allocation3 + $0xf8] sm:$0xff]
    %v2773 = vpack.c.bf16 %v2767, %v2767
    %v2774 = vld [vmem:[#allocation6] sm:$0xff]
    %v2775 = vld [vmem:[#allocation6 + $0x8] sm:$0xff]
    %v2776 = vld [vmem:[#allocation6 + $0x10] sm:$0xff]
    %v2777 = vld [vmem:[#allocation6 + $0x18] sm:$0xff]
    %v2778 = vld [vmem:[#allocation6 + $0x20] sm:$0xff]
    %v2779 = vld [vmem:[#allocation6 + $0x28] sm:$0xff]
    %v2780 = vld [vmem:[#allocation6 + $0x30] sm:$0xff]
    %v2781 = vld [vmem:[#allocation6 + $0x38] sm:$0xff]
    %v2782 = vld [vmem:[#allocation6 + $0x40] sm:$0xff]
    %v2783 = vld [vmem:[#allocation6 + $0x48] sm:$0xff]
    %v2784 = vld [vmem:[#allocation6 + $0x50] sm:$0xff]
    %v2785 = vld [vmem:[#allocation6 + $0x58] sm:$0xff]
    %v2786 = vld [vmem:[#allocation6 + $0x60] sm:$0xff]
    %v2787 = vld [vmem:[#allocation6 + $0x68] sm:$0xff]
    %v2788 = vld [vmem:[#allocation6 + $0x70] sm:$0xff]
    %v2789 = vld [vmem:[#allocation6 + $0x78] sm:$0xff]
    %v2790 = vld [vmem:[#allocation6 + $0x80] sm:$0xff]
    %v2791 = vld [vmem:[#allocation6 + $0x88] sm:$0xff]
    %v2792 = vld [vmem:[#allocation6 + $0x90] sm:$0xff]
    %v2793 = vld [vmem:[#allocation6 + $0x98] sm:$0xff]
    %v2794 = vld [vmem:[#allocation6 + $0xa0] sm:$0xff]
    %v2795 = vld [vmem:[#allocation6 + $0xa8] sm:$0xff]
    %v2796 = vld [vmem:[#allocation6 + $0xb0] sm:$0xff]
    %v2797 = vld [vmem:[#allocation6 + $0xb8] sm:$0xff]
    %v2798 = vld [vmem:[#allocation6 + $0xc0] sm:$0xff]
    %v2799 = vld [vmem:[#allocation6 + $0xc8] sm:$0xff]
    %v2800 = vld [vmem:[#allocation6 + $0xd0] sm:$0xff]
    %v2801 = vld [vmem:[#allocation6 + $0xd8] sm:$0xff]
    %v2802 = vld [vmem:[#allocation6 + $0xe0] sm:$0xff]
    %v2803 = vld [vmem:[#allocation6 + $0xe8] sm:$0xff]
    %v2804 = vld [vmem:[#allocation6 + $0xf0] sm:$0xff]
    %v2805 = vld [vmem:[#allocation6 + $0xf8] sm:$0xff]
    %v2838 = vunpack.c.l.b16 %v2774
    %v2839 = vunpack.c.h.b16 %v2774
    %v2840 = vunpack.c.l.b16 %v2775
    %v2841 = vunpack.c.h.b16 %v2775
    %v2842 = vunpack.c.l.b16 %v2776
    %v2843 = vunpack.c.h.b16 %v2776
    %v2844 = vunpack.c.l.b16 %v2777
    %v2845 = vunpack.c.h.b16 %v2777
    %v2846 = vunpack.c.l.b16 %v2778
    %v2847 = vunpack.c.h.b16 %v2778
    %v2848 = vunpack.c.l.b16 %v2779
    %v2849 = vunpack.c.h.b16 %v2779
    %v2850 = vunpack.c.l.b16 %v2780
    %v2851 = vunpack.c.h.b16 %v2780
    %v2852 = vunpack.c.l.b16 %v2781
    %v2853 = vunpack.c.h.b16 %v2781
    %v2854 = vunpack.c.l.b16 %v2782
    %v2855 = vunpack.c.h.b16 %v2782
    %v2856 = vunpack.c.l.b16 %v2783
    %v2857 = vunpack.c.h.b16 %v2783
    %v2858 = vunpack.c.l.b16 %v2784
    %v2859 = vunpack.c.h.b16 %v2784
    %v2860 = vunpack.c.l.b16 %v2785
    %v2861 = vunpack.c.h.b16 %v2785
    %v2862 = vunpack.c.l.b16 %v2786
    %v2863 = vunpack.c.h.b16 %v2786
    %v2864 = vunpack.c.l.b16 %v2787
    %v2865 = vunpack.c.h.b16 %v2787
    %v2866 = vunpack.c.l.b16 %v2788
    %v2867 = vunpack.c.h.b16 %v2788
    %v2868 = vunpack.c.l.b16 %v2789
    %v2869 = vunpack.c.h.b16 %v2789
    %v2870 = vunpack.c.l.b16 %v2790
    %v2871 = vunpack.c.h.b16 %v2790
    %v2872 = vunpack.c.l.b16 %v2791
    %v2873 = vunpack.c.h.b16 %v2791
    %v2874 = vunpack.c.l.b16 %v2792
    %v2875 = vunpack.c.h.b16 %v2792
    %v2876 = vunpack.c.l.b16 %v2793
    %v2877 = vunpack.c.h.b16 %v2793
    %v2878 = vunpack.c.l.b16 %v2794
    %v2879 = vunpack.c.h.b16 %v2794
    %v2880 = vunpack.c.l.b16 %v2795
    %v2881 = vunpack.c.h.b16 %v2795
    %v2882 = vunpack.c.l.b16 %v2796
    %v2883 = vunpack.c.h.b16 %v2796
    %v2884 = vunpack.c.l.b16 %v2797
    %v2885 = vunpack.c.h.b16 %v2797
    %v2886 = vunpack.c.l.b16 %v2798
    %v2887 = vunpack.c.h.b16 %v2798
    %v2888 = vunpack.c.l.b16 %v2799
    %v2889 = vunpack.c.h.b16 %v2799
    %v2890 = vunpack.c.l.b16 %v2800
    %v2891 = vunpack.c.h.b16 %v2800
    %v2892 = vunpack.c.l.b16 %v2801
    %v2893 = vunpack.c.h.b16 %v2801
    %v2894 = vunpack.c.l.b16 %v2802
    %v2895 = vunpack.c.h.b16 %v2802
    %v2896 = vunpack.c.l.b16 %v2803
    %v2897 = vunpack.c.h.b16 %v2803
    %v2898 = vunpack.c.l.b16 %v2804
    %v2899 = vunpack.c.h.b16 %v2804
    %v2900 = vunpack.c.l.b16 %v2805
    %v2901 = vunpack.c.h.b16 %v2805
    %v2902 = vpack.c.b16 %v2842, %v2838
    %v2903 = vpack.c.b16 %v2843, %v2839
    %v2904 = vpack.c.b16 %v2844, %v2840
    %v2905 = vpack.c.b16 %v2845, %v2841
    %v2906 = vpack.c.b16 %v2850, %v2846
    %v2907 = vpack.c.b16 %v2851, %v2847
    %v2908 = vpack.c.b16 %v2852, %v2848
    %v2909 = vpack.c.b16 %v2853, %v2849
    %v2910 = vpack.c.b16 %v2858, %v2854
    %v2911 = vpack.c.b16 %v2859, %v2855
    %v2912 = vpack.c.b16 %v2860, %v2856
    %v2913 = vpack.c.b16 %v2861, %v2857
    %v2914 = vpack.c.b16 %v2866, %v2862
    %v2915 = vpack.c.b16 %v2867, %v2863
    %v2916 = vpack.c.b16 %v2868, %v2864
    %v2917 = vpack.c.b16 %v2869, %v2865
    %v2918 = vpack.c.b16 %v2874, %v2870
    %v2919 = vpack.c.b16 %v2875, %v2871
    %v2920 = vpack.c.b16 %v2876, %v2872
    %v2921 = vpack.c.b16 %v2877, %v2873
    %v2922 = vpack.c.b16 %v2882, %v2878
    %v2923 = vpack.c.b16 %v2883, %v2879
    %v2924 = vpack.c.b16 %v2884, %v2880
    %v2925 = vpack.c.b16 %v2885, %v2881
    %v2926 = vpack.c.b16 %v2890, %v2886
    %v2927 = vpack.c.b16 %v2891, %v2887
    %v2928 = vpack.c.b16 %v2892, %v2888
    %v2929 = vpack.c.b16 %v2893, %v2889
    %v2930 = vpack.c.b16 %v2898, %v2894
    %v2931 = vpack.c.b16 %v2899, %v2895
    %v2932 = vpack.c.b16 %v2900, %v2896
    %v2933 = vpack.c.b16 %v2901, %v2897
    %2966 = vmatpush.bf16.msra.mxu0 %v2930
    %2967 = vmatpush.bf16.msra.mxu0 %v2926
    %2968 = vmatpush.bf16.msra.mxu0 %v2922
    %2969 = vmatpush.bf16.msra.mxu0 %v2918
    %2970 = vmatpush.bf16.msra.mxu0 %v2914
    %2971 = vmatpush.bf16.msra.mxu0 %v2910
    %2972 = vmatpush.bf16.msra.mxu0 %v2906
    %2973 = vmatpush.bf16.msra.mxu0 %v2902
    %2974 = vmatmul.bf16.gmra.mxu0 %v2773
    %v2975 = vpop.f32.mrf.mxu0
    %v2976 = vadd.f32 0.0, %v2975
    %v2977 = vpop.f32.mrf.mxu0
    %2978 = vdwg.mxu0
    %2979 = vmatpush.bf16.msra.mxu0 %v2931
    %2980 = vmatpush.bf16.msra.mxu0 %v2927
    %2981 = vmatpush.bf16.msra.mxu0 %v2923
    %2982 = vmatpush.bf16.msra.mxu0 %v2919
    %2983 = vmatpush.bf16.msra.mxu0 %v2915
    %2984 = vmatpush.bf16.msra.mxu0 %v2911
    %2985 = vmatpush.bf16.msra.mxu0 %v2907
    %2986 = vmatpush.bf16.msra.mxu0 %v2903
    %2987 = vmatmul.bf16.gmra.mxu0 %v2773
    %v2988 = vpop.f32.mrf.mxu0
    %v2989 = vadd.f32 0.0, %v2988
    %v2990 = vpop.f32.mrf.mxu0
    %2991 = vdwg.mxu0
    %2992 = vmatpush.bf16.msra.mxu0 %v2932
    %2993 = vmatpush.bf16.msra.mxu0 %v2928
    %2994 = vmatpush.bf16.msra.mxu0 %v2924
    %2995 = vmatpush.bf16.msra.mxu0 %v2920
    %2996 = vmatpush.bf16.msra.mxu0 %v2916
    %2997 = vmatpush.bf16.msra.mxu0 %v2912
    %2998 = vmatpush.bf16.msra.mxu0 %v2908
    %2999 = vmatpush.bf16.msra.mxu0 %v2904
    %3000 = vmatmul.bf16.gmra.mxu0 %v2773
    %v3001 = vpop.f32.mrf.mxu0
    %v3002 = vadd.f32 0.0, %v3001
    %v3003 = vpop.f32.mrf.mxu0
    %3004 = vdwg.mxu0
    %3005 = vmatpush.bf16.msra.mxu0 %v2933
    %3006 = vmatpush.bf16.msra.mxu0 %v2929
    %3007 = vmatpush.bf16.msra.mxu0 %v2925
    %3008 = vmatpush.bf16.msra.mxu0 %v2921
    %3009 = vmatpush.bf16.msra.mxu0 %v2917
    %3010 = vmatpush.bf16.msra.mxu0 %v2913
    %3011 = vmatpush.bf16.msra.mxu0 %v2909
    %3012 = vmatpush.bf16.msra.mxu0 %v2905
    %3013 = vmatmul.bf16.gmra.mxu0 %v2773
    %v3014 = vpop.f32.mrf.mxu0
    %v3015 = vadd.f32 0.0, %v3014
    %v3016 = vpop.f32.mrf.mxu0
    %3017 = vdwg.mxu0
    %v3018 = vadd.f32 %v2769, %v2976
    %v3019 = vadd.f32 %v2770, %v2989
    %v3020 = vadd.f32 %v2771, %v3002
    %v3021 = vadd.f32 %v2772, %v3015
    %v3022 = vxor.u32 %v3018, 2147483648
    %v3023 = vxor.u32 %v3019, 2147483648
    %v3024 = vxor.u32 %v3020, 2147483648
    %v3025 = vmul.f32 %v3022, 1.442695
    %v3026 = vpow.pop %v3025
    %v3027 = vmul.f32 %v3023, 1.442695
    %v3028 = vpow.pop %v3027
    %v3029 = vmul.f32 %v3024, 1.442695
    %v3030 = vpow.pop %v3029
    %v3031 = vadd.f32 %v3026, 1.0
    %v3032 = vadd.f32 %v3028, 1.0
    %v3033 = vadd.f32 %v3030, 1.0
    %v3034 = vrcp.pop %v3031
    %v3035 = vmul.f32 %v3031, %v3034
    %v3036 = vsub.f32 1.0, %v3035
    %v3037 = vmul.f32 %v3034, %v3036
    %v3038 = vadd.f32 %v3034, %v3037
    %vm3039 = vweird.f32 %v3031
    %vm3040 = vweird.f32 %v3034
    %vm3041 = vmor %vm3039, %vm3040
    %v3042 = vsel %vm3041, %v3034, %v3038
    %v3043 = vand.u32 2147483647, %v3031
    %vm3044 = vcmp.eq.f32.partialorder %v3043, 8.507059e+37
    %v3045 = vand.u32 %v3031, 2147483648
    %v3046 = vor.u32 1.1754944e-38, %v3045
    %v3047 = vsel %vm3044, %v3046, %v3042
    %v3048 = vmul.f32 1.0, %v3047
    %v3049 = vrcp.pop %v3032
    %v3050 = vmul.f32 %v3032, %v3049
    %v3051 = vsub.f32 1.0, %v3050
    %v3052 = vmul.f32 %v3049, %v3051
    %v3053 = vadd.f32 %v3049, %v3052
    %vm3054 = vweird.f32 %v3032
    %vm3055 = vweird.f32 %v3049
    %vm3056 = vmor %vm3054, %vm3055
    %v3057 = vsel %vm3056, %v3049, %v3053
    %v3058 = vand.u32 2147483647, %v3032
    %vm3059 = vcmp.eq.f32.partialorder %v3058, 8.507059e+37
    %v3060 = vand.u32 %v3032, 2147483648
    %v3061 = vor.u32 1.1754944e-38, %v3060
    %v3062 = vsel %vm3059, %v3061, %v3057
    %v3063 = vmul.f32 1.0, %v3062
    %v3064 = vrcp.pop %v3033
    %v3065 = vmul.f32 %v3033, %v3064
    %v3066 = vsub.f32 1.0, %v3065
    %v3067 = vmul.f32 %v3064, %v3066
    %v3068 = vadd.f32 %v3064, %v3067
    %vm3069 = vweird.f32 %v3033
    %vm3070 = vweird.f32 %v3064
    %vm3071 = vmor %vm3069, %vm3070
    %v3072 = vsel %vm3071, %v3064, %v3068
    %v3073 = vand.u32 2147483647, %v3033
    %vm3074 = vcmp.eq.f32.partialorder %v3073, 8.507059e+37
    %v3075 = vand.u32 %v3033, 2147483648
    %v3076 = vor.u32 1.1754944e-38, %v3075
    %v3077 = vsel %vm3074, %v3076, %v3072
    %v3078 = vmul.f32 1.0, %v3077
    %v3079 = vtanh.pop %v3021
    %v3080 = vmul.f32 %v3063, %v2765
    %v3081 = vmul.f32 %v3048, %v3079
    %v3082 = vadd.f32 %v3080, %v3081
    %v3083 = vtanh.pop %v3082
    %v3084 = vmul.f32 %v3078, %v3083
    %3085 = vst [vmem:[#allocation2 + $0x38] sm:$0xff] %v3084
    %3086 = vst [vmem:[%s15] sm:$0xff] %v3084
    %3087 = vst [vmem:[%s16] sm:$0xff] %v3082
    %v3088 = vld [vmem:[#allocation2] sm:$0xff]
    %v3089 = vld [vmem:[#allocation2 + $0x8] sm:$0xff]
    %v3090 = vld [vmem:[#allocation2 + $0x10] sm:$0xff]
    %v3091 = vld [vmem:[#allocation2 + $0x18] sm:$0xff]
    %v3092 = vld [vmem:[#allocation2 + $0x20] sm:$0xff]
    %v3093 = vld [vmem:[#allocation2 + $0x28] sm:$0xff]
    %v3094 = vld [vmem:[#allocation2 + $0x30] sm:$0xff]
    %v3095 = vld [vmem:[#allocation2 + $0x38] sm:$0xff]
    %v3096 = vpack.c.bf16 %v3089, %v3088
    %v3097 = vpack.c.bf16 %v3091, %v3090
    %v3098 = vpack.c.bf16 %v3093, %v3092
    %v3099 = vpack.c.bf16 %v3095, %v3094
    %v3100 = vld [vmem:[#allocation8] sm:$0xff]
    %v3101 = vld [vmem:[#allocation8 + $0x8] sm:$0xff]
    %v3102 = vld [vmem:[#allocation8 + $0x10] sm:$0xff]
    %v3103 = vld [vmem:[#allocation8 + $0x18] sm:$0xff]
    %v3104 = vld [vmem:[#allocation8 + $0x20] sm:$0xff]
    %v3105 = vld [vmem:[#allocation8 + $0x28] sm:$0xff]
    %v3106 = vld [vmem:[#allocation8 + $0x30] sm:$0xff]
    %v3107 = vld [vmem:[#allocation8 + $0x38] sm:$0xff]
    %v3108 = vld [vmem:[#allocation8 + $0x40] sm:$0xff]
    %v3109 = vld [vmem:[#allocation8 + $0x48] sm:$0xff]
    %v3110 = vld [vmem:[#allocation8 + $0x50] sm:$0xff]
    %v3111 = vld [vmem:[#allocation8 + $0x58] sm:$0xff]
    %v3112 = vld [vmem:[#allocation8 + $0x60] sm:$0xff]
    %v3113 = vld [vmem:[#allocation8 + $0x68] sm:$0xff]
    %v3114 = vld [vmem:[#allocation8 + $0x70] sm:$0xff]
    %v3115 = vld [vmem:[#allocation8 + $0x78] sm:$0xff]
    %v3116 = vld [vmem:[#allocation8 + $0x80] sm:$0xff]
    %v3117 = vld [vmem:[#allocation8 + $0x88] sm:$0xff]
    %v3118 = vld [vmem:[#allocation8 + $0x90] sm:$0xff]
    %v3119 = vld [vmem:[#allocation8 + $0x98] sm:$0xff]
    %v3120 = vld [vmem:[#allocation8 + $0xa0] sm:$0xff]
    %v3121 = vld [vmem:[#allocation8 + $0xa8] sm:$0xff]
    %v3122 = vld [vmem:[#allocation8 + $0xb0] sm:$0xff]
    %v3123 = vld [vmem:[#allocation8 + $0xb8] sm:$0xff]
    %v3124 = vld [vmem:[#allocation8 + $0xc0] sm:$0xff]
    %v3125 = vld [vmem:[#allocation8 + $0xc8] sm:$0xff]
    %v3126 = vld [vmem:[#allocation8 + $0xd0] sm:$0xff]
    %v3127 = vld [vmem:[#allocation8 + $0xd8] sm:$0xff]
    %v3128 = vld [vmem:[#allocation8 + $0xe0] sm:$0xff]
    %v3129 = vld [vmem:[#allocation8 + $0xe8] sm:$0xff]
    %v3130 = vld [vmem:[#allocation8 + $0xf0] sm:$0xff]
    %v3131 = vld [vmem:[#allocation8 + $0xf8] sm:$0xff]
    %v3132 = vld [vmem:[%s6] sm:$0xf]
    %v3134 = vperm.slane %v3132, 0
    %v3135 = vperm.slane %v3132, 1
    %v3136 = vperm.slane %v3132, 2
    %v3137 = vperm.slane %v3132, 3
    %v3174 = vunpack.c.l.b16 %v3100
    %v3175 = vunpack.c.h.b16 %v3100
    %v3176 = vunpack.c.l.b16 %v3101
    %v3177 = vunpack.c.h.b16 %v3101
    %v3178 = vunpack.c.l.b16 %v3102
    %v3179 = vunpack.c.h.b16 %v3102
    %v3180 = vunpack.c.l.b16 %v3103
    %v3181 = vunpack.c.h.b16 %v3103
    %v3182 = vunpack.c.l.b16 %v3104
    %v3183 = vunpack.c.h.b16 %v3104
    %v3184 = vunpack.c.l.b16 %v3105
    %v3185 = vunpack.c.h.b16 %v3105
    %v3186 = vunpack.c.l.b16 %v3106
    %v3187 = vunpack.c.h.b16 %v3106
    %v3188 = vunpack.c.l.b16 %v3107
    %v3189 = vunpack.c.h.b16 %v3107
    %v3190 = vunpack.c.l.b16 %v3108
    %v3191 = vunpack.c.h.b16 %v3108
    %v3192 = vunpack.c.l.b16 %v3109
    %v3193 = vunpack.c.h.b16 %v3109
    %v3194 = vunpack.c.l.b16 %v3110
    %v3195 = vunpack.c.h.b16 %v3110
    %v3196 = vunpack.c.l.b16 %v3111
    %v3197 = vunpack.c.h.b16 %v3111
    %v3198 = vunpack.c.l.b16 %v3112
    %v3199 = vunpack.c.h.b16 %v3112
    %v3200 = vunpack.c.l.b16 %v3113
    %v3201 = vunpack.c.h.b16 %v3113
    %v3202 = vunpack.c.l.b16 %v3114
    %v3203 = vunpack.c.h.b16 %v3114
    %v3204 = vunpack.c.l.b16 %v3115
    %v3205 = vunpack.c.h.b16 %v3115
    %v3206 = vunpack.c.l.b16 %v3116
    %v3207 = vunpack.c.h.b16 %v3116
    %v3208 = vunpack.c.l.b16 %v3117
    %v3209 = vunpack.c.h.b16 %v3117
    %v3210 = vunpack.c.l.b16 %v3118
    %v3211 = vunpack.c.h.b16 %v3118
    %v3212 = vunpack.c.l.b16 %v3119
    %v3213 = vunpack.c.h.b16 %v3119
    %v3214 = vunpack.c.l.b16 %v3120
    %v3215 = vunpack.c.h.b16 %v3120
    %v3216 = vunpack.c.l.b16 %v3121
    %v3217 = vunpack.c.h.b16 %v3121
    %v3218 = vunpack.c.l.b16 %v3122
    %v3219 = vunpack.c.h.b16 %v3122
    %v3220 = vunpack.c.l.b16 %v3123
    %v3221 = vunpack.c.h.b16 %v3123
    %v3222 = vunpack.c.l.b16 %v3124
    %v3223 = vunpack.c.h.b16 %v3124
    %v3224 = vunpack.c.l.b16 %v3125
    %v3225 = vunpack.c.h.b16 %v3125
    %v3226 = vunpack.c.l.b16 %v3126
    %v3227 = vunpack.c.h.b16 %v3126
    %v3228 = vunpack.c.l.b16 %v3127
    %v3229 = vunpack.c.h.b16 %v3127
    %v3230 = vunpack.c.l.b16 %v3128
    %v3231 = vunpack.c.h.b16 %v3128
    %v3232 = vunpack.c.l.b16 %v3129
    %v3233 = vunpack.c.h.b16 %v3129
    %v3234 = vunpack.c.l.b16 %v3130
    %v3235 = vunpack.c.h.b16 %v3130
    %v3236 = vunpack.c.l.b16 %v3131
    %v3237 = vunpack.c.h.b16 %v3131
    %v3238 = vpack.c.b16 %v3178, %v3174
    %v3239 = vpack.c.b16 %v3179, %v3175
    %v3240 = vpack.c.b16 %v3180, %v3176
    %v3241 = vpack.c.b16 %v3181, %v3177
    %v3242 = vpack.c.b16 %v3186, %v3182
    %v3243 = vpack.c.b16 %v3187, %v3183
    %v3244 = vpack.c.b16 %v3188, %v3184
    %v3245 = vpack.c.b16 %v3189, %v3185
    %v3246 = vpack.c.b16 %v3194, %v3190
    %v3247 = vpack.c.b16 %v3195, %v3191
    %v3248 = vpack.c.b16 %v3196, %v3192
    %v3249 = vpack.c.b16 %v3197, %v3193
    %v3250 = vpack.c.b16 %v3202, %v3198
    %v3251 = vpack.c.b16 %v3203, %v3199
    %v3252 = vpack.c.b16 %v3204, %v3200
    %v3253 = vpack.c.b16 %v3205, %v3201
    %v3254 = vpack.c.b16 %v3210, %v3206
    %v3255 = vpack.c.b16 %v3211, %v3207
    %v3256 = vpack.c.b16 %v3212, %v3208
    %v3257 = vpack.c.b16 %v3213, %v3209
    %v3258 = vpack.c.b16 %v3218, %v3214
    %v3259 = vpack.c.b16 %v3219, %v3215
    %v3260 = vpack.c.b16 %v3220, %v3216
    %v3261 = vpack.c.b16 %v3221, %v3217
    %v3262 = vpack.c.b16 %v3226, %v3222
    %v3263 = vpack.c.b16 %v3227, %v3223
    %v3264 = vpack.c.b16 %v3228, %v3224
    %v3265 = vpack.c.b16 %v3229, %v3225
    %v3266 = vpack.c.b16 %v3234, %v3230
    %v3267 = vpack.c.b16 %v3235, %v3231
    %v3268 = vpack.c.b16 %v3236, %v3232
    %v3269 = vpack.c.b16 %v3237, %v3233
    %3302 = vmatpush.bf16.msra.mxu0 %v3266
    %3303 = vmatpush.bf16.msra.mxu0 %v3262
    %3304 = vmatpush.bf16.msra.mxu0 %v3258
    %3305 = vmatpush.bf16.msra.mxu0 %v3254
    %3306 = vmatpush.bf16.msra.mxu0 %v3250
    %3307 = vmatpush.bf16.msra.mxu0 %v3246
    %3308 = vmatpush.bf16.msra.mxu0 %v3242
    %3309 = vmatpush.bf16.msra.mxu0 %v3238
    %3310 = vmatmul.bf16.gmra.mxu0 %v3096
    %v3311 = vpop.f32.mrf.mxu0
    %v3312 = vadd.f32 %v3134, %v3311
    %v3313 = vpop.f32.mrf.mxu0
    %v3314 = vadd.f32 %v3134, %v3313
    %3315 = vmatmul.bf16.gmra.mxu0 %v3097
    %v3316 = vpop.f32.mrf.mxu0
    %v3317 = vadd.f32 %v3134, %v3316
    %v3318 = vpop.f32.mrf.mxu0
    %v3319 = vadd.f32 %v3134, %v3318
    %3320 = vmatmul.bf16.gmra.mxu0 %v3098
    %v3321 = vpop.f32.mrf.mxu0
    %v3322 = vadd.f32 %v3134, %v3321
    %v3323 = vpop.f32.mrf.mxu0
    %v3324 = vadd.f32 %v3134, %v3323
    %3325 = vmatmul.bf16.gmra.mxu0 %v3099
    %v3326 = vpop.f32.mrf.mxu0
    %v3327 = vadd.f32 %v3134, %v3326
    %v3328 = vpop.f32.mrf.mxu0
    %v3329 = vadd.f32 %v3134, %v3328
    %3330 = vdwg.mxu0
    %3331 = vmatpush.bf16.msra.mxu0 %v3267
    %3332 = vmatpush.bf16.msra.mxu0 %v3263
    %3333 = vmatpush.bf16.msra.mxu0 %v3259
    %3334 = vmatpush.bf16.msra.mxu0 %v3255
    %3335 = vmatpush.bf16.msra.mxu0 %v3251
    %3336 = vmatpush.bf16.msra.mxu0 %v3247
    %3337 = vmatpush.bf16.msra.mxu0 %v3243
    %3338 = vmatpush.bf16.msra.mxu0 %v3239
    %3339 = vmatmul.bf16.gmra.mxu0 %v3096
    %v3340 = vpop.f32.mrf.mxu0
    %v3341 = vadd.f32 %v3135, %v3340
    %v3342 = vpop.f32.mrf.mxu0
    %v3343 = vadd.f32 %v3135, %v3342
    %3344 = vmatmul.bf16.gmra.mxu0 %v3097
    %v3345 = vpop.f32.mrf.mxu0
    %v3346 = vadd.f32 %v3135, %v3345
    %v3347 = vpop.f32.mrf.mxu0
    %v3348 = vadd.f32 %v3135, %v3347
    %3349 = vmatmul.bf16.gmra.mxu0 %v3098
    %v3350 = vpop.f32.mrf.mxu0
    %v3351 = vadd.f32 %v3135, %v3350
    %v3352 = vpop.f32.mrf.mxu0
    %v3353 = vadd.f32 %v3135, %v3352
    %3354 = vmatmul.bf16.gmra.mxu0 %v3099
    %v3355 = vpop.f32.mrf.mxu0
    %v3356 = vadd.f32 %v3135, %v3355
    %v3357 = vpop.f32.mrf.mxu0
    %v3358 = vadd.f32 %v3135, %v3357
    %3359 = vdwg.mxu0
    %3360 = vmatpush.bf16.msra.mxu0 %v3268
    %3361 = vmatpush.bf16.msra.mxu0 %v3264
    %3362 = vmatpush.bf16.msra.mxu0 %v3260
    %3363 = vmatpush.bf16.msra.mxu0 %v3256
    %3364 = vmatpush.bf16.msra.mxu0 %v3252
    %3365 = vmatpush.bf16.msra.mxu0 %v3248
    %3366 = vmatpush.bf16.msra.mxu0 %v3244
    %3367 = vmatpush.bf16.msra.mxu0 %v3240
    %3368 = vmatmul.bf16.gmra.mxu0 %v3096
    %v3369 = vpop.f32.mrf.mxu0
    %v3370 = vadd.f32 %v3136, %v3369
    %v3371 = vpop.f32.mrf.mxu0
    %v3372 = vadd.f32 %v3136, %v3371
    %3373 = vmatmul.bf16.gmra.mxu0 %v3097
    %v3374 = vpop.f32.mrf.mxu0
    %v3375 = vadd.f32 %v3136, %v3374
    %v3376 = vpop.f32.mrf.mxu0
    %v3377 = vadd.f32 %v3136, %v3376
    %3378 = vmatmul.bf16.gmra.mxu0 %v3098
    %v3379 = vpop.f32.mrf.mxu0
    %v3380 = vadd.f32 %v3136, %v3379
    %v3381 = vpop.f32.mrf.mxu0
    %v3382 = vadd.f32 %v3136, %v3381
    %3383 = vmatmul.bf16.gmra.mxu0 %v3099
    %v3384 = vpop.f32.mrf.mxu0
    %v3385 = vadd.f32 %v3136, %v3384
    %v3386 = vpop.f32.mrf.mxu0
    %v3387 = vadd.f32 %v3136, %v3386
    %3388 = vdwg.mxu0
    %3389 = vmatpush.bf16.msra.mxu0 %v3269
    %3390 = vmatpush.bf16.msra.mxu0 %v3265
    %3391 = vmatpush.bf16.msra.mxu0 %v3261
    %3392 = vmatpush.bf16.msra.mxu0 %v3257
    %3393 = vmatpush.bf16.msra.mxu0 %v3253
    %3394 = vmatpush.bf16.msra.mxu0 %v3249
    %3395 = vmatpush.bf16.msra.mxu0 %v3245
    %3396 = vmatpush.bf16.msra.mxu0 %v3241
    %3397 = vmatmul.bf16.gmra.mxu0 %v3096
    %v3398 = vpop.f32.mrf.mxu0
    %v3399 = vadd.f32 %v3137, %v3398
    %v3400 = vpop.f32.mrf.mxu0
    %v3401 = vadd.f32 %v3137, %v3400
    %3402 = vmatmul.bf16.gmra.mxu0 %v3097
    %v3403 = vpop.f32.mrf.mxu0
    %v3404 = vadd.f32 %v3137, %v3403
    %v3405 = vpop.f32.mrf.mxu0
    %v3406 = vadd.f32 %v3137, %v3405
    %3407 = vmatmul.bf16.gmra.mxu0 %v3098
    %v3408 = vpop.f32.mrf.mxu0
    %v3409 = vadd.f32 %v3137, %v3408
    %v3410 = vpop.f32.mrf.mxu0
    %v3411 = vadd.f32 %v3137, %v3410
    %3412 = vmatmul.bf16.gmra.mxu0 %v3099
    %v3413 = vpop.f32.mrf.mxu0
    %v3414 = vadd.f32 %v3137, %v3413
    %v3415 = vpop.f32.mrf.mxu0
    %v3416 = vadd.f32 %v3137, %v3415
    %3417 = vdwg.mxu0
    %3418 = vst [vmem:[#allocation3] sm:$0xff] %v3312
    %3419 = vst [vmem:[#allocation3 + $0x8] sm:$0xff] %v3341
    %3420 = vst [vmem:[#allocation3 + $0x10] sm:$0xff] %v3370
    %3421 = vst [vmem:[#allocation3 + $0x18] sm:$0xff] %v3399
    %3422 = vst [vmem:[#allocation3 + $0x20] sm:$0xff] %v3314
    %3423 = vst [vmem:[#allocation3 + $0x28] sm:$0xff] %v3343
    %3424 = vst [vmem:[#allocation3 + $0x30] sm:$0xff] %v3372
    %3425 = vst [vmem:[#allocation3 + $0x38] sm:$0xff] %v3401
    %3426 = vst [vmem:[#allocation3 + $0x40] sm:$0xff] %v3317
    %3427 = vst [vmem:[#allocation3 + $0x48] sm:$0xff] %v3346
    %3428 = vst [vmem:[#allocation3 + $0x50] sm:$0xff] %v3375
    %3429 = vst [vmem:[#allocation3 + $0x58] sm:$0xff] %v3404
    %3430 = vst [vmem:[#allocation3 + $0x60] sm:$0xff] %v3319
    %3431 = vst [vmem:[#allocation3 + $0x68] sm:$0xff] %v3348
    %3432 = vst [vmem:[#allocation3 + $0x70] sm:$0xff] %v3377
    %3433 = vst [vmem:[#allocation3 + $0x78] sm:$0xff] %v3406
    %3434 = vst [vmem:[#allocation3 + $0x80] sm:$0xff] %v3322
    %3435 = vst [vmem:[#allocation3 + $0x88] sm:$0xff] %v3351
    %3436 = vst [vmem:[#allocation3 + $0x90] sm:$0xff] %v3380
    %3437 = vst [vmem:[#allocation3 + $0x98] sm:$0xff] %v3409
    %3438 = vst [vmem:[#allocation3 + $0xa0] sm:$0xff] %v3324
    %3439 = vst [vmem:[#allocation3 + $0xa8] sm:$0xff] %v3353
    %3440 = vst [vmem:[#allocation3 + $0xb0] sm:$0xff] %v3382
    %3441 = vst [vmem:[#allocation3 + $0xb8] sm:$0xff] %v3411
    %3442 = vst [vmem:[#allocation3 + $0xc0] sm:$0xff] %v3327
    %3443 = vst [vmem:[#allocation3 + $0xc8] sm:$0xff] %v3356
    %3444 = vst [vmem:[#allocation3 + $0xd0] sm:$0xff] %v3385
    %3445 = vst [vmem:[#allocation3 + $0xd8] sm:$0xff] %v3414
    %3446 = vst [vmem:[#allocation3 + $0xe0] sm:$0xff] %v3329
    %3447 = vst [vmem:[#allocation3 + $0xe8] sm:$0xff] %v3358
    %3448 = vst [vmem:[#allocation3 + $0xf0] sm:$0xff] %v3387
    %3449 = vst [vmem:[#allocation3 + $0xf8] sm:$0xff] %v3416
    %s3450 = scalar_lea.vmem %s10, 8
    %v3451 = vld [vmem:[%s3450] sm:$0xff]
    %s3452 = scalar_lea.vmem %s11, 8
    %v3453 = vld [vmem:[%s3452] sm:$0xff]
    %v3454 = vld [vmem:[#allocation3] sm:$0xff]
    %v3455 = vld [vmem:[#allocation3 + $0x8] sm:$0xff]
    %v3456 = vld [vmem:[#allocation3 + $0x10] sm:$0xff]
    %v3457 = vld [vmem:[#allocation3 + $0x18] sm:$0xff]
    %v3458 = vpack.c.bf16 %v3451, %v3451
    %v3459 = vld [vmem:[#allocation9] sm:$0xff]
    %v3460 = vld [vmem:[#allocation9 + $0x8] sm:$0xff]
    %v3461 = vld [vmem:[#allocation9 + $0x10] sm:$0xff]
    %v3462 = vld [vmem:[#allocation9 + $0x18] sm:$0xff]
    %v3463 = vld [vmem:[#allocation9 + $0x20] sm:$0xff]
    %v3464 = vld [vmem:[#allocation9 + $0x28] sm:$0xff]
    %v3465 = vld [vmem:[#allocation9 + $0x30] sm:$0xff]
    %v3466 = vld [vmem:[#allocation9 + $0x38] sm:$0xff]
    %v3467 = vld [vmem:[#allocation9 + $0x40] sm:$0xff]
    %v3468 = vld [vmem:[#allocation9 + $0x48] sm:$0xff]
    %v3469 = vld [vmem:[#allocation9 + $0x50] sm:$0xff]
    %v3470 = vld [vmem:[#allocation9 + $0x58] sm:$0xff]
    %v3471 = vld [vmem:[#allocation9 + $0x60] sm:$0xff]
    %v3472 = vld [vmem:[#allocation9 + $0x68] sm:$0xff]
    %v3473 = vld [vmem:[#allocation9 + $0x70] sm:$0xff]
    %v3474 = vld [vmem:[#allocation9 + $0x78] sm:$0xff]
    %v3475 = vld [vmem:[#allocation9 + $0x80] sm:$0xff]
    %v3476 = vld [vmem:[#allocation9 + $0x88] sm:$0xff]
    %v3477 = vld [vmem:[#allocation9 + $0x90] sm:$0xff]
    %v3478 = vld [vmem:[#allocation9 + $0x98] sm:$0xff]
    %v3479 = vld [vmem:[#allocation9 + $0xa0] sm:$0xff]
    %v3480 = vld [vmem:[#allocation9 + $0xa8] sm:$0xff]
    %v3481 = vld [vmem:[#allocation9 + $0xb0] sm:$0xff]
    %v3482 = vld [vmem:[#allocation9 + $0xb8] sm:$0xff]
    %v3483 = vld [vmem:[#allocation9 + $0xc0] sm:$0xff]
    %v3484 = vld [vmem:[#allocation9 + $0xc8] sm:$0xff]
    %v3485 = vld [vmem:[#allocation9 + $0xd0] sm:$0xff]
    %v3486 = vld [vmem:[#allocation9 + $0xd8] sm:$0xff]
    %v3487 = vld [vmem:[#allocation9 + $0xe0] sm:$0xff]
    %v3488 = vld [vmem:[#allocation9 + $0xe8] sm:$0xff]
    %v3489 = vld [vmem:[#allocation9 + $0xf0] sm:$0xff]
    %v3490 = vld [vmem:[#allocation9 + $0xf8] sm:$0xff]
    %v3523 = vunpack.c.l.b16 %v3459
    %v3524 = vunpack.c.h.b16 %v3459
    %v3525 = vunpack.c.l.b16 %v3460
    %v3526 = vunpack.c.h.b16 %v3460
    %v3527 = vunpack.c.l.b16 %v3461
    %v3528 = vunpack.c.h.b16 %v3461
    %v3529 = vunpack.c.l.b16 %v3462
    %v3530 = vunpack.c.h.b16 %v3462
    %v3531 = vunpack.c.l.b16 %v3463
    %v3532 = vunpack.c.h.b16 %v3463
    %v3533 = vunpack.c.l.b16 %v3464
    %v3534 = vunpack.c.h.b16 %v3464
    %v3535 = vunpack.c.l.b16 %v3465
    %v3536 = vunpack.c.h.b16 %v3465
    %v3537 = vunpack.c.l.b16 %v3466
    %v3538 = vunpack.c.h.b16 %v3466
    %v3539 = vunpack.c.l.b16 %v3467
    %v3540 = vunpack.c.h.b16 %v3467
    %v3541 = vunpack.c.l.b16 %v3468
    %v3542 = vunpack.c.h.b16 %v3468
    %v3543 = vunpack.c.l.b16 %v3469
    %v3544 = vunpack.c.h.b16 %v3469
    %v3545 = vunpack.c.l.b16 %v3470
    %v3546 = vunpack.c.h.b16 %v3470
    %v3547 = vunpack.c.l.b16 %v3471
    %v3548 = vunpack.c.h.b16 %v3471
    %v3549 = vunpack.c.l.b16 %v3472
    %v3550 = vunpack.c.h.b16 %v3472
    %v3551 = vunpack.c.l.b16 %v3473
    %v3552 = vunpack.c.h.b16 %v3473
    %v3553 = vunpack.c.l.b16 %v3474
    %v3554 = vunpack.c.h.b16 %v3474
    %v3555 = vunpack.c.l.b16 %v3475
    %v3556 = vunpack.c.h.b16 %v3475
    %v3557 = vunpack.c.l.b16 %v3476
    %v3558 = vunpack.c.h.b16 %v3476
    %v3559 = vunpack.c.l.b16 %v3477
    %v3560 = vunpack.c.h.b16 %v3477
    %v3561 = vunpack.c.l.b16 %v3478
    %v3562 = vunpack.c.h.b16 %v3478
    %v3563 = vunpack.c.l.b16 %v3479
    %v3564 = vunpack.c.h.b16 %v3479
    %v3565 = vunpack.c.l.b16 %v3480
    %v3566 = vunpack.c.h.b16 %v3480
    %v3567 = vunpack.c.l.b16 %v3481
    %v3568 = vunpack.c.h.b16 %v3481
    %v3569 = vunpack.c.l.b16 %v3482
    %v3570 = vunpack.c.h.b16 %v3482
    %v3571 = vunpack.c.l.b16 %v3483
    %v3572 = vunpack.c.h.b16 %v3483
    %v3573 = vunpack.c.l.b16 %v3484
    %v3574 = vunpack.c.h.b16 %v3484
    %v3575 = vunpack.c.l.b16 %v3485
    %v3576 = vunpack.c.h.b16 %v3485
    %v3577 = vunpack.c.l.b16 %v3486
    %v3578 = vunpack.c.h.b16 %v3486
    %v3579 = vunpack.c.l.b16 %v3487
    %v3580 = vunpack.c.h.b16 %v3487
    %v3581 = vunpack.c.l.b16 %v3488
    %v3582 = vunpack.c.h.b16 %v3488
    %v3583 = vunpack.c.l.b16 %v3489
    %v3584 = vunpack.c.h.b16 %v3489
    %v3585 = vunpack.c.l.b16 %v3490
    %v3586 = vunpack.c.h.b16 %v3490
    %v3587 = vpack.c.b16 %v3527, %v3523
    %v3588 = vpack.c.b16 %v3528, %v3524
    %v3589 = vpack.c.b16 %v3529, %v3525
    %v3590 = vpack.c.b16 %v3530, %v3526
    %v3591 = vpack.c.b16 %v3535, %v3531
    %v3592 = vpack.c.b16 %v3536, %v3532
    %v3593 = vpack.c.b16 %v3537, %v3533
    %v3594 = vpack.c.b16 %v3538, %v3534
    %v3595 = vpack.c.b16 %v3543, %v3539
    %v3596 = vpack.c.b16 %v3544, %v3540
    %v3597 = vpack.c.b16 %v3545, %v3541
    %v3598 = vpack.c.b16 %v3546, %v3542
    %v3599 = vpack.c.b16 %v3551, %v3547
    %v3600 = vpack.c.b16 %v3552, %v3548
    %v3601 = vpack.c.b16 %v3553, %v3549
    %v3602 = vpack.c.b16 %v3554, %v3550
    %v3603 = vpack.c.b16 %v3559, %v3555
    %v3604 = vpack.c.b16 %v3560, %v3556
    %v3605 = vpack.c.b16 %v3561, %v3557
    %v3606 = vpack.c.b16 %v3562, %v3558
    %v3607 = vpack.c.b16 %v3567, %v3563
    %v3608 = vpack.c.b16 %v3568, %v3564
    %v3609 = vpack.c.b16 %v3569, %v3565
    %v3610 = vpack.c.b16 %v3570, %v3566
    %v3611 = vpack.c.b16 %v3575, %v3571
    %v3612 = vpack.c.b16 %v3576, %v3572
    %v3613 = vpack.c.b16 %v3577, %v3573
    %v3614 = vpack.c.b16 %v3578, %v3574
    %v3615 = vpack.c.b16 %v3583, %v3579
    %v3616 = vpack.c.b16 %v3584, %v3580
    %v3617 = vpack.c.b16 %v3585, %v3581
    %v3618 = vpack.c.b16 %v3586, %v3582
    %3651 = vmatpush.bf16.msra.mxu0 %v3615
    %3652 = vmatpush.bf16.msra.mxu0 %v3611
    %3653 = vmatpush.bf16.msra.mxu0 %v3607
    %3654 = vmatpush.bf16.msra.mxu0 %v3603
    %3655 = vmatpush.bf16.msra.mxu0 %v3599
    %3656 = vmatpush.bf16.msra.mxu0 %v3595
    %3657 = vmatpush.bf16.msra.mxu0 %v3591
    %3658 = vmatpush.bf16.msra.mxu0 %v3587
    %3659 = vmatmul.bf16.gmra.mxu0 %v3458
    %v3660 = vpop.f32.mrf.mxu0
    %v3661 = vadd.f32 0.0, %v3660
    %v3662 = vpop.f32.mrf.mxu0
    %3663 = vdwg.mxu0
    %3664 = vmatpush.bf16.msra.mxu0 %v3616
    %3665 = vmatpush.bf16.msra.mxu0 %v3612
    %3666 = vmatpush.bf16.msra.mxu0 %v3608
    %3667 = vmatpush.bf16.msra.mxu0 %v3604
    %3668 = vmatpush.bf16.msra.mxu0 %v3600
    %3669 = vmatpush.bf16.msra.mxu0 %v3596
    %3670 = vmatpush.bf16.msra.mxu0 %v3592
    %3671 = vmatpush.bf16.msra.mxu0 %v3588
    %3672 = vmatmul.bf16.gmra.mxu0 %v3458
    %v3673 = vpop.f32.mrf.mxu0
    %v3674 = vadd.f32 0.0, %v3673
    %v3675 = vpop.f32.mrf.mxu0
    %3676 = vdwg.mxu0
    %3677 = vmatpush.bf16.msra.mxu0 %v3617
    %3678 = vmatpush.bf16.msra.mxu0 %v3613
    %3679 = vmatpush.bf16.msra.mxu0 %v3609
    %3680 = vmatpush.bf16.msra.mxu0 %v3605
    %3681 = vmatpush.bf16.msra.mxu0 %v3601
    %3682 = vmatpush.bf16.msra.mxu0 %v3597
    %3683 = vmatpush.bf16.msra.mxu0 %v3593
    %3684 = vmatpush.bf16.msra.mxu0 %v3589
    %3685 = vmatmul.bf16.gmra.mxu0 %v3458
    %v3686 = vpop.f32.mrf.mxu0
    %v3687 = vadd.f32 0.0, %v3686
    %v3688 = vpop.f32.mrf.mxu0
    %3689 = vdwg.mxu0
    %3690 = vmatpush.bf16.msra.mxu0 %v3618
    %3691 = vmatpush.bf16.msra.mxu0 %v3614
    %3692 = vmatpush.bf16.msra.mxu0 %v3610
    %3693 = vmatpush.bf16.msra.mxu0 %v3606
    %3694 = vmatpush.bf16.msra.mxu0 %v3602
    %3695 = vmatpush.bf16.msra.mxu0 %v3598
    %3696 = vmatpush.bf16.msra.mxu0 %v3594
    %3697 = vmatpush.bf16.msra.mxu0 %v3590
    %3698 = vmatmul.bf16.gmra.mxu0 %v3458
    %v3699 = vpop.f32.mrf.mxu0
    %v3700 = vadd.f32 0.0, %v3699
    %v3701 = vpop.f32.mrf.mxu0
    %3702 = vdwg.mxu0
    %v3703 = vadd.f32 %v3454, %v3661
    %v3704 = vadd.f32 %v3455, %v3674
    %v3705 = vadd.f32 %v3456, %v3687
    %v3706 = vadd.f32 %v3457, %v3700
    %v3707 = vxor.u32 %v3703, 2147483648
    %v3708 = vxor.u32 %v3704, 2147483648
    %v3709 = vxor.u32 %v3705, 2147483648
    %v3710 = vmul.f32 %v3707, 1.442695
    %v3711 = vpow.pop %v3710
    %v3712 = vmul.f32 %v3708, 1.442695
    %v3713 = vpow.pop %v3712
    %v3714 = vmul.f32 %v3709, 1.442695
    %v3715 = vpow.pop %v3714
    %v3716 = vadd.f32 %v3711, 1.0
    %v3717 = vadd.f32 %v3713, 1.0
    %v3718 = vadd.f32 %v3715, 1.0
    %v3719 = vrcp.pop %v3716
    %v3720 = vmul.f32 %v3716, %v3719
    %v3721 = vsub.f32 1.0, %v3720
    %v3722 = vmul.f32 %v3719, %v3721
    %v3723 = vadd.f32 %v3719, %v3722
    %vm3724 = vweird.f32 %v3716
    %vm3725 = vweird.f32 %v3719
    %vm3726 = vmor %vm3724, %vm3725
    %v3727 = vsel %vm3726, %v3719, %v3723
    %v3728 = vand.u32 2147483647, %v3716
    %vm3729 = vcmp.eq.f32.partialorder %v3728, 8.507059e+37
    %v3730 = vand.u32 %v3716, 2147483648
    %v3731 = vor.u32 1.1754944e-38, %v3730
    %v3732 = vsel %vm3729, %v3731, %v3727
    %v3733 = vmul.f32 1.0, %v3732
    %v3734 = vrcp.pop %v3717
    %v3735 = vmul.f32 %v3717, %v3734
    %v3736 = vsub.f32 1.0, %v3735
    %v3737 = vmul.f32 %v3734, %v3736
    %v3738 = vadd.f32 %v3734, %v3737
    %vm3739 = vweird.f32 %v3717
    %vm3740 = vweird.f32 %v3734
    %vm3741 = vmor %vm3739, %vm3740
    %v3742 = vsel %vm3741, %v3734, %v3738
    %v3743 = vand.u32 2147483647, %v3717
    %vm3744 = vcmp.eq.f32.partialorder %v3743, 8.507059e+37
    %v3745 = vand.u32 %v3717, 2147483648
    %v3746 = vor.u32 1.1754944e-38, %v3745
    %v3747 = vsel %vm3744, %v3746, %v3742
    %v3748 = vmul.f32 1.0, %v3747
    %v3749 = vrcp.pop %v3718
    %v3750 = vmul.f32 %v3718, %v3749
    %v3751 = vsub.f32 1.0, %v3750
    %v3752 = vmul.f32 %v3749, %v3751
    %v3753 = vadd.f32 %v3749, %v3752
    %vm3754 = vweird.f32 %v3718
    %vm3755 = vweird.f32 %v3749
    %vm3756 = vmor %vm3754, %vm3755
    %v3757 = vsel %vm3756, %v3749, %v3753
    %v3758 = vand.u32 2147483647, %v3718
    %vm3759 = vcmp.eq.f32.partialorder %v3758, 8.507059e+37
    %v3760 = vand.u32 %v3718, 2147483648
    %v3761 = vor.u32 1.1754944e-38, %v3760
    %v3762 = vsel %vm3759, %v3761, %v3757
    %v3763 = vmul.f32 1.0, %v3762
    %v3764 = vtanh.pop %v3706
    %v3765 = vmul.f32 %v3748, %v3453
    %v3766 = vmul.f32 %v3733, %v3764
    %v3767 = vadd.f32 %v3765, %v3766
    %v3768 = vtanh.pop %v3767
    %v3769 = vmul.f32 %v3763, %v3768
    %3770 = vst [vmem:[#allocation2] sm:$0xff] %v3769
    %v3771 = vld [vmem:[#allocation3 + $0x20] sm:$0xff]
    %v3772 = vld [vmem:[#allocation3 + $0x28] sm:$0xff]
    %v3773 = vld [vmem:[#allocation3 + $0x30] sm:$0xff]
    %v3774 = vld [vmem:[#allocation3 + $0x38] sm:$0xff]
    %v3775 = vpack.c.bf16 %v3769, %v3769
    %v3776 = vld [vmem:[#allocation9] sm:$0xff]
    %v3777 = vld [vmem:[#allocation9 + $0x8] sm:$0xff]
    %v3778 = vld [vmem:[#allocation9 + $0x10] sm:$0xff]
    %v3779 = vld [vmem:[#allocation9 + $0x18] sm:$0xff]
    %v3780 = vld [vmem:[#allocation9 + $0x20] sm:$0xff]
    %v3781 = vld [vmem:[#allocation9 + $0x28] sm:$0xff]
    %v3782 = vld [vmem:[#allocation9 + $0x30] sm:$0xff]
    %v3783 = vld [vmem:[#allocation9 + $0x38] sm:$0xff]
    %v3784 = vld [vmem:[#allocation9 + $0x40] sm:$0xff]
    %v3785 = vld [vmem:[#allocation9 + $0x48] sm:$0xff]
    %v3786 = vld [vmem:[#allocation9 + $0x50] sm:$0xff]
    %v3787 = vld [vmem:[#allocation9 + $0x58] sm:$0xff]
    %v3788 = vld [vmem:[#allocation9 + $0x60] sm:$0xff]
    %v3789 = vld [vmem:[#allocation9 + $0x68] sm:$0xff]
    %v3790 = vld [vmem:[#allocation9 + $0x70] sm:$0xff]
    %v3791 = vld [vmem:[#allocation9 + $0x78] sm:$0xff]
    %v3792 = vld [vmem:[#allocation9 + $0x80] sm:$0xff]
    %v3793 = vld [vmem:[#allocation9 + $0x88] sm:$0xff]
    %v3794 = vld [vmem:[#allocation9 + $0x90] sm:$0xff]
    %v3795 = vld [vmem:[#allocation9 + $0x98] sm:$0xff]
    %v3796 = vld [vmem:[#allocation9 + $0xa0] sm:$0xff]
    %v3797 = vld [vmem:[#allocation9 + $0xa8] sm:$0xff]
    %v3798 = vld [vmem:[#allocation9 + $0xb0] sm:$0xff]
    %v3799 = vld [vmem:[#allocation9 + $0xb8] sm:$0xff]
    %v3800 = vld [vmem:[#allocation9 + $0xc0] sm:$0xff]
    %v3801 = vld [vmem:[#allocation9 + $0xc8] sm:$0xff]
    %v3802 = vld [vmem:[#allocation9 + $0xd0] sm:$0xff]
    %v3803 = vld [vmem:[#allocation9 + $0xd8] sm:$0xff]
    %v3804 = vld [vmem:[#allocation9 + $0xe0] sm:$0xff]
    %v3805 = vld [vmem:[#allocation9 + $0xe8] sm:$0xff]
    %v3806 = vld [vmem:[#allocation9 + $0xf0] sm:$0xff]
    %v3807 = vld [vmem:[#allocation9 + $0xf8] sm:$0xff]
    %v3840 = vunpack.c.l.b16 %v3776
    %v3841 = vunpack.c.h.b16 %v3776
    %v3842 = vunpack.c.l.b16 %v3777
    %v3843 = vunpack.c.h.b16 %v3777
    %v3844 = vunpack.c.l.b16 %v3778
    %v3845 = vunpack.c.h.b16 %v3778
    %v3846 = vunpack.c.l.b16 %v3779
    %v3847 = vunpack.c.h.b16 %v3779
    %v3848 = vunpack.c.l.b16 %v3780
    %v3849 = vunpack.c.h.b16 %v3780
    %v3850 = vunpack.c.l.b16 %v3781
    %v3851 = vunpack.c.h.b16 %v3781
    %v3852 = vunpack.c.l.b16 %v3782
    %v3853 = vunpack.c.h.b16 %v3782
    %v3854 = vunpack.c.l.b16 %v3783
    %v3855 = vunpack.c.h.b16 %v3783
    %v3856 = vunpack.c.l.b16 %v3784
    %v3857 = vunpack.c.h.b16 %v3784
    %v3858 = vunpack.c.l.b16 %v3785
    %v3859 = vunpack.c.h.b16 %v3785
    %v3860 = vunpack.c.l.b16 %v3786
    %v3861 = vunpack.c.h.b16 %v3786
    %v3862 = vunpack.c.l.b16 %v3787
    %v3863 = vunpack.c.h.b16 %v3787
    %v3864 = vunpack.c.l.b16 %v3788
    %v3865 = vunpack.c.h.b16 %v3788
    %v3866 = vunpack.c.l.b16 %v3789
    %v3867 = vunpack.c.h.b16 %v3789
    %v3868 = vunpack.c.l.b16 %v3790
    %v3869 = vunpack.c.h.b16 %v3790
    %v3870 = vunpack.c.l.b16 %v3791
    %v3871 = vunpack.c.h.b16 %v3791
    %v3872 = vunpack.c.l.b16 %v3792
    %v3873 = vunpack.c.h.b16 %v3792
    %v3874 = vunpack.c.l.b16 %v3793
    %v3875 = vunpack.c.h.b16 %v3793
    %v3876 = vunpack.c.l.b16 %v3794
    %v3877 = vunpack.c.h.b16 %v3794
    %v3878 = vunpack.c.l.b16 %v3795
    %v3879 = vunpack.c.h.b16 %v3795
    %v3880 = vunpack.c.l.b16 %v3796
    %v3881 = vunpack.c.h.b16 %v3796
    %v3882 = vunpack.c.l.b16 %v3797
    %v3883 = vunpack.c.h.b16 %v3797
    %v3884 = vunpack.c.l.b16 %v3798
    %v3885 = vunpack.c.h.b16 %v3798
    %v3886 = vunpack.c.l.b16 %v3799
    %v3887 = vunpack.c.h.b16 %v3799
    %v3888 = vunpack.c.l.b16 %v3800
    %v3889 = vunpack.c.h.b16 %v3800
    %v3890 = vunpack.c.l.b16 %v3801
    %v3891 = vunpack.c.h.b16 %v3801
    %v3892 = vunpack.c.l.b16 %v3802
    %v3893 = vunpack.c.h.b16 %v3802
    %v3894 = vunpack.c.l.b16 %v3803
    %v3895 = vunpack.c.h.b16 %v3803
    %v3896 = vunpack.c.l.b16 %v3804
    %v3897 = vunpack.c.h.b16 %v3804
    %v3898 = vunpack.c.l.b16 %v3805
    %v3899 = vunpack.c.h.b16 %v3805
    %v3900 = vunpack.c.l.b16 %v3806
    %v3901 = vunpack.c.h.b16 %v3806
    %v3902 = vunpack.c.l.b16 %v3807
    %v3903 = vunpack.c.h.b16 %v3807
    %v3904 = vpack.c.b16 %v3844, %v3840
    %v3905 = vpack.c.b16 %v3845, %v3841
    %v3906 = vpack.c.b16 %v3846, %v3842
    %v3907 = vpack.c.b16 %v3847, %v3843
    %v3908 = vpack.c.b16 %v3852, %v3848
    %v3909 = vpack.c.b16 %v3853, %v3849
    %v3910 = vpack.c.b16 %v3854, %v3850
    %v3911 = vpack.c.b16 %v3855, %v3851
    %v3912 = vpack.c.b16 %v3860, %v3856
    %v3913 = vpack.c.b16 %v3861, %v3857
    %v3914 = vpack.c.b16 %v3862, %v3858
    %v3915 = vpack.c.b16 %v3863, %v3859
    %v3916 = vpack.c.b16 %v3868, %v3864
    %v3917 = vpack.c.b16 %v3869, %v3865
    %v3918 = vpack.c.b16 %v3870, %v3866
    %v3919 = vpack.c.b16 %v3871, %v3867
    %v3920 = vpack.c.b16 %v3876, %v3872
    %v3921 = vpack.c.b16 %v3877, %v3873
    %v3922 = vpack.c.b16 %v3878, %v3874
    %v3923 = vpack.c.b16 %v3879, %v3875
    %v3924 = vpack.c.b16 %v3884, %v3880
    %v3925 = vpack.c.b16 %v3885, %v3881
    %v3926 = vpack.c.b16 %v3886, %v3882
    %v3927 = vpack.c.b16 %v3887, %v3883
    %v3928 = vpack.c.b16 %v3892, %v3888
    %v3929 = vpack.c.b16 %v3893, %v3889
    %v3930 = vpack.c.b16 %v3894, %v3890
    %v3931 = vpack.c.b16 %v3895, %v3891
    %v3932 = vpack.c.b16 %v3900, %v3896
    %v3933 = vpack.c.b16 %v3901, %v3897
    %v3934 = vpack.c.b16 %v3902, %v3898
    %v3935 = vpack.c.b16 %v3903, %v3899
    %3968 = vmatpush.bf16.msra.mxu0 %v3932
    %3969 = vmatpush.bf16.msra.mxu0 %v3928
    %3970 = vmatpush.bf16.msra.mxu0 %v3924
    %3971 = vmatpush.bf16.msra.mxu0 %v3920
    %3972 = vmatpush.bf16.msra.mxu0 %v3916
    %3973 = vmatpush.bf16.msra.mxu0 %v3912
    %3974 = vmatpush.bf16.msra.mxu0 %v3908
    %3975 = vmatpush.bf16.msra.mxu0 %v3904
    %3976 = vmatmul.bf16.gmra.mxu0 %v3775
    %v3977 = vpop.f32.mrf.mxu0
    %v3978 = vadd.f32 0.0, %v3977
    %v3979 = vpop.f32.mrf.mxu0
    %3980 = vdwg.mxu0
    %3981 = vmatpush.bf16.msra.mxu0 %v3933
    %3982 = vmatpush.bf16.msra.mxu0 %v3929
    %3983 = vmatpush.bf16.msra.mxu0 %v3925
    %3984 = vmatpush.bf16.msra.mxu0 %v3921
    %3985 = vmatpush.bf16.msra.mxu0 %v3917
    %3986 = vmatpush.bf16.msra.mxu0 %v3913
    %3987 = vmatpush.bf16.msra.mxu0 %v3909
    %3988 = vmatpush.bf16.msra.mxu0 %v3905
    %3989 = vmatmul.bf16.gmra.mxu0 %v3775
    %v3990 = vpop.f32.mrf.mxu0
    %v3991 = vadd.f32 0.0, %v3990
    %v3992 = vpop.f32.mrf.mxu0
    %3993 = vdwg.mxu0
    %3994 = vmatpush.bf16.msra.mxu0 %v3934
    %3995 = vmatpush.bf16.msra.mxu0 %v3930
    %3996 = vmatpush.bf16.msra.mxu0 %v3926
    %3997 = vmatpush.bf16.msra.mxu0 %v3922
    %3998 = vmatpush.bf16.msra.mxu0 %v3918
    %3999 = vmatpush.bf16.msra.mxu0 %v3914
    %4000 = vmatpush.bf16.msra.mxu0 %v3910
    %4001 = vmatpush.bf16.msra.mxu0 %v3906
    %4002 = vmatmul.bf16.gmra.mxu0 %v3775
    %v4003 = vpop.f32.mrf.mxu0
    %v4004 = vadd.f32 0.0, %v4003
    %v4005 = vpop.f32.mrf.mxu0
    %4006 = vdwg.mxu0
    %4007 = vmatpush.bf16.msra.mxu0 %v3935
    %4008 = vmatpush.bf16.msra.mxu0 %v3931
    %4009 = vmatpush.bf16.msra.mxu0 %v3927
    %4010 = vmatpush.bf16.msra.mxu0 %v3923
    %4011 = vmatpush.bf16.msra.mxu0 %v3919
    %4012 = vmatpush.bf16.msra.mxu0 %v3915
    %4013 = vmatpush.bf16.msra.mxu0 %v3911
    %4014 = vmatpush.bf16.msra.mxu0 %v3907
    %4015 = vmatmul.bf16.gmra.mxu0 %v3775
    %v4016 = vpop.f32.mrf.mxu0
    %v4017 = vadd.f32 0.0, %v4016
    %v4018 = vpop.f32.mrf.mxu0
    %4019 = vdwg.mxu0
    %v4020 = vadd.f32 %v3771, %v3978
    %v4021 = vadd.f32 %v3772, %v3991
    %v4022 = vadd.f32 %v3773, %v4004
    %v4023 = vadd.f32 %v3774, %v4017
    %v4024 = vxor.u32 %v4020, 2147483648
    %v4025 = vxor.u32 %v4021, 2147483648
    %v4026 = vxor.u32 %v4022, 2147483648
    %v4027 = vmul.f32 %v4024, 1.442695
    %v4028 = vpow.pop %v4027
    %v4029 = vmul.f32 %v4025, 1.442695
    %v4030 = vpow.pop %v4029
    %v4031 = vmul.f32 %v4026, 1.442695
    %v4032 = vpow.pop %v4031
    %v4033 = vadd.f32 %v4028, 1.0
    %v4034 = vadd.f32 %v4030, 1.0
    %v4035 = vadd.f32 %v4032, 1.0
    %v4036 = vrcp.pop %v4033
    %v4037 = vmul.f32 %v4033, %v4036
    %v4038 = vsub.f32 1.0, %v4037
    %v4039 = vmul.f32 %v4036, %v4038
    %v4040 = vadd.f32 %v4036, %v4039
    %vm4041 = vweird.f32 %v4033
    %vm4042 = vweird.f32 %v4036
    %vm4043 = vmor %vm4041, %vm4042
    %v4044 = vsel %vm4043, %v4036, %v4040
    %v4045 = vand.u32 2147483647, %v4033
    %vm4046 = vcmp.eq.f32.partialorder %v4045, 8.507059e+37
    %v4047 = vand.u32 %v4033, 2147483648
    %v4048 = vor.u32 1.1754944e-38, %v4047
    %v4049 = vsel %vm4046, %v4048, %v4044
    %v4050 = vmul.f32 1.0, %v4049
    %v4051 = vrcp.pop %v4034
    %v4052 = vmul.f32 %v4034, %v4051
    %v4053 = vsub.f32 1.0, %v4052
    %v4054 = vmul.f32 %v4051, %v4053
    %v4055 = vadd.f32 %v4051, %v4054
    %vm4056 = vweird.f32 %v4034
    %vm4057 = vweird.f32 %v4051
    %vm4058 = vmor %vm4056, %vm4057
    %v4059 = vsel %vm4058, %v4051, %v4055
    %v4060 = vand.u32 2147483647, %v4034
    %vm4061 = vcmp.eq.f32.partialorder %v4060, 8.507059e+37
    %v4062 = vand.u32 %v4034, 2147483648
    %v4063 = vor.u32 1.1754944e-38, %v4062
    %v4064 = vsel %vm4061, %v4063, %v4059
    %v4065 = vmul.f32 1.0, %v4064
    %v4066 = vrcp.pop %v4035
    %v4067 = vmul.f32 %v4035, %v4066
    %v4068 = vsub.f32 1.0, %v4067
    %v4069 = vmul.f32 %v4066, %v4068
    %v4070 = vadd.f32 %v4066, %v4069
    %vm4071 = vweird.f32 %v4035
    %vm4072 = vweird.f32 %v4066
    %vm4073 = vmor %vm4071, %vm4072
    %v4074 = vsel %vm4073, %v4066, %v4070
    %v4075 = vand.u32 2147483647, %v4035
    %vm4076 = vcmp.eq.f32.partialorder %v4075, 8.507059e+37
    %v4077 = vand.u32 %v4035, 2147483648
    %v4078 = vor.u32 1.1754944e-38, %v4077
    %v4079 = vsel %vm4076, %v4078, %v4074
    %v4080 = vmul.f32 1.0, %v4079
    %v4081 = vtanh.pop %v4023
    %v4082 = vmul.f32 %v4065, %v3767
    %v4083 = vmul.f32 %v4050, %v4081
    %v4084 = vadd.f32 %v4082, %v4083
    %v4085 = vtanh.pop %v4084
    %v4086 = vmul.f32 %v4080, %v4085
    %4087 = vst [vmem:[#allocation2 + $0x8] sm:$0xff] %v4086
    %v4088 = vld [vmem:[#allocation3 + $0x40] sm:$0xff]
    %v4089 = vld [vmem:[#allocation3 + $0x48] sm:$0xff]
    %v4090 = vld [vmem:[#allocation3 + $0x50] sm:$0xff]
    %v4091 = vld [vmem:[#allocation3 + $0x58] sm:$0xff]
    %v4092 = vpack.c.bf16 %v4086, %v4086
    %v4093 = vld [vmem:[#allocation9] sm:$0xff]
    %v4094 = vld [vmem:[#allocation9 + $0x8] sm:$0xff]
    %v4095 = vld [vmem:[#allocation9 + $0x10] sm:$0xff]
    %v4096 = vld [vmem:[#allocation9 + $0x18] sm:$0xff]
    %v4097 = vld [vmem:[#allocation9 + $0x20] sm:$0xff]
    %v4098 = vld [vmem:[#allocation9 + $0x28] sm:$0xff]
    %v4099 = vld [vmem:[#allocation9 + $0x30] sm:$0xff]
    %v4100 = vld [vmem:[#allocation9 + $0x38] sm:$0xff]
    %v4101 = vld [vmem:[#allocation9 + $0x40] sm:$0xff]
    %v4102 = vld [vmem:[#allocation9 + $0x48] sm:$0xff]
    %v4103 = vld [vmem:[#allocation9 + $0x50] sm:$0xff]
    %v4104 = vld [vmem:[#allocation9 + $0x58] sm:$0xff]
    %v4105 = vld [vmem:[#allocation9 + $0x60] sm:$0xff]
    %v4106 = vld [vmem:[#allocation9 + $0x68] sm:$0xff]
    %v4107 = vld [vmem:[#allocation9 + $0x70] sm:$0xff]
    %v4108 = vld [vmem:[#allocation9 + $0x78] sm:$0xff]
    %v4109 = vld [vmem:[#allocation9 + $0x80] sm:$0xff]
    %v4110 = vld [vmem:[#allocation9 + $0x88] sm:$0xff]
    %v4111 = vld [vmem:[#allocation9 + $0x90] sm:$0xff]
    %v4112 = vld [vmem:[#allocation9 + $0x98] sm:$0xff]
    %v4113 = vld [vmem:[#allocation9 + $0xa0] sm:$0xff]
    %v4114 = vld [vmem:[#allocation9 + $0xa8] sm:$0xff]
    %v4115 = vld [vmem:[#allocation9 + $0xb0] sm:$0xff]
    %v4116 = vld [vmem:[#allocation9 + $0xb8] sm:$0xff]
    %v4117 = vld [vmem:[#allocation9 + $0xc0] sm:$0xff]
    %v4118 = vld [vmem:[#allocation9 + $0xc8] sm:$0xff]
    %v4119 = vld [vmem:[#allocation9 + $0xd0] sm:$0xff]
    %v4120 = vld [vmem:[#allocation9 + $0xd8] sm:$0xff]
    %v4121 = vld [vmem:[#allocation9 + $0xe0] sm:$0xff]
    %v4122 = vld [vmem:[#allocation9 + $0xe8] sm:$0xff]
    %v4123 = vld [vmem:[#allocation9 + $0xf0] sm:$0xff]
    %v4124 = vld [vmem:[#allocation9 + $0xf8] sm:$0xff]
    %v4157 = vunpack.c.l.b16 %v4093
    %v4158 = vunpack.c.h.b16 %v4093
    %v4159 = vunpack.c.l.b16 %v4094
    %v4160 = vunpack.c.h.b16 %v4094
    %v4161 = vunpack.c.l.b16 %v4095
    %v4162 = vunpack.c.h.b16 %v4095
    %v4163 = vunpack.c.l.b16 %v4096
    %v4164 = vunpack.c.h.b16 %v4096
    %v4165 = vunpack.c.l.b16 %v4097
    %v4166 = vunpack.c.h.b16 %v4097
    %v4167 = vunpack.c.l.b16 %v4098
    %v4168 = vunpack.c.h.b16 %v4098
    %v4169 = vunpack.c.l.b16 %v4099
    %v4170 = vunpack.c.h.b16 %v4099
    %v4171 = vunpack.c.l.b16 %v4100
    %v4172 = vunpack.c.h.b16 %v4100
    %v4173 = vunpack.c.l.b16 %v4101
    %v4174 = vunpack.c.h.b16 %v4101
    %v4175 = vunpack.c.l.b16 %v4102
    %v4176 = vunpack.c.h.b16 %v4102
    %v4177 = vunpack.c.l.b16 %v4103
    %v4178 = vunpack.c.h.b16 %v4103
    %v4179 = vunpack.c.l.b16 %v4104
    %v4180 = vunpack.c.h.b16 %v4104
    %v4181 = vunpack.c.l.b16 %v4105
    %v4182 = vunpack.c.h.b16 %v4105
    %v4183 = vunpack.c.l.b16 %v4106
    %v4184 = vunpack.c.h.b16 %v4106
    %v4185 = vunpack.c.l.b16 %v4107
    %v4186 = vunpack.c.h.b16 %v4107
    %v4187 = vunpack.c.l.b16 %v4108
    %v4188 = vunpack.c.h.b16 %v4108
    %v4189 = vunpack.c.l.b16 %v4109
    %v4190 = vunpack.c.h.b16 %v4109
    %v4191 = vunpack.c.l.b16 %v4110
    %v4192 = vunpack.c.h.b16 %v4110
    %v4193 = vunpack.c.l.b16 %v4111
    %v4194 = vunpack.c.h.b16 %v4111
    %v4195 = vunpack.c.l.b16 %v4112
    %v4196 = vunpack.c.h.b16 %v4112
    %v4197 = vunpack.c.l.b16 %v4113
    %v4198 = vunpack.c.h.b16 %v4113
    %v4199 = vunpack.c.l.b16 %v4114
    %v4200 = vunpack.c.h.b16 %v4114
    %v4201 = vunpack.c.l.b16 %v4115
    %v4202 = vunpack.c.h.b16 %v4115
    %v4203 = vunpack.c.l.b16 %v4116
    %v4204 = vunpack.c.h.b16 %v4116
    %v4205 = vunpack.c.l.b16 %v4117
    %v4206 = vunpack.c.h.b16 %v4117
    %v4207 = vunpack.c.l.b16 %v4118
    %v4208 = vunpack.c.h.b16 %v4118
    %v4209 = vunpack.c.l.b16 %v4119
    %v4210 = vunpack.c.h.b16 %v4119
    %v4211 = vunpack.c.l.b16 %v4120
    %v4212 = vunpack.c.h.b16 %v4120
    %v4213 = vunpack.c.l.b16 %v4121
    %v4214 = vunpack.c.h.b16 %v4121
    %v4215 = vunpack.c.l.b16 %v4122
    %v4216 = vunpack.c.h.b16 %v4122
    %v4217 = vunpack.c.l.b16 %v4123
    %v4218 = vunpack.c.h.b16 %v4123
    %v4219 = vunpack.c.l.b16 %v4124
    %v4220 = vunpack.c.h.b16 %v4124
    %v4221 = vpack.c.b16 %v4161, %v4157
    %v4222 = vpack.c.b16 %v4162, %v4158
    %v4223 = vpack.c.b16 %v4163, %v4159
    %v4224 = vpack.c.b16 %v4164, %v4160
    %v4225 = vpack.c.b16 %v4169, %v4165
    %v4226 = vpack.c.b16 %v4170, %v4166
    %v4227 = vpack.c.b16 %v4171, %v4167
    %v4228 = vpack.c.b16 %v4172, %v4168
    %v4229 = vpack.c.b16 %v4177, %v4173
    %v4230 = vpack.c.b16 %v4178, %v4174
    %v4231 = vpack.c.b16 %v4179, %v4175
    %v4232 = vpack.c.b16 %v4180, %v4176
    %v4233 = vpack.c.b16 %v4185, %v4181
    %v4234 = vpack.c.b16 %v4186, %v4182
    %v4235 = vpack.c.b16 %v4187, %v4183
    %v4236 = vpack.c.b16 %v4188, %v4184
    %v4237 = vpack.c.b16 %v4193, %v4189
    %v4238 = vpack.c.b16 %v4194, %v4190
    %v4239 = vpack.c.b16 %v4195, %v4191
    %v4240 = vpack.c.b16 %v4196, %v4192
    %v4241 = vpack.c.b16 %v4201, %v4197
    %v4242 = vpack.c.b16 %v4202, %v4198
    %v4243 = vpack.c.b16 %v4203, %v4199
    %v4244 = vpack.c.b16 %v4204, %v4200
    %v4245 = vpack.c.b16 %v4209, %v4205
    %v4246 = vpack.c.b16 %v4210, %v4206
    %v4247 = vpack.c.b16 %v4211, %v4207
    %v4248 = vpack.c.b16 %v4212, %v4208
    %v4249 = vpack.c.b16 %v4217, %v4213
    %v4250 = vpack.c.b16 %v4218, %v4214
    %v4251 = vpack.c.b16 %v4219, %v4215
    %v4252 = vpack.c.b16 %v4220, %v4216
    %4285 = vmatpush.bf16.msra.mxu0 %v4249
    %4286 = vmatpush.bf16.msra.mxu0 %v4245
    %4287 = vmatpush.bf16.msra.mxu0 %v4241
    %4288 = vmatpush.bf16.msra.mxu0 %v4237
    %4289 = vmatpush.bf16.msra.mxu0 %v4233
    %4290 = vmatpush.bf16.msra.mxu0 %v4229
    %4291 = vmatpush.bf16.msra.mxu0 %v4225
    %4292 = vmatpush.bf16.msra.mxu0 %v4221
    %4293 = vmatmul.bf16.gmra.mxu0 %v4092
    %v4294 = vpop.f32.mrf.mxu0
    %v4295 = vadd.f32 0.0, %v4294
    %v4296 = vpop.f32.mrf.mxu0
    %4297 = vdwg.mxu0
    %4298 = vmatpush.bf16.msra.mxu0 %v4250
    %4299 = vmatpush.bf16.msra.mxu0 %v4246
    %4300 = vmatpush.bf16.msra.mxu0 %v4242
    %4301 = vmatpush.bf16.msra.mxu0 %v4238
    %4302 = vmatpush.bf16.msra.mxu0 %v4234
    %4303 = vmatpush.bf16.msra.mxu0 %v4230
    %4304 = vmatpush.bf16.msra.mxu0 %v4226
    %4305 = vmatpush.bf16.msra.mxu0 %v4222
    %4306 = vmatmul.bf16.gmra.mxu0 %v4092
    %v4307 = vpop.f32.mrf.mxu0
    %v4308 = vadd.f32 0.0, %v4307
    %v4309 = vpop.f32.mrf.mxu0
    %4310 = vdwg.mxu0
    %4311 = vmatpush.bf16.msra.mxu0 %v4251
    %4312 = vmatpush.bf16.msra.mxu0 %v4247
    %4313 = vmatpush.bf16.msra.mxu0 %v4243
    %4314 = vmatpush.bf16.msra.mxu0 %v4239
    %4315 = vmatpush.bf16.msra.mxu0 %v4235
    %4316 = vmatpush.bf16.msra.mxu0 %v4231
    %4317 = vmatpush.bf16.msra.mxu0 %v4227
    %4318 = vmatpush.bf16.msra.mxu0 %v4223
    %4319 = vmatmul.bf16.gmra.mxu0 %v4092
    %v4320 = vpop.f32.mrf.mxu0
    %v4321 = vadd.f32 0.0, %v4320
    %v4322 = vpop.f32.mrf.mxu0
    %4323 = vdwg.mxu0
    %4324 = vmatpush.bf16.msra.mxu0 %v4252
    %4325 = vmatpush.bf16.msra.mxu0 %v4248
    %4326 = vmatpush.bf16.msra.mxu0 %v4244
    %4327 = vmatpush.bf16.msra.mxu0 %v4240
    %4328 = vmatpush.bf16.msra.mxu0 %v4236
    %4329 = vmatpush.bf16.msra.mxu0 %v4232
    %4330 = vmatpush.bf16.msra.mxu0 %v4228
    %4331 = vmatpush.bf16.msra.mxu0 %v4224
    %4332 = vmatmul.bf16.gmra.mxu0 %v4092
    %v4333 = vpop.f32.mrf.mxu0
    %v4334 = vadd.f32 0.0, %v4333
    %v4335 = vpop.f32.mrf.mxu0
    %4336 = vdwg.mxu0
    %v4337 = vadd.f32 %v4088, %v4295
    %v4338 = vadd.f32 %v4089, %v4308
    %v4339 = vadd.f32 %v4090, %v4321
    %v4340 = vadd.f32 %v4091, %v4334
    %v4341 = vxor.u32 %v4337, 2147483648
    %v4342 = vxor.u32 %v4338, 2147483648
    %v4343 = vxor.u32 %v4339, 2147483648
    %v4344 = vmul.f32 %v4341, 1.442695
    %v4345 = vpow.pop %v4344
    %v4346 = vmul.f32 %v4342, 1.442695
    %v4347 = vpow.pop %v4346
    %v4348 = vmul.f32 %v4343, 1.442695
    %v4349 = vpow.pop %v4348
    %v4350 = vadd.f32 %v4345, 1.0
    %v4351 = vadd.f32 %v4347, 1.0
    %v4352 = vadd.f32 %v4349, 1.0
    %v4353 = vrcp.pop %v4350
    %v4354 = vmul.f32 %v4350, %v4353
    %v4355 = vsub.f32 1.0, %v4354
    %v4356 = vmul.f32 %v4353, %v4355
    %v4357 = vadd.f32 %v4353, %v4356
    %vm4358 = vweird.f32 %v4350
    %vm4359 = vweird.f32 %v4353
    %vm4360 = vmor %vm4358, %vm4359
    %v4361 = vsel %vm4360, %v4353, %v4357
    %v4362 = vand.u32 2147483647, %v4350
    %vm4363 = vcmp.eq.f32.partialorder %v4362, 8.507059e+37
    %v4364 = vand.u32 %v4350, 2147483648
    %v4365 = vor.u32 1.1754944e-38, %v4364
    %v4366 = vsel %vm4363, %v4365, %v4361
    %v4367 = vmul.f32 1.0, %v4366
    %v4368 = vrcp.pop %v4351
    %v4369 = vmul.f32 %v4351, %v4368
    %v4370 = vsub.f32 1.0, %v4369
    %v4371 = vmul.f32 %v4368, %v4370
    %v4372 = vadd.f32 %v4368, %v4371
    %vm4373 = vweird.f32 %v4351
    %vm4374 = vweird.f32 %v4368
    %vm4375 = vmor %vm4373, %vm4374
    %v4376 = vsel %vm4375, %v4368, %v4372
    %v4377 = vand.u32 2147483647, %v4351
    %vm4378 = vcmp.eq.f32.partialorder %v4377, 8.507059e+37
    %v4379 = vand.u32 %v4351, 2147483648
    %v4380 = vor.u32 1.1754944e-38, %v4379
    %v4381 = vsel %vm4378, %v4380, %v4376
    %v4382 = vmul.f32 1.0, %v4381
    %v4383 = vrcp.pop %v4352
    %v4384 = vmul.f32 %v4352, %v4383
    %v4385 = vsub.f32 1.0, %v4384
    %v4386 = vmul.f32 %v4383, %v4385
    %v4387 = vadd.f32 %v4383, %v4386
    %vm4388 = vweird.f32 %v4352
    %vm4389 = vweird.f32 %v4383
    %vm4390 = vmor %vm4388, %vm4389
    %v4391 = vsel %vm4390, %v4383, %v4387
    %v4392 = vand.u32 2147483647, %v4352
    %vm4393 = vcmp.eq.f32.partialorder %v4392, 8.507059e+37
    %v4394 = vand.u32 %v4352, 2147483648
    %v4395 = vor.u32 1.1754944e-38, %v4394
    %v4396 = vsel %vm4393, %v4395, %v4391
    %v4397 = vmul.f32 1.0, %v4396
    %v4398 = vtanh.pop %v4340
    %v4399 = vmul.f32 %v4382, %v4084
    %v4400 = vmul.f32 %v4367, %v4398
    %v4401 = vadd.f32 %v4399, %v4400
    %v4402 = vtanh.pop %v4401
    %v4403 = vmul.f32 %v4397, %v4402
    %4404 = vst [vmem:[#allocation2 + $0x10] sm:$0xff] %v4403
    %v4405 = vld [vmem:[#allocation3 + $0x60] sm:$0xff]
    %v4406 = vld [vmem:[#allocation3 + $0x68] sm:$0xff]
    %v4407 = vld [vmem:[#allocation3 + $0x70] sm:$0xff]
    %v4408 = vld [vmem:[#allocation3 + $0x78] sm:$0xff]
    %v4409 = vpack.c.bf16 %v4403, %v4403
    %v4410 = vld [vmem:[#allocation9] sm:$0xff]
    %v4411 = vld [vmem:[#allocation9 + $0x8] sm:$0xff]
    %v4412 = vld [vmem:[#allocation9 + $0x10] sm:$0xff]
    %v4413 = vld [vmem:[#allocation9 + $0x18] sm:$0xff]
    %v4414 = vld [vmem:[#allocation9 + $0x20] sm:$0xff]
    %v4415 = vld [vmem:[#allocation9 + $0x28] sm:$0xff]
    %v4416 = vld [vmem:[#allocation9 + $0x30] sm:$0xff]
    %v4417 = vld [vmem:[#allocation9 + $0x38] sm:$0xff]
    %v4418 = vld [vmem:[#allocation9 + $0x40] sm:$0xff]
    %v4419 = vld [vmem:[#allocation9 + $0x48] sm:$0xff]
    %v4420 = vld [vmem:[#allocation9 + $0x50] sm:$0xff]
    %v4421 = vld [vmem:[#allocation9 + $0x58] sm:$0xff]
    %v4422 = vld [vmem:[#allocation9 + $0x60] sm:$0xff]
    %v4423 = vld [vmem:[#allocation9 + $0x68] sm:$0xff]
    %v4424 = vld [vmem:[#allocation9 + $0x70] sm:$0xff]
    %v4425 = vld [vmem:[#allocation9 + $0x78] sm:$0xff]
    %v4426 = vld [vmem:[#allocation9 + $0x80] sm:$0xff]
    %v4427 = vld [vmem:[#allocation9 + $0x88] sm:$0xff]
    %v4428 = vld [vmem:[#allocation9 + $0x90] sm:$0xff]
    %v4429 = vld [vmem:[#allocation9 + $0x98] sm:$0xff]
    %v4430 = vld [vmem:[#allocation9 + $0xa0] sm:$0xff]
    %v4431 = vld [vmem:[#allocation9 + $0xa8] sm:$0xff]
    %v4432 = vld [vmem:[#allocation9 + $0xb0] sm:$0xff]
    %v4433 = vld [vmem:[#allocation9 + $0xb8] sm:$0xff]
    %v4434 = vld [vmem:[#allocation9 + $0xc0] sm:$0xff]
    %v4435 = vld [vmem:[#allocation9 + $0xc8] sm:$0xff]
    %v4436 = vld [vmem:[#allocation9 + $0xd0] sm:$0xff]
    %v4437 = vld [vmem:[#allocation9 + $0xd8] sm:$0xff]
    %v4438 = vld [vmem:[#allocation9 + $0xe0] sm:$0xff]
    %v4439 = vld [vmem:[#allocation9 + $0xe8] sm:$0xff]
    %v4440 = vld [vmem:[#allocation9 + $0xf0] sm:$0xff]
    %v4441 = vld [vmem:[#allocation9 + $0xf8] sm:$0xff]
    %v4474 = vunpack.c.l.b16 %v4410
    %v4475 = vunpack.c.h.b16 %v4410
    %v4476 = vunpack.c.l.b16 %v4411
    %v4477 = vunpack.c.h.b16 %v4411
    %v4478 = vunpack.c.l.b16 %v4412
    %v4479 = vunpack.c.h.b16 %v4412
    %v4480 = vunpack.c.l.b16 %v4413
    %v4481 = vunpack.c.h.b16 %v4413
    %v4482 = vunpack.c.l.b16 %v4414
    %v4483 = vunpack.c.h.b16 %v4414
    %v4484 = vunpack.c.l.b16 %v4415
    %v4485 = vunpack.c.h.b16 %v4415
    %v4486 = vunpack.c.l.b16 %v4416
    %v4487 = vunpack.c.h.b16 %v4416
    %v4488 = vunpack.c.l.b16 %v4417
    %v4489 = vunpack.c.h.b16 %v4417
    %v4490 = vunpack.c.l.b16 %v4418
    %v4491 = vunpack.c.h.b16 %v4418
    %v4492 = vunpack.c.l.b16 %v4419
    %v4493 = vunpack.c.h.b16 %v4419
    %v4494 = vunpack.c.l.b16 %v4420
    %v4495 = vunpack.c.h.b16 %v4420
    %v4496 = vunpack.c.l.b16 %v4421
    %v4497 = vunpack.c.h.b16 %v4421
    %v4498 = vunpack.c.l.b16 %v4422
    %v4499 = vunpack.c.h.b16 %v4422
    %v4500 = vunpack.c.l.b16 %v4423
    %v4501 = vunpack.c.h.b16 %v4423
    %v4502 = vunpack.c.l.b16 %v4424
    %v4503 = vunpack.c.h.b16 %v4424
    %v4504 = vunpack.c.l.b16 %v4425
    %v4505 = vunpack.c.h.b16 %v4425
    %v4506 = vunpack.c.l.b16 %v4426
    %v4507 = vunpack.c.h.b16 %v4426
    %v4508 = vunpack.c.l.b16 %v4427
    %v4509 = vunpack.c.h.b16 %v4427
    %v4510 = vunpack.c.l.b16 %v4428
    %v4511 = vunpack.c.h.b16 %v4428
    %v4512 = vunpack.c.l.b16 %v4429
    %v4513 = vunpack.c.h.b16 %v4429
    %v4514 = vunpack.c.l.b16 %v4430
    %v4515 = vunpack.c.h.b16 %v4430
    %v4516 = vunpack.c.l.b16 %v4431
    %v4517 = vunpack.c.h.b16 %v4431
    %v4518 = vunpack.c.l.b16 %v4432
    %v4519 = vunpack.c.h.b16 %v4432
    %v4520 = vunpack.c.l.b16 %v4433
    %v4521 = vunpack.c.h.b16 %v4433
    %v4522 = vunpack.c.l.b16 %v4434
    %v4523 = vunpack.c.h.b16 %v4434
    %v4524 = vunpack.c.l.b16 %v4435
    %v4525 = vunpack.c.h.b16 %v4435
    %v4526 = vunpack.c.l.b16 %v4436
    %v4527 = vunpack.c.h.b16 %v4436
    %v4528 = vunpack.c.l.b16 %v4437
    %v4529 = vunpack.c.h.b16 %v4437
    %v4530 = vunpack.c.l.b16 %v4438
    %v4531 = vunpack.c.h.b16 %v4438
    %v4532 = vunpack.c.l.b16 %v4439
    %v4533 = vunpack.c.h.b16 %v4439
    %v4534 = vunpack.c.l.b16 %v4440
    %v4535 = vunpack.c.h.b16 %v4440
    %v4536 = vunpack.c.l.b16 %v4441
    %v4537 = vunpack.c.h.b16 %v4441
    %v4538 = vpack.c.b16 %v4478, %v4474
    %v4539 = vpack.c.b16 %v4479, %v4475
    %v4540 = vpack.c.b16 %v4480, %v4476
    %v4541 = vpack.c.b16 %v4481, %v4477
    %v4542 = vpack.c.b16 %v4486, %v4482
    %v4543 = vpack.c.b16 %v4487, %v4483
    %v4544 = vpack.c.b16 %v4488, %v4484
    %v4545 = vpack.c.b16 %v4489, %v4485
    %v4546 = vpack.c.b16 %v4494, %v4490
    %v4547 = vpack.c.b16 %v4495, %v4491
    %v4548 = vpack.c.b16 %v4496, %v4492
    %v4549 = vpack.c.b16 %v4497, %v4493
    %v4550 = vpack.c.b16 %v4502, %v4498
    %v4551 = vpack.c.b16 %v4503, %v4499
    %v4552 = vpack.c.b16 %v4504, %v4500
    %v4553 = vpack.c.b16 %v4505, %v4501
    %v4554 = vpack.c.b16 %v4510, %v4506
    %v4555 = vpack.c.b16 %v4511, %v4507
    %v4556 = vpack.c.b16 %v4512, %v4508
    %v4557 = vpack.c.b16 %v4513, %v4509
    %v4558 = vpack.c.b16 %v4518, %v4514
    %v4559 = vpack.c.b16 %v4519, %v4515
    %v4560 = vpack.c.b16 %v4520, %v4516
    %v4561 = vpack.c.b16 %v4521, %v4517
    %v4562 = vpack.c.b16 %v4526, %v4522
    %v4563 = vpack.c.b16 %v4527, %v4523
    %v4564 = vpack.c.b16 %v4528, %v4524
    %v4565 = vpack.c.b16 %v4529, %v4525
    %v4566 = vpack.c.b16 %v4534, %v4530
    %v4567 = vpack.c.b16 %v4535, %v4531
    %v4568 = vpack.c.b16 %v4536, %v4532
    %v4569 = vpack.c.b16 %v4537, %v4533
    %4602 = vmatpush.bf16.msra.mxu0 %v4566
    %4603 = vmatpush.bf16.msra.mxu0 %v4562
    %4604 = vmatpush.bf16.msra.mxu0 %v4558
    %4605 = vmatpush.bf16.msra.mxu0 %v4554
    %4606 = vmatpush.bf16.msra.mxu0 %v4550
    %4607 = vmatpush.bf16.msra.mxu0 %v4546
    %4608 = vmatpush.bf16.msra.mxu0 %v4542
    %4609 = vmatpush.bf16.msra.mxu0 %v4538
    %4610 = vmatmul.bf16.gmra.mxu0 %v4409
    %v4611 = vpop.f32.mrf.mxu0
    %v4612 = vadd.f32 0.0, %v4611
    %v4613 = vpop.f32.mrf.mxu0
    %4614 = vdwg.mxu0
    %4615 = vmatpush.bf16.msra.mxu0 %v4567
    %4616 = vmatpush.bf16.msra.mxu0 %v4563
    %4617 = vmatpush.bf16.msra.mxu0 %v4559
    %4618 = vmatpush.bf16.msra.mxu0 %v4555
    %4619 = vmatpush.bf16.msra.mxu0 %v4551
    %4620 = vmatpush.bf16.msra.mxu0 %v4547
    %4621 = vmatpush.bf16.msra.mxu0 %v4543
    %4622 = vmatpush.bf16.msra.mxu0 %v4539
    %4623 = vmatmul.bf16.gmra.mxu0 %v4409
    %v4624 = vpop.f32.mrf.mxu0
    %v4625 = vadd.f32 0.0, %v4624
    %v4626 = vpop.f32.mrf.mxu0
    %4627 = vdwg.mxu0
    %4628 = vmatpush.bf16.msra.mxu0 %v4568
    %4629 = vmatpush.bf16.msra.mxu0 %v4564
    %4630 = vmatpush.bf16.msra.mxu0 %v4560
    %4631 = vmatpush.bf16.msra.mxu0 %v4556
    %4632 = vmatpush.bf16.msra.mxu0 %v4552
    %4633 = vmatpush.bf16.msra.mxu0 %v4548
    %4634 = vmatpush.bf16.msra.mxu0 %v4544
    %4635 = vmatpush.bf16.msra.mxu0 %v4540
    %4636 = vmatmul.bf16.gmra.mxu0 %v4409
    %v4637 = vpop.f32.mrf.mxu0
    %v4638 = vadd.f32 0.0, %v4637
    %v4639 = vpop.f32.mrf.mxu0
    %4640 = vdwg.mxu0
    %4641 = vmatpush.bf16.msra.mxu0 %v4569
    %4642 = vmatpush.bf16.msra.mxu0 %v4565
    %4643 = vmatpush.bf16.msra.mxu0 %v4561
    %4644 = vmatpush.bf16.msra.mxu0 %v4557
    %4645 = vmatpush.bf16.msra.mxu0 %v4553
    %4646 = vmatpush.bf16.msra.mxu0 %v4549
    %4647 = vmatpush.bf16.msra.mxu0 %v4545
    %4648 = vmatpush.bf16.msra.mxu0 %v4541
    %4649 = vmatmul.bf16.gmra.mxu0 %v4409
    %v4650 = vpop.f32.mrf.mxu0
    %v4651 = vadd.f32 0.0, %v4650
    %v4652 = vpop.f32.mrf.mxu0
    %4653 = vdwg.mxu0
    %v4654 = vadd.f32 %v4405, %v4612
    %v4655 = vadd.f32 %v4406, %v4625
    %v4656 = vadd.f32 %v4407, %v4638
    %v4657 = vadd.f32 %v4408, %v4651
    %v4658 = vxor.u32 %v4654, 2147483648
    %v4659 = vxor.u32 %v4655, 2147483648
    %v4660 = vxor.u32 %v4656, 2147483648
    %v4661 = vmul.f32 %v4658, 1.442695
    %v4662 = vpow.pop %v4661
    %v4663 = vmul.f32 %v4659, 1.442695
    %v4664 = vpow.pop %v4663
    %v4665 = vmul.f32 %v4660, 1.442695
    %v4666 = vpow.pop %v4665
    %v4667 = vadd.f32 %v4662, 1.0
    %v4668 = vadd.f32 %v4664, 1.0
    %v4669 = vadd.f32 %v4666, 1.0
    %v4670 = vrcp.pop %v4667
    %v4671 = vmul.f32 %v4667, %v4670
    %v4672 = vsub.f32 1.0, %v4671
    %v4673 = vmul.f32 %v4670, %v4672
    %v4674 = vadd.f32 %v4670, %v4673
    %vm4675 = vweird.f32 %v4667
    %vm4676 = vweird.f32 %v4670
    %vm4677 = vmor %vm4675, %vm4676
    %v4678 = vsel %vm4677, %v4670, %v4674
    %v4679 = vand.u32 2147483647, %v4667
    %vm4680 = vcmp.eq.f32.partialorder %v4679, 8.507059e+37
    %v4681 = vand.u32 %v4667, 2147483648
    %v4682 = vor.u32 1.1754944e-38, %v4681
    %v4683 = vsel %vm4680, %v4682, %v4678
    %v4684 = vmul.f32 1.0, %v4683
    %v4685 = vrcp.pop %v4668
    %v4686 = vmul.f32 %v4668, %v4685
    %v4687 = vsub.f32 1.0, %v4686
    %v4688 = vmul.f32 %v4685, %v4687
    %v4689 = vadd.f32 %v4685, %v4688
    %vm4690 = vweird.f32 %v4668
    %vm4691 = vweird.f32 %v4685
    %vm4692 = vmor %vm4690, %vm4691
    %v4693 = vsel %vm4692, %v4685, %v4689
    %v4694 = vand.u32 2147483647, %v4668
    %vm4695 = vcmp.eq.f32.partialorder %v4694, 8.507059e+37
    %v4696 = vand.u32 %v4668, 2147483648
    %v4697 = vor.u32 1.1754944e-38, %v4696
    %v4698 = vsel %vm4695, %v4697, %v4693
    %v4699 = vmul.f32 1.0, %v4698
    %v4700 = vrcp.pop %v4669
    %v4701 = vmul.f32 %v4669, %v4700
    %v4702 = vsub.f32 1.0, %v4701
    %v4703 = vmul.f32 %v4700, %v4702
    %v4704 = vadd.f32 %v4700, %v4703
    %vm4705 = vweird.f32 %v4669
    %vm4706 = vweird.f32 %v4700
    %vm4707 = vmor %vm4705, %vm4706
    %v4708 = vsel %vm4707, %v4700, %v4704
    %v4709 = vand.u32 2147483647, %v4669
    %vm4710 = vcmp.eq.f32.partialorder %v4709, 8.507059e+37
    %v4711 = vand.u32 %v4669, 2147483648
    %v4712 = vor.u32 1.1754944e-38, %v4711
    %v4713 = vsel %vm4710, %v4712, %v4708
    %v4714 = vmul.f32 1.0, %v4713
    %v4715 = vtanh.pop %v4657
    %v4716 = vmul.f32 %v4699, %v4401
    %v4717 = vmul.f32 %v4684, %v4715
    %v4718 = vadd.f32 %v4716, %v4717
    %v4719 = vtanh.pop %v4718
    %v4720 = vmul.f32 %v4714, %v4719
    %4721 = vst [vmem:[#allocation2 + $0x18] sm:$0xff] %v4720
    %v4722 = vld [vmem:[#allocation3 + $0x80] sm:$0xff]
    %v4723 = vld [vmem:[#allocation3 + $0x88] sm:$0xff]
    %v4724 = vld [vmem:[#allocation3 + $0x90] sm:$0xff]
    %v4725 = vld [vmem:[#allocation3 + $0x98] sm:$0xff]
    %v4726 = vpack.c.bf16 %v4720, %v4720
    %v4727 = vld [vmem:[#allocation9] sm:$0xff]
    %v4728 = vld [vmem:[#allocation9 + $0x8] sm:$0xff]
    %v4729 = vld [vmem:[#allocation9 + $0x10] sm:$0xff]
    %v4730 = vld [vmem:[#allocation9 + $0x18] sm:$0xff]
    %v4731 = vld [vmem:[#allocation9 + $0x20] sm:$0xff]
    %v4732 = vld [vmem:[#allocation9 + $0x28] sm:$0xff]
    %v4733 = vld [vmem:[#allocation9 + $0x30] sm:$0xff]
    %v4734 = vld [vmem:[#allocation9 + $0x38] sm:$0xff]
    %v4735 = vld [vmem:[#allocation9 + $0x40] sm:$0xff]
    %v4736 = vld [vmem:[#allocation9 + $0x48] sm:$0xff]
    %v4737 = vld [vmem:[#allocation9 + $0x50] sm:$0xff]
    %v4738 = vld [vmem:[#allocation9 + $0x58] sm:$0xff]
    %v4739 = vld [vmem:[#allocation9 + $0x60] sm:$0xff]
    %v4740 = vld [vmem:[#allocation9 + $0x68] sm:$0xff]
    %v4741 = vld [vmem:[#allocation9 + $0x70] sm:$0xff]
    %v4742 = vld [vmem:[#allocation9 + $0x78] sm:$0xff]
    %v4743 = vld [vmem:[#allocation9 + $0x80] sm:$0xff]
    %v4744 = vld [vmem:[#allocation9 + $0x88] sm:$0xff]
    %v4745 = vld [vmem:[#allocation9 + $0x90] sm:$0xff]
    %v4746 = vld [vmem:[#allocation9 + $0x98] sm:$0xff]
    %v4747 = vld [vmem:[#allocation9 + $0xa0] sm:$0xff]
    %v4748 = vld [vmem:[#allocation9 + $0xa8] sm:$0xff]
    %v4749 = vld [vmem:[#allocation9 + $0xb0] sm:$0xff]
    %v4750 = vld [vmem:[#allocation9 + $0xb8] sm:$0xff]
    %v4751 = vld [vmem:[#allocation9 + $0xc0] sm:$0xff]
    %v4752 = vld [vmem:[#allocation9 + $0xc8] sm:$0xff]
    %v4753 = vld [vmem:[#allocation9 + $0xd0] sm:$0xff]
    %v4754 = vld [vmem:[#allocation9 + $0xd8] sm:$0xff]
    %v4755 = vld [vmem:[#allocation9 + $0xe0] sm:$0xff]
    %v4756 = vld [vmem:[#allocation9 + $0xe8] sm:$0xff]
    %v4757 = vld [vmem:[#allocation9 + $0xf0] sm:$0xff]
    %v4758 = vld [vmem:[#allocation9 + $0xf8] sm:$0xff]
    %v4791 = vunpack.c.l.b16 %v4727
    %v4792 = vunpack.c.h.b16 %v4727
    %v4793 = vunpack.c.l.b16 %v4728
    %v4794 = vunpack.c.h.b16 %v4728
    %v4795 = vunpack.c.l.b16 %v4729
    %v4796 = vunpack.c.h.b16 %v4729
    %v4797 = vunpack.c.l.b16 %v4730
    %v4798 = vunpack.c.h.b16 %v4730
    %v4799 = vunpack.c.l.b16 %v4731
    %v4800 = vunpack.c.h.b16 %v4731
    %v4801 = vunpack.c.l.b16 %v4732
    %v4802 = vunpack.c.h.b16 %v4732
    %v4803 = vunpack.c.l.b16 %v4733
    %v4804 = vunpack.c.h.b16 %v4733
    %v4805 = vunpack.c.l.b16 %v4734
    %v4806 = vunpack.c.h.b16 %v4734
    %v4807 = vunpack.c.l.b16 %v4735
    %v4808 = vunpack.c.h.b16 %v4735
    %v4809 = vunpack.c.l.b16 %v4736
    %v4810 = vunpack.c.h.b16 %v4736
    %v4811 = vunpack.c.l.b16 %v4737
    %v4812 = vunpack.c.h.b16 %v4737
    %v4813 = vunpack.c.l.b16 %v4738
    %v4814 = vunpack.c.h.b16 %v4738
    %v4815 = vunpack.c.l.b16 %v4739
    %v4816 = vunpack.c.h.b16 %v4739
    %v4817 = vunpack.c.l.b16 %v4740
    %v4818 = vunpack.c.h.b16 %v4740
    %v4819 = vunpack.c.l.b16 %v4741
    %v4820 = vunpack.c.h.b16 %v4741
    %v4821 = vunpack.c.l.b16 %v4742
    %v4822 = vunpack.c.h.b16 %v4742
    %v4823 = vunpack.c.l.b16 %v4743
    %v4824 = vunpack.c.h.b16 %v4743
    %v4825 = vunpack.c.l.b16 %v4744
    %v4826 = vunpack.c.h.b16 %v4744
    %v4827 = vunpack.c.l.b16 %v4745
    %v4828 = vunpack.c.h.b16 %v4745
    %v4829 = vunpack.c.l.b16 %v4746
    %v4830 = vunpack.c.h.b16 %v4746
    %v4831 = vunpack.c.l.b16 %v4747
    %v4832 = vunpack.c.h.b16 %v4747
    %v4833 = vunpack.c.l.b16 %v4748
    %v4834 = vunpack.c.h.b16 %v4748
    %v4835 = vunpack.c.l.b16 %v4749
    %v4836 = vunpack.c.h.b16 %v4749
    %v4837 = vunpack.c.l.b16 %v4750
    %v4838 = vunpack.c.h.b16 %v4750
    %v4839 = vunpack.c.l.b16 %v4751
    %v4840 = vunpack.c.h.b16 %v4751
    %v4841 = vunpack.c.l.b16 %v4752
    %v4842 = vunpack.c.h.b16 %v4752
    %v4843 = vunpack.c.l.b16 %v4753
    %v4844 = vunpack.c.h.b16 %v4753
    %v4845 = vunpack.c.l.b16 %v4754
    %v4846 = vunpack.c.h.b16 %v4754
    %v4847 = vunpack.c.l.b16 %v4755
    %v4848 = vunpack.c.h.b16 %v4755
    %v4849 = vunpack.c.l.b16 %v4756
    %v4850 = vunpack.c.h.b16 %v4756
    %v4851 = vunpack.c.l.b16 %v4757
    %v4852 = vunpack.c.h.b16 %v4757
    %v4853 = vunpack.c.l.b16 %v4758
    %v4854 = vunpack.c.h.b16 %v4758
    %v4855 = vpack.c.b16 %v4795, %v4791
    %v4856 = vpack.c.b16 %v4796, %v4792
    %v4857 = vpack.c.b16 %v4797, %v4793
    %v4858 = vpack.c.b16 %v4798, %v4794
    %v4859 = vpack.c.b16 %v4803, %v4799
    %v4860 = vpack.c.b16 %v4804, %v4800
    %v4861 = vpack.c.b16 %v4805, %v4801
    %v4862 = vpack.c.b16 %v4806, %v4802
    %v4863 = vpack.c.b16 %v4811, %v4807
    %v4864 = vpack.c.b16 %v4812, %v4808
    %v4865 = vpack.c.b16 %v4813, %v4809
    %v4866 = vpack.c.b16 %v4814, %v4810
    %v4867 = vpack.c.b16 %v4819, %v4815
    %v4868 = vpack.c.b16 %v4820, %v4816
    %v4869 = vpack.c.b16 %v4821, %v4817
    %v4870 = vpack.c.b16 %v4822, %v4818
    %v4871 = vpack.c.b16 %v4827, %v4823
    %v4872 = vpack.c.b16 %v4828, %v4824
    %v4873 = vpack.c.b16 %v4829, %v4825
    %v4874 = vpack.c.b16 %v4830, %v4826
    %v4875 = vpack.c.b16 %v4835, %v4831
    %v4876 = vpack.c.b16 %v4836, %v4832
    %v4877 = vpack.c.b16 %v4837, %v4833
    %v4878 = vpack.c.b16 %v4838, %v4834
    %v4879 = vpack.c.b16 %v4843, %v4839
    %v4880 = vpack.c.b16 %v4844, %v4840
    %v4881 = vpack.c.b16 %v4845, %v4841
    %v4882 = vpack.c.b16 %v4846, %v4842
    %v4883 = vpack.c.b16 %v4851, %v4847
    %v4884 = vpack.c.b16 %v4852, %v4848
    %v4885 = vpack.c.b16 %v4853, %v4849
    %v4886 = vpack.c.b16 %v4854, %v4850
    %4919 = vmatpush.bf16.msra.mxu0 %v4883
    %4920 = vmatpush.bf16.msra.mxu0 %v4879
    %4921 = vmatpush.bf16.msra.mxu0 %v4875
    %4922 = vmatpush.bf16.msra.mxu0 %v4871
    %4923 = vmatpush.bf16.msra.mxu0 %v4867
    %4924 = vmatpush.bf16.msra.mxu0 %v4863
    %4925 = vmatpush.bf16.msra.mxu0 %v4859
    %4926 = vmatpush.bf16.msra.mxu0 %v4855
    %4927 = vmatmul.bf16.gmra.mxu0 %v4726
    %v4928 = vpop.f32.mrf.mxu0
    %v4929 = vadd.f32 0.0, %v4928
    %v4930 = vpop.f32.mrf.mxu0
    %4931 = vdwg.mxu0
    %4932 = vmatpush.bf16.msra.mxu0 %v4884
    %4933 = vmatpush.bf16.msra.mxu0 %v4880
    %4934 = vmatpush.bf16.msra.mxu0 %v4876
    %4935 = vmatpush.bf16.msra.mxu0 %v4872
    %4936 = vmatpush.bf16.msra.mxu0 %v4868
    %4937 = vmatpush.bf16.msra.mxu0 %v4864
    %4938 = vmatpush.bf16.msra.mxu0 %v4860
    %4939 = vmatpush.bf16.msra.mxu0 %v4856
    %4940 = vmatmul.bf16.gmra.mxu0 %v4726
    %v4941 = vpop.f32.mrf.mxu0
    %v4942 = vadd.f32 0.0, %v4941
    %v4943 = vpop.f32.mrf.mxu0
    %4944 = vdwg.mxu0
    %4945 = vmatpush.bf16.msra.mxu0 %v4885
    %4946 = vmatpush.bf16.msra.mxu0 %v4881
    %4947 = vmatpush.bf16.msra.mxu0 %v4877
    %4948 = vmatpush.bf16.msra.mxu0 %v4873
    %4949 = vmatpush.bf16.msra.mxu0 %v4869
    %4950 = vmatpush.bf16.msra.mxu0 %v4865
    %4951 = vmatpush.bf16.msra.mxu0 %v4861
    %4952 = vmatpush.bf16.msra.mxu0 %v4857
    %4953 = vmatmul.bf16.gmra.mxu0 %v4726
    %v4954 = vpop.f32.mrf.mxu0
    %v4955 = vadd.f32 0.0, %v4954
    %v4956 = vpop.f32.mrf.mxu0
    %4957 = vdwg.mxu0
    %4958 = vmatpush.bf16.msra.mxu0 %v4886
    %4959 = vmatpush.bf16.msra.mxu0 %v4882
    %4960 = vmatpush.bf16.msra.mxu0 %v4878
    %4961 = vmatpush.bf16.msra.mxu0 %v4874
    %4962 = vmatpush.bf16.msra.mxu0 %v4870
    %4963 = vmatpush.bf16.msra.mxu0 %v4866
    %4964 = vmatpush.bf16.msra.mxu0 %v4862
    %4965 = vmatpush.bf16.msra.mxu0 %v4858
    %4966 = vmatmul.bf16.gmra.mxu0 %v4726
    %v4967 = vpop.f32.mrf.mxu0
    %v4968 = vadd.f32 0.0, %v4967
    %v4969 = vpop.f32.mrf.mxu0
    %4970 = vdwg.mxu0
    %v4971 = vadd.f32 %v4722, %v4929
    %v4972 = vadd.f32 %v4723, %v4942
    %v4973 = vadd.f32 %v4724, %v4955
    %v4974 = vadd.f32 %v4725, %v4968
    %v4975 = vxor.u32 %v4971, 2147483648
    %v4976 = vxor.u32 %v4972, 2147483648
    %v4977 = vxor.u32 %v4973, 2147483648
    %v4978 = vmul.f32 %v4975, 1.442695
    %v4979 = vpow.pop %v4978
    %v4980 = vmul.f32 %v4976, 1.442695
    %v4981 = vpow.pop %v4980
    %v4982 = vmul.f32 %v4977, 1.442695
    %v4983 = vpow.pop %v4982
    %v4984 = vadd.f32 %v4979, 1.0
    %v4985 = vadd.f32 %v4981, 1.0
    %v4986 = vadd.f32 %v4983, 1.0
    %v4987 = vrcp.pop %v4984
    %v4988 = vmul.f32 %v4984, %v4987
    %v4989 = vsub.f32 1.0, %v4988
    %v4990 = vmul.f32 %v4987, %v4989
    %v4991 = vadd.f32 %v4987, %v4990
    %vm4992 = vweird.f32 %v4984
    %vm4993 = vweird.f32 %v4987
    %vm4994 = vmor %vm4992, %vm4993
    %v4995 = vsel %vm4994, %v4987, %v4991
    %v4996 = vand.u32 2147483647, %v4984
    %vm4997 = vcmp.eq.f32.partialorder %v4996, 8.507059e+37
    %v4998 = vand.u32 %v4984, 2147483648
    %v4999 = vor.u32 1.1754944e-38, %v4998
    %v5000 = vsel %vm4997, %v4999, %v4995
    %v5001 = vmul.f32 1.0, %v5000
    %v5002 = vrcp.pop %v4985
    %v5003 = vmul.f32 %v4985, %v5002
    %v5004 = vsub.f32 1.0, %v5003
    %v5005 = vmul.f32 %v5002, %v5004
    %v5006 = vadd.f32 %v5002, %v5005
    %vm5007 = vweird.f32 %v4985
    %vm5008 = vweird.f32 %v5002
    %vm5009 = vmor %vm5007, %vm5008
    %v5010 = vsel %vm5009, %v5002, %v5006
    %v5011 = vand.u32 2147483647, %v4985
    %vm5012 = vcmp.eq.f32.partialorder %v5011, 8.507059e+37
    %v5013 = vand.u32 %v4985, 2147483648
    %v5014 = vor.u32 1.1754944e-38, %v5013
    %v5015 = vsel %vm5012, %v5014, %v5010
    %v5016 = vmul.f32 1.0, %v5015
    %v5017 = vrcp.pop %v4986
    %v5018 = vmul.f32 %v4986, %v5017
    %v5019 = vsub.f32 1.0, %v5018
    %v5020 = vmul.f32 %v5017, %v5019
    %v5021 = vadd.f32 %v5017, %v5020
    %vm5022 = vweird.f32 %v4986
    %vm5023 = vweird.f32 %v5017
    %vm5024 = vmor %vm5022, %vm5023
    %v5025 = vsel %vm5024, %v5017, %v5021
    %v5026 = vand.u32 2147483647, %v4986
    %vm5027 = vcmp.eq.f32.partialorder %v5026, 8.507059e+37
    %v5028 = vand.u32 %v4986, 2147483648
    %v5029 = vor.u32 1.1754944e-38, %v5028
    %v5030 = vsel %vm5027, %v5029, %v5025
    %v5031 = vmul.f32 1.0, %v5030
    %v5032 = vtanh.pop %v4974
    %v5033 = vmul.f32 %v5016, %v4718
    %v5034 = vmul.f32 %v5001, %v5032
    %v5035 = vadd.f32 %v5033, %v5034
    %v5036 = vtanh.pop %v5035
    %v5037 = vmul.f32 %v5031, %v5036
    %5038 = vst [vmem:[#allocation2 + $0x20] sm:$0xff] %v5037
    %v5039 = vld [vmem:[#allocation3 + $0xa0] sm:$0xff]
    %v5040 = vld [vmem:[#allocation3 + $0xa8] sm:$0xff]
    %v5041 = vld [vmem:[#allocation3 + $0xb0] sm:$0xff]
    %v5042 = vld [vmem:[#allocation3 + $0xb8] sm:$0xff]
    %v5043 = vpack.c.bf16 %v5037, %v5037
    %v5044 = vld [vmem:[#allocation9] sm:$0xff]
    %v5045 = vld [vmem:[#allocation9 + $0x8] sm:$0xff]
    %v5046 = vld [vmem:[#allocation9 + $0x10] sm:$0xff]
    %v5047 = vld [vmem:[#allocation9 + $0x18] sm:$0xff]
    %v5048 = vld [vmem:[#allocation9 + $0x20] sm:$0xff]
    %v5049 = vld [vmem:[#allocation9 + $0x28] sm:$0xff]
    %v5050 = vld [vmem:[#allocation9 + $0x30] sm:$0xff]
    %v5051 = vld [vmem:[#allocation9 + $0x38] sm:$0xff]
    %v5052 = vld [vmem:[#allocation9 + $0x40] sm:$0xff]
    %v5053 = vld [vmem:[#allocation9 + $0x48] sm:$0xff]
    %v5054 = vld [vmem:[#allocation9 + $0x50] sm:$0xff]
    %v5055 = vld [vmem:[#allocation9 + $0x58] sm:$0xff]
    %v5056 = vld [vmem:[#allocation9 + $0x60] sm:$0xff]
    %v5057 = vld [vmem:[#allocation9 + $0x68] sm:$0xff]
    %v5058 = vld [vmem:[#allocation9 + $0x70] sm:$0xff]
    %v5059 = vld [vmem:[#allocation9 + $0x78] sm:$0xff]
    %v5060 = vld [vmem:[#allocation9 + $0x80] sm:$0xff]
    %v5061 = vld [vmem:[#allocation9 + $0x88] sm:$0xff]
    %v5062 = vld [vmem:[#allocation9 + $0x90] sm:$0xff]
    %v5063 = vld [vmem:[#allocation9 + $0x98] sm:$0xff]
    %v5064 = vld [vmem:[#allocation9 + $0xa0] sm:$0xff]
    %v5065 = vld [vmem:[#allocation9 + $0xa8] sm:$0xff]
    %v5066 = vld [vmem:[#allocation9 + $0xb0] sm:$0xff]
    %v5067 = vld [vmem:[#allocation9 + $0xb8] sm:$0xff]
    %v5068 = vld [vmem:[#allocation9 + $0xc0] sm:$0xff]
    %v5069 = vld [vmem:[#allocation9 + $0xc8] sm:$0xff]
    %v5070 = vld [vmem:[#allocation9 + $0xd0] sm:$0xff]
    %v5071 = vld [vmem:[#allocation9 + $0xd8] sm:$0xff]
    %v5072 = vld [vmem:[#allocation9 + $0xe0] sm:$0xff]
    %v5073 = vld [vmem:[#allocation9 + $0xe8] sm:$0xff]
    %v5074 = vld [vmem:[#allocation9 + $0xf0] sm:$0xff]
    %v5075 = vld [vmem:[#allocation9 + $0xf8] sm:$0xff]
    %v5108 = vunpack.c.l.b16 %v5044
    %v5109 = vunpack.c.h.b16 %v5044
    %v5110 = vunpack.c.l.b16 %v5045
    %v5111 = vunpack.c.h.b16 %v5045
    %v5112 = vunpack.c.l.b16 %v5046
    %v5113 = vunpack.c.h.b16 %v5046
    %v5114 = vunpack.c.l.b16 %v5047
    %v5115 = vunpack.c.h.b16 %v5047
    %v5116 = vunpack.c.l.b16 %v5048
    %v5117 = vunpack.c.h.b16 %v5048
    %v5118 = vunpack.c.l.b16 %v5049
    %v5119 = vunpack.c.h.b16 %v5049
    %v5120 = vunpack.c.l.b16 %v5050
    %v5121 = vunpack.c.h.b16 %v5050
    %v5122 = vunpack.c.l.b16 %v5051
    %v5123 = vunpack.c.h.b16 %v5051
    %v5124 = vunpack.c.l.b16 %v5052
    %v5125 = vunpack.c.h.b16 %v5052
    %v5126 = vunpack.c.l.b16 %v5053
    %v5127 = vunpack.c.h.b16 %v5053
    %v5128 = vunpack.c.l.b16 %v5054
    %v5129 = vunpack.c.h.b16 %v5054
    %v5130 = vunpack.c.l.b16 %v5055
    %v5131 = vunpack.c.h.b16 %v5055
    %v5132 = vunpack.c.l.b16 %v5056
    %v5133 = vunpack.c.h.b16 %v5056
    %v5134 = vunpack.c.l.b16 %v5057
    %v5135 = vunpack.c.h.b16 %v5057
    %v5136 = vunpack.c.l.b16 %v5058
    %v5137 = vunpack.c.h.b16 %v5058
    %v5138 = vunpack.c.l.b16 %v5059
    %v5139 = vunpack.c.h.b16 %v5059
    %v5140 = vunpack.c.l.b16 %v5060
    %v5141 = vunpack.c.h.b16 %v5060
    %v5142 = vunpack.c.l.b16 %v5061
    %v5143 = vunpack.c.h.b16 %v5061
    %v5144 = vunpack.c.l.b16 %v5062
    %v5145 = vunpack.c.h.b16 %v5062
    %v5146 = vunpack.c.l.b16 %v5063
    %v5147 = vunpack.c.h.b16 %v5063
    %v5148 = vunpack.c.l.b16 %v5064
    %v5149 = vunpack.c.h.b16 %v5064
    %v5150 = vunpack.c.l.b16 %v5065
    %v5151 = vunpack.c.h.b16 %v5065
    %v5152 = vunpack.c.l.b16 %v5066
    %v5153 = vunpack.c.h.b16 %v5066
    %v5154 = vunpack.c.l.b16 %v5067
    %v5155 = vunpack.c.h.b16 %v5067
    %v5156 = vunpack.c.l.b16 %v5068
    %v5157 = vunpack.c.h.b16 %v5068
    %v5158 = vunpack.c.l.b16 %v5069
    %v5159 = vunpack.c.h.b16 %v5069
    %v5160 = vunpack.c.l.b16 %v5070
    %v5161 = vunpack.c.h.b16 %v5070
    %v5162 = vunpack.c.l.b16 %v5071
    %v5163 = vunpack.c.h.b16 %v5071
    %v5164 = vunpack.c.l.b16 %v5072
    %v5165 = vunpack.c.h.b16 %v5072
    %v5166 = vunpack.c.l.b16 %v5073
    %v5167 = vunpack.c.h.b16 %v5073
    %v5168 = vunpack.c.l.b16 %v5074
    %v5169 = vunpack.c.h.b16 %v5074
    %v5170 = vunpack.c.l.b16 %v5075
    %v5171 = vunpack.c.h.b16 %v5075
    %v5172 = vpack.c.b16 %v5112, %v5108
    %v5173 = vpack.c.b16 %v5113, %v5109
    %v5174 = vpack.c.b16 %v5114, %v5110
    %v5175 = vpack.c.b16 %v5115, %v5111
    %v5176 = vpack.c.b16 %v5120, %v5116
    %v5177 = vpack.c.b16 %v5121, %v5117
    %v5178 = vpack.c.b16 %v5122, %v5118
    %v5179 = vpack.c.b16 %v5123, %v5119
    %v5180 = vpack.c.b16 %v5128, %v5124
    %v5181 = vpack.c.b16 %v5129, %v5125
    %v5182 = vpack.c.b16 %v5130, %v5126
    %v5183 = vpack.c.b16 %v5131, %v5127
    %v5184 = vpack.c.b16 %v5136, %v5132
    %v5185 = vpack.c.b16 %v5137, %v5133
    %v5186 = vpack.c.b16 %v5138, %v5134
    %v5187 = vpack.c.b16 %v5139, %v5135
    %v5188 = vpack.c.b16 %v5144, %v5140
    %v5189 = vpack.c.b16 %v5145, %v5141
    %v5190 = vpack.c.b16 %v5146, %v5142
    %v5191 = vpack.c.b16 %v5147, %v5143
    %v5192 = vpack.c.b16 %v5152, %v5148
    %v5193 = vpack.c.b16 %v5153, %v5149
    %v5194 = vpack.c.b16 %v5154, %v5150
    %v5195 = vpack.c.b16 %v5155, %v5151
    %v5196 = vpack.c.b16 %v5160, %v5156
    %v5197 = vpack.c.b16 %v5161, %v5157
    %v5198 = vpack.c.b16 %v5162, %v5158
    %v5199 = vpack.c.b16 %v5163, %v5159
    %v5200 = vpack.c.b16 %v5168, %v5164
    %v5201 = vpack.c.b16 %v5169, %v5165
    %v5202 = vpack.c.b16 %v5170, %v5166
    %v5203 = vpack.c.b16 %v5171, %v5167
    %5236 = vmatpush.bf16.msra.mxu0 %v5200
    %5237 = vmatpush.bf16.msra.mxu0 %v5196
    %5238 = vmatpush.bf16.msra.mxu0 %v5192
    %5239 = vmatpush.bf16.msra.mxu0 %v5188
    %5240 = vmatpush.bf16.msra.mxu0 %v5184
    %5241 = vmatpush.bf16.msra.mxu0 %v5180
    %5242 = vmatpush.bf16.msra.mxu0 %v5176
    %5243 = vmatpush.bf16.msra.mxu0 %v5172
    %5244 = vmatmul.bf16.gmra.mxu0 %v5043
    %v5245 = vpop.f32.mrf.mxu0
    %v5246 = vadd.f32 0.0, %v5245
    %v5247 = vpop.f32.mrf.mxu0
    %5248 = vdwg.mxu0
    %5249 = vmatpush.bf16.msra.mxu0 %v5201
    %5250 = vmatpush.bf16.msra.mxu0 %v5197
    %5251 = vmatpush.bf16.msra.mxu0 %v5193
    %5252 = vmatpush.bf16.msra.mxu0 %v5189
    %5253 = vmatpush.bf16.msra.mxu0 %v5185
    %5254 = vmatpush.bf16.msra.mxu0 %v5181
    %5255 = vmatpush.bf16.msra.mxu0 %v5177
    %5256 = vmatpush.bf16.msra.mxu0 %v5173
    %5257 = vmatmul.bf16.gmra.mxu0 %v5043
    %v5258 = vpop.f32.mrf.mxu0
    %v5259 = vadd.f32 0.0, %v5258
    %v5260 = vpop.f32.mrf.mxu0
    %5261 = vdwg.mxu0
    %5262 = vmatpush.bf16.msra.mxu0 %v5202
    %5263 = vmatpush.bf16.msra.mxu0 %v5198
    %5264 = vmatpush.bf16.msra.mxu0 %v5194
    %5265 = vmatpush.bf16.msra.mxu0 %v5190
    %5266 = vmatpush.bf16.msra.mxu0 %v5186
    %5267 = vmatpush.bf16.msra.mxu0 %v5182
    %5268 = vmatpush.bf16.msra.mxu0 %v5178
    %5269 = vmatpush.bf16.msra.mxu0 %v5174
    %5270 = vmatmul.bf16.gmra.mxu0 %v5043
    %v5271 = vpop.f32.mrf.mxu0
    %v5272 = vadd.f32 0.0, %v5271
    %v5273 = vpop.f32.mrf.mxu0
    %5274 = vdwg.mxu0
    %5275 = vmatpush.bf16.msra.mxu0 %v5203
    %5276 = vmatpush.bf16.msra.mxu0 %v5199
    %5277 = vmatpush.bf16.msra.mxu0 %v5195
    %5278 = vmatpush.bf16.msra.mxu0 %v5191
    %5279 = vmatpush.bf16.msra.mxu0 %v5187
    %5280 = vmatpush.bf16.msra.mxu0 %v5183
    %5281 = vmatpush.bf16.msra.mxu0 %v5179
    %5282 = vmatpush.bf16.msra.mxu0 %v5175
    %5283 = vmatmul.bf16.gmra.mxu0 %v5043
    %v5284 = vpop.f32.mrf.mxu0
    %v5285 = vadd.f32 0.0, %v5284
    %v5286 = vpop.f32.mrf.mxu0
    %5287 = vdwg.mxu0
    %v5288 = vadd.f32 %v5039, %v5246
    %v5289 = vadd.f32 %v5040, %v5259
    %v5290 = vadd.f32 %v5041, %v5272
    %v5291 = vadd.f32 %v5042, %v5285
    %v5292 = vxor.u32 %v5288, 2147483648
    %v5293 = vxor.u32 %v5289, 2147483648
    %v5294 = vxor.u32 %v5290, 2147483648
    %v5295 = vmul.f32 %v5292, 1.442695
    %v5296 = vpow.pop %v5295
    %v5297 = vmul.f32 %v5293, 1.442695
    %v5298 = vpow.pop %v5297
    %v5299 = vmul.f32 %v5294, 1.442695
    %v5300 = vpow.pop %v5299
    %v5301 = vadd.f32 %v5296, 1.0
    %v5302 = vadd.f32 %v5298, 1.0
    %v5303 = vadd.f32 %v5300, 1.0
    %v5304 = vrcp.pop %v5301
    %v5305 = vmul.f32 %v5301, %v5304
    %v5306 = vsub.f32 1.0, %v5305
    %v5307 = vmul.f32 %v5304, %v5306
    %v5308 = vadd.f32 %v5304, %v5307
    %vm5309 = vweird.f32 %v5301
    %vm5310 = vweird.f32 %v5304
    %vm5311 = vmor %vm5309, %vm5310
    %v5312 = vsel %vm5311, %v5304, %v5308
    %v5313 = vand.u32 2147483647, %v5301
    %vm5314 = vcmp.eq.f32.partialorder %v5313, 8.507059e+37
    %v5315 = vand.u32 %v5301, 2147483648
    %v5316 = vor.u32 1.1754944e-38, %v5315
    %v5317 = vsel %vm5314, %v5316, %v5312
    %v5318 = vmul.f32 1.0, %v5317
    %v5319 = vrcp.pop %v5302
    %v5320 = vmul.f32 %v5302, %v5319
    %v5321 = vsub.f32 1.0, %v5320
    %v5322 = vmul.f32 %v5319, %v5321
    %v5323 = vadd.f32 %v5319, %v5322
    %vm5324 = vweird.f32 %v5302
    %vm5325 = vweird.f32 %v5319
    %vm5326 = vmor %vm5324, %vm5325
    %v5327 = vsel %vm5326, %v5319, %v5323
    %v5328 = vand.u32 2147483647, %v5302
    %vm5329 = vcmp.eq.f32.partialorder %v5328, 8.507059e+37
    %v5330 = vand.u32 %v5302, 2147483648
    %v5331 = vor.u32 1.1754944e-38, %v5330
    %v5332 = vsel %vm5329, %v5331, %v5327
    %v5333 = vmul.f32 1.0, %v5332
    %v5334 = vrcp.pop %v5303
    %v5335 = vmul.f32 %v5303, %v5334
    %v5336 = vsub.f32 1.0, %v5335
    %v5337 = vmul.f32 %v5334, %v5336
    %v5338 = vadd.f32 %v5334, %v5337
    %vm5339 = vweird.f32 %v5303
    %vm5340 = vweird.f32 %v5334
    %vm5341 = vmor %vm5339, %vm5340
    %v5342 = vsel %vm5341, %v5334, %v5338
    %v5343 = vand.u32 2147483647, %v5303
    %vm5344 = vcmp.eq.f32.partialorder %v5343, 8.507059e+37
    %v5345 = vand.u32 %v5303, 2147483648
    %v5346 = vor.u32 1.1754944e-38, %v5345
    %v5347 = vsel %vm5344, %v5346, %v5342
    %v5348 = vmul.f32 1.0, %v5347
    %v5349 = vtanh.pop %v5291
    %v5350 = vmul.f32 %v5333, %v5035
    %v5351 = vmul.f32 %v5318, %v5349
    %v5352 = vadd.f32 %v5350, %v5351
    %v5353 = vtanh.pop %v5352
    %v5354 = vmul.f32 %v5348, %v5353
    %5355 = vst [vmem:[#allocation2 + $0x28] sm:$0xff] %v5354
    %v5356 = vld [vmem:[#allocation3 + $0xc0] sm:$0xff]
    %v5357 = vld [vmem:[#allocation3 + $0xc8] sm:$0xff]
    %v5358 = vld [vmem:[#allocation3 + $0xd0] sm:$0xff]
    %v5359 = vld [vmem:[#allocation3 + $0xd8] sm:$0xff]
    %v5360 = vpack.c.bf16 %v5354, %v5354
    %v5361 = vld [vmem:[#allocation9] sm:$0xff]
    %v5362 = vld [vmem:[#allocation9 + $0x8] sm:$0xff]
    %v5363 = vld [vmem:[#allocation9 + $0x10] sm:$0xff]
    %v5364 = vld [vmem:[#allocation9 + $0x18] sm:$0xff]
    %v5365 = vld [vmem:[#allocation9 + $0x20] sm:$0xff]
    %v5366 = vld [vmem:[#allocation9 + $0x28] sm:$0xff]
    %v5367 = vld [vmem:[#allocation9 + $0x30] sm:$0xff]
    %v5368 = vld [vmem:[#allocation9 + $0x38] sm:$0xff]
    %v5369 = vld [vmem:[#allocation9 + $0x40] sm:$0xff]
    %v5370 = vld [vmem:[#allocation9 + $0x48] sm:$0xff]
    %v5371 = vld [vmem:[#allocation9 + $0x50] sm:$0xff]
    %v5372 = vld [vmem:[#allocation9 + $0x58] sm:$0xff]
    %v5373 = vld [vmem:[#allocation9 + $0x60] sm:$0xff]
    %v5374 = vld [vmem:[#allocation9 + $0x68] sm:$0xff]
    %v5375 = vld [vmem:[#allocation9 + $0x70] sm:$0xff]
    %v5376 = vld [vmem:[#allocation9 + $0x78] sm:$0xff]
    %v5377 = vld [vmem:[#allocation9 + $0x80] sm:$0xff]
    %v5378 = vld [vmem:[#allocation9 + $0x88] sm:$0xff]
    %v5379 = vld [vmem:[#allocation9 + $0x90] sm:$0xff]
    %v5380 = vld [vmem:[#allocation9 + $0x98] sm:$0xff]
    %v5381 = vld [vmem:[#allocation9 + $0xa0] sm:$0xff]
    %v5382 = vld [vmem:[#allocation9 + $0xa8] sm:$0xff]
    %v5383 = vld [vmem:[#allocation9 + $0xb0] sm:$0xff]
    %v5384 = vld [vmem:[#allocation9 + $0xb8] sm:$0xff]
    %v5385 = vld [vmem:[#allocation9 + $0xc0] sm:$0xff]
    %v5386 = vld [vmem:[#allocation9 + $0xc8] sm:$0xff]
    %v5387 = vld [vmem:[#allocation9 + $0xd0] sm:$0xff]
    %v5388 = vld [vmem:[#allocation9 + $0xd8] sm:$0xff]
    %v5389 = vld [vmem:[#allocation9 + $0xe0] sm:$0xff]
    %v5390 = vld [vmem:[#allocation9 + $0xe8] sm:$0xff]
    %v5391 = vld [vmem:[#allocation9 + $0xf0] sm:$0xff]
    %v5392 = vld [vmem:[#allocation9 + $0xf8] sm:$0xff]
    %v5425 = vunpack.c.l.b16 %v5361
    %v5426 = vunpack.c.h.b16 %v5361
    %v5427 = vunpack.c.l.b16 %v5362
    %v5428 = vunpack.c.h.b16 %v5362
    %v5429 = vunpack.c.l.b16 %v5363
    %v5430 = vunpack.c.h.b16 %v5363
    %v5431 = vunpack.c.l.b16 %v5364
    %v5432 = vunpack.c.h.b16 %v5364
    %v5433 = vunpack.c.l.b16 %v5365
    %v5434 = vunpack.c.h.b16 %v5365
    %v5435 = vunpack.c.l.b16 %v5366
    %v5436 = vunpack.c.h.b16 %v5366
    %v5437 = vunpack.c.l.b16 %v5367
    %v5438 = vunpack.c.h.b16 %v5367
    %v5439 = vunpack.c.l.b16 %v5368
    %v5440 = vunpack.c.h.b16 %v5368
    %v5441 = vunpack.c.l.b16 %v5369
    %v5442 = vunpack.c.h.b16 %v5369
    %v5443 = vunpack.c.l.b16 %v5370
    %v5444 = vunpack.c.h.b16 %v5370
    %v5445 = vunpack.c.l.b16 %v5371
    %v5446 = vunpack.c.h.b16 %v5371
    %v5447 = vunpack.c.l.b16 %v5372
    %v5448 = vunpack.c.h.b16 %v5372
    %v5449 = vunpack.c.l.b16 %v5373
    %v5450 = vunpack.c.h.b16 %v5373
    %v5451 = vunpack.c.l.b16 %v5374
    %v5452 = vunpack.c.h.b16 %v5374
    %v5453 = vunpack.c.l.b16 %v5375
    %v5454 = vunpack.c.h.b16 %v5375
    %v5455 = vunpack.c.l.b16 %v5376
    %v5456 = vunpack.c.h.b16 %v5376
    %v5457 = vunpack.c.l.b16 %v5377
    %v5458 = vunpack.c.h.b16 %v5377
    %v5459 = vunpack.c.l.b16 %v5378
    %v5460 = vunpack.c.h.b16 %v5378
    %v5461 = vunpack.c.l.b16 %v5379
    %v5462 = vunpack.c.h.b16 %v5379
    %v5463 = vunpack.c.l.b16 %v5380
    %v5464 = vunpack.c.h.b16 %v5380
    %v5465 = vunpack.c.l.b16 %v5381
    %v5466 = vunpack.c.h.b16 %v5381
    %v5467 = vunpack.c.l.b16 %v5382
    %v5468 = vunpack.c.h.b16 %v5382
    %v5469 = vunpack.c.l.b16 %v5383
    %v5470 = vunpack.c.h.b16 %v5383
    %v5471 = vunpack.c.l.b16 %v5384
    %v5472 = vunpack.c.h.b16 %v5384
    %v5473 = vunpack.c.l.b16 %v5385
    %v5474 = vunpack.c.h.b16 %v5385
    %v5475 = vunpack.c.l.b16 %v5386
    %v5476 = vunpack.c.h.b16 %v5386
    %v5477 = vunpack.c.l.b16 %v5387
    %v5478 = vunpack.c.h.b16 %v5387
    %v5479 = vunpack.c.l.b16 %v5388
    %v5480 = vunpack.c.h.b16 %v5388
    %v5481 = vunpack.c.l.b16 %v5389
    %v5482 = vunpack.c.h.b16 %v5389
    %v5483 = vunpack.c.l.b16 %v5390
    %v5484 = vunpack.c.h.b16 %v5390
    %v5485 = vunpack.c.l.b16 %v5391
    %v5486 = vunpack.c.h.b16 %v5391
    %v5487 = vunpack.c.l.b16 %v5392
    %v5488 = vunpack.c.h.b16 %v5392
    %v5489 = vpack.c.b16 %v5429, %v5425
    %v5490 = vpack.c.b16 %v5430, %v5426
    %v5491 = vpack.c.b16 %v5431, %v5427
    %v5492 = vpack.c.b16 %v5432, %v5428
    %v5493 = vpack.c.b16 %v5437, %v5433
    %v5494 = vpack.c.b16 %v5438, %v5434
    %v5495 = vpack.c.b16 %v5439, %v5435
    %v5496 = vpack.c.b16 %v5440, %v5436
    %v5497 = vpack.c.b16 %v5445, %v5441
    %v5498 = vpack.c.b16 %v5446, %v5442
    %v5499 = vpack.c.b16 %v5447, %v5443
    %v5500 = vpack.c.b16 %v5448, %v5444
    %v5501 = vpack.c.b16 %v5453, %v5449
    %v5502 = vpack.c.b16 %v5454, %v5450
    %v5503 = vpack.c.b16 %v5455, %v5451
    %v5504 = vpack.c.b16 %v5456, %v5452
    %v5505 = vpack.c.b16 %v5461, %v5457
    %v5506 = vpack.c.b16 %v5462, %v5458
    %v5507 = vpack.c.b16 %v5463, %v5459
    %v5508 = vpack.c.b16 %v5464, %v5460
    %v5509 = vpack.c.b16 %v5469, %v5465
    %v5510 = vpack.c.b16 %v5470, %v5466
    %v5511 = vpack.c.b16 %v5471, %v5467
    %v5512 = vpack.c.b16 %v5472, %v5468
    %v5513 = vpack.c.b16 %v5477, %v5473
    %v5514 = vpack.c.b16 %v5478, %v5474
    %v5515 = vpack.c.b16 %v5479, %v5475
    %v5516 = vpack.c.b16 %v5480, %v5476
    %v5517 = vpack.c.b16 %v5485, %v5481
    %v5518 = vpack.c.b16 %v5486, %v5482
    %v5519 = vpack.c.b16 %v5487, %v5483
    %v5520 = vpack.c.b16 %v5488, %v5484
    %5553 = vmatpush.bf16.msra.mxu0 %v5517
    %5554 = vmatpush.bf16.msra.mxu0 %v5513
    %5555 = vmatpush.bf16.msra.mxu0 %v5509
    %5556 = vmatpush.bf16.msra.mxu0 %v5505
    %5557 = vmatpush.bf16.msra.mxu0 %v5501
    %5558 = vmatpush.bf16.msra.mxu0 %v5497
    %5559 = vmatpush.bf16.msra.mxu0 %v5493
    %5560 = vmatpush.bf16.msra.mxu0 %v5489
    %5561 = vmatmul.bf16.gmra.mxu0 %v5360
    %v5562 = vpop.f32.mrf.mxu0
    %v5563 = vadd.f32 0.0, %v5562
    %v5564 = vpop.f32.mrf.mxu0
    %5565 = vdwg.mxu0
    %5566 = vmatpush.bf16.msra.mxu0 %v5518
    %5567 = vmatpush.bf16.msra.mxu0 %v5514
    %5568 = vmatpush.bf16.msra.mxu0 %v5510
    %5569 = vmatpush.bf16.msra.mxu0 %v5506
    %5570 = vmatpush.bf16.msra.mxu0 %v5502
    %5571 = vmatpush.bf16.msra.mxu0 %v5498
    %5572 = vmatpush.bf16.msra.mxu0 %v5494
    %5573 = vmatpush.bf16.msra.mxu0 %v5490
    %5574 = vmatmul.bf16.gmra.mxu0 %v5360
    %v5575 = vpop.f32.mrf.mxu0
    %v5576 = vadd.f32 0.0, %v5575
    %v5577 = vpop.f32.mrf.mxu0
    %5578 = vdwg.mxu0
    %5579 = vmatpush.bf16.msra.mxu0 %v5519
    %5580 = vmatpush.bf16.msra.mxu0 %v5515
    %5581 = vmatpush.bf16.msra.mxu0 %v5511
    %5582 = vmatpush.bf16.msra.mxu0 %v5507
    %5583 = vmatpush.bf16.msra.mxu0 %v5503
    %5584 = vmatpush.bf16.msra.mxu0 %v5499
    %5585 = vmatpush.bf16.msra.mxu0 %v5495
    %5586 = vmatpush.bf16.msra.mxu0 %v5491
    %5587 = vmatmul.bf16.gmra.mxu0 %v5360
    %v5588 = vpop.f32.mrf.mxu0
    %v5589 = vadd.f32 0.0, %v5588
    %v5590 = vpop.f32.mrf.mxu0
    %5591 = vdwg.mxu0
    %5592 = vmatpush.bf16.msra.mxu0 %v5520
    %5593 = vmatpush.bf16.msra.mxu0 %v5516
    %5594 = vmatpush.bf16.msra.mxu0 %v5512
    %5595 = vmatpush.bf16.msra.mxu0 %v5508
    %5596 = vmatpush.bf16.msra.mxu0 %v5504
    %5597 = vmatpush.bf16.msra.mxu0 %v5500
    %5598 = vmatpush.bf16.msra.mxu0 %v5496
    %5599 = vmatpush.bf16.msra.mxu0 %v5492
    %5600 = vmatmul.bf16.gmra.mxu0 %v5360
    %v5601 = vpop.f32.mrf.mxu0
    %v5602 = vadd.f32 0.0, %v5601
    %v5603 = vpop.f32.mrf.mxu0
    %5604 = vdwg.mxu0
    %v5605 = vadd.f32 %v5356, %v5563
    %v5606 = vadd.f32 %v5357, %v5576
    %v5607 = vadd.f32 %v5358, %v5589
    %v5608 = vadd.f32 %v5359, %v5602
    %v5609 = vxor.u32 %v5605, 2147483648
    %v5610 = vxor.u32 %v5606, 2147483648
    %v5611 = vxor.u32 %v5607, 2147483648
    %v5612 = vmul.f32 %v5609, 1.442695
    %v5613 = vpow.pop %v5612
    %v5614 = vmul.f32 %v5610, 1.442695
    %v5615 = vpow.pop %v5614
    %v5616 = vmul.f32 %v5611, 1.442695
    %v5617 = vpow.pop %v5616
    %v5618 = vadd.f32 %v5613, 1.0
    %v5619 = vadd.f32 %v5615, 1.0
    %v5620 = vadd.f32 %v5617, 1.0
    %v5621 = vrcp.pop %v5618
    %v5622 = vmul.f32 %v5618, %v5621
    %v5623 = vsub.f32 1.0, %v5622
    %v5624 = vmul.f32 %v5621, %v5623
    %v5625 = vadd.f32 %v5621, %v5624
    %vm5626 = vweird.f32 %v5618
    %vm5627 = vweird.f32 %v5621
    %vm5628 = vmor %vm5626, %vm5627
    %v5629 = vsel %vm5628, %v5621, %v5625
    %v5630 = vand.u32 2147483647, %v5618
    %vm5631 = vcmp.eq.f32.partialorder %v5630, 8.507059e+37
    %v5632 = vand.u32 %v5618, 2147483648
    %v5633 = vor.u32 1.1754944e-38, %v5632
    %v5634 = vsel %vm5631, %v5633, %v5629
    %v5635 = vmul.f32 1.0, %v5634
    %v5636 = vrcp.pop %v5619
    %v5637 = vmul.f32 %v5619, %v5636
    %v5638 = vsub.f32 1.0, %v5637
    %v5639 = vmul.f32 %v5636, %v5638
    %v5640 = vadd.f32 %v5636, %v5639
    %vm5641 = vweird.f32 %v5619
    %vm5642 = vweird.f32 %v5636
    %vm5643 = vmor %vm5641, %vm5642
    %v5644 = vsel %vm5643, %v5636, %v5640
    %v5645 = vand.u32 2147483647, %v5619
    %vm5646 = vcmp.eq.f32.partialorder %v5645, 8.507059e+37
    %v5647 = vand.u32 %v5619, 2147483648
    %v5648 = vor.u32 1.1754944e-38, %v5647
    %v5649 = vsel %vm5646, %v5648, %v5644
    %v5650 = vmul.f32 1.0, %v5649
    %v5651 = vrcp.pop %v5620
    %v5652 = vmul.f32 %v5620, %v5651
    %v5653 = vsub.f32 1.0, %v5652
    %v5654 = vmul.f32 %v5651, %v5653
    %v5655 = vadd.f32 %v5651, %v5654
    %vm5656 = vweird.f32 %v5620
    %vm5657 = vweird.f32 %v5651
    %vm5658 = vmor %vm5656, %vm5657
    %v5659 = vsel %vm5658, %v5651, %v5655
    %v5660 = vand.u32 2147483647, %v5620
    %vm5661 = vcmp.eq.f32.partialorder %v5660, 8.507059e+37
    %v5662 = vand.u32 %v5620, 2147483648
    %v5663 = vor.u32 1.1754944e-38, %v5662
    %v5664 = vsel %vm5661, %v5663, %v5659
    %v5665 = vmul.f32 1.0, %v5664
    %v5666 = vtanh.pop %v5608
    %v5667 = vmul.f32 %v5650, %v5352
    %v5668 = vmul.f32 %v5635, %v5666
    %v5669 = vadd.f32 %v5667, %v5668
    %v5670 = vtanh.pop %v5669
    %v5671 = vmul.f32 %v5665, %v5670
    %5672 = vst [vmem:[#allocation2 + $0x30] sm:$0xff] %v5671
    %v5673 = vld [vmem:[#allocation3 + $0xe0] sm:$0xff]
    %v5674 = vld [vmem:[#allocation3 + $0xe8] sm:$0xff]
    %v5675 = vld [vmem:[#allocation3 + $0xf0] sm:$0xff]
    %v5676 = vld [vmem:[#allocation3 + $0xf8] sm:$0xff]
    %v5677 = vpack.c.bf16 %v5671, %v5671
    %v5678 = vld [vmem:[#allocation9] sm:$0xff]
    %v5679 = vld [vmem:[#allocation9 + $0x8] sm:$0xff]
    %v5680 = vld [vmem:[#allocation9 + $0x10] sm:$0xff]
    %v5681 = vld [vmem:[#allocation9 + $0x18] sm:$0xff]
    %v5682 = vld [vmem:[#allocation9 + $0x20] sm:$0xff]
    %v5683 = vld [vmem:[#allocation9 + $0x28] sm:$0xff]
    %v5684 = vld [vmem:[#allocation9 + $0x30] sm:$0xff]
    %v5685 = vld [vmem:[#allocation9 + $0x38] sm:$0xff]
    %v5686 = vld [vmem:[#allocation9 + $0x40] sm:$0xff]
    %v5687 = vld [vmem:[#allocation9 + $0x48] sm:$0xff]
    %v5688 = vld [vmem:[#allocation9 + $0x50] sm:$0xff]
    %v5689 = vld [vmem:[#allocation9 + $0x58] sm:$0xff]
    %v5690 = vld [vmem:[#allocation9 + $0x60] sm:$0xff]
    %v5691 = vld [vmem:[#allocation9 + $0x68] sm:$0xff]
    %v5692 = vld [vmem:[#allocation9 + $0x70] sm:$0xff]
    %v5693 = vld [vmem:[#allocation9 + $0x78] sm:$0xff]
    %v5694 = vld [vmem:[#allocation9 + $0x80] sm:$0xff]
    %v5695 = vld [vmem:[#allocation9 + $0x88] sm:$0xff]
    %v5696 = vld [vmem:[#allocation9 + $0x90] sm:$0xff]
    %v5697 = vld [vmem:[#allocation9 + $0x98] sm:$0xff]
    %v5698 = vld [vmem:[#allocation9 + $0xa0] sm:$0xff]
    %v5699 = vld [vmem:[#allocation9 + $0xa8] sm:$0xff]
    %v5700 = vld [vmem:[#allocation9 + $0xb0] sm:$0xff]
    %v5701 = vld [vmem:[#allocation9 + $0xb8] sm:$0xff]
    %v5702 = vld [vmem:[#allocation9 + $0xc0] sm:$0xff]
    %v5703 = vld [vmem:[#allocation9 + $0xc8] sm:$0xff]
    %v5704 = vld [vmem:[#allocation9 + $0xd0] sm:$0xff]
    %v5705 = vld [vmem:[#allocation9 + $0xd8] sm:$0xff]
    %v5706 = vld [vmem:[#allocation9 + $0xe0] sm:$0xff]
    %v5707 = vld [vmem:[#allocation9 + $0xe8] sm:$0xff]
    %v5708 = vld [vmem:[#allocation9 + $0xf0] sm:$0xff]
    %v5709 = vld [vmem:[#allocation9 + $0xf8] sm:$0xff]
    %v5742 = vunpack.c.l.b16 %v5678
    %v5743 = vunpack.c.h.b16 %v5678
    %v5744 = vunpack.c.l.b16 %v5679
    %v5745 = vunpack.c.h.b16 %v5679
    %v5746 = vunpack.c.l.b16 %v5680
    %v5747 = vunpack.c.h.b16 %v5680
    %v5748 = vunpack.c.l.b16 %v5681
    %v5749 = vunpack.c.h.b16 %v5681
    %v5750 = vunpack.c.l.b16 %v5682
    %v5751 = vunpack.c.h.b16 %v5682
    %v5752 = vunpack.c.l.b16 %v5683
    %v5753 = vunpack.c.h.b16 %v5683
    %v5754 = vunpack.c.l.b16 %v5684
    %v5755 = vunpack.c.h.b16 %v5684
    %v5756 = vunpack.c.l.b16 %v5685
    %v5757 = vunpack.c.h.b16 %v5685
    %v5758 = vunpack.c.l.b16 %v5686
    %v5759 = vunpack.c.h.b16 %v5686
    %v5760 = vunpack.c.l.b16 %v5687
    %v5761 = vunpack.c.h.b16 %v5687
    %v5762 = vunpack.c.l.b16 %v5688
    %v5763 = vunpack.c.h.b16 %v5688
    %v5764 = vunpack.c.l.b16 %v5689
    %v5765 = vunpack.c.h.b16 %v5689
    %v5766 = vunpack.c.l.b16 %v5690
    %v5767 = vunpack.c.h.b16 %v5690
    %v5768 = vunpack.c.l.b16 %v5691
    %v5769 = vunpack.c.h.b16 %v5691
    %v5770 = vunpack.c.l.b16 %v5692
    %v5771 = vunpack.c.h.b16 %v5692
    %v5772 = vunpack.c.l.b16 %v5693
    %v5773 = vunpack.c.h.b16 %v5693
    %v5774 = vunpack.c.l.b16 %v5694
    %v5775 = vunpack.c.h.b16 %v5694
    %v5776 = vunpack.c.l.b16 %v5695
    %v5777 = vunpack.c.h.b16 %v5695
    %v5778 = vunpack.c.l.b16 %v5696
    %v5779 = vunpack.c.h.b16 %v5696
    %v5780 = vunpack.c.l.b16 %v5697
    %v5781 = vunpack.c.h.b16 %v5697
    %v5782 = vunpack.c.l.b16 %v5698
    %v5783 = vunpack.c.h.b16 %v5698
    %v5784 = vunpack.c.l.b16 %v5699
    %v5785 = vunpack.c.h.b16 %v5699
    %v5786 = vunpack.c.l.b16 %v5700
    %v5787 = vunpack.c.h.b16 %v5700
    %v5788 = vunpack.c.l.b16 %v5701
    %v5789 = vunpack.c.h.b16 %v5701
    %v5790 = vunpack.c.l.b16 %v5702
    %v5791 = vunpack.c.h.b16 %v5702
    %v5792 = vunpack.c.l.b16 %v5703
    %v5793 = vunpack.c.h.b16 %v5703
    %v5794 = vunpack.c.l.b16 %v5704
    %v5795 = vunpack.c.h.b16 %v5704
    %v5796 = vunpack.c.l.b16 %v5705
    %v5797 = vunpack.c.h.b16 %v5705
    %v5798 = vunpack.c.l.b16 %v5706
    %v5799 = vunpack.c.h.b16 %v5706
    %v5800 = vunpack.c.l.b16 %v5707
    %v5801 = vunpack.c.h.b16 %v5707
    %v5802 = vunpack.c.l.b16 %v5708
    %v5803 = vunpack.c.h.b16 %v5708
    %v5804 = vunpack.c.l.b16 %v5709
    %v5805 = vunpack.c.h.b16 %v5709
    %v5806 = vpack.c.b16 %v5746, %v5742
    %v5807 = vpack.c.b16 %v5747, %v5743
    %v5808 = vpack.c.b16 %v5748, %v5744
    %v5809 = vpack.c.b16 %v5749, %v5745
    %v5810 = vpack.c.b16 %v5754, %v5750
    %v5811 = vpack.c.b16 %v5755, %v5751
    %v5812 = vpack.c.b16 %v5756, %v5752
    %v5813 = vpack.c.b16 %v5757, %v5753
    %v5814 = vpack.c.b16 %v5762, %v5758
    %v5815 = vpack.c.b16 %v5763, %v5759
    %v5816 = vpack.c.b16 %v5764, %v5760
    %v5817 = vpack.c.b16 %v5765, %v5761
    %v5818 = vpack.c.b16 %v5770, %v5766
    %v5819 = vpack.c.b16 %v5771, %v5767
    %v5820 = vpack.c.b16 %v5772, %v5768
    %v5821 = vpack.c.b16 %v5773, %v5769
    %v5822 = vpack.c.b16 %v5778, %v5774
    %v5823 = vpack.c.b16 %v5779, %v5775
    %v5824 = vpack.c.b16 %v5780, %v5776
    %v5825 = vpack.c.b16 %v5781, %v5777
    %v5826 = vpack.c.b16 %v5786, %v5782
    %v5827 = vpack.c.b16 %v5787, %v5783
    %v5828 = vpack.c.b16 %v5788, %v5784
    %v5829 = vpack.c.b16 %v5789, %v5785
    %v5830 = vpack.c.b16 %v5794, %v5790
    %v5831 = vpack.c.b16 %v5795, %v5791
    %v5832 = vpack.c.b16 %v5796, %v5792
    %v5833 = vpack.c.b16 %v5797, %v5793
    %v5834 = vpack.c.b16 %v5802, %v5798
    %v5835 = vpack.c.b16 %v5803, %v5799
    %v5836 = vpack.c.b16 %v5804, %v5800
    %v5837 = vpack.c.b16 %v5805, %v5801
    %5870 = vmatpush.bf16.msra.mxu0 %v5834
    %5871 = vmatpush.bf16.msra.mxu0 %v5830
    %5872 = vmatpush.bf16.msra.mxu0 %v5826
    %5873 = vmatpush.bf16.msra.mxu0 %v5822
    %5874 = vmatpush.bf16.msra.mxu0 %v5818
    %5875 = vmatpush.bf16.msra.mxu0 %v5814
    %5876 = vmatpush.bf16.msra.mxu0 %v5810
    %5877 = vmatpush.bf16.msra.mxu0 %v5806
    %5878 = vmatmul.bf16.gmra.mxu0 %v5677
    %v5879 = vpop.f32.mrf.mxu0
    %v5880 = vadd.f32 0.0, %v5879
    %v5881 = vpop.f32.mrf.mxu0
    %5882 = vdwg.mxu0
    %5883 = vmatpush.bf16.msra.mxu0 %v5835
    %5884 = vmatpush.bf16.msra.mxu0 %v5831
    %5885 = vmatpush.bf16.msra.mxu0 %v5827
    %5886 = vmatpush.bf16.msra.mxu0 %v5823
    %5887 = vmatpush.bf16.msra.mxu0 %v5819
    %5888 = vmatpush.bf16.msra.mxu0 %v5815
    %5889 = vmatpush.bf16.msra.mxu0 %v5811
    %5890 = vmatpush.bf16.msra.mxu0 %v5807
    %5891 = vmatmul.bf16.gmra.mxu0 %v5677
    %v5892 = vpop.f32.mrf.mxu0
    %v5893 = vadd.f32 0.0, %v5892
    %v5894 = vpop.f32.mrf.mxu0
    %5895 = vdwg.mxu0
    %5896 = vmatpush.bf16.msra.mxu0 %v5836
    %5897 = vmatpush.bf16.msra.mxu0 %v5832
    %5898 = vmatpush.bf16.msra.mxu0 %v5828
    %5899 = vmatpush.bf16.msra.mxu0 %v5824
    %5900 = vmatpush.bf16.msra.mxu0 %v5820
    %5901 = vmatpush.bf16.msra.mxu0 %v5816
    %5902 = vmatpush.bf16.msra.mxu0 %v5812
    %5903 = vmatpush.bf16.msra.mxu0 %v5808
    %5904 = vmatmul.bf16.gmra.mxu0 %v5677
    %v5905 = vpop.f32.mrf.mxu0
    %v5906 = vadd.f32 0.0, %v5905
    %v5907 = vpop.f32.mrf.mxu0
    %5908 = vdwg.mxu0
    %5909 = vmatpush.bf16.msra.mxu0 %v5837
    %5910 = vmatpush.bf16.msra.mxu0 %v5833
    %5911 = vmatpush.bf16.msra.mxu0 %v5829
    %5912 = vmatpush.bf16.msra.mxu0 %v5825
    %5913 = vmatpush.bf16.msra.mxu0 %v5821
    %5914 = vmatpush.bf16.msra.mxu0 %v5817
    %5915 = vmatpush.bf16.msra.mxu0 %v5813
    %5916 = vmatpush.bf16.msra.mxu0 %v5809
    %5917 = vmatmul.bf16.gmra.mxu0 %v5677
    %v5918 = vpop.f32.mrf.mxu0
    %v5919 = vadd.f32 0.0, %v5918
    %v5920 = vpop.f32.mrf.mxu0
    %5921 = vdwg.mxu0
    %v5922 = vadd.f32 %v5673, %v5880
    %v5923 = vadd.f32 %v5674, %v5893
    %v5924 = vadd.f32 %v5675, %v5906
    %v5925 = vadd.f32 %v5676, %v5919
    %v5926 = vxor.u32 %v5922, 2147483648
    %v5927 = vxor.u32 %v5923, 2147483648
    %v5928 = vxor.u32 %v5924, 2147483648
    %v5929 = vmul.f32 %v5926, 1.442695
    %v5930 = vpow.pop %v5929
    %v5931 = vmul.f32 %v5927, 1.442695
    %v5932 = vpow.pop %v5931
    %v5933 = vmul.f32 %v5928, 1.442695
    %v5934 = vpow.pop %v5933
    %v5935 = vadd.f32 %v5930, 1.0
    %v5936 = vadd.f32 %v5932, 1.0
    %v5937 = vadd.f32 %v5934, 1.0
    %v5938 = vrcp.pop %v5935
    %v5939 = vmul.f32 %v5935, %v5938
    %v5940 = vsub.f32 1.0, %v5939
    %v5941 = vmul.f32 %v5938, %v5940
    %v5942 = vadd.f32 %v5938, %v5941
    %vm5943 = vweird.f32 %v5935
    %vm5944 = vweird.f32 %v5938
    %vm5945 = vmor %vm5943, %vm5944
    %v5946 = vsel %vm5945, %v5938, %v5942
    %v5947 = vand.u32 2147483647, %v5935
    %vm5948 = vcmp.eq.f32.partialorder %v5947, 8.507059e+37
    %v5949 = vand.u32 %v5935, 2147483648
    %v5950 = vor.u32 1.1754944e-38, %v5949
    %v5951 = vsel %vm5948, %v5950, %v5946
    %v5952 = vmul.f32 1.0, %v5951
    %v5953 = vrcp.pop %v5936
    %v5954 = vmul.f32 %v5936, %v5953
    %v5955 = vsub.f32 1.0, %v5954
    %v5956 = vmul.f32 %v5953, %v5955
    %v5957 = vadd.f32 %v5953, %v5956
    %vm5958 = vweird.f32 %v5936
    %vm5959 = vweird.f32 %v5953
    %vm5960 = vmor %vm5958, %vm5959
    %v5961 = vsel %vm5960, %v5953, %v5957
    %v5962 = vand.u32 2147483647, %v5936
    %vm5963 = vcmp.eq.f32.partialorder %v5962, 8.507059e+37
    %v5964 = vand.u32 %v5936, 2147483648
    %v5965 = vor.u32 1.1754944e-38, %v5964
    %v5966 = vsel %vm5963, %v5965, %v5961
    %v5967 = vmul.f32 1.0, %v5966
    %v5968 = vrcp.pop %v5937
    %v5969 = vmul.f32 %v5937, %v5968
    %v5970 = vsub.f32 1.0, %v5969
    %v5971 = vmul.f32 %v5968, %v5970
    %v5972 = vadd.f32 %v5968, %v5971
    %vm5973 = vweird.f32 %v5937
    %vm5974 = vweird.f32 %v5968
    %vm5975 = vmor %vm5973, %vm5974
    %v5976 = vsel %vm5975, %v5968, %v5972
    %v5977 = vand.u32 2147483647, %v5937
    %vm5978 = vcmp.eq.f32.partialorder %v5977, 8.507059e+37
    %v5979 = vand.u32 %v5937, 2147483648
    %v5980 = vor.u32 1.1754944e-38, %v5979
    %v5981 = vsel %vm5978, %v5980, %v5976
    %v5982 = vmul.f32 1.0, %v5981
    %v5983 = vtanh.pop %v5925
    %v5984 = vmul.f32 %v5967, %v5669
    %v5985 = vmul.f32 %v5952, %v5983
    %v5986 = vadd.f32 %v5984, %v5985
    %v5987 = vtanh.pop %v5986
    %v5988 = vmul.f32 %v5982, %v5987
    %5989 = vst [vmem:[#allocation2 + $0x38] sm:$0xff] %v5988
    %s5990 = scalar_lea.vmem %s15, 8
    %5991 = vst [vmem:[%s5990] sm:$0xff] %v5988
    %s5992 = scalar_lea.vmem %s16, 8
    %5993 = vst [vmem:[%s5992] sm:$0xff] %v5986
    %v5994 = vld [vmem:[#allocation2] sm:$0xff]
    %v5995 = vld [vmem:[#allocation2 + $0x8] sm:$0xff]
    %v5996 = vld [vmem:[#allocation2 + $0x10] sm:$0xff]
    %v5997 = vld [vmem:[#allocation2 + $0x18] sm:$0xff]
    %v5998 = vld [vmem:[#allocation2 + $0x20] sm:$0xff]
    %v5999 = vld [vmem:[#allocation2 + $0x28] sm:$0xff]
    %v6000 = vld [vmem:[#allocation2 + $0x30] sm:$0xff]
    %v6001 = vld [vmem:[#allocation2 + $0x38] sm:$0xff]
    %v6002 = vpack.c.bf16 %v5995, %v5994
    %v6003 = vpack.c.bf16 %v5997, %v5996
    %v6004 = vpack.c.bf16 %v5999, %v5998
    %v6005 = vpack.c.bf16 %v6001, %v6000
    %v6006 = vld [vmem:[#allocation11] sm:$0xff]
    %v6007 = vld [vmem:[#allocation11 + $0x8] sm:$0xff]
    %v6008 = vld [vmem:[#allocation11 + $0x10] sm:$0xff]
    %v6009 = vld [vmem:[#allocation11 + $0x18] sm:$0xff]
    %v6010 = vld [vmem:[#allocation11 + $0x20] sm:$0xff]
    %v6011 = vld [vmem:[#allocation11 + $0x28] sm:$0xff]
    %v6012 = vld [vmem:[#allocation11 + $0x30] sm:$0xff]
    %v6013 = vld [vmem:[#allocation11 + $0x38] sm:$0xff]
    %v6014 = vld [vmem:[#allocation11 + $0x40] sm:$0xff]
    %v6015 = vld [vmem:[#allocation11 + $0x48] sm:$0xff]
    %v6016 = vld [vmem:[#allocation11 + $0x50] sm:$0xff]
    %v6017 = vld [vmem:[#allocation11 + $0x58] sm:$0xff]
    %v6018 = vld [vmem:[#allocation11 + $0x60] sm:$0xff]
    %v6019 = vld [vmem:[#allocation11 + $0x68] sm:$0xff]
    %v6020 = vld [vmem:[#allocation11 + $0x70] sm:$0xff]
    %v6021 = vld [vmem:[#allocation11 + $0x78] sm:$0xff]
    %v6022 = vld [vmem:[#allocation11 + $0x80] sm:$0xff]
    %v6023 = vld [vmem:[#allocation11 + $0x88] sm:$0xff]
    %v6024 = vld [vmem:[#allocation11 + $0x90] sm:$0xff]
    %v6025 = vld [vmem:[#allocation11 + $0x98] sm:$0xff]
    %v6026 = vld [vmem:[#allocation11 + $0xa0] sm:$0xff]
    %v6027 = vld [vmem:[#allocation11 + $0xa8] sm:$0xff]
    %v6028 = vld [vmem:[#allocation11 + $0xb0] sm:$0xff]
    %v6029 = vld [vmem:[#allocation11 + $0xb8] sm:$0xff]
    %v6030 = vld [vmem:[#allocation11 + $0xc0] sm:$0xff]
    %v6031 = vld [vmem:[#allocation11 + $0xc8] sm:$0xff]
    %v6032 = vld [vmem:[#allocation11 + $0xd0] sm:$0xff]
    %v6033 = vld [vmem:[#allocation11 + $0xd8] sm:$0xff]
    %v6034 = vld [vmem:[#allocation11 + $0xe0] sm:$0xff]
    %v6035 = vld [vmem:[#allocation11 + $0xe8] sm:$0xff]
    %v6036 = vld [vmem:[#allocation11 + $0xf0] sm:$0xff]
    %v6037 = vld [vmem:[#allocation11 + $0xf8] sm:$0xff]
    %v6038 = vld [vmem:[%s9] sm:$0xf]
    %v6040 = vperm.slane %v6038, 0
    %v6041 = vperm.slane %v6038, 1
    %v6042 = vperm.slane %v6038, 2
    %v6043 = vperm.slane %v6038, 3
    %v6080 = vunpack.c.l.b16 %v6006
    %v6081 = vunpack.c.h.b16 %v6006
    %v6082 = vunpack.c.l.b16 %v6007
    %v6083 = vunpack.c.h.b16 %v6007
    %v6084 = vunpack.c.l.b16 %v6008
    %v6085 = vunpack.c.h.b16 %v6008
    %v6086 = vunpack.c.l.b16 %v6009
    %v6087 = vunpack.c.h.b16 %v6009
    %v6088 = vunpack.c.l.b16 %v6010
    %v6089 = vunpack.c.h.b16 %v6010
    %v6090 = vunpack.c.l.b16 %v6011
    %v6091 = vunpack.c.h.b16 %v6011
    %v6092 = vunpack.c.l.b16 %v6012
    %v6093 = vunpack.c.h.b16 %v6012
    %v6094 = vunpack.c.l.b16 %v6013
    %v6095 = vunpack.c.h.b16 %v6013
    %v6096 = vunpack.c.l.b16 %v6014
    %v6097 = vunpack.c.h.b16 %v6014
    %v6098 = vunpack.c.l.b16 %v6015
    %v6099 = vunpack.c.h.b16 %v6015
    %v6100 = vunpack.c.l.b16 %v6016
    %v6101 = vunpack.c.h.b16 %v6016
    %v6102 = vunpack.c.l.b16 %v6017
    %v6103 = vunpack.c.h.b16 %v6017
    %v6104 = vunpack.c.l.b16 %v6018
    %v6105 = vunpack.c.h.b16 %v6018
    %v6106 = vunpack.c.l.b16 %v6019
    %v6107 = vunpack.c.h.b16 %v6019
    %v6108 = vunpack.c.l.b16 %v6020
    %v6109 = vunpack.c.h.b16 %v6020
    %v6110 = vunpack.c.l.b16 %v6021
    %v6111 = vunpack.c.h.b16 %v6021
    %v6112 = vunpack.c.l.b16 %v6022
    %v6113 = vunpack.c.h.b16 %v6022
    %v6114 = vunpack.c.l.b16 %v6023
    %v6115 = vunpack.c.h.b16 %v6023
    %v6116 = vunpack.c.l.b16 %v6024
    %v6117 = vunpack.c.h.b16 %v6024
    %v6118 = vunpack.c.l.b16 %v6025
    %v6119 = vunpack.c.h.b16 %v6025
    %v6120 = vunpack.c.l.b16 %v6026
    %v6121 = vunpack.c.h.b16 %v6026
    %v6122 = vunpack.c.l.b16 %v6027
    %v6123 = vunpack.c.h.b16 %v6027
    %v6124 = vunpack.c.l.b16 %v6028
    %v6125 = vunpack.c.h.b16 %v6028
    %v6126 = vunpack.c.l.b16 %v6029
    %v6127 = vunpack.c.h.b16 %v6029
    %v6128 = vunpack.c.l.b16 %v6030
    %v6129 = vunpack.c.h.b16 %v6030
    %v6130 = vunpack.c.l.b16 %v6031
    %v6131 = vunpack.c.h.b16 %v6031
    %v6132 = vunpack.c.l.b16 %v6032
    %v6133 = vunpack.c.h.b16 %v6032
    %v6134 = vunpack.c.l.b16 %v6033
    %v6135 = vunpack.c.h.b16 %v6033
    %v6136 = vunpack.c.l.b16 %v6034
    %v6137 = vunpack.c.h.b16 %v6034
    %v6138 = vunpack.c.l.b16 %v6035
    %v6139 = vunpack.c.h.b16 %v6035
    %v6140 = vunpack.c.l.b16 %v6036
    %v6141 = vunpack.c.h.b16 %v6036
    %v6142 = vunpack.c.l.b16 %v6037
    %v6143 = vunpack.c.h.b16 %v6037
    %v6144 = vpack.c.b16 %v6084, %v6080
    %v6145 = vpack.c.b16 %v6085, %v6081
    %v6146 = vpack.c.b16 %v6086, %v6082
    %v6147 = vpack.c.b16 %v6087, %v6083
    %v6148 = vpack.c.b16 %v6092, %v6088
    %v6149 = vpack.c.b16 %v6093, %v6089
    %v6150 = vpack.c.b16 %v6094, %v6090
    %v6151 = vpack.c.b16 %v6095, %v6091
    %v6152 = vpack.c.b16 %v6100, %v6096
    %v6153 = vpack.c.b16 %v6101, %v6097
    %v6154 = vpack.c.b16 %v6102, %v6098
    %v6155 = vpack.c.b16 %v6103, %v6099
    %v6156 = vpack.c.b16 %v6108, %v6104
    %v6157 = vpack.c.b16 %v6109, %v6105
    %v6158 = vpack.c.b16 %v6110, %v6106
    %v6159 = vpack.c.b16 %v6111, %v6107
    %v6160 = vpack.c.b16 %v6116, %v6112
    %v6161 = vpack.c.b16 %v6117, %v6113
    %v6162 = vpack.c.b16 %v6118, %v6114
    %v6163 = vpack.c.b16 %v6119, %v6115
    %v6164 = vpack.c.b16 %v6124, %v6120
    %v6165 = vpack.c.b16 %v6125, %v6121
    %v6166 = vpack.c.b16 %v6126, %v6122
    %v6167 = vpack.c.b16 %v6127, %v6123
    %v6168 = vpack.c.b16 %v6132, %v6128
    %v6169 = vpack.c.b16 %v6133, %v6129
    %v6170 = vpack.c.b16 %v6134, %v6130
    %v6171 = vpack.c.b16 %v6135, %v6131
    %v6172 = vpack.c.b16 %v6140, %v6136
    %v6173 = vpack.c.b16 %v6141, %v6137
    %v6174 = vpack.c.b16 %v6142, %v6138
    %v6175 = vpack.c.b16 %v6143, %v6139
    %6208 = vmatpush.bf16.msra.mxu0 %v6172
    %6209 = vmatpush.bf16.msra.mxu0 %v6168
    %6210 = vmatpush.bf16.msra.mxu0 %v6164
    %6211 = vmatpush.bf16.msra.mxu0 %v6160
    %6212 = vmatpush.bf16.msra.mxu0 %v6156
    %6213 = vmatpush.bf16.msra.mxu0 %v6152
    %6214 = vmatpush.bf16.msra.mxu0 %v6148
    %6215 = vmatpush.bf16.msra.mxu0 %v6144
    %6216 = vmatmul.bf16.gmra.mxu0 %v6002
    %v6217 = vpop.f32.mrf.mxu0
    %v6218 = vadd.f32 %v6040, %v6217
    %v6219 = vpop.f32.mrf.mxu0
    %v6220 = vadd.f32 %v6040, %v6219
    %6221 = vmatmul.bf16.gmra.mxu0 %v6003
    %v6222 = vpop.f32.mrf.mxu0
    %v6223 = vadd.f32 %v6040, %v6222
    %v6224 = vpop.f32.mrf.mxu0
    %v6225 = vadd.f32 %v6040, %v6224
    %6226 = vmatmul.bf16.gmra.mxu0 %v6004
    %v6227 = vpop.f32.mrf.mxu0
    %v6228 = vadd.f32 %v6040, %v6227
    %v6229 = vpop.f32.mrf.mxu0
    %v6230 = vadd.f32 %v6040, %v6229
    %6231 = vmatmul.bf16.gmra.mxu0 %v6005
    %v6232 = vpop.f32.mrf.mxu0
    %v6233 = vadd.f32 %v6040, %v6232
    %v6234 = vpop.f32.mrf.mxu0
    %v6235 = vadd.f32 %v6040, %v6234
    %6236 = vdwg.mxu0
    %6237 = vmatpush.bf16.msra.mxu0 %v6173
    %6238 = vmatpush.bf16.msra.mxu0 %v6169
    %6239 = vmatpush.bf16.msra.mxu0 %v6165
    %6240 = vmatpush.bf16.msra.mxu0 %v6161
    %6241 = vmatpush.bf16.msra.mxu0 %v6157
    %6242 = vmatpush.bf16.msra.mxu0 %v6153
    %6243 = vmatpush.bf16.msra.mxu0 %v6149
    %6244 = vmatpush.bf16.msra.mxu0 %v6145
    %6245 = vmatmul.bf16.gmra.mxu0 %v6002
    %v6246 = vpop.f32.mrf.mxu0
    %v6247 = vadd.f32 %v6041, %v6246
    %v6248 = vpop.f32.mrf.mxu0
    %v6249 = vadd.f32 %v6041, %v6248
    %6250 = vmatmul.bf16.gmra.mxu0 %v6003
    %v6251 = vpop.f32.mrf.mxu0
    %v6252 = vadd.f32 %v6041, %v6251
    %v6253 = vpop.f32.mrf.mxu0
    %v6254 = vadd.f32 %v6041, %v6253
    %6255 = vmatmul.bf16.gmra.mxu0 %v6004
    %v6256 = vpop.f32.mrf.mxu0
    %v6257 = vadd.f32 %v6041, %v6256
    %v6258 = vpop.f32.mrf.mxu0
    %v6259 = vadd.f32 %v6041, %v6258
    %6260 = vmatmul.bf16.gmra.mxu0 %v6005
    %v6261 = vpop.f32.mrf.mxu0
    %v6262 = vadd.f32 %v6041, %v6261
    %v6263 = vpop.f32.mrf.mxu0
    %v6264 = vadd.f32 %v6041, %v6263
    %6265 = vdwg.mxu0
    %6266 = vmatpush.bf16.msra.mxu0 %v6174
    %6267 = vmatpush.bf16.msra.mxu0 %v6170
    %6268 = vmatpush.bf16.msra.mxu0 %v6166
    %6269 = vmatpush.bf16.msra.mxu0 %v6162
    %6270 = vmatpush.bf16.msra.mxu0 %v6158
    %6271 = vmatpush.bf16.msra.mxu0 %v6154
    %6272 = vmatpush.bf16.msra.mxu0 %v6150
    %6273 = vmatpush.bf16.msra.mxu0 %v6146
    %6274 = vmatmul.bf16.gmra.mxu0 %v6002
    %v6275 = vpop.f32.mrf.mxu0
    %v6276 = vadd.f32 %v6042, %v6275
    %v6277 = vpop.f32.mrf.mxu0
    %v6278 = vadd.f32 %v6042, %v6277
    %6279 = vmatmul.bf16.gmra.mxu0 %v6003
    %v6280 = vpop.f32.mrf.mxu0
    %v6281 = vadd.f32 %v6042, %v6280
    %v6282 = vpop.f32.mrf.mxu0
    %v6283 = vadd.f32 %v6042, %v6282
    %6284 = vmatmul.bf16.gmra.mxu0 %v6004
    %v6285 = vpop.f32.mrf.mxu0
    %v6286 = vadd.f32 %v6042, %v6285
    %v6287 = vpop.f32.mrf.mxu0
    %v6288 = vadd.f32 %v6042, %v6287
    %6289 = vmatmul.bf16.gmra.mxu0 %v6005
    %v6290 = vpop.f32.mrf.mxu0
    %v6291 = vadd.f32 %v6042, %v6290
    %v6292 = vpop.f32.mrf.mxu0
    %v6293 = vadd.f32 %v6042, %v6292
    %6294 = vdwg.mxu0
    %6295 = vmatpush.bf16.msra.mxu0 %v6175
    %6296 = vmatpush.bf16.msra.mxu0 %v6171
    %6297 = vmatpush.bf16.msra.mxu0 %v6167
    %6298 = vmatpush.bf16.msra.mxu0 %v6163
    %6299 = vmatpush.bf16.msra.mxu0 %v6159
    %6300 = vmatpush.bf16.msra.mxu0 %v6155
    %6301 = vmatpush.bf16.msra.mxu0 %v6151
    %6302 = vmatpush.bf16.msra.mxu0 %v6147
    %6303 = vmatmul.bf16.gmra.mxu0 %v6002
    %v6304 = vpop.f32.mrf.mxu0
    %v6305 = vadd.f32 %v6043, %v6304
    %v6306 = vpop.f32.mrf.mxu0
    %v6307 = vadd.f32 %v6043, %v6306
    %6308 = vmatmul.bf16.gmra.mxu0 %v6003
    %v6309 = vpop.f32.mrf.mxu0
    %v6310 = vadd.f32 %v6043, %v6309
    %v6311 = vpop.f32.mrf.mxu0
    %v6312 = vadd.f32 %v6043, %v6311
    %6313 = vmatmul.bf16.gmra.mxu0 %v6004
    %v6314 = vpop.f32.mrf.mxu0
    %v6315 = vadd.f32 %v6043, %v6314
    %v6316 = vpop.f32.mrf.mxu0
    %v6317 = vadd.f32 %v6043, %v6316
    %6318 = vmatmul.bf16.gmra.mxu0 %v6005
    %v6319 = vpop.f32.mrf.mxu0
    %v6320 = vadd.f32 %v6043, %v6319
    %v6321 = vpop.f32.mrf.mxu0
    %v6322 = vadd.f32 %v6043, %v6321
    %6323 = vdwg.mxu0
    %6324 = vst [vmem:[#allocation3] sm:$0xff] %v6218
    %6325 = vst [vmem:[#allocation3 + $0x8] sm:$0xff] %v6247
    %6326 = vst [vmem:[#allocation3 + $0x10] sm:$0xff] %v6276
    %6327 = vst [vmem:[#allocation3 + $0x18] sm:$0xff] %v6305
    %6328 = vst [vmem:[#allocation3 + $0x20] sm:$0xff] %v6220
    %6329 = vst [vmem:[#allocation3 + $0x28] sm:$0xff] %v6249
    %6330 = vst [vmem:[#allocation3 + $0x30] sm:$0xff] %v6278
    %6331 = vst [vmem:[#allocation3 + $0x38] sm:$0xff] %v6307
    %6332 = vst [vmem:[#allocation3 + $0x40] sm:$0xff] %v6223
    %6333 = vst [vmem:[#allocation3 + $0x48] sm:$0xff] %v6252
    %6334 = vst [vmem:[#allocation3 + $0x50] sm:$0xff] %v6281
    %6335 = vst [vmem:[#allocation3 + $0x58] sm:$0xff] %v6310
    %6336 = vst [vmem:[#allocation3 + $0x60] sm:$0xff] %v6225
    %6337 = vst [vmem:[#allocation3 + $0x68] sm:$0xff] %v6254
    %6338 = vst [vmem:[#allocation3 + $0x70] sm:$0xff] %v6283
    %6339 = vst [vmem:[#allocation3 + $0x78] sm:$0xff] %v6312
    %6340 = vst [vmem:[#allocation3 + $0x80] sm:$0xff] %v6228
    %6341 = vst [vmem:[#allocation3 + $0x88] sm:$0xff] %v6257
    %6342 = vst [vmem:[#allocation3 + $0x90] sm:$0xff] %v6286
    %6343 = vst [vmem:[#allocation3 + $0x98] sm:$0xff] %v6315
    %6344 = vst [vmem:[#allocation3 + $0xa0] sm:$0xff] %v6230
    %6345 = vst [vmem:[#allocation3 + $0xa8] sm:$0xff] %v6259
    %6346 = vst [vmem:[#allocation3 + $0xb0] sm:$0xff] %v6288
    %6347 = vst [vmem:[#allocation3 + $0xb8] sm:$0xff] %v6317
    %6348 = vst [vmem:[#allocation3 + $0xc0] sm:$0xff] %v6233
    %6349 = vst [vmem:[#allocation3 + $0xc8] sm:$0xff] %v6262
    %6350 = vst [vmem:[#allocation3 + $0xd0] sm:$0xff] %v6291
    %6351 = vst [vmem:[#allocation3 + $0xd8] sm:$0xff] %v6320
    %6352 = vst [vmem:[#allocation3 + $0xe0] sm:$0xff] %v6235
    %6353 = vst [vmem:[#allocation3 + $0xe8] sm:$0xff] %v6264
    %6354 = vst [vmem:[#allocation3 + $0xf0] sm:$0xff] %v6293
    %6355 = vst [vmem:[#allocation3 + $0xf8] sm:$0xff] %v6322
    %s6356 = scalar_lea.vmem %s10, 16
    %v6357 = vld [vmem:[%s6356] sm:$0xff]
    %s6358 = scalar_lea.vmem %s11, 16
    %v6359 = vld [vmem:[%s6358] sm:$0xff]
    %v6360 = vld [vmem:[#allocation3] sm:$0xff]
    %v6361 = vld [vmem:[#allocation3 + $0x8] sm:$0xff]
    %v6362 = vld [vmem:[#allocation3 + $0x10] sm:$0xff]
    %v6363 = vld [vmem:[#allocation3 + $0x18] sm:$0xff]
    %v6364 = vpack.c.bf16 %v6357, %v6357
    %v6365 = vld [vmem:[#allocation12] sm:$0xff]
    %v6366 = vld [vmem:[#allocation12 + $0x8] sm:$0xff]
    %v6367 = vld [vmem:[#allocation12 + $0x10] sm:$0xff]
    %v6368 = vld [vmem:[#allocation12 + $0x18] sm:$0xff]
    %v6369 = vld [vmem:[#allocation12 + $0x20] sm:$0xff]
    %v6370 = vld [vmem:[#allocation12 + $0x28] sm:$0xff]
    %v6371 = vld [vmem:[#allocation12 + $0x30] sm:$0xff]
    %v6372 = vld [vmem:[#allocation12 + $0x38] sm:$0xff]
    %v6373 = vld [vmem:[#allocation12 + $0x40] sm:$0xff]
    %v6374 = vld [vmem:[#allocation12 + $0x48] sm:$0xff]
    %v6375 = vld [vmem:[#allocation12 + $0x50] sm:$0xff]
    %v6376 = vld [vmem:[#allocation12 + $0x58] sm:$0xff]
    %v6377 = vld [vmem:[#allocation12 + $0x60] sm:$0xff]
    %v6378 = vld [vmem:[#allocation12 + $0x68] sm:$0xff]
    %v6379 = vld [vmem:[#allocation12 + $0x70] sm:$0xff]
    %v6380 = vld [vmem:[#allocation12 + $0x78] sm:$0xff]
    %v6381 = vld [vmem:[#allocation12 + $0x80] sm:$0xff]
    %v6382 = vld [vmem:[#allocation12 + $0x88] sm:$0xff]
    %v6383 = vld [vmem:[#allocation12 + $0x90] sm:$0xff]
    %v6384 = vld [vmem:[#allocation12 + $0x98] sm:$0xff]
    %v6385 = vld [vmem:[#allocation12 + $0xa0] sm:$0xff]
    %v6386 = vld [vmem:[#allocation12 + $0xa8] sm:$0xff]
    %v6387 = vld [vmem:[#allocation12 + $0xb0] sm:$0xff]
    %v6388 = vld [vmem:[#allocation12 + $0xb8] sm:$0xff]
    %v6389 = vld [vmem:[#allocation12 + $0xc0] sm:$0xff]
    %v6390 = vld [vmem:[#allocation12 + $0xc8] sm:$0xff]
    %v6391 = vld [vmem:[#allocation12 + $0xd0] sm:$0xff]
    %v6392 = vld [vmem:[#allocation12 + $0xd8] sm:$0xff]
    %v6393 = vld [vmem:[#allocation12 + $0xe0] sm:$0xff]
    %v6394 = vld [vmem:[#allocation12 + $0xe8] sm:$0xff]
    %v6395 = vld [vmem:[#allocation12 + $0xf0] sm:$0xff]
    %v6396 = vld [vmem:[#allocation12 + $0xf8] sm:$0xff]
    %v6429 = vunpack.c.l.b16 %v6365
    %v6430 = vunpack.c.h.b16 %v6365
    %v6431 = vunpack.c.l.b16 %v6366
    %v6432 = vunpack.c.h.b16 %v6366
    %v6433 = vunpack.c.l.b16 %v6367
    %v6434 = vunpack.c.h.b16 %v6367
    %v6435 = vunpack.c.l.b16 %v6368
    %v6436 = vunpack.c.h.b16 %v6368
    %v6437 = vunpack.c.l.b16 %v6369
    %v6438 = vunpack.c.h.b16 %v6369
    %v6439 = vunpack.c.l.b16 %v6370
    %v6440 = vunpack.c.h.b16 %v6370
    %v6441 = vunpack.c.l.b16 %v6371
    %v6442 = vunpack.c.h.b16 %v6371
    %v6443 = vunpack.c.l.b16 %v6372
    %v6444 = vunpack.c.h.b16 %v6372
    %v6445 = vunpack.c.l.b16 %v6373
    %v6446 = vunpack.c.h.b16 %v6373
    %v6447 = vunpack.c.l.b16 %v6374
    %v6448 = vunpack.c.h.b16 %v6374
    %v6449 = vunpack.c.l.b16 %v6375
    %v6450 = vunpack.c.h.b16 %v6375
    %v6451 = vunpack.c.l.b16 %v6376
    %v6452 = vunpack.c.h.b16 %v6376
    %v6453 = vunpack.c.l.b16 %v6377
    %v6454 = vunpack.c.h.b16 %v6377
    %v6455 = vunpack.c.l.b16 %v6378
    %v6456 = vunpack.c.h.b16 %v6378
    %v6457 = vunpack.c.l.b16 %v6379
    %v6458 = vunpack.c.h.b16 %v6379
    %v6459 = vunpack.c.l.b16 %v6380
    %v6460 = vunpack.c.h.b16 %v6380
    %v6461 = vunpack.c.l.b16 %v6381
    %v6462 = vunpack.c.h.b16 %v6381
    %v6463 = vunpack.c.l.b16 %v6382
    %v6464 = vunpack.c.h.b16 %v6382
    %v6465 = vunpack.c.l.b16 %v6383
    %v6466 = vunpack.c.h.b16 %v6383
    %v6467 = vunpack.c.l.b16 %v6384
    %v6468 = vunpack.c.h.b16 %v6384
    %v6469 = vunpack.c.l.b16 %v6385
    %v6470 = vunpack.c.h.b16 %v6385
    %v6471 = vunpack.c.l.b16 %v6386
    %v6472 = vunpack.c.h.b16 %v6386
    %v6473 = vunpack.c.l.b16 %v6387
    %v6474 = vunpack.c.h.b16 %v6387
    %v6475 = vunpack.c.l.b16 %v6388
    %v6476 = vunpack.c.h.b16 %v6388
    %v6477 = vunpack.c.l.b16 %v6389
    %v6478 = vunpack.c.h.b16 %v6389
    %v6479 = vunpack.c.l.b16 %v6390
    %v6480 = vunpack.c.h.b16 %v6390
    %v6481 = vunpack.c.l.b16 %v6391
    %v6482 = vunpack.c.h.b16 %v6391
    %v6483 = vunpack.c.l.b16 %v6392
    %v6484 = vunpack.c.h.b16 %v6392
    %v6485 = vunpack.c.l.b16 %v6393
    %v6486 = vunpack.c.h.b16 %v6393
    %v6487 = vunpack.c.l.b16 %v6394
    %v6488 = vunpack.c.h.b16 %v6394
    %v6489 = vunpack.c.l.b16 %v6395
    %v6490 = vunpack.c.h.b16 %v6395
    %v6491 = vunpack.c.l.b16 %v6396
    %v6492 = vunpack.c.h.b16 %v6396
    %v6493 = vpack.c.b16 %v6433, %v6429
    %v6494 = vpack.c.b16 %v6434, %v6430
    %v6495 = vpack.c.b16 %v6435, %v6431
    %v6496 = vpack.c.b16 %v6436, %v6432
    %v6497 = vpack.c.b16 %v6441, %v6437
    %v6498 = vpack.c.b16 %v6442, %v6438
    %v6499 = vpack.c.b16 %v6443, %v6439
    %v6500 = vpack.c.b16 %v6444, %v6440
    %v6501 = vpack.c.b16 %v6449, %v6445
    %v6502 = vpack.c.b16 %v6450, %v6446
    %v6503 = vpack.c.b16 %v6451, %v6447
    %v6504 = vpack.c.b16 %v6452, %v6448
    %v6505 = vpack.c.b16 %v6457, %v6453
    %v6506 = vpack.c.b16 %v6458, %v6454
    %v6507 = vpack.c.b16 %v6459, %v6455
    %v6508 = vpack.c.b16 %v6460, %v6456
    %v6509 = vpack.c.b16 %v6465, %v6461
    %v6510 = vpack.c.b16 %v6466, %v6462
    %v6511 = vpack.c.b16 %v6467, %v6463
    %v6512 = vpack.c.b16 %v6468, %v6464
    %v6513 = vpack.c.b16 %v6473, %v6469
    %v6514 = vpack.c.b16 %v6474, %v6470
    %v6515 = vpack.c.b16 %v6475, %v6471
    %v6516 = vpack.c.b16 %v6476, %v6472
    %v6517 = vpack.c.b16 %v6481, %v6477
    %v6518 = vpack.c.b16 %v6482, %v6478
    %v6519 = vpack.c.b16 %v6483, %v6479
    %v6520 = vpack.c.b16 %v6484, %v6480
    %v6521 = vpack.c.b16 %v6489, %v6485
    %v6522 = vpack.c.b16 %v6490, %v6486
    %v6523 = vpack.c.b16 %v6491, %v6487
    %v6524 = vpack.c.b16 %v6492, %v6488
    %6557 = vmatpush.bf16.msra.mxu0 %v6521
    %6558 = vmatpush.bf16.msra.mxu0 %v6517
    %6559 = vmatpush.bf16.msra.mxu0 %v6513
    %6560 = vmatpush.bf16.msra.mxu0 %v6509
    %6561 = vmatpush.bf16.msra.mxu0 %v6505
    %6562 = vmatpush.bf16.msra.mxu0 %v6501
    %6563 = vmatpush.bf16.msra.mxu0 %v6497
    %6564 = vmatpush.bf16.msra.mxu0 %v6493
    %6565 = vmatmul.bf16.gmra.mxu0 %v6364
    %v6566 = vpop.f32.mrf.mxu0
    %v6567 = vadd.f32 0.0, %v6566
    %v6568 = vpop.f32.mrf.mxu0
    %6569 = vdwg.mxu0
    %6570 = vmatpush.bf16.msra.mxu0 %v6522
    %6571 = vmatpush.bf16.msra.mxu0 %v6518
    %6572 = vmatpush.bf16.msra.mxu0 %v6514
    %6573 = vmatpush.bf16.msra.mxu0 %v6510
    %6574 = vmatpush.bf16.msra.mxu0 %v6506
    %6575 = vmatpush.bf16.msra.mxu0 %v6502
    %6576 = vmatpush.bf16.msra.mxu0 %v6498
    %6577 = vmatpush.bf16.msra.mxu0 %v6494
    %6578 = vmatmul.bf16.gmra.mxu0 %v6364
    %v6579 = vpop.f32.mrf.mxu0
    %v6580 = vadd.f32 0.0, %v6579
    %v6581 = vpop.f32.mrf.mxu0
    %6582 = vdwg.mxu0
    %6583 = vmatpush.bf16.msra.mxu0 %v6523
    %6584 = vmatpush.bf16.msra.mxu0 %v6519
    %6585 = vmatpush.bf16.msra.mxu0 %v6515
    %6586 = vmatpush.bf16.msra.mxu0 %v6511
    %6587 = vmatpush.bf16.msra.mxu0 %v6507
    %6588 = vmatpush.bf16.msra.mxu0 %v6503
    %6589 = vmatpush.bf16.msra.mxu0 %v6499
    %6590 = vmatpush.bf16.msra.mxu0 %v6495
    %6591 = vmatmul.bf16.gmra.mxu0 %v6364
    %v6592 = vpop.f32.mrf.mxu0
    %v6593 = vadd.f32 0.0, %v6592
    %v6594 = vpop.f32.mrf.mxu0
    %6595 = vdwg.mxu0
    %6596 = vmatpush.bf16.msra.mxu0 %v6524
    %6597 = vmatpush.bf16.msra.mxu0 %v6520
    %6598 = vmatpush.bf16.msra.mxu0 %v6516
    %6599 = vmatpush.bf16.msra.mxu0 %v6512
    %6600 = vmatpush.bf16.msra.mxu0 %v6508
    %6601 = vmatpush.bf16.msra.mxu0 %v6504
    %6602 = vmatpush.bf16.msra.mxu0 %v6500
    %6603 = vmatpush.bf16.msra.mxu0 %v6496
    %6604 = vmatmul.bf16.gmra.mxu0 %v6364
    %v6605 = vpop.f32.mrf.mxu0
    %v6606 = vadd.f32 0.0, %v6605
    %v6607 = vpop.f32.mrf.mxu0
    %6608 = vdwg.mxu0
    %v6609 = vadd.f32 %v6360, %v6567
    %v6610 = vadd.f32 %v6361, %v6580
    %v6611 = vadd.f32 %v6362, %v6593
    %v6612 = vadd.f32 %v6363, %v6606
    %v6613 = vxor.u32 %v6609, 2147483648
    %v6614 = vxor.u32 %v6610, 2147483648
    %v6615 = vxor.u32 %v6611, 2147483648
    %v6616 = vmul.f32 %v6613, 1.442695
    %v6617 = vpow.pop %v6616
    %v6618 = vmul.f32 %v6614, 1.442695
    %v6619 = vpow.pop %v6618
    %v6620 = vmul.f32 %v6615, 1.442695
    %v6621 = vpow.pop %v6620
    %v6622 = vadd.f32 %v6617, 1.0
    %v6623 = vadd.f32 %v6619, 1.0
    %v6624 = vadd.f32 %v6621, 1.0
    %v6625 = vrcp.pop %v6622
    %v6626 = vmul.f32 %v6622, %v6625
    %v6627 = vsub.f32 1.0, %v6626
    %v6628 = vmul.f32 %v6625, %v6627
    %v6629 = vadd.f32 %v6625, %v6628
    %vm6630 = vweird.f32 %v6622
    %vm6631 = vweird.f32 %v6625
    %vm6632 = vmor %vm6630, %vm6631
    %v6633 = vsel %vm6632, %v6625, %v6629
    %v6634 = vand.u32 2147483647, %v6622
    %vm6635 = vcmp.eq.f32.partialorder %v6634, 8.507059e+37
    %v6636 = vand.u32 %v6622, 2147483648
    %v6637 = vor.u32 1.1754944e-38, %v6636
    %v6638 = vsel %vm6635, %v6637, %v6633
    %v6639 = vmul.f32 1.0, %v6638
    %v6640 = vrcp.pop %v6623
    %v6641 = vmul.f32 %v6623, %v6640
    %v6642 = vsub.f32 1.0, %v6641
    %v6643 = vmul.f32 %v6640, %v6642
    %v6644 = vadd.f32 %v6640, %v6643
    %vm6645 = vweird.f32 %v6623
    %vm6646 = vweird.f32 %v6640
    %vm6647 = vmor %vm6645, %vm6646
    %v6648 = vsel %vm6647, %v6640, %v6644
    %v6649 = vand.u32 2147483647, %v6623
    %vm6650 = vcmp.eq.f32.partialorder %v6649, 8.507059e+37
    %v6651 = vand.u32 %v6623, 2147483648
    %v6652 = vor.u32 1.1754944e-38, %v6651
    %v6653 = vsel %vm6650, %v6652, %v6648
    %v6654 = vmul.f32 1.0, %v6653
    %v6655 = vrcp.pop %v6624
    %v6656 = vmul.f32 %v6624, %v6655
    %v6657 = vsub.f32 1.0, %v6656
    %v6658 = vmul.f32 %v6655, %v6657
    %v6659 = vadd.f32 %v6655, %v6658
    %vm6660 = vweird.f32 %v6624
    %vm6661 = vweird.f32 %v6655
    %vm6662 = vmor %vm6660, %vm6661
    %v6663 = vsel %vm6662, %v6655, %v6659
    %v6664 = vand.u32 2147483647, %v6624
    %vm6665 = vcmp.eq.f32.partialorder %v6664, 8.507059e+37
    %v6666 = vand.u32 %v6624, 2147483648
    %v6667 = vor.u32 1.1754944e-38, %v6666
    %v6668 = vsel %vm6665, %v6667, %v6663
    %v6669 = vmul.f32 1.0, %v6668
    %v6670 = vtanh.pop %v6612
    %v6671 = vmul.f32 %v6654, %v6359
    %v6672 = vmul.f32 %v6639, %v6670
    %v6673 = vadd.f32 %v6671, %v6672
    %v6674 = vtanh.pop %v6673
    %v6675 = vmul.f32 %v6669, %v6674
    %6676 = vst [vmem:[#allocation2] sm:$0xff] %v6675
    %v6677 = vld [vmem:[#allocation3 + $0x20] sm:$0xff]
    %v6678 = vld [vmem:[#allocation3 + $0x28] sm:$0xff]
    %v6679 = vld [vmem:[#allocation3 + $0x30] sm:$0xff]
    %v6680 = vld [vmem:[#allocation3 + $0x38] sm:$0xff]
    %v6681 = vpack.c.bf16 %v6675, %v6675
    %v6682 = vld [vmem:[#allocation12] sm:$0xff]
    %v6683 = vld [vmem:[#allocation12 + $0x8] sm:$0xff]
    %v6684 = vld [vmem:[#allocation12 + $0x10] sm:$0xff]
    %v6685 = vld [vmem:[#allocation12 + $0x18] sm:$0xff]
    %v6686 = vld [vmem:[#allocation12 + $0x20] sm:$0xff]
    %v6687 = vld [vmem:[#allocation12 + $0x28] sm:$0xff]
    %v6688 = vld [vmem:[#allocation12 + $0x30] sm:$0xff]
    %v6689 = vld [vmem:[#allocation12 + $0x38] sm:$0xff]
    %v6690 = vld [vmem:[#allocation12 + $0x40] sm:$0xff]
    %v6691 = vld [vmem:[#allocation12 + $0x48] sm:$0xff]
    %v6692 = vld [vmem:[#allocation12 + $0x50] sm:$0xff]
    %v6693 = vld [vmem:[#allocation12 + $0x58] sm:$0xff]
    %v6694 = vld [vmem:[#allocation12 + $0x60] sm:$0xff]
    %v6695 = vld [vmem:[#allocation12 + $0x68] sm:$0xff]
    %v6696 = vld [vmem:[#allocation12 + $0x70] sm:$0xff]
    %v6697 = vld [vmem:[#allocation12 + $0x78] sm:$0xff]
    %v6698 = vld [vmem:[#allocation12 + $0x80] sm:$0xff]
    %v6699 = vld [vmem:[#allocation12 + $0x88] sm:$0xff]
    %v6700 = vld [vmem:[#allocation12 + $0x90] sm:$0xff]
    %v6701 = vld [vmem:[#allocation12 + $0x98] sm:$0xff]
    %v6702 = vld [vmem:[#allocation12 + $0xa0] sm:$0xff]
    %v6703 = vld [vmem:[#allocation12 + $0xa8] sm:$0xff]
    %v6704 = vld [vmem:[#allocation12 + $0xb0] sm:$0xff]
    %v6705 = vld [vmem:[#allocation12 + $0xb8] sm:$0xff]
    %v6706 = vld [vmem:[#allocation12 + $0xc0] sm:$0xff]
    %v6707 = vld [vmem:[#allocation12 + $0xc8] sm:$0xff]
    %v6708 = vld [vmem:[#allocation12 + $0xd0] sm:$0xff]
    %v6709 = vld [vmem:[#allocation12 + $0xd8] sm:$0xff]
    %v6710 = vld [vmem:[#allocation12 + $0xe0] sm:$0xff]
    %v6711 = vld [vmem:[#allocation12 + $0xe8] sm:$0xff]
    %v6712 = vld [vmem:[#allocation12 + $0xf0] sm:$0xff]
    %v6713 = vld [vmem:[#allocation12 + $0xf8] sm:$0xff]
    %v6746 = vunpack.c.l.b16 %v6682
    %v6747 = vunpack.c.h.b16 %v6682
    %v6748 = vunpack.c.l.b16 %v6683
    %v6749 = vunpack.c.h.b16 %v6683
    %v6750 = vunpack.c.l.b16 %v6684
    %v6751 = vunpack.c.h.b16 %v6684
    %v6752 = vunpack.c.l.b16 %v6685
    %v6753 = vunpack.c.h.b16 %v6685
    %v6754 = vunpack.c.l.b16 %v6686
    %v6755 = vunpack.c.h.b16 %v6686
    %v6756 = vunpack.c.l.b16 %v6687
    %v6757 = vunpack.c.h.b16 %v6687
    %v6758 = vunpack.c.l.b16 %v6688
    %v6759 = vunpack.c.h.b16 %v6688
    %v6760 = vunpack.c.l.b16 %v6689
    %v6761 = vunpack.c.h.b16 %v6689
    %v6762 = vunpack.c.l.b16 %v6690
    %v6763 = vunpack.c.h.b16 %v6690
    %v6764 = vunpack.c.l.b16 %v6691
    %v6765 = vunpack.c.h.b16 %v6691
    %v6766 = vunpack.c.l.b16 %v6692
    %v6767 = vunpack.c.h.b16 %v6692
    %v6768 = vunpack.c.l.b16 %v6693
    %v6769 = vunpack.c.h.b16 %v6693
    %v6770 = vunpack.c.l.b16 %v6694
    %v6771 = vunpack.c.h.b16 %v6694
    %v6772 = vunpack.c.l.b16 %v6695
    %v6773 = vunpack.c.h.b16 %v6695
    %v6774 = vunpack.c.l.b16 %v6696
    %v6775 = vunpack.c.h.b16 %v6696
    %v6776 = vunpack.c.l.b16 %v6697
    %v6777 = vunpack.c.h.b16 %v6697
    %v6778 = vunpack.c.l.b16 %v6698
    %v6779 = vunpack.c.h.b16 %v6698
    %v6780 = vunpack.c.l.b16 %v6699
    %v6781 = vunpack.c.h.b16 %v6699
    %v6782 = vunpack.c.l.b16 %v6700
    %v6783 = vunpack.c.h.b16 %v6700
    %v6784 = vunpack.c.l.b16 %v6701
    %v6785 = vunpack.c.h.b16 %v6701
    %v6786 = vunpack.c.l.b16 %v6702
    %v6787 = vunpack.c.h.b16 %v6702
    %v6788 = vunpack.c.l.b16 %v6703
    %v6789 = vunpack.c.h.b16 %v6703
    %v6790 = vunpack.c.l.b16 %v6704
    %v6791 = vunpack.c.h.b16 %v6704
    %v6792 = vunpack.c.l.b16 %v6705
    %v6793 = vunpack.c.h.b16 %v6705
    %v6794 = vunpack.c.l.b16 %v6706
    %v6795 = vunpack.c.h.b16 %v6706
    %v6796 = vunpack.c.l.b16 %v6707
    %v6797 = vunpack.c.h.b16 %v6707
    %v6798 = vunpack.c.l.b16 %v6708
    %v6799 = vunpack.c.h.b16 %v6708
    %v6800 = vunpack.c.l.b16 %v6709
    %v6801 = vunpack.c.h.b16 %v6709
    %v6802 = vunpack.c.l.b16 %v6710
    %v6803 = vunpack.c.h.b16 %v6710
    %v6804 = vunpack.c.l.b16 %v6711
    %v6805 = vunpack.c.h.b16 %v6711
    %v6806 = vunpack.c.l.b16 %v6712
    %v6807 = vunpack.c.h.b16 %v6712
    %v6808 = vunpack.c.l.b16 %v6713
    %v6809 = vunpack.c.h.b16 %v6713
    %v6810 = vpack.c.b16 %v6750, %v6746
    %v6811 = vpack.c.b16 %v6751, %v6747
    %v6812 = vpack.c.b16 %v6752, %v6748
    %v6813 = vpack.c.b16 %v6753, %v6749
    %v6814 = vpack.c.b16 %v6758, %v6754
    %v6815 = vpack.c.b16 %v6759, %v6755
    %v6816 = vpack.c.b16 %v6760, %v6756
    %v6817 = vpack.c.b16 %v6761, %v6757
    %v6818 = vpack.c.b16 %v6766, %v6762
    %v6819 = vpack.c.b16 %v6767, %v6763
    %v6820 = vpack.c.b16 %v6768, %v6764
    %v6821 = vpack.c.b16 %v6769, %v6765
    %v6822 = vpack.c.b16 %v6774, %v6770
    %v6823 = vpack.c.b16 %v6775, %v6771
    %v6824 = vpack.c.b16 %v6776, %v6772
    %v6825 = vpack.c.b16 %v6777, %v6773
    %v6826 = vpack.c.b16 %v6782, %v6778
    %v6827 = vpack.c.b16 %v6783, %v6779
    %v6828 = vpack.c.b16 %v6784, %v6780
    %v6829 = vpack.c.b16 %v6785, %v6781
    %v6830 = vpack.c.b16 %v6790, %v6786
    %v6831 = vpack.c.b16 %v6791, %v6787
    %v6832 = vpack.c.b16 %v6792, %v6788
    %v6833 = vpack.c.b16 %v6793, %v6789
    %v6834 = vpack.c.b16 %v6798, %v6794
    %v6835 = vpack.c.b16 %v6799, %v6795
    %v6836 = vpack.c.b16 %v6800, %v6796
    %v6837 = vpack.c.b16 %v6801, %v6797
    %v6838 = vpack.c.b16 %v6806, %v6802
    %v6839 = vpack.c.b16 %v6807, %v6803
    %v6840 = vpack.c.b16 %v6808, %v6804
    %v6841 = vpack.c.b16 %v6809, %v6805
    %6874 = vmatpush.bf16.msra.mxu0 %v6838
    %6875 = vmatpush.bf16.msra.mxu0 %v6834
    %6876 = vmatpush.bf16.msra.mxu0 %v6830
    %6877 = vmatpush.bf16.msra.mxu0 %v6826
    %6878 = vmatpush.bf16.msra.mxu0 %v6822
    %6879 = vmatpush.bf16.msra.mxu0 %v6818
    %6880 = vmatpush.bf16.msra.mxu0 %v6814
    %6881 = vmatpush.bf16.msra.mxu0 %v6810
    %6882 = vmatmul.bf16.gmra.mxu0 %v6681
    %v6883 = vpop.f32.mrf.mxu0
    %v6884 = vadd.f32 0.0, %v6883
    %v6885 = vpop.f32.mrf.mxu0
    %6886 = vdwg.mxu0
    %6887 = vmatpush.bf16.msra.mxu0 %v6839
    %6888 = vmatpush.bf16.msra.mxu0 %v6835
    %6889 = vmatpush.bf16.msra.mxu0 %v6831
    %6890 = vmatpush.bf16.msra.mxu0 %v6827
    %6891 = vmatpush.bf16.msra.mxu0 %v6823
    %6892 = vmatpush.bf16.msra.mxu0 %v6819
    %6893 = vmatpush.bf16.msra.mxu0 %v6815
    %6894 = vmatpush.bf16.msra.mxu0 %v6811
    %6895 = vmatmul.bf16.gmra.mxu0 %v6681
    %v6896 = vpop.f32.mrf.mxu0
    %v6897 = vadd.f32 0.0, %v6896
    %v6898 = vpop.f32.mrf.mxu0
    %6899 = vdwg.mxu0
    %6900 = vmatpush.bf16.msra.mxu0 %v6840
    %6901 = vmatpush.bf16.msra.mxu0 %v6836
    %6902 = vmatpush.bf16.msra.mxu0 %v6832
    %6903 = vmatpush.bf16.msra.mxu0 %v6828
    %6904 = vmatpush.bf16.msra.mxu0 %v6824
    %6905 = vmatpush.bf16.msra.mxu0 %v6820
    %6906 = vmatpush.bf16.msra.mxu0 %v6816
    %6907 = vmatpush.bf16.msra.mxu0 %v6812
    %6908 = vmatmul.bf16.gmra.mxu0 %v6681
    %v6909 = vpop.f32.mrf.mxu0
    %v6910 = vadd.f32 0.0, %v6909
    %v6911 = vpop.f32.mrf.mxu0
    %6912 = vdwg.mxu0
    %6913 = vmatpush.bf16.msra.mxu0 %v6841
    %6914 = vmatpush.bf16.msra.mxu0 %v6837
    %6915 = vmatpush.bf16.msra.mxu0 %v6833
    %6916 = vmatpush.bf16.msra.mxu0 %v6829
    %6917 = vmatpush.bf16.msra.mxu0 %v6825
    %6918 = vmatpush.bf16.msra.mxu0 %v6821
    %6919 = vmatpush.bf16.msra.mxu0 %v6817
    %6920 = vmatpush.bf16.msra.mxu0 %v6813
    %6921 = vmatmul.bf16.gmra.mxu0 %v6681
    %v6922 = vpop.f32.mrf.mxu0
    %v6923 = vadd.f32 0.0, %v6922
    %v6924 = vpop.f32.mrf.mxu0
    %6925 = vdwg.mxu0
    %v6926 = vadd.f32 %v6677, %v6884
    %v6927 = vadd.f32 %v6678, %v6897
    %v6928 = vadd.f32 %v6679, %v6910
    %v6929 = vadd.f32 %v6680, %v6923
    %v6930 = vxor.u32 %v6926, 2147483648
    %v6931 = vxor.u32 %v6927, 2147483648
    %v6932 = vxor.u32 %v6928, 2147483648
    %v6933 = vmul.f32 %v6930, 1.442695
    %v6934 = vpow.pop %v6933
    %v6935 = vmul.f32 %v6931, 1.442695
    %v6936 = vpow.pop %v6935
    %v6937 = vmul.f32 %v6932, 1.442695
    %v6938 = vpow.pop %v6937
    %v6939 = vadd.f32 %v6934, 1.0
    %v6940 = vadd.f32 %v6936, 1.0
    %v6941 = vadd.f32 %v6938, 1.0
    %v6942 = vrcp.pop %v6939
    %v6943 = vmul.f32 %v6939, %v6942
    %v6944 = vsub.f32 1.0, %v6943
    %v6945 = vmul.f32 %v6942, %v6944
    %v6946 = vadd.f32 %v6942, %v6945
    %vm6947 = vweird.f32 %v6939
    %vm6948 = vweird.f32 %v6942
    %vm6949 = vmor %vm6947, %vm6948
    %v6950 = vsel %vm6949, %v6942, %v6946
    %v6951 = vand.u32 2147483647, %v6939
    %vm6952 = vcmp.eq.f32.partialorder %v6951, 8.507059e+37
    %v6953 = vand.u32 %v6939, 2147483648
    %v6954 = vor.u32 1.1754944e-38, %v6953
    %v6955 = vsel %vm6952, %v6954, %v6950
    %v6956 = vmul.f32 1.0, %v6955
    %v6957 = vrcp.pop %v6940
    %v6958 = vmul.f32 %v6940, %v6957
    %v6959 = vsub.f32 1.0, %v6958
    %v6960 = vmul.f32 %v6957, %v6959
    %v6961 = vadd.f32 %v6957, %v6960
    %vm6962 = vweird.f32 %v6940
    %vm6963 = vweird.f32 %v6957
    %vm6964 = vmor %vm6962, %vm6963
    %v6965 = vsel %vm6964, %v6957, %v6961
    %v6966 = vand.u32 2147483647, %v6940
    %vm6967 = vcmp.eq.f32.partialorder %v6966, 8.507059e+37
    %v6968 = vand.u32 %v6940, 2147483648
    %v6969 = vor.u32 1.1754944e-38, %v6968
    %v6970 = vsel %vm6967, %v6969, %v6965
    %v6971 = vmul.f32 1.0, %v6970
    %v6972 = vrcp.pop %v6941
    %v6973 = vmul.f32 %v6941, %v6972
    %v6974 = vsub.f32 1.0, %v6973
    %v6975 = vmul.f32 %v6972, %v6974
    %v6976 = vadd.f32 %v6972, %v6975
    %vm6977 = vweird.f32 %v6941
    %vm6978 = vweird.f32 %v6972
    %vm6979 = vmor %vm6977, %vm6978
    %v6980 = vsel %vm6979, %v6972, %v6976
    %v6981 = vand.u32 2147483647, %v6941
    %vm6982 = vcmp.eq.f32.partialorder %v6981, 8.507059e+37
    %v6983 = vand.u32 %v6941, 2147483648
    %v6984 = vor.u32 1.1754944e-38, %v6983
    %v6985 = vsel %vm6982, %v6984, %v6980
    %v6986 = vmul.f32 1.0, %v6985
    %v6987 = vtanh.pop %v6929
    %v6988 = vmul.f32 %v6971, %v6673
    %v6989 = vmul.f32 %v6956, %v6987
    %v6990 = vadd.f32 %v6988, %v6989
    %v6991 = vtanh.pop %v6990
    %v6992 = vmul.f32 %v6986, %v6991
    %6993 = vst [vmem:[#allocation2 + $0x8] sm:$0xff] %v6992
    %v6994 = vld [vmem:[#allocation3 + $0x40] sm:$0xff]
    %v6995 = vld [vmem:[#allocation3 + $0x48] sm:$0xff]
    %v6996 = vld [vmem:[#allocation3 + $0x50] sm:$0xff]
    %v6997 = vld [vmem:[#allocation3 + $0x58] sm:$0xff]
    %v6998 = vpack.c.bf16 %v6992, %v6992
    %v6999 = vld [vmem:[#allocation12] sm:$0xff]
    %v7000 = vld [vmem:[#allocation12 + $0x8] sm:$0xff]
    %v7001 = vld [vmem:[#allocation12 + $0x10] sm:$0xff]
    %v7002 = vld [vmem:[#allocation12 + $0x18] sm:$0xff]
    %v7003 = vld [vmem:[#allocation12 + $0x20] sm:$0xff]
    %v7004 = vld [vmem:[#allocation12 + $0x28] sm:$0xff]
    %v7005 = vld [vmem:[#allocation12 + $0x30] sm:$0xff]
    %v7006 = vld [vmem:[#allocation12 + $0x38] sm:$0xff]
    %v7007 = vld [vmem:[#allocation12 + $0x40] sm:$0xff]
    %v7008 = vld [vmem:[#allocation12 + $0x48] sm:$0xff]
    %v7009 = vld [vmem:[#allocation12 + $0x50] sm:$0xff]
    %v7010 = vld [vmem:[#allocation12 + $0x58] sm:$0xff]
    %v7011 = vld [vmem:[#allocation12 + $0x60] sm:$0xff]
    %v7012 = vld [vmem:[#allocation12 + $0x68] sm:$0xff]
    %v7013 = vld [vmem:[#allocation12 + $0x70] sm:$0xff]
    %v7014 = vld [vmem:[#allocation12 + $0x78] sm:$0xff]
    %v7015 = vld [vmem:[#allocation12 + $0x80] sm:$0xff]
    %v7016 = vld [vmem:[#allocation12 + $0x88] sm:$0xff]
    %v7017 = vld [vmem:[#allocation12 + $0x90] sm:$0xff]
    %v7018 = vld [vmem:[#allocation12 + $0x98] sm:$0xff]
    %v7019 = vld [vmem:[#allocation12 + $0xa0] sm:$0xff]
    %v7020 = vld [vmem:[#allocation12 + $0xa8] sm:$0xff]
    %v7021 = vld [vmem:[#allocation12 + $0xb0] sm:$0xff]
    %v7022 = vld [vmem:[#allocation12 + $0xb8] sm:$0xff]
    %v7023 = vld [vmem:[#allocation12 + $0xc0] sm:$0xff]
    %v7024 = vld [vmem:[#allocation12 + $0xc8] sm:$0xff]
    %v7025 = vld [vmem:[#allocation12 + $0xd0] sm:$0xff]
    %v7026 = vld [vmem:[#allocation12 + $0xd8] sm:$0xff]
    %v7027 = vld [vmem:[#allocation12 + $0xe0] sm:$0xff]
    %v7028 = vld [vmem:[#allocation12 + $0xe8] sm:$0xff]
    %v7029 = vld [vmem:[#allocation12 + $0xf0] sm:$0xff]
    %v7030 = vld [vmem:[#allocation12 + $0xf8] sm:$0xff]
    %v7063 = vunpack.c.l.b16 %v6999
    %v7064 = vunpack.c.h.b16 %v6999
    %v7065 = vunpack.c.l.b16 %v7000
    %v7066 = vunpack.c.h.b16 %v7000
    %v7067 = vunpack.c.l.b16 %v7001
    %v7068 = vunpack.c.h.b16 %v7001
    %v7069 = vunpack.c.l.b16 %v7002
    %v7070 = vunpack.c.h.b16 %v7002
    %v7071 = vunpack.c.l.b16 %v7003
    %v7072 = vunpack.c.h.b16 %v7003
    %v7073 = vunpack.c.l.b16 %v7004
    %v7074 = vunpack.c.h.b16 %v7004
    %v7075 = vunpack.c.l.b16 %v7005
    %v7076 = vunpack.c.h.b16 %v7005
    %v7077 = vunpack.c.l.b16 %v7006
    %v7078 = vunpack.c.h.b16 %v7006
    %v7079 = vunpack.c.l.b16 %v7007
    %v7080 = vunpack.c.h.b16 %v7007
    %v7081 = vunpack.c.l.b16 %v7008
    %v7082 = vunpack.c.h.b16 %v7008
    %v7083 = vunpack.c.l.b16 %v7009
    %v7084 = vunpack.c.h.b16 %v7009
    %v7085 = vunpack.c.l.b16 %v7010
    %v7086 = vunpack.c.h.b16 %v7010
    %v7087 = vunpack.c.l.b16 %v7011
    %v7088 = vunpack.c.h.b16 %v7011
    %v7089 = vunpack.c.l.b16 %v7012
    %v7090 = vunpack.c.h.b16 %v7012
    %v7091 = vunpack.c.l.b16 %v7013
    %v7092 = vunpack.c.h.b16 %v7013
    %v7093 = vunpack.c.l.b16 %v7014
    %v7094 = vunpack.c.h.b16 %v7014
    %v7095 = vunpack.c.l.b16 %v7015
    %v7096 = vunpack.c.h.b16 %v7015
    %v7097 = vunpack.c.l.b16 %v7016
    %v7098 = vunpack.c.h.b16 %v7016
    %v7099 = vunpack.c.l.b16 %v7017
    %v7100 = vunpack.c.h.b16 %v7017
    %v7101 = vunpack.c.l.b16 %v7018
    %v7102 = vunpack.c.h.b16 %v7018
    %v7103 = vunpack.c.l.b16 %v7019
    %v7104 = vunpack.c.h.b16 %v7019
    %v7105 = vunpack.c.l.b16 %v7020
    %v7106 = vunpack.c.h.b16 %v7020
    %v7107 = vunpack.c.l.b16 %v7021
    %v7108 = vunpack.c.h.b16 %v7021
    %v7109 = vunpack.c.l.b16 %v7022
    %v7110 = vunpack.c.h.b16 %v7022
    %v7111 = vunpack.c.l.b16 %v7023
    %v7112 = vunpack.c.h.b16 %v7023
    %v7113 = vunpack.c.l.b16 %v7024
    %v7114 = vunpack.c.h.b16 %v7024
    %v7115 = vunpack.c.l.b16 %v7025
    %v7116 = vunpack.c.h.b16 %v7025
    %v7117 = vunpack.c.l.b16 %v7026
    %v7118 = vunpack.c.h.b16 %v7026
    %v7119 = vunpack.c.l.b16 %v7027
    %v7120 = vunpack.c.h.b16 %v7027
    %v7121 = vunpack.c.l.b16 %v7028
    %v7122 = vunpack.c.h.b16 %v7028
    %v7123 = vunpack.c.l.b16 %v7029
    %v7124 = vunpack.c.h.b16 %v7029
    %v7125 = vunpack.c.l.b16 %v7030
    %v7126 = vunpack.c.h.b16 %v7030
    %v7127 = vpack.c.b16 %v7067, %v7063
    %v7128 = vpack.c.b16 %v7068, %v7064
    %v7129 = vpack.c.b16 %v7069, %v7065
    %v7130 = vpack.c.b16 %v7070, %v7066
    %v7131 = vpack.c.b16 %v7075, %v7071
    %v7132 = vpack.c.b16 %v7076, %v7072
    %v7133 = vpack.c.b16 %v7077, %v7073
    %v7134 = vpack.c.b16 %v7078, %v7074
    %v7135 = vpack.c.b16 %v7083, %v7079
    %v7136 = vpack.c.b16 %v7084, %v7080
    %v7137 = vpack.c.b16 %v7085, %v7081
    %v7138 = vpack.c.b16 %v7086, %v7082
    %v7139 = vpack.c.b16 %v7091, %v7087
    %v7140 = vpack.c.b16 %v7092, %v7088
    %v7141 = vpack.c.b16 %v7093, %v7089
    %v7142 = vpack.c.b16 %v7094, %v7090
    %v7143 = vpack.c.b16 %v7099, %v7095
    %v7144 = vpack.c.b16 %v7100, %v7096
    %v7145 = vpack.c.b16 %v7101, %v7097
    %v7146 = vpack.c.b16 %v7102, %v7098
    %v7147 = vpack.c.b16 %v7107, %v7103
    %v7148 = vpack.c.b16 %v7108, %v7104
    %v7149 = vpack.c.b16 %v7109, %v7105
    %v7150 = vpack.c.b16 %v7110, %v7106
    %v7151 = vpack.c.b16 %v7115, %v7111
    %v7152 = vpack.c.b16 %v7116, %v7112
    %v7153 = vpack.c.b16 %v7117, %v7113
    %v7154 = vpack.c.b16 %v7118, %v7114
    %v7155 = vpack.c.b16 %v7123, %v7119
    %v7156 = vpack.c.b16 %v7124, %v7120
    %v7157 = vpack.c.b16 %v7125, %v7121
    %v7158 = vpack.c.b16 %v7126, %v7122
    %7191 = vmatpush.bf16.msra.mxu0 %v7155
    %7192 = vmatpush.bf16.msra.mxu0 %v7151
    %7193 = vmatpush.bf16.msra.mxu0 %v7147
    %7194 = vmatpush.bf16.msra.mxu0 %v7143
    %7195 = vmatpush.bf16.msra.mxu0 %v7139
    %7196 = vmatpush.bf16.msra.mxu0 %v7135
    %7197 = vmatpush.bf16.msra.mxu0 %v7131
    %7198 = vmatpush.bf16.msra.mxu0 %v7127
    %7199 = vmatmul.bf16.gmra.mxu0 %v6998
    %v7200 = vpop.f32.mrf.mxu0
    %v7201 = vadd.f32 0.0, %v7200
    %v7202 = vpop.f32.mrf.mxu0
    %7203 = vdwg.mxu0
    %7204 = vmatpush.bf16.msra.mxu0 %v7156
    %7205 = vmatpush.bf16.msra.mxu0 %v7152
    %7206 = vmatpush.bf16.msra.mxu0 %v7148
    %7207 = vmatpush.bf16.msra.mxu0 %v7144
    %7208 = vmatpush.bf16.msra.mxu0 %v7140
    %7209 = vmatpush.bf16.msra.mxu0 %v7136
    %7210 = vmatpush.bf16.msra.mxu0 %v7132
    %7211 = vmatpush.bf16.msra.mxu0 %v7128
    %7212 = vmatmul.bf16.gmra.mxu0 %v6998
    %v7213 = vpop.f32.mrf.mxu0
    %v7214 = vadd.f32 0.0, %v7213
    %v7215 = vpop.f32.mrf.mxu0
    %7216 = vdwg.mxu0
    %7217 = vmatpush.bf16.msra.mxu0 %v7157
    %7218 = vmatpush.bf16.msra.mxu0 %v7153
    %7219 = vmatpush.bf16.msra.mxu0 %v7149
    %7220 = vmatpush.bf16.msra.mxu0 %v7145
    %7221 = vmatpush.bf16.msra.mxu0 %v7141
    %7222 = vmatpush.bf16.msra.mxu0 %v7137
    %7223 = vmatpush.bf16.msra.mxu0 %v7133
    %7224 = vmatpush.bf16.msra.mxu0 %v7129
    %7225 = vmatmul.bf16.gmra.mxu0 %v6998
    %v7226 = vpop.f32.mrf.mxu0
    %v7227 = vadd.f32 0.0, %v7226
    %v7228 = vpop.f32.mrf.mxu0
    %7229 = vdwg.mxu0
    %7230 = vmatpush.bf16.msra.mxu0 %v7158
    %7231 = vmatpush.bf16.msra.mxu0 %v7154
    %7232 = vmatpush.bf16.msra.mxu0 %v7150
    %7233 = vmatpush.bf16.msra.mxu0 %v7146
    %7234 = vmatpush.bf16.msra.mxu0 %v7142
    %7235 = vmatpush.bf16.msra.mxu0 %v7138
    %7236 = vmatpush.bf16.msra.mxu0 %v7134
    %7237 = vmatpush.bf16.msra.mxu0 %v7130
    %7238 = vmatmul.bf16.gmra.mxu0 %v6998
    %v7239 = vpop.f32.mrf.mxu0
    %v7240 = vadd.f32 0.0, %v7239
    %v7241 = vpop.f32.mrf.mxu0
    %7242 = vdwg.mxu0
    %v7243 = vadd.f32 %v6994, %v7201
    %v7244 = vadd.f32 %v6995, %v7214
    %v7245 = vadd.f32 %v6996, %v7227
    %v7246 = vadd.f32 %v6997, %v7240
    %v7247 = vxor.u32 %v7243, 2147483648
    %v7248 = vxor.u32 %v7244, 2147483648
    %v7249 = vxor.u32 %v7245, 2147483648
    %v7250 = vmul.f32 %v7247, 1.442695
    %v7251 = vpow.pop %v7250
    %v7252 = vmul.f32 %v7248, 1.442695
    %v7253 = vpow.pop %v7252
    %v7254 = vmul.f32 %v7249, 1.442695
    %v7255 = vpow.pop %v7254
    %v7256 = vadd.f32 %v7251, 1.0
    %v7257 = vadd.f32 %v7253, 1.0
    %v7258 = vadd.f32 %v7255, 1.0
    %v7259 = vrcp.pop %v7256
    %v7260 = vmul.f32 %v7256, %v7259
    %v7261 = vsub.f32 1.0, %v7260
    %v7262 = vmul.f32 %v7259, %v7261
    %v7263 = vadd.f32 %v7259, %v7262
    %vm7264 = vweird.f32 %v7256
    %vm7265 = vweird.f32 %v7259
    %vm7266 = vmor %vm7264, %vm7265
    %v7267 = vsel %vm7266, %v7259, %v7263
    %v7268 = vand.u32 2147483647, %v7256
    %vm7269 = vcmp.eq.f32.partialorder %v7268, 8.507059e+37
    %v7270 = vand.u32 %v7256, 2147483648
    %v7271 = vor.u32 1.1754944e-38, %v7270
    %v7272 = vsel %vm7269, %v7271, %v7267
    %v7273 = vmul.f32 1.0, %v7272
    %v7274 = vrcp.pop %v7257
    %v7275 = vmul.f32 %v7257, %v7274
    %v7276 = vsub.f32 1.0, %v7275
    %v7277 = vmul.f32 %v7274, %v7276
    %v7278 = vadd.f32 %v7274, %v7277
    %vm7279 = vweird.f32 %v7257
    %vm7280 = vweird.f32 %v7274
    %vm7281 = vmor %vm7279, %vm7280
    %v7282 = vsel %vm7281, %v7274, %v7278
    %v7283 = vand.u32 2147483647, %v7257
    %vm7284 = vcmp.eq.f32.partialorder %v7283, 8.507059e+37
    %v7285 = vand.u32 %v7257, 2147483648
    %v7286 = vor.u32 1.1754944e-38, %v7285
    %v7287 = vsel %vm7284, %v7286, %v7282
    %v7288 = vmul.f32 1.0, %v7287
    %v7289 = vrcp.pop %v7258
    %v7290 = vmul.f32 %v7258, %v7289
    %v7291 = vsub.f32 1.0, %v7290
    %v7292 = vmul.f32 %v7289, %v7291
    %v7293 = vadd.f32 %v7289, %v7292
    %vm7294 = vweird.f32 %v7258
    %vm7295 = vweird.f32 %v7289
    %vm7296 = vmor %vm7294, %vm7295
    %v7297 = vsel %vm7296, %v7289, %v7293
    %v7298 = vand.u32 2147483647, %v7258
    %vm7299 = vcmp.eq.f32.partialorder %v7298, 8.507059e+37
    %v7300 = vand.u32 %v7258, 2147483648
    %v7301 = vor.u32 1.1754944e-38, %v7300
    %v7302 = vsel %vm7299, %v7301, %v7297
    %v7303 = vmul.f32 1.0, %v7302
    %v7304 = vtanh.pop %v7246
    %v7305 = vmul.f32 %v7288, %v6990
    %v7306 = vmul.f32 %v7273, %v7304
    %v7307 = vadd.f32 %v7305, %v7306
    %v7308 = vtanh.pop %v7307
    %v7309 = vmul.f32 %v7303, %v7308
    %7310 = vst [vmem:[#allocation2 + $0x10] sm:$0xff] %v7309
    %v7311 = vld [vmem:[#allocation3 + $0x60] sm:$0xff]
    %v7312 = vld [vmem:[#allocation3 + $0x68] sm:$0xff]
    %v7313 = vld [vmem:[#allocation3 + $0x70] sm:$0xff]
    %v7314 = vld [vmem:[#allocation3 + $0x78] sm:$0xff]
    %v7315 = vpack.c.bf16 %v7309, %v7309
    %v7316 = vld [vmem:[#allocation12] sm:$0xff]
    %v7317 = vld [vmem:[#allocation12 + $0x8] sm:$0xff]
    %v7318 = vld [vmem:[#allocation12 + $0x10] sm:$0xff]
    %v7319 = vld [vmem:[#allocation12 + $0x18] sm:$0xff]
    %v7320 = vld [vmem:[#allocation12 + $0x20] sm:$0xff]
    %v7321 = vld [vmem:[#allocation12 + $0x28] sm:$0xff]
    %v7322 = vld [vmem:[#allocation12 + $0x30] sm:$0xff]
    %v7323 = vld [vmem:[#allocation12 + $0x38] sm:$0xff]
    %v7324 = vld [vmem:[#allocation12 + $0x40] sm:$0xff]
    %v7325 = vld [vmem:[#allocation12 + $0x48] sm:$0xff]
    %v7326 = vld [vmem:[#allocation12 + $0x50] sm:$0xff]
    %v7327 = vld [vmem:[#allocation12 + $0x58] sm:$0xff]
    %v7328 = vld [vmem:[#allocation12 + $0x60] sm:$0xff]
    %v7329 = vld [vmem:[#allocation12 + $0x68] sm:$0xff]
    %v7330 = vld [vmem:[#allocation12 + $0x70] sm:$0xff]
    %v7331 = vld [vmem:[#allocation12 + $0x78] sm:$0xff]
    %v7332 = vld [vmem:[#allocation12 + $0x80] sm:$0xff]
    %v7333 = vld [vmem:[#allocation12 + $0x88] sm:$0xff]
    %v7334 = vld [vmem:[#allocation12 + $0x90] sm:$0xff]
    %v7335 = vld [vmem:[#allocation12 + $0x98] sm:$0xff]
    %v7336 = vld [vmem:[#allocation12 + $0xa0] sm:$0xff]
    %v7337 = vld [vmem:[#allocation12 + $0xa8] sm:$0xff]
    %v7338 = vld [vmem:[#allocation12 + $0xb0] sm:$0xff]
    %v7339 = vld [vmem:[#allocation12 + $0xb8] sm:$0xff]
    %v7340 = vld [vmem:[#allocation12 + $0xc0] sm:$0xff]
    %v7341 = vld [vmem:[#allocation12 + $0xc8] sm:$0xff]
    %v7342 = vld [vmem:[#allocation12 + $0xd0] sm:$0xff]
    %v7343 = vld [vmem:[#allocation12 + $0xd8] sm:$0xff]
    %v7344 = vld [vmem:[#allocation12 + $0xe0] sm:$0xff]
    %v7345 = vld [vmem:[#allocation12 + $0xe8] sm:$0xff]
    %v7346 = vld [vmem:[#allocation12 + $0xf0] sm:$0xff]
    %v7347 = vld [vmem:[#allocation12 + $0xf8] sm:$0xff]
    %v7380 = vunpack.c.l.b16 %v7316
    %v7381 = vunpack.c.h.b16 %v7316
    %v7382 = vunpack.c.l.b16 %v7317
    %v7383 = vunpack.c.h.b16 %v7317
    %v7384 = vunpack.c.l.b16 %v7318
    %v7385 = vunpack.c.h.b16 %v7318
    %v7386 = vunpack.c.l.b16 %v7319
    %v7387 = vunpack.c.h.b16 %v7319
    %v7388 = vunpack.c.l.b16 %v7320
    %v7389 = vunpack.c.h.b16 %v7320
    %v7390 = vunpack.c.l.b16 %v7321
    %v7391 = vunpack.c.h.b16 %v7321
    %v7392 = vunpack.c.l.b16 %v7322
    %v7393 = vunpack.c.h.b16 %v7322
    %v7394 = vunpack.c.l.b16 %v7323
    %v7395 = vunpack.c.h.b16 %v7323
    %v7396 = vunpack.c.l.b16 %v7324
    %v7397 = vunpack.c.h.b16 %v7324
    %v7398 = vunpack.c.l.b16 %v7325
    %v7399 = vunpack.c.h.b16 %v7325
    %v7400 = vunpack.c.l.b16 %v7326
    %v7401 = vunpack.c.h.b16 %v7326
    %v7402 = vunpack.c.l.b16 %v7327
    %v7403 = vunpack.c.h.b16 %v7327
    %v7404 = vunpack.c.l.b16 %v7328
    %v7405 = vunpack.c.h.b16 %v7328
    %v7406 = vunpack.c.l.b16 %v7329
    %v7407 = vunpack.c.h.b16 %v7329
    %v7408 = vunpack.c.l.b16 %v7330
    %v7409 = vunpack.c.h.b16 %v7330
    %v7410 = vunpack.c.l.b16 %v7331
    %v7411 = vunpack.c.h.b16 %v7331
    %v7412 = vunpack.c.l.b16 %v7332
    %v7413 = vunpack.c.h.b16 %v7332
    %v7414 = vunpack.c.l.b16 %v7333
    %v7415 = vunpack.c.h.b16 %v7333
    %v7416 = vunpack.c.l.b16 %v7334
    %v7417 = vunpack.c.h.b16 %v7334
    %v7418 = vunpack.c.l.b16 %v7335
    %v7419 = vunpack.c.h.b16 %v7335
    %v7420 = vunpack.c.l.b16 %v7336
    %v7421 = vunpack.c.h.b16 %v7336
    %v7422 = vunpack.c.l.b16 %v7337
    %v7423 = vunpack.c.h.b16 %v7337
    %v7424 = vunpack.c.l.b16 %v7338
    %v7425 = vunpack.c.h.b16 %v7338
    %v7426 = vunpack.c.l.b16 %v7339
    %v7427 = vunpack.c.h.b16 %v7339
    %v7428 = vunpack.c.l.b16 %v7340
    %v7429 = vunpack.c.h.b16 %v7340
    %v7430 = vunpack.c.l.b16 %v7341
    %v7431 = vunpack.c.h.b16 %v7341
    %v7432 = vunpack.c.l.b16 %v7342
    %v7433 = vunpack.c.h.b16 %v7342
    %v7434 = vunpack.c.l.b16 %v7343
    %v7435 = vunpack.c.h.b16 %v7343
    %v7436 = vunpack.c.l.b16 %v7344
    %v7437 = vunpack.c.h.b16 %v7344
    %v7438 = vunpack.c.l.b16 %v7345
    %v7439 = vunpack.c.h.b16 %v7345
    %v7440 = vunpack.c.l.b16 %v7346
    %v7441 = vunpack.c.h.b16 %v7346
    %v7442 = vunpack.c.l.b16 %v7347
    %v7443 = vunpack.c.h.b16 %v7347
    %v7444 = vpack.c.b16 %v7384, %v7380
    %v7445 = vpack.c.b16 %v7385, %v7381
    %v7446 = vpack.c.b16 %v7386, %v7382
    %v7447 = vpack.c.b16 %v7387, %v7383
    %v7448 = vpack.c.b16 %v7392, %v7388
    %v7449 = vpack.c.b16 %v7393, %v7389
    %v7450 = vpack.c.b16 %v7394, %v7390
    %v7451 = vpack.c.b16 %v7395, %v7391
    %v7452 = vpack.c.b16 %v7400, %v7396
    %v7453 = vpack.c.b16 %v7401, %v7397
    %v7454 = vpack.c.b16 %v7402, %v7398
    %v7455 = vpack.c.b16 %v7403, %v7399
    %v7456 = vpack.c.b16 %v7408, %v7404
    %v7457 = vpack.c.b16 %v7409, %v7405
    %v7458 = vpack.c.b16 %v7410, %v7406
    %v7459 = vpack.c.b16 %v7411, %v7407
    %v7460 = vpack.c.b16 %v7416, %v7412
    %v7461 = vpack.c.b16 %v7417, %v7413
    %v7462 = vpack.c.b16 %v7418, %v7414
    %v7463 = vpack.c.b16 %v7419, %v7415
    %v7464 = vpack.c.b16 %v7424, %v7420
    %v7465 = vpack.c.b16 %v7425, %v7421
    %v7466 = vpack.c.b16 %v7426, %v7422
    %v7467 = vpack.c.b16 %v7427, %v7423
    %v7468 = vpack.c.b16 %v7432, %v7428
    %v7469 = vpack.c.b16 %v7433, %v7429
    %v7470 = vpack.c.b16 %v7434, %v7430
    %v7471 = vpack.c.b16 %v7435, %v7431
    %v7472 = vpack.c.b16 %v7440, %v7436
    %v7473 = vpack.c.b16 %v7441, %v7437
    %v7474 = vpack.c.b16 %v7442, %v7438
    %v7475 = vpack.c.b16 %v7443, %v7439
    %7508 = vmatpush.bf16.msra.mxu0 %v7472
    %7509 = vmatpush.bf16.msra.mxu0 %v7468
    %7510 = vmatpush.bf16.msra.mxu0 %v7464
    %7511 = vmatpush.bf16.msra.mxu0 %v7460
    %7512 = vmatpush.bf16.msra.mxu0 %v7456
    %7513 = vmatpush.bf16.msra.mxu0 %v7452
    %7514 = vmatpush.bf16.msra.mxu0 %v7448
    %7515 = vmatpush.bf16.msra.mxu0 %v7444
    %7516 = vmatmul.bf16.gmra.mxu0 %v7315
    %v7517 = vpop.f32.mrf.mxu0
    %v7518 = vadd.f32 0.0, %v7517
    %v7519 = vpop.f32.mrf.mxu0
    %7520 = vdwg.mxu0
    %7521 = vmatpush.bf16.msra.mxu0 %v7473
    %7522 = vmatpush.bf16.msra.mxu0 %v7469
    %7523 = vmatpush.bf16.msra.mxu0 %v7465
    %7524 = vmatpush.bf16.msra.mxu0 %v7461
    %7525 = vmatpush.bf16.msra.mxu0 %v7457
    %7526 = vmatpush.bf16.msra.mxu0 %v7453
    %7527 = vmatpush.bf16.msra.mxu0 %v7449
    %7528 = vmatpush.bf16.msra.mxu0 %v7445
    %7529 = vmatmul.bf16.gmra.mxu0 %v7315
    %v7530 = vpop.f32.mrf.mxu0
    %v7531 = vadd.f32 0.0, %v7530
    %v7532 = vpop.f32.mrf.mxu0
    %7533 = vdwg.mxu0
    %7534 = vmatpush.bf16.msra.mxu0 %v7474
    %7535 = vmatpush.bf16.msra.mxu0 %v7470
    %7536 = vmatpush.bf16.msra.mxu0 %v7466
    %7537 = vmatpush.bf16.msra.mxu0 %v7462
    %7538 = vmatpush.bf16.msra.mxu0 %v7458
    %7539 = vmatpush.bf16.msra.mxu0 %v7454
    %7540 = vmatpush.bf16.msra.mxu0 %v7450
    %7541 = vmatpush.bf16.msra.mxu0 %v7446
    %7542 = vmatmul.bf16.gmra.mxu0 %v7315
    %v7543 = vpop.f32.mrf.mxu0
    %v7544 = vadd.f32 0.0, %v7543
    %v7545 = vpop.f32.mrf.mxu0
    %7546 = vdwg.mxu0
    %7547 = vmatpush.bf16.msra.mxu0 %v7475
    %7548 = vmatpush.bf16.msra.mxu0 %v7471
    %7549 = vmatpush.bf16.msra.mxu0 %v7467
    %7550 = vmatpush.bf16.msra.mxu0 %v7463
    %7551 = vmatpush.bf16.msra.mxu0 %v7459
    %7552 = vmatpush.bf16.msra.mxu0 %v7455
    %7553 = vmatpush.bf16.msra.mxu0 %v7451
    %7554 = vmatpush.bf16.msra.mxu0 %v7447
    %7555 = vmatmul.bf16.gmra.mxu0 %v7315
    %v7556 = vpop.f32.mrf.mxu0
    %v7557 = vadd.f32 0.0, %v7556
    %v7558 = vpop.f32.mrf.mxu0
    %7559 = vdwg.mxu0
    %v7560 = vadd.f32 %v7311, %v7518
    %v7561 = vadd.f32 %v7312, %v7531
    %v7562 = vadd.f32 %v7313, %v7544
    %v7563 = vadd.f32 %v7314, %v7557
    %v7564 = vxor.u32 %v7560, 2147483648
    %v7565 = vxor.u32 %v7561, 2147483648
    %v7566 = vxor.u32 %v7562, 2147483648
    %v7567 = vmul.f32 %v7564, 1.442695
    %v7568 = vpow.pop %v7567
    %v7569 = vmul.f32 %v7565, 1.442695
    %v7570 = vpow.pop %v7569
    %v7571 = vmul.f32 %v7566, 1.442695
    %v7572 = vpow.pop %v7571
    %v7573 = vadd.f32 %v7568, 1.0
    %v7574 = vadd.f32 %v7570, 1.0
    %v7575 = vadd.f32 %v7572, 1.0
    %v7576 = vrcp.pop %v7573
    %v7577 = vmul.f32 %v7573, %v7576
    %v7578 = vsub.f32 1.0, %v7577
    %v7579 = vmul.f32 %v7576, %v7578
    %v7580 = vadd.f32 %v7576, %v7579
    %vm7581 = vweird.f32 %v7573
    %vm7582 = vweird.f32 %v7576
    %vm7583 = vmor %vm7581, %vm7582
    %v7584 = vsel %vm7583, %v7576, %v7580
    %v7585 = vand.u32 2147483647, %v7573
    %vm7586 = vcmp.eq.f32.partialorder %v7585, 8.507059e+37
    %v7587 = vand.u32 %v7573, 2147483648
    %v7588 = vor.u32 1.1754944e-38, %v7587
    %v7589 = vsel %vm7586, %v7588, %v7584
    %v7590 = vmul.f32 1.0, %v7589
    %v7591 = vrcp.pop %v7574
    %v7592 = vmul.f32 %v7574, %v7591
    %v7593 = vsub.f32 1.0, %v7592
    %v7594 = vmul.f32 %v7591, %v7593
    %v7595 = vadd.f32 %v7591, %v7594
    %vm7596 = vweird.f32 %v7574
    %vm7597 = vweird.f32 %v7591
    %vm7598 = vmor %vm7596, %vm7597
    %v7599 = vsel %vm7598, %v7591, %v7595
    %v7600 = vand.u32 2147483647, %v7574
    %vm7601 = vcmp.eq.f32.partialorder %v7600, 8.507059e+37
    %v7602 = vand.u32 %v7574, 2147483648
    %v7603 = vor.u32 1.1754944e-38, %v7602
    %v7604 = vsel %vm7601, %v7603, %v7599
    %v7605 = vmul.f32 1.0, %v7604
    %v7606 = vrcp.pop %v7575
    %v7607 = vmul.f32 %v7575, %v7606
    %v7608 = vsub.f32 1.0, %v7607
    %v7609 = vmul.f32 %v7606, %v7608
    %v7610 = vadd.f32 %v7606, %v7609
    %vm7611 = vweird.f32 %v7575
    %vm7612 = vweird.f32 %v7606
    %vm7613 = vmor %vm7611, %vm7612
    %v7614 = vsel %vm7613, %v7606, %v7610
    %v7615 = vand.u32 2147483647, %v7575
    %vm7616 = vcmp.eq.f32.partialorder %v7615, 8.507059e+37
    %v7617 = vand.u32 %v7575, 2147483648
    %v7618 = vor.u32 1.1754944e-38, %v7617
    %v7619 = vsel %vm7616, %v7618, %v7614
    %v7620 = vmul.f32 1.0, %v7619
    %v7621 = vtanh.pop %v7563
    %v7622 = vmul.f32 %v7605, %v7307
    %v7623 = vmul.f32 %v7590, %v7621
    %v7624 = vadd.f32 %v7622, %v7623
    %v7625 = vtanh.pop %v7624
    %v7626 = vmul.f32 %v7620, %v7625
    %7627 = vst [vmem:[#allocation2 + $0x18] sm:$0xff] %v7626
    %v7628 = vld [vmem:[#allocation3 + $0x80] sm:$0xff]
    %v7629 = vld [vmem:[#allocation3 + $0x88] sm:$0xff]
    %v7630 = vld [vmem:[#allocation3 + $0x90] sm:$0xff]
    %v7631 = vld [vmem:[#allocation3 + $0x98] sm:$0xff]
    %v7632 = vpack.c.bf16 %v7626, %v7626
    %v7633 = vld [vmem:[#allocation12] sm:$0xff]
    %v7634 = vld [vmem:[#allocation12 + $0x8] sm:$0xff]
    %v7635 = vld [vmem:[#allocation12 + $0x10] sm:$0xff]
    %v7636 = vld [vmem:[#allocation12 + $0x18] sm:$0xff]
    %v7637 = vld [vmem:[#allocation12 + $0x20] sm:$0xff]
    %v7638 = vld [vmem:[#allocation12 + $0x28] sm:$0xff]
    %v7639 = vld [vmem:[#allocation12 + $0x30] sm:$0xff]
    %v7640 = vld [vmem:[#allocation12 + $0x38] sm:$0xff]
    %v7641 = vld [vmem:[#allocation12 + $0x40] sm:$0xff]
    %v7642 = vld [vmem:[#allocation12 + $0x48] sm:$0xff]
    %v7643 = vld [vmem:[#allocation12 + $0x50] sm:$0xff]
    %v7644 = vld [vmem:[#allocation12 + $0x58] sm:$0xff]
    %v7645 = vld [vmem:[#allocation12 + $0x60] sm:$0xff]
    %v7646 = vld [vmem:[#allocation12 + $0x68] sm:$0xff]
    %v7647 = vld [vmem:[#allocation12 + $0x70] sm:$0xff]
    %v7648 = vld [vmem:[#allocation12 + $0x78] sm:$0xff]
    %v7649 = vld [vmem:[#allocation12 + $0x80] sm:$0xff]
    %v7650 = vld [vmem:[#allocation12 + $0x88] sm:$0xff]
    %v7651 = vld [vmem:[#allocation12 + $0x90] sm:$0xff]
    %v7652 = vld [vmem:[#allocation12 + $0x98] sm:$0xff]
    %v7653 = vld [vmem:[#allocation12 + $0xa0] sm:$0xff]
    %v7654 = vld [vmem:[#allocation12 + $0xa8] sm:$0xff]
    %v7655 = vld [vmem:[#allocation12 + $0xb0] sm:$0xff]
    %v7656 = vld [vmem:[#allocation12 + $0xb8] sm:$0xff]
    %v7657 = vld [vmem:[#allocation12 + $0xc0] sm:$0xff]
    %v7658 = vld [vmem:[#allocation12 + $0xc8] sm:$0xff]
    %v7659 = vld [vmem:[#allocation12 + $0xd0] sm:$0xff]
    %v7660 = vld [vmem:[#allocation12 + $0xd8] sm:$0xff]
    %v7661 = vld [vmem:[#allocation12 + $0xe0] sm:$0xff]
    %v7662 = vld [vmem:[#allocation12 + $0xe8] sm:$0xff]
    %v7663 = vld [vmem:[#allocation12 + $0xf0] sm:$0xff]
    %v7664 = vld [vmem:[#allocation12 + $0xf8] sm:$0xff]
    %v7697 = vunpack.c.l.b16 %v7633
    %v7698 = vunpack.c.h.b16 %v7633
    %v7699 = vunpack.c.l.b16 %v7634
    %v7700 = vunpack.c.h.b16 %v7634
    %v7701 = vunpack.c.l.b16 %v7635
    %v7702 = vunpack.c.h.b16 %v7635
    %v7703 = vunpack.c.l.b16 %v7636
    %v7704 = vunpack.c.h.b16 %v7636
    %v7705 = vunpack.c.l.b16 %v7637
    %v7706 = vunpack.c.h.b16 %v7637
    %v7707 = vunpack.c.l.b16 %v7638
    %v7708 = vunpack.c.h.b16 %v7638
    %v7709 = vunpack.c.l.b16 %v7639
    %v7710 = vunpack.c.h.b16 %v7639
    %v7711 = vunpack.c.l.b16 %v7640
    %v7712 = vunpack.c.h.b16 %v7640
    %v7713 = vunpack.c.l.b16 %v7641
    %v7714 = vunpack.c.h.b16 %v7641
    %v7715 = vunpack.c.l.b16 %v7642
    %v7716 = vunpack.c.h.b16 %v7642
    %v7717 = vunpack.c.l.b16 %v7643
    %v7718 = vunpack.c.h.b16 %v7643
    %v7719 = vunpack.c.l.b16 %v7644
    %v7720 = vunpack.c.h.b16 %v7644
    %v7721 = vunpack.c.l.b16 %v7645
    %v7722 = vunpack.c.h.b16 %v7645
    %v7723 = vunpack.c.l.b16 %v7646
    %v7724 = vunpack.c.h.b16 %v7646
    %v7725 = vunpack.c.l.b16 %v7647
    %v7726 = vunpack.c.h.b16 %v7647
    %v7727 = vunpack.c.l.b16 %v7648
    %v7728 = vunpack.c.h.b16 %v7648
    %v7729 = vunpack.c.l.b16 %v7649
    %v7730 = vunpack.c.h.b16 %v7649
    %v7731 = vunpack.c.l.b16 %v7650
    %v7732 = vunpack.c.h.b16 %v7650
    %v7733 = vunpack.c.l.b16 %v7651
    %v7734 = vunpack.c.h.b16 %v7651
    %v7735 = vunpack.c.l.b16 %v7652
    %v7736 = vunpack.c.h.b16 %v7652
    %v7737 = vunpack.c.l.b16 %v7653
    %v7738 = vunpack.c.h.b16 %v7653
    %v7739 = vunpack.c.l.b16 %v7654
    %v7740 = vunpack.c.h.b16 %v7654
    %v7741 = vunpack.c.l.b16 %v7655
    %v7742 = vunpack.c.h.b16 %v7655
    %v7743 = vunpack.c.l.b16 %v7656
    %v7744 = vunpack.c.h.b16 %v7656
    %v7745 = vunpack.c.l.b16 %v7657
    %v7746 = vunpack.c.h.b16 %v7657
    %v7747 = vunpack.c.l.b16 %v7658
    %v7748 = vunpack.c.h.b16 %v7658
    %v7749 = vunpack.c.l.b16 %v7659
    %v7750 = vunpack.c.h.b16 %v7659
    %v7751 = vunpack.c.l.b16 %v7660
    %v7752 = vunpack.c.h.b16 %v7660
    %v7753 = vunpack.c.l.b16 %v7661
    %v7754 = vunpack.c.h.b16 %v7661
    %v7755 = vunpack.c.l.b16 %v7662
    %v7756 = vunpack.c.h.b16 %v7662
    %v7757 = vunpack.c.l.b16 %v7663
    %v7758 = vunpack.c.h.b16 %v7663
    %v7759 = vunpack.c.l.b16 %v7664
    %v7760 = vunpack.c.h.b16 %v7664
    %v7761 = vpack.c.b16 %v7701, %v7697
    %v7762 = vpack.c.b16 %v7702, %v7698
    %v7763 = vpack.c.b16 %v7703, %v7699
    %v7764 = vpack.c.b16 %v7704, %v7700
    %v7765 = vpack.c.b16 %v7709, %v7705
    %v7766 = vpack.c.b16 %v7710, %v7706
    %v7767 = vpack.c.b16 %v7711, %v7707
    %v7768 = vpack.c.b16 %v7712, %v7708
    %v7769 = vpack.c.b16 %v7717, %v7713
    %v7770 = vpack.c.b16 %v7718, %v7714
    %v7771 = vpack.c.b16 %v7719, %v7715
    %v7772 = vpack.c.b16 %v7720, %v7716
    %v7773 = vpack.c.b16 %v7725, %v7721
    %v7774 = vpack.c.b16 %v7726, %v7722
    %v7775 = vpack.c.b16 %v7727, %v7723
    %v7776 = vpack.c.b16 %v7728, %v7724
    %v7777 = vpack.c.b16 %v7733, %v7729
    %v7778 = vpack.c.b16 %v7734, %v7730
    %v7779 = vpack.c.b16 %v7735, %v7731
    %v7780 = vpack.c.b16 %v7736, %v7732
    %v7781 = vpack.c.b16 %v7741, %v7737
    %v7782 = vpack.c.b16 %v7742, %v7738
    %v7783 = vpack.c.b16 %v7743, %v7739
    %v7784 = vpack.c.b16 %v7744, %v7740
    %v7785 = vpack.c.b16 %v7749, %v7745
    %v7786 = vpack.c.b16 %v7750, %v7746
    %v7787 = vpack.c.b16 %v7751, %v7747
    %v7788 = vpack.c.b16 %v7752, %v7748
    %v7789 = vpack.c.b16 %v7757, %v7753
    %v7790 = vpack.c.b16 %v7758, %v7754
    %v7791 = vpack.c.b16 %v7759, %v7755
    %v7792 = vpack.c.b16 %v7760, %v7756
    %7825 = vmatpush.bf16.msra.mxu0 %v7789
    %7826 = vmatpush.bf16.msra.mxu0 %v7785
    %7827 = vmatpush.bf16.msra.mxu0 %v7781
    %7828 = vmatpush.bf16.msra.mxu0 %v7777
    %7829 = vmatpush.bf16.msra.mxu0 %v7773
    %7830 = vmatpush.bf16.msra.mxu0 %v7769
    %7831 = vmatpush.bf16.msra.mxu0 %v7765
    %7832 = vmatpush.bf16.msra.mxu0 %v7761
    %7833 = vmatmul.bf16.gmra.mxu0 %v7632
    %v7834 = vpop.f32.mrf.mxu0
    %v7835 = vadd.f32 0.0, %v7834
    %v7836 = vpop.f32.mrf.mxu0
    %7837 = vdwg.mxu0
    %7838 = vmatpush.bf16.msra.mxu0 %v7790
    %7839 = vmatpush.bf16.msra.mxu0 %v7786
    %7840 = vmatpush.bf16.msra.mxu0 %v7782
    %7841 = vmatpush.bf16.msra.mxu0 %v7778
    %7842 = vmatpush.bf16.msra.mxu0 %v7774
    %7843 = vmatpush.bf16.msra.mxu0 %v7770
    %7844 = vmatpush.bf16.msra.mxu0 %v7766
    %7845 = vmatpush.bf16.msra.mxu0 %v7762
    %7846 = vmatmul.bf16.gmra.mxu0 %v7632
    %v7847 = vpop.f32.mrf.mxu0
    %v7848 = vadd.f32 0.0, %v7847
    %v7849 = vpop.f32.mrf.mxu0
    %7850 = vdwg.mxu0
    %7851 = vmatpush.bf16.msra.mxu0 %v7791
    %7852 = vmatpush.bf16.msra.mxu0 %v7787
    %7853 = vmatpush.bf16.msra.mxu0 %v7783
    %7854 = vmatpush.bf16.msra.mxu0 %v7779
    %7855 = vmatpush.bf16.msra.mxu0 %v7775
    %7856 = vmatpush.bf16.msra.mxu0 %v7771
    %7857 = vmatpush.bf16.msra.mxu0 %v7767
    %7858 = vmatpush.bf16.msra.mxu0 %v7763
    %7859 = vmatmul.bf16.gmra.mxu0 %v7632
    %v7860 = vpop.f32.mrf.mxu0
    %v7861 = vadd.f32 0.0, %v7860
    %v7862 = vpop.f32.mrf.mxu0
    %7863 = vdwg.mxu0
    %7864 = vmatpush.bf16.msra.mxu0 %v7792
    %7865 = vmatpush.bf16.msra.mxu0 %v7788
    %7866 = vmatpush.bf16.msra.mxu0 %v7784
    %7867 = vmatpush.bf16.msra.mxu0 %v7780
    %7868 = vmatpush.bf16.msra.mxu0 %v7776
    %7869 = vmatpush.bf16.msra.mxu0 %v7772
    %7870 = vmatpush.bf16.msra.mxu0 %v7768
    %7871 = vmatpush.bf16.msra.mxu0 %v7764
    %7872 = vmatmul.bf16.gmra.mxu0 %v7632
    %v7873 = vpop.f32.mrf.mxu0
    %v7874 = vadd.f32 0.0, %v7873
    %v7875 = vpop.f32.mrf.mxu0
    %7876 = vdwg.mxu0
    %v7877 = vadd.f32 %v7628, %v7835
    %v7878 = vadd.f32 %v7629, %v7848
    %v7879 = vadd.f32 %v7630, %v7861
    %v7880 = vadd.f32 %v7631, %v7874
    %v7881 = vxor.u32 %v7877, 2147483648
    %v7882 = vxor.u32 %v7878, 2147483648
    %v7883 = vxor.u32 %v7879, 2147483648
    %v7884 = vmul.f32 %v7881, 1.442695
    %v7885 = vpow.pop %v7884
    %v7886 = vmul.f32 %v7882, 1.442695
    %v7887 = vpow.pop %v7886
    %v7888 = vmul.f32 %v7883, 1.442695
    %v7889 = vpow.pop %v7888
    %v7890 = vadd.f32 %v7885, 1.0
    %v7891 = vadd.f32 %v7887, 1.0
    %v7892 = vadd.f32 %v7889, 1.0
    %v7893 = vrcp.pop %v7890
    %v7894 = vmul.f32 %v7890, %v7893
    %v7895 = vsub.f32 1.0, %v7894
    %v7896 = vmul.f32 %v7893, %v7895
    %v7897 = vadd.f32 %v7893, %v7896
    %vm7898 = vweird.f32 %v7890
    %vm7899 = vweird.f32 %v7893
    %vm7900 = vmor %vm7898, %vm7899
    %v7901 = vsel %vm7900, %v7893, %v7897
    %v7902 = vand.u32 2147483647, %v7890
    %vm7903 = vcmp.eq.f32.partialorder %v7902, 8.507059e+37
    %v7904 = vand.u32 %v7890, 2147483648
    %v7905 = vor.u32 1.1754944e-38, %v7904
    %v7906 = vsel %vm7903, %v7905, %v7901
    %v7907 = vmul.f32 1.0, %v7906
    %v7908 = vrcp.pop %v7891
    %v7909 = vmul.f32 %v7891, %v7908
    %v7910 = vsub.f32 1.0, %v7909
    %v7911 = vmul.f32 %v7908, %v7910
    %v7912 = vadd.f32 %v7908, %v7911
    %vm7913 = vweird.f32 %v7891
    %vm7914 = vweird.f32 %v7908
    %vm7915 = vmor %vm7913, %vm7914
    %v7916 = vsel %vm7915, %v7908, %v7912
    %v7917 = vand.u32 2147483647, %v7891
    %vm7918 = vcmp.eq.f32.partialorder %v7917, 8.507059e+37
    %v7919 = vand.u32 %v7891, 2147483648
    %v7920 = vor.u32 1.1754944e-38, %v7919
    %v7921 = vsel %vm7918, %v7920, %v7916
    %v7922 = vmul.f32 1.0, %v7921
    %v7923 = vrcp.pop %v7892
    %v7924 = vmul.f32 %v7892, %v7923
    %v7925 = vsub.f32 1.0, %v7924
    %v7926 = vmul.f32 %v7923, %v7925
    %v7927 = vadd.f32 %v7923, %v7926
    %vm7928 = vweird.f32 %v7892
    %vm7929 = vweird.f32 %v7923
    %vm7930 = vmor %vm7928, %vm7929
    %v7931 = vsel %vm7930, %v7923, %v7927
    %v7932 = vand.u32 2147483647, %v7892
    %vm7933 = vcmp.eq.f32.partialorder %v7932, 8.507059e+37
    %v7934 = vand.u32 %v7892, 2147483648
    %v7935 = vor.u32 1.1754944e-38, %v7934
    %v7936 = vsel %vm7933, %v7935, %v7931
    %v7937 = vmul.f32 1.0, %v7936
    %v7938 = vtanh.pop %v7880
    %v7939 = vmul.f32 %v7922, %v7624
    %v7940 = vmul.f32 %v7907, %v7938
    %v7941 = vadd.f32 %v7939, %v7940
    %v7942 = vtanh.pop %v7941
    %v7943 = vmul.f32 %v7937, %v7942
    %7944 = vst [vmem:[#allocation2 + $0x20] sm:$0xff] %v7943
    %v7945 = vld [vmem:[#allocation3 + $0xa0] sm:$0xff]
    %v7946 = vld [vmem:[#allocation3 + $0xa8] sm:$0xff]
    %v7947 = vld [vmem:[#allocation3 + $0xb0] sm:$0xff]
    %v7948 = vld [vmem:[#allocation3 + $0xb8] sm:$0xff]
    %v7949 = vpack.c.bf16 %v7943, %v7943
    %v7950 = vld [vmem:[#allocation12] sm:$0xff]
    %v7951 = vld [vmem:[#allocation12 + $0x8] sm:$0xff]
    %v7952 = vld [vmem:[#allocation12 + $0x10] sm:$0xff]
    %v7953 = vld [vmem:[#allocation12 + $0x18] sm:$0xff]
    %v7954 = vld [vmem:[#allocation12 + $0x20] sm:$0xff]
    %v7955 = vld [vmem:[#allocation12 + $0x28] sm:$0xff]
    %v7956 = vld [vmem:[#allocation12 + $0x30] sm:$0xff]
    %v7957 = vld [vmem:[#allocation12 + $0x38] sm:$0xff]
    %v7958 = vld [vmem:[#allocation12 + $0x40] sm:$0xff]
    %v7959 = vld [vmem:[#allocation12 + $0x48] sm:$0xff]
    %v7960 = vld [vmem:[#allocation12 + $0x50] sm:$0xff]
    %v7961 = vld [vmem:[#allocation12 + $0x58] sm:$0xff]
    %v7962 = vld [vmem:[#allocation12 + $0x60] sm:$0xff]
    %v7963 = vld [vmem:[#allocation12 + $0x68] sm:$0xff]
    %v7964 = vld [vmem:[#allocation12 + $0x70] sm:$0xff]
    %v7965 = vld [vmem:[#allocation12 + $0x78] sm:$0xff]
    %v7966 = vld [vmem:[#allocation12 + $0x80] sm:$0xff]
    %v7967 = vld [vmem:[#allocation12 + $0x88] sm:$0xff]
    %v7968 = vld [vmem:[#allocation12 + $0x90] sm:$0xff]
    %v7969 = vld [vmem:[#allocation12 + $0x98] sm:$0xff]
    %v7970 = vld [vmem:[#allocation12 + $0xa0] sm:$0xff]
    %v7971 = vld [vmem:[#allocation12 + $0xa8] sm:$0xff]
    %v7972 = vld [vmem:[#allocation12 + $0xb0] sm:$0xff]
    %v7973 = vld [vmem:[#allocation12 + $0xb8] sm:$0xff]
    %v7974 = vld [vmem:[#allocation12 + $0xc0] sm:$0xff]
    %v7975 = vld [vmem:[#allocation12 + $0xc8] sm:$0xff]
    %v7976 = vld [vmem:[#allocation12 + $0xd0] sm:$0xff]
    %v7977 = vld [vmem:[#allocation12 + $0xd8] sm:$0xff]
    %v7978 = vld [vmem:[#allocation12 + $0xe0] sm:$0xff]
    %v7979 = vld [vmem:[#allocation12 + $0xe8] sm:$0xff]
    %v7980 = vld [vmem:[#allocation12 + $0xf0] sm:$0xff]
    %v7981 = vld [vmem:[#allocation12 + $0xf8] sm:$0xff]
    %v8014 = vunpack.c.l.b16 %v7950
    %v8015 = vunpack.c.h.b16 %v7950
    %v8016 = vunpack.c.l.b16 %v7951
    %v8017 = vunpack.c.h.b16 %v7951
    %v8018 = vunpack.c.l.b16 %v7952
    %v8019 = vunpack.c.h.b16 %v7952
    %v8020 = vunpack.c.l.b16 %v7953
    %v8021 = vunpack.c.h.b16 %v7953
    %v8022 = vunpack.c.l.b16 %v7954
    %v8023 = vunpack.c.h.b16 %v7954
    %v8024 = vunpack.c.l.b16 %v7955
    %v8025 = vunpack.c.h.b16 %v7955
    %v8026 = vunpack.c.l.b16 %v7956
    %v8027 = vunpack.c.h.b16 %v7956
    %v8028 = vunpack.c.l.b16 %v7957
    %v8029 = vunpack.c.h.b16 %v7957
    %v8030 = vunpack.c.l.b16 %v7958
    %v8031 = vunpack.c.h.b16 %v7958
    %v8032 = vunpack.c.l.b16 %v7959
    %v8033 = vunpack.c.h.b16 %v7959
    %v8034 = vunpack.c.l.b16 %v7960
    %v8035 = vunpack.c.h.b16 %v7960
    %v8036 = vunpack.c.l.b16 %v7961
    %v8037 = vunpack.c.h.b16 %v7961
    %v8038 = vunpack.c.l.b16 %v7962
    %v8039 = vunpack.c.h.b16 %v7962
    %v8040 = vunpack.c.l.b16 %v7963
    %v8041 = vunpack.c.h.b16 %v7963
    %v8042 = vunpack.c.l.b16 %v7964
    %v8043 = vunpack.c.h.b16 %v7964
    %v8044 = vunpack.c.l.b16 %v7965
    %v8045 = vunpack.c.h.b16 %v7965
    %v8046 = vunpack.c.l.b16 %v7966
    %v8047 = vunpack.c.h.b16 %v7966
    %v8048 = vunpack.c.l.b16 %v7967
    %v8049 = vunpack.c.h.b16 %v7967
    %v8050 = vunpack.c.l.b16 %v7968
    %v8051 = vunpack.c.h.b16 %v7968
    %v8052 = vunpack.c.l.b16 %v7969
    %v8053 = vunpack.c.h.b16 %v7969
    %v8054 = vunpack.c.l.b16 %v7970
    %v8055 = vunpack.c.h.b16 %v7970
    %v8056 = vunpack.c.l.b16 %v7971
    %v8057 = vunpack.c.h.b16 %v7971
    %v8058 = vunpack.c.l.b16 %v7972
    %v8059 = vunpack.c.h.b16 %v7972
    %v8060 = vunpack.c.l.b16 %v7973
    %v8061 = vunpack.c.h.b16 %v7973
    %v8062 = vunpack.c.l.b16 %v7974
    %v8063 = vunpack.c.h.b16 %v7974
    %v8064 = vunpack.c.l.b16 %v7975
    %v8065 = vunpack.c.h.b16 %v7975
    %v8066 = vunpack.c.l.b16 %v7976
    %v8067 = vunpack.c.h.b16 %v7976
    %v8068 = vunpack.c.l.b16 %v7977
    %v8069 = vunpack.c.h.b16 %v7977
    %v8070 = vunpack.c.l.b16 %v7978
    %v8071 = vunpack.c.h.b16 %v7978
    %v8072 = vunpack.c.l.b16 %v7979
    %v8073 = vunpack.c.h.b16 %v7979
    %v8074 = vunpack.c.l.b16 %v7980
    %v8075 = vunpack.c.h.b16 %v7980
    %v8076 = vunpack.c.l.b16 %v7981
    %v8077 = vunpack.c.h.b16 %v7981
    %v8078 = vpack.c.b16 %v8018, %v8014
    %v8079 = vpack.c.b16 %v8019, %v8015
    %v8080 = vpack.c.b16 %v8020, %v8016
    %v8081 = vpack.c.b16 %v8021, %v8017
    %v8082 = vpack.c.b16 %v8026, %v8022
    %v8083 = vpack.c.b16 %v8027, %v8023
    %v8084 = vpack.c.b16 %v8028, %v8024
    %v8085 = vpack.c.b16 %v8029, %v8025
    %v8086 = vpack.c.b16 %v8034, %v8030
    %v8087 = vpack.c.b16 %v8035, %v8031
    %v8088 = vpack.c.b16 %v8036, %v8032
    %v8089 = vpack.c.b16 %v8037, %v8033
    %v8090 = vpack.c.b16 %v8042, %v8038
    %v8091 = vpack.c.b16 %v8043, %v8039
    %v8092 = vpack.c.b16 %v8044, %v8040
    %v8093 = vpack.c.b16 %v8045, %v8041
    %v8094 = vpack.c.b16 %v8050, %v8046
    %v8095 = vpack.c.b16 %v8051, %v8047
    %v8096 = vpack.c.b16 %v8052, %v8048
    %v8097 = vpack.c.b16 %v8053, %v8049
    %v8098 = vpack.c.b16 %v8058, %v8054
    %v8099 = vpack.c.b16 %v8059, %v8055
    %v8100 = vpack.c.b16 %v8060, %v8056
    %v8101 = vpack.c.b16 %v8061, %v8057
    %v8102 = vpack.c.b16 %v8066, %v8062
    %v8103 = vpack.c.b16 %v8067, %v8063
    %v8104 = vpack.c.b16 %v8068, %v8064
    %v8105 = vpack.c.b16 %v8069, %v8065
    %v8106 = vpack.c.b16 %v8074, %v8070
    %v8107 = vpack.c.b16 %v8075, %v8071
    %v8108 = vpack.c.b16 %v8076, %v8072
    %v8109 = vpack.c.b16 %v8077, %v8073
    %8142 = vmatpush.bf16.msra.mxu0 %v8106
    %8143 = vmatpush.bf16.msra.mxu0 %v8102
    %8144 = vmatpush.bf16.msra.mxu0 %v8098
    %8145 = vmatpush.bf16.msra.mxu0 %v8094
    %8146 = vmatpush.bf16.msra.mxu0 %v8090
    %8147 = vmatpush.bf16.msra.mxu0 %v8086
    %8148 = vmatpush.bf16.msra.mxu0 %v8082
    %8149 = vmatpush.bf16.msra.mxu0 %v8078
    %8150 = vmatmul.bf16.gmra.mxu0 %v7949
    %v8151 = vpop.f32.mrf.mxu0
    %v8152 = vadd.f32 0.0, %v8151
    %v8153 = vpop.f32.mrf.mxu0
    %8154 = vdwg.mxu0
    %8155 = vmatpush.bf16.msra.mxu0 %v8107
    %8156 = vmatpush.bf16.msra.mxu0 %v8103
    %8157 = vmatpush.bf16.msra.mxu0 %v8099
    %8158 = vmatpush.bf16.msra.mxu0 %v8095
    %8159 = vmatpush.bf16.msra.mxu0 %v8091
    %8160 = vmatpush.bf16.msra.mxu0 %v8087
    %8161 = vmatpush.bf16.msra.mxu0 %v8083
    %8162 = vmatpush.bf16.msra.mxu0 %v8079
    %8163 = vmatmul.bf16.gmra.mxu0 %v7949
    %v8164 = vpop.f32.mrf.mxu0
    %v8165 = vadd.f32 0.0, %v8164
    %v8166 = vpop.f32.mrf.mxu0
    %8167 = vdwg.mxu0
    %8168 = vmatpush.bf16.msra.mxu0 %v8108
    %8169 = vmatpush.bf16.msra.mxu0 %v8104
    %8170 = vmatpush.bf16.msra.mxu0 %v8100
    %8171 = vmatpush.bf16.msra.mxu0 %v8096
    %8172 = vmatpush.bf16.msra.mxu0 %v8092
    %8173 = vmatpush.bf16.msra.mxu0 %v8088
    %8174 = vmatpush.bf16.msra.mxu0 %v8084
    %8175 = vmatpush.bf16.msra.mxu0 %v8080
    %8176 = vmatmul.bf16.gmra.mxu0 %v7949
    %v8177 = vpop.f32.mrf.mxu0
    %v8178 = vadd.f32 0.0, %v8177
    %v8179 = vpop.f32.mrf.mxu0
    %8180 = vdwg.mxu0
    %8181 = vmatpush.bf16.msra.mxu0 %v8109
    %8182 = vmatpush.bf16.msra.mxu0 %v8105
    %8183 = vmatpush.bf16.msra.mxu0 %v8101
    %8184 = vmatpush.bf16.msra.mxu0 %v8097
    %8185 = vmatpush.bf16.msra.mxu0 %v8093
    %8186 = vmatpush.bf16.msra.mxu0 %v8089
    %8187 = vmatpush.bf16.msra.mxu0 %v8085
    %8188 = vmatpush.bf16.msra.mxu0 %v8081
    %8189 = vmatmul.bf16.gmra.mxu0 %v7949
    %v8190 = vpop.f32.mrf.mxu0
    %v8191 = vadd.f32 0.0, %v8190
    %v8192 = vpop.f32.mrf.mxu0
    %8193 = vdwg.mxu0
    %v8194 = vadd.f32 %v7945, %v8152
    %v8195 = vadd.f32 %v7946, %v8165
    %v8196 = vadd.f32 %v7947, %v8178
    %v8197 = vadd.f32 %v7948, %v8191
    %v8198 = vxor.u32 %v8194, 2147483648
    %v8199 = vxor.u32 %v8195, 2147483648
    %v8200 = vxor.u32 %v8196, 2147483648
    %v8201 = vmul.f32 %v8198, 1.442695
    %v8202 = vpow.pop %v8201
    %v8203 = vmul.f32 %v8199, 1.442695
    %v8204 = vpow.pop %v8203
    %v8205 = vmul.f32 %v8200, 1.442695
    %v8206 = vpow.pop %v8205
    %v8207 = vadd.f32 %v8202, 1.0
    %v8208 = vadd.f32 %v8204, 1.0
    %v8209 = vadd.f32 %v8206, 1.0
    %v8210 = vrcp.pop %v8207
    %v8211 = vmul.f32 %v8207, %v8210
    %v8212 = vsub.f32 1.0, %v8211
    %v8213 = vmul.f32 %v8210, %v8212
    %v8214 = vadd.f32 %v8210, %v8213
    %vm8215 = vweird.f32 %v8207
    %vm8216 = vweird.f32 %v8210
    %vm8217 = vmor %vm8215, %vm8216
    %v8218 = vsel %vm8217, %v8210, %v8214
    %v8219 = vand.u32 2147483647, %v8207
    %vm8220 = vcmp.eq.f32.partialorder %v8219, 8.507059e+37
    %v8221 = vand.u32 %v8207, 2147483648
    %v8222 = vor.u32 1.1754944e-38, %v8221
    %v8223 = vsel %vm8220, %v8222, %v8218
    %v8224 = vmul.f32 1.0, %v8223
    %v8225 = vrcp.pop %v8208
    %v8226 = vmul.f32 %v8208, %v8225
    %v8227 = vsub.f32 1.0, %v8226
    %v8228 = vmul.f32 %v8225, %v8227
    %v8229 = vadd.f32 %v8225, %v8228
    %vm8230 = vweird.f32 %v8208
    %vm8231 = vweird.f32 %v8225
    %vm8232 = vmor %vm8230, %vm8231
    %v8233 = vsel %vm8232, %v8225, %v8229
    %v8234 = vand.u32 2147483647, %v8208
    %vm8235 = vcmp.eq.f32.partialorder %v8234, 8.507059e+37
    %v8236 = vand.u32 %v8208, 2147483648
    %v8237 = vor.u32 1.1754944e-38, %v8236
    %v8238 = vsel %vm8235, %v8237, %v8233
    %v8239 = vmul.f32 1.0, %v8238
    %v8240 = vrcp.pop %v8209
    %v8241 = vmul.f32 %v8209, %v8240
    %v8242 = vsub.f32 1.0, %v8241
    %v8243 = vmul.f32 %v8240, %v8242
    %v8244 = vadd.f32 %v8240, %v8243
    %vm8245 = vweird.f32 %v8209
    %vm8246 = vweird.f32 %v8240
    %vm8247 = vmor %vm8245, %vm8246
    %v8248 = vsel %vm8247, %v8240, %v8244
    %v8249 = vand.u32 2147483647, %v8209
    %vm8250 = vcmp.eq.f32.partialorder %v8249, 8.507059e+37
    %v8251 = vand.u32 %v8209, 2147483648
    %v8252 = vor.u32 1.1754944e-38, %v8251
    %v8253 = vsel %vm8250, %v8252, %v8248
    %v8254 = vmul.f32 1.0, %v8253
    %v8255 = vtanh.pop %v8197
    %v8256 = vmul.f32 %v8239, %v7941
    %v8257 = vmul.f32 %v8224, %v8255
    %v8258 = vadd.f32 %v8256, %v8257
    %v8259 = vtanh.pop %v8258
    %v8260 = vmul.f32 %v8254, %v8259
    %8261 = vst [vmem:[#allocation2 + $0x28] sm:$0xff] %v8260
    %v8262 = vld [vmem:[#allocation3 + $0xc0] sm:$0xff]
    %v8263 = vld [vmem:[#allocation3 + $0xc8] sm:$0xff]
    %v8264 = vld [vmem:[#allocation3 + $0xd0] sm:$0xff]
    %v8265 = vld [vmem:[#allocation3 + $0xd8] sm:$0xff]
    %v8266 = vpack.c.bf16 %v8260, %v8260
    %v8267 = vld [vmem:[#allocation12] sm:$0xff]
    %v8268 = vld [vmem:[#allocation12 + $0x8] sm:$0xff]
    %v8269 = vld [vmem:[#allocation12 + $0x10] sm:$0xff]
    %v8270 = vld [vmem:[#allocation12 + $0x18] sm:$0xff]
    %v8271 = vld [vmem:[#allocation12 + $0x20] sm:$0xff]
    %v8272 = vld [vmem:[#allocation12 + $0x28] sm:$0xff]
    %v8273 = vld [vmem:[#allocation12 + $0x30] sm:$0xff]
    %v8274 = vld [vmem:[#allocation12 + $0x38] sm:$0xff]
    %v8275 = vld [vmem:[#allocation12 + $0x40] sm:$0xff]
    %v8276 = vld [vmem:[#allocation12 + $0x48] sm:$0xff]
    %v8277 = vld [vmem:[#allocation12 + $0x50] sm:$0xff]
    %v8278 = vld [vmem:[#allocation12 + $0x58] sm:$0xff]
    %v8279 = vld [vmem:[#allocation12 + $0x60] sm:$0xff]
    %v8280 = vld [vmem:[#allocation12 + $0x68] sm:$0xff]
    %v8281 = vld [vmem:[#allocation12 + $0x70] sm:$0xff]
    %v8282 = vld [vmem:[#allocation12 + $0x78] sm:$0xff]
    %v8283 = vld [vmem:[#allocation12 + $0x80] sm:$0xff]
    %v8284 = vld [vmem:[#allocation12 + $0x88] sm:$0xff]
    %v8285 = vld [vmem:[#allocation12 + $0x90] sm:$0xff]
    %v8286 = vld [vmem:[#allocation12 + $0x98] sm:$0xff]
    %v8287 = vld [vmem:[#allocation12 + $0xa0] sm:$0xff]
    %v8288 = vld [vmem:[#allocation12 + $0xa8] sm:$0xff]
    %v8289 = vld [vmem:[#allocation12 + $0xb0] sm:$0xff]
    %v8290 = vld [vmem:[#allocation12 + $0xb8] sm:$0xff]
    %v8291 = vld [vmem:[#allocation12 + $0xc0] sm:$0xff]
    %v8292 = vld [vmem:[#allocation12 + $0xc8] sm:$0xff]
    %v8293 = vld [vmem:[#allocation12 + $0xd0] sm:$0xff]
    %v8294 = vld [vmem:[#allocation12 + $0xd8] sm:$0xff]
    %v8295 = vld [vmem:[#allocation12 + $0xe0] sm:$0xff]
    %v8296 = vld [vmem:[#allocation12 + $0xe8] sm:$0xff]
    %v8297 = vld [vmem:[#allocation12 + $0xf0] sm:$0xff]
    %v8298 = vld [vmem:[#allocation12 + $0xf8] sm:$0xff]
    %v8331 = vunpack.c.l.b16 %v8267
    %v8332 = vunpack.c.h.b16 %v8267
    %v8333 = vunpack.c.l.b16 %v8268
    %v8334 = vunpack.c.h.b16 %v8268
    %v8335 = vunpack.c.l.b16 %v8269
    %v8336 = vunpack.c.h.b16 %v8269
    %v8337 = vunpack.c.l.b16 %v8270
    %v8338 = vunpack.c.h.b16 %v8270
    %v8339 = vunpack.c.l.b16 %v8271
    %v8340 = vunpack.c.h.b16 %v8271
    %v8341 = vunpack.c.l.b16 %v8272
    %v8342 = vunpack.c.h.b16 %v8272
    %v8343 = vunpack.c.l.b16 %v8273
    %v8344 = vunpack.c.h.b16 %v8273
    %v8345 = vunpack.c.l.b16 %v8274
    %v8346 = vunpack.c.h.b16 %v8274
    %v8347 = vunpack.c.l.b16 %v8275
    %v8348 = vunpack.c.h.b16 %v8275
    %v8349 = vunpack.c.l.b16 %v8276
    %v8350 = vunpack.c.h.b16 %v8276
    %v8351 = vunpack.c.l.b16 %v8277
    %v8352 = vunpack.c.h.b16 %v8277
    %v8353 = vunpack.c.l.b16 %v8278
    %v8354 = vunpack.c.h.b16 %v8278
    %v8355 = vunpack.c.l.b16 %v8279
    %v8356 = vunpack.c.h.b16 %v8279
    %v8357 = vunpack.c.l.b16 %v8280
    %v8358 = vunpack.c.h.b16 %v8280
    %v8359 = vunpack.c.l.b16 %v8281
    %v8360 = vunpack.c.h.b16 %v8281
    %v8361 = vunpack.c.l.b16 %v8282
    %v8362 = vunpack.c.h.b16 %v8282
    %v8363 = vunpack.c.l.b16 %v8283
    %v8364 = vunpack.c.h.b16 %v8283
    %v8365 = vunpack.c.l.b16 %v8284
    %v8366 = vunpack.c.h.b16 %v8284
    %v8367 = vunpack.c.l.b16 %v8285
    %v8368 = vunpack.c.h.b16 %v8285
    %v8369 = vunpack.c.l.b16 %v8286
    %v8370 = vunpack.c.h.b16 %v8286
    %v8371 = vunpack.c.l.b16 %v8287
    %v8372 = vunpack.c.h.b16 %v8287
    %v8373 = vunpack.c.l.b16 %v8288
    %v8374 = vunpack.c.h.b16 %v8288
    %v8375 = vunpack.c.l.b16 %v8289
    %v8376 = vunpack.c.h.b16 %v8289
    %v8377 = vunpack.c.l.b16 %v8290
    %v8378 = vunpack.c.h.b16 %v8290
    %v8379 = vunpack.c.l.b16 %v8291
    %v8380 = vunpack.c.h.b16 %v8291
    %v8381 = vunpack.c.l.b16 %v8292
    %v8382 = vunpack.c.h.b16 %v8292
    %v8383 = vunpack.c.l.b16 %v8293
    %v8384 = vunpack.c.h.b16 %v8293
    %v8385 = vunpack.c.l.b16 %v8294
    %v8386 = vunpack.c.h.b16 %v8294
    %v8387 = vunpack.c.l.b16 %v8295
    %v8388 = vunpack.c.h.b16 %v8295
    %v8389 = vunpack.c.l.b16 %v8296
    %v8390 = vunpack.c.h.b16 %v8296
    %v8391 = vunpack.c.l.b16 %v8297
    %v8392 = vunpack.c.h.b16 %v8297
    %v8393 = vunpack.c.l.b16 %v8298
    %v8394 = vunpack.c.h.b16 %v8298
    %v8395 = vpack.c.b16 %v8335, %v8331
    %v8396 = vpack.c.b16 %v8336, %v8332
    %v8397 = vpack.c.b16 %v8337, %v8333
    %v8398 = vpack.c.b16 %v8338, %v8334
    %v8399 = vpack.c.b16 %v8343, %v8339
    %v8400 = vpack.c.b16 %v8344, %v8340
    %v8401 = vpack.c.b16 %v8345, %v8341
    %v8402 = vpack.c.b16 %v8346, %v8342
    %v8403 = vpack.c.b16 %v8351, %v8347
    %v8404 = vpack.c.b16 %v8352, %v8348
    %v8405 = vpack.c.b16 %v8353, %v8349
    %v8406 = vpack.c.b16 %v8354, %v8350
    %v8407 = vpack.c.b16 %v8359, %v8355
    %v8408 = vpack.c.b16 %v8360, %v8356
    %v8409 = vpack.c.b16 %v8361, %v8357
    %v8410 = vpack.c.b16 %v8362, %v8358
    %v8411 = vpack.c.b16 %v8367, %v8363
    %v8412 = vpack.c.b16 %v8368, %v8364
    %v8413 = vpack.c.b16 %v8369, %v8365
    %v8414 = vpack.c.b16 %v8370, %v8366
    %v8415 = vpack.c.b16 %v8375, %v8371
    %v8416 = vpack.c.b16 %v8376, %v8372
    %v8417 = vpack.c.b16 %v8377, %v8373
    %v8418 = vpack.c.b16 %v8378, %v8374
    %v8419 = vpack.c.b16 %v8383, %v8379
    %v8420 = vpack.c.b16 %v8384, %v8380
    %v8421 = vpack.c.b16 %v8385, %v8381
    %v8422 = vpack.c.b16 %v8386, %v8382
    %v8423 = vpack.c.b16 %v8391, %v8387
    %v8424 = vpack.c.b16 %v8392, %v8388
    %v8425 = vpack.c.b16 %v8393, %v8389
    %v8426 = vpack.c.b16 %v8394, %v8390
    %8459 = vmatpush.bf16.msra.mxu0 %v8423
    %8460 = vmatpush.bf16.msra.mxu0 %v8419
    %8461 = vmatpush.bf16.msra.mxu0 %v8415
    %8462 = vmatpush.bf16.msra.mxu0 %v8411
    %8463 = vmatpush.bf16.msra.mxu0 %v8407
    %8464 = vmatpush.bf16.msra.mxu0 %v8403
    %8465 = vmatpush.bf16.msra.mxu0 %v8399
    %8466 = vmatpush.bf16.msra.mxu0 %v8395
    %8467 = vmatmul.bf16.gmra.mxu0 %v8266
    %v8468 = vpop.f32.mrf.mxu0
    %v8469 = vadd.f32 0.0, %v8468
    %v8470 = vpop.f32.mrf.mxu0
    %8471 = vdwg.mxu0
    %8472 = vmatpush.bf16.msra.mxu0 %v8424
    %8473 = vmatpush.bf16.msra.mxu0 %v8420
    %8474 = vmatpush.bf16.msra.mxu0 %v8416
    %8475 = vmatpush.bf16.msra.mxu0 %v8412
    %8476 = vmatpush.bf16.msra.mxu0 %v8408
    %8477 = vmatpush.bf16.msra.mxu0 %v8404
    %8478 = vmatpush.bf16.msra.mxu0 %v8400
    %8479 = vmatpush.bf16.msra.mxu0 %v8396
    %8480 = vmatmul.bf16.gmra.mxu0 %v8266
    %v8481 = vpop.f32.mrf.mxu0
    %v8482 = vadd.f32 0.0, %v8481
    %v8483 = vpop.f32.mrf.mxu0
    %8484 = vdwg.mxu0
    %8485 = vmatpush.bf16.msra.mxu0 %v8425
    %8486 = vmatpush.bf16.msra.mxu0 %v8421
    %8487 = vmatpush.bf16.msra.mxu0 %v8417
    %8488 = vmatpush.bf16.msra.mxu0 %v8413
    %8489 = vmatpush.bf16.msra.mxu0 %v8409
    %8490 = vmatpush.bf16.msra.mxu0 %v8405
    %8491 = vmatpush.bf16.msra.mxu0 %v8401
    %8492 = vmatpush.bf16.msra.mxu0 %v8397
    %8493 = vmatmul.bf16.gmra.mxu0 %v8266
    %v8494 = vpop.f32.mrf.mxu0
    %v8495 = vadd.f32 0.0, %v8494
    %v8496 = vpop.f32.mrf.mxu0
    %8497 = vdwg.mxu0
    %8498 = vmatpush.bf16.msra.mxu0 %v8426
    %8499 = vmatpush.bf16.msra.mxu0 %v8422
    %8500 = vmatpush.bf16.msra.mxu0 %v8418
    %8501 = vmatpush.bf16.msra.mxu0 %v8414
    %8502 = vmatpush.bf16.msra.mxu0 %v8410
    %8503 = vmatpush.bf16.msra.mxu0 %v8406
    %8504 = vmatpush.bf16.msra.mxu0 %v8402
    %8505 = vmatpush.bf16.msra.mxu0 %v8398
    %8506 = vmatmul.bf16.gmra.mxu0 %v8266
    %v8507 = vpop.f32.mrf.mxu0
    %v8508 = vadd.f32 0.0, %v8507
    %v8509 = vpop.f32.mrf.mxu0
    %8510 = vdwg.mxu0
    %v8511 = vadd.f32 %v8262, %v8469
    %v8512 = vadd.f32 %v8263, %v8482
    %v8513 = vadd.f32 %v8264, %v8495
    %v8514 = vadd.f32 %v8265, %v8508
    %v8515 = vxor.u32 %v8511, 2147483648
    %v8516 = vxor.u32 %v8512, 2147483648
    %v8517 = vxor.u32 %v8513, 2147483648
    %v8518 = vmul.f32 %v8515, 1.442695
    %v8519 = vpow.pop %v8518
    %v8520 = vmul.f32 %v8516, 1.442695
    %v8521 = vpow.pop %v8520
    %v8522 = vmul.f32 %v8517, 1.442695
    %v8523 = vpow.pop %v8522
    %v8524 = vadd.f32 %v8519, 1.0
    %v8525 = vadd.f32 %v8521, 1.0
    %v8526 = vadd.f32 %v8523, 1.0
    %v8527 = vrcp.pop %v8524
    %v8528 = vmul.f32 %v8524, %v8527
    %v8529 = vsub.f32 1.0, %v8528
    %v8530 = vmul.f32 %v8527, %v8529
    %v8531 = vadd.f32 %v8527, %v8530
    %vm8532 = vweird.f32 %v8524
    %vm8533 = vweird.f32 %v8527
    %vm8534 = vmor %vm8532, %vm8533
    %v8535 = vsel %vm8534, %v8527, %v8531
    %v8536 = vand.u32 2147483647, %v8524
    %vm8537 = vcmp.eq.f32.partialorder %v8536, 8.507059e+37
    %v8538 = vand.u32 %v8524, 2147483648
    %v8539 = vor.u32 1.1754944e-38, %v8538
    %v8540 = vsel %vm8537, %v8539, %v8535
    %v8541 = vmul.f32 1.0, %v8540
    %v8542 = vrcp.pop %v8525
    %v8543 = vmul.f32 %v8525, %v8542
    %v8544 = vsub.f32 1.0, %v8543
    %v8545 = vmul.f32 %v8542, %v8544
    %v8546 = vadd.f32 %v8542, %v8545
    %vm8547 = vweird.f32 %v8525
    %vm8548 = vweird.f32 %v8542
    %vm8549 = vmor %vm8547, %vm8548
    %v8550 = vsel %vm8549, %v8542, %v8546
    %v8551 = vand.u32 2147483647, %v8525
    %vm8552 = vcmp.eq.f32.partialorder %v8551, 8.507059e+37
    %v8553 = vand.u32 %v8525, 2147483648
    %v8554 = vor.u32 1.1754944e-38, %v8553
    %v8555 = vsel %vm8552, %v8554, %v8550
    %v8556 = vmul.f32 1.0, %v8555
    %v8557 = vrcp.pop %v8526
    %v8558 = vmul.f32 %v8526, %v8557
    %v8559 = vsub.f32 1.0, %v8558
    %v8560 = vmul.f32 %v8557, %v8559
    %v8561 = vadd.f32 %v8557, %v8560
    %vm8562 = vweird.f32 %v8526
    %vm8563 = vweird.f32 %v8557
    %vm8564 = vmor %vm8562, %vm8563
    %v8565 = vsel %vm8564, %v8557, %v8561
    %v8566 = vand.u32 2147483647, %v8526
    %vm8567 = vcmp.eq.f32.partialorder %v8566, 8.507059e+37
    %v8568 = vand.u32 %v8526, 2147483648
    %v8569 = vor.u32 1.1754944e-38, %v8568
    %v8570 = vsel %vm8567, %v8569, %v8565
    %v8571 = vmul.f32 1.0, %v8570
    %v8572 = vtanh.pop %v8514
    %v8573 = vmul.f32 %v8556, %v8258
    %v8574 = vmul.f32 %v8541, %v8572
    %v8575 = vadd.f32 %v8573, %v8574
    %v8576 = vtanh.pop %v8575
    %v8577 = vmul.f32 %v8571, %v8576
    %8578 = vst [vmem:[#allocation2 + $0x30] sm:$0xff] %v8577
    %v8579 = vld [vmem:[#allocation3 + $0xe0] sm:$0xff]
    %v8580 = vld [vmem:[#allocation3 + $0xe8] sm:$0xff]
    %v8581 = vld [vmem:[#allocation3 + $0xf0] sm:$0xff]
    %v8582 = vld [vmem:[#allocation3 + $0xf8] sm:$0xff]
    %v8583 = vpack.c.bf16 %v8577, %v8577
    %v8584 = vld [vmem:[#allocation12] sm:$0xff]
    %v8585 = vld [vmem:[#allocation12 + $0x8] sm:$0xff]
    %v8586 = vld [vmem:[#allocation12 + $0x10] sm:$0xff]
    %v8587 = vld [vmem:[#allocation12 + $0x18] sm:$0xff]
    %v8588 = vld [vmem:[#allocation12 + $0x20] sm:$0xff]
    %v8589 = vld [vmem:[#allocation12 + $0x28] sm:$0xff]
    %v8590 = vld [vmem:[#allocation12 + $0x30] sm:$0xff]
    %v8591 = vld [vmem:[#allocation12 + $0x38] sm:$0xff]
    %v8592 = vld [vmem:[#allocation12 + $0x40] sm:$0xff]
    %v8593 = vld [vmem:[#allocation12 + $0x48] sm:$0xff]
    %v8594 = vld [vmem:[#allocation12 + $0x50] sm:$0xff]
    %v8595 = vld [vmem:[#allocation12 + $0x58] sm:$0xff]
    %v8596 = vld [vmem:[#allocation12 + $0x60] sm:$0xff]
    %v8597 = vld [vmem:[#allocation12 + $0x68] sm:$0xff]
    %v8598 = vld [vmem:[#allocation12 + $0x70] sm:$0xff]
    %v8599 = vld [vmem:[#allocation12 + $0x78] sm:$0xff]
    %v8600 = vld [vmem:[#allocation12 + $0x80] sm:$0xff]
    %v8601 = vld [vmem:[#allocation12 + $0x88] sm:$0xff]
    %v8602 = vld [vmem:[#allocation12 + $0x90] sm:$0xff]
    %v8603 = vld [vmem:[#allocation12 + $0x98] sm:$0xff]
    %v8604 = vld [vmem:[#allocation12 + $0xa0] sm:$0xff]
    %v8605 = vld [vmem:[#allocation12 + $0xa8] sm:$0xff]
    %v8606 = vld [vmem:[#allocation12 + $0xb0] sm:$0xff]
    %v8607 = vld [vmem:[#allocation12 + $0xb8] sm:$0xff]
    %v8608 = vld [vmem:[#allocation12 + $0xc0] sm:$0xff]
    %v8609 = vld [vmem:[#allocation12 + $0xc8] sm:$0xff]
    %v8610 = vld [vmem:[#allocation12 + $0xd0] sm:$0xff]
    %v8611 = vld [vmem:[#allocation12 + $0xd8] sm:$0xff]
    %v8612 = vld [vmem:[#allocation12 + $0xe0] sm:$0xff]
    %v8613 = vld [vmem:[#allocation12 + $0xe8] sm:$0xff]
    %v8614 = vld [vmem:[#allocation12 + $0xf0] sm:$0xff]
    %v8615 = vld [vmem:[#allocation12 + $0xf8] sm:$0xff]
    %v8648 = vunpack.c.l.b16 %v8584
    %v8649 = vunpack.c.h.b16 %v8584
    %v8650 = vunpack.c.l.b16 %v8585
    %v8651 = vunpack.c.h.b16 %v8585
    %v8652 = vunpack.c.l.b16 %v8586
    %v8653 = vunpack.c.h.b16 %v8586
    %v8654 = vunpack.c.l.b16 %v8587
    %v8655 = vunpack.c.h.b16 %v8587
    %v8656 = vunpack.c.l.b16 %v8588
    %v8657 = vunpack.c.h.b16 %v8588
    %v8658 = vunpack.c.l.b16 %v8589
    %v8659 = vunpack.c.h.b16 %v8589
    %v8660 = vunpack.c.l.b16 %v8590
    %v8661 = vunpack.c.h.b16 %v8590
    %v8662 = vunpack.c.l.b16 %v8591
    %v8663 = vunpack.c.h.b16 %v8591
    %v8664 = vunpack.c.l.b16 %v8592
    %v8665 = vunpack.c.h.b16 %v8592
    %v8666 = vunpack.c.l.b16 %v8593
    %v8667 = vunpack.c.h.b16 %v8593
    %v8668 = vunpack.c.l.b16 %v8594
    %v8669 = vunpack.c.h.b16 %v8594
    %v8670 = vunpack.c.l.b16 %v8595
    %v8671 = vunpack.c.h.b16 %v8595
    %v8672 = vunpack.c.l.b16 %v8596
    %v8673 = vunpack.c.h.b16 %v8596
    %v8674 = vunpack.c.l.b16 %v8597
    %v8675 = vunpack.c.h.b16 %v8597
    %v8676 = vunpack.c.l.b16 %v8598
    %v8677 = vunpack.c.h.b16 %v8598
    %v8678 = vunpack.c.l.b16 %v8599
    %v8679 = vunpack.c.h.b16 %v8599
    %v8680 = vunpack.c.l.b16 %v8600
    %v8681 = vunpack.c.h.b16 %v8600
    %v8682 = vunpack.c.l.b16 %v8601
    %v8683 = vunpack.c.h.b16 %v8601
    %v8684 = vunpack.c.l.b16 %v8602
    %v8685 = vunpack.c.h.b16 %v8602
    %v8686 = vunpack.c.l.b16 %v8603
    %v8687 = vunpack.c.h.b16 %v8603
    %v8688 = vunpack.c.l.b16 %v8604
    %v8689 = vunpack.c.h.b16 %v8604
    %v8690 = vunpack.c.l.b16 %v8605
    %v8691 = vunpack.c.h.b16 %v8605
    %v8692 = vunpack.c.l.b16 %v8606
    %v8693 = vunpack.c.h.b16 %v8606
    %v8694 = vunpack.c.l.b16 %v8607
    %v8695 = vunpack.c.h.b16 %v8607
    %v8696 = vunpack.c.l.b16 %v8608
    %v8697 = vunpack.c.h.b16 %v8608
    %v8698 = vunpack.c.l.b16 %v8609
    %v8699 = vunpack.c.h.b16 %v8609
    %v8700 = vunpack.c.l.b16 %v8610
    %v8701 = vunpack.c.h.b16 %v8610
    %v8702 = vunpack.c.l.b16 %v8611
    %v8703 = vunpack.c.h.b16 %v8611
    %v8704 = vunpack.c.l.b16 %v8612
    %v8705 = vunpack.c.h.b16 %v8612
    %v8706 = vunpack.c.l.b16 %v8613
    %v8707 = vunpack.c.h.b16 %v8613
    %v8708 = vunpack.c.l.b16 %v8614
    %v8709 = vunpack.c.h.b16 %v8614
    %v8710 = vunpack.c.l.b16 %v8615
    %v8711 = vunpack.c.h.b16 %v8615
    %v8712 = vpack.c.b16 %v8652, %v8648
    %v8713 = vpack.c.b16 %v8653, %v8649
    %v8714 = vpack.c.b16 %v8654, %v8650
    %v8715 = vpack.c.b16 %v8655, %v8651
    %v8716 = vpack.c.b16 %v8660, %v8656
    %v8717 = vpack.c.b16 %v8661, %v8657
    %v8718 = vpack.c.b16 %v8662, %v8658
    %v8719 = vpack.c.b16 %v8663, %v8659
    %v8720 = vpack.c.b16 %v8668, %v8664
    %v8721 = vpack.c.b16 %v8669, %v8665
    %v8722 = vpack.c.b16 %v8670, %v8666
    %v8723 = vpack.c.b16 %v8671, %v8667
    %v8724 = vpack.c.b16 %v8676, %v8672
    %v8725 = vpack.c.b16 %v8677, %v8673
    %v8726 = vpack.c.b16 %v8678, %v8674
    %v8727 = vpack.c.b16 %v8679, %v8675
    %v8728 = vpack.c.b16 %v8684, %v8680
    %v8729 = vpack.c.b16 %v8685, %v8681
    %v8730 = vpack.c.b16 %v8686, %v8682
    %v8731 = vpack.c.b16 %v8687, %v8683
    %v8732 = vpack.c.b16 %v8692, %v8688
    %v8733 = vpack.c.b16 %v8693, %v8689
    %v8734 = vpack.c.b16 %v8694, %v8690
    %v8735 = vpack.c.b16 %v8695, %v8691
    %v8736 = vpack.c.b16 %v8700, %v8696
    %v8737 = vpack.c.b16 %v8701, %v8697
    %v8738 = vpack.c.b16 %v8702, %v8698
    %v8739 = vpack.c.b16 %v8703, %v8699
    %v8740 = vpack.c.b16 %v8708, %v8704
    %v8741 = vpack.c.b16 %v8709, %v8705
    %v8742 = vpack.c.b16 %v8710, %v8706
    %v8743 = vpack.c.b16 %v8711, %v8707
    %8776 = vmatpush.bf16.msra.mxu0 %v8740
    %8777 = vmatpush.bf16.msra.mxu0 %v8736
    %8778 = vmatpush.bf16.msra.mxu0 %v8732
    %8779 = vmatpush.bf16.msra.mxu0 %v8728
    %8780 = vmatpush.bf16.msra.mxu0 %v8724
    %8781 = vmatpush.bf16.msra.mxu0 %v8720
    %8782 = vmatpush.bf16.msra.mxu0 %v8716
    %8783 = vmatpush.bf16.msra.mxu0 %v8712
    %8784 = vmatmul.bf16.gmra.mxu0 %v8583
    %v8785 = vpop.f32.mrf.mxu0
    %v8786 = vadd.f32 0.0, %v8785
    %v8787 = vpop.f32.mrf.mxu0
    %8788 = vdwg.mxu0
    %8789 = vmatpush.bf16.msra.mxu0 %v8741
    %8790 = vmatpush.bf16.msra.mxu0 %v8737
    %8791 = vmatpush.bf16.msra.mxu0 %v8733
    %8792 = vmatpush.bf16.msra.mxu0 %v8729
    %8793 = vmatpush.bf16.msra.mxu0 %v8725
    %8794 = vmatpush.bf16.msra.mxu0 %v8721
    %8795 = vmatpush.bf16.msra.mxu0 %v8717
    %8796 = vmatpush.bf16.msra.mxu0 %v8713
    %8797 = vmatmul.bf16.gmra.mxu0 %v8583
    %v8798 = vpop.f32.mrf.mxu0
    %v8799 = vadd.f32 0.0, %v8798
    %v8800 = vpop.f32.mrf.mxu0
    %8801 = vdwg.mxu0
    %8802 = vmatpush.bf16.msra.mxu0 %v8742
    %8803 = vmatpush.bf16.msra.mxu0 %v8738
    %8804 = vmatpush.bf16.msra.mxu0 %v8734
    %8805 = vmatpush.bf16.msra.mxu0 %v8730
    %8806 = vmatpush.bf16.msra.mxu0 %v8726
    %8807 = vmatpush.bf16.msra.mxu0 %v8722
    %8808 = vmatpush.bf16.msra.mxu0 %v8718
    %8809 = vmatpush.bf16.msra.mxu0 %v8714
    %8810 = vmatmul.bf16.gmra.mxu0 %v8583
    %v8811 = vpop.f32.mrf.mxu0
    %v8812 = vadd.f32 0.0, %v8811
    %v8813 = vpop.f32.mrf.mxu0
    %8814 = vdwg.mxu0
    %8815 = vmatpush.bf16.msra.mxu0 %v8743
    %8816 = vmatpush.bf16.msra.mxu0 %v8739
    %8817 = vmatpush.bf16.msra.mxu0 %v8735
    %8818 = vmatpush.bf16.msra.mxu0 %v8731
    %8819 = vmatpush.bf16.msra.mxu0 %v8727
    %8820 = vmatpush.bf16.msra.mxu0 %v8723
    %8821 = vmatpush.bf16.msra.mxu0 %v8719
    %8822 = vmatpush.bf16.msra.mxu0 %v8715
    %8823 = vmatmul.bf16.gmra.mxu0 %v8583
    %v8824 = vpop.f32.mrf.mxu0
    %v8825 = vadd.f32 0.0, %v8824
    %v8826 = vpop.f32.mrf.mxu0
    %8827 = vdwg.mxu0
    %v8828 = vadd.f32 %v8579, %v8786
    %v8829 = vadd.f32 %v8580, %v8799
    %v8830 = vadd.f32 %v8581, %v8812
    %v8831 = vadd.f32 %v8582, %v8825
    %v8832 = vxor.u32 %v8828, 2147483648
    %v8833 = vxor.u32 %v8829, 2147483648
    %v8834 = vxor.u32 %v8830, 2147483648
    %v8835 = vmul.f32 %v8832, 1.442695
    %v8836 = vpow.pop %v8835
    %v8837 = vmul.f32 %v8833, 1.442695
    %v8838 = vpow.pop %v8837
    %v8839 = vmul.f32 %v8834, 1.442695
    %v8840 = vpow.pop %v8839
    %v8841 = vadd.f32 %v8836, 1.0
    %v8842 = vadd.f32 %v8838, 1.0
    %v8843 = vadd.f32 %v8840, 1.0
    %v8844 = vrcp.pop %v8841
    %v8845 = vmul.f32 %v8841, %v8844
    %v8846 = vsub.f32 1.0, %v8845
    %v8847 = vmul.f32 %v8844, %v8846
    %v8848 = vadd.f32 %v8844, %v8847
    %vm8849 = vweird.f32 %v8841
    %vm8850 = vweird.f32 %v8844
    %vm8851 = vmor %vm8849, %vm8850
    %v8852 = vsel %vm8851, %v8844, %v8848
    %v8853 = vand.u32 2147483647, %v8841
    %vm8854 = vcmp.eq.f32.partialorder %v8853, 8.507059e+37
    %v8855 = vand.u32 %v8841, 2147483648
    %v8856 = vor.u32 1.1754944e-38, %v8855
    %v8857 = vsel %vm8854, %v8856, %v8852
    %v8858 = vmul.f32 1.0, %v8857
    %v8859 = vrcp.pop %v8842
    %v8860 = vmul.f32 %v8842, %v8859
    %v8861 = vsub.f32 1.0, %v8860
    %v8862 = vmul.f32 %v8859, %v8861
    %v8863 = vadd.f32 %v8859, %v8862
    %vm8864 = vweird.f32 %v8842
    %vm8865 = vweird.f32 %v8859
    %vm8866 = vmor %vm8864, %vm8865
    %v8867 = vsel %vm8866, %v8859, %v8863
    %v8868 = vand.u32 2147483647, %v8842
    %vm8869 = vcmp.eq.f32.partialorder %v8868, 8.507059e+37
    %v8870 = vand.u32 %v8842, 2147483648
    %v8871 = vor.u32 1.1754944e-38, %v8870
    %v8872 = vsel %vm8869, %v8871, %v8867
    %v8873 = vmul.f32 1.0, %v8872
    %v8874 = vrcp.pop %v8843
    %v8875 = vmul.f32 %v8843, %v8874
    %v8876 = vsub.f32 1.0, %v8875
    %v8877 = vmul.f32 %v8874, %v8876
    %v8878 = vadd.f32 %v8874, %v8877
    %vm8879 = vweird.f32 %v8843
    %vm8880 = vweird.f32 %v8874
    %vm8881 = vmor %vm8879, %vm8880
    %v8882 = vsel %vm8881, %v8874, %v8878
    %v8883 = vand.u32 2147483647, %v8843
    %vm8884 = vcmp.eq.f32.partialorder %v8883, 8.507059e+37
    %v8885 = vand.u32 %v8843, 2147483648
    %v8886 = vor.u32 1.1754944e-38, %v8885
    %v8887 = vsel %vm8884, %v8886, %v8882
    %v8888 = vmul.f32 1.0, %v8887
    %v8889 = vtanh.pop %v8831
    %v8890 = vmul.f32 %v8873, %v8575
    %v8891 = vmul.f32 %v8858, %v8889
    %v8892 = vadd.f32 %v8890, %v8891
    %v8893 = vtanh.pop %v8892
    %v8894 = vmul.f32 %v8888, %v8893
    %8895 = vst [vmem:[#allocation2 + $0x38] sm:$0xff] %v8894
    %s8896 = scalar_lea.vmem %s15, 16
    %8897 = vst [vmem:[%s8896] sm:$0xff] %v8894
    %s8898 = scalar_lea.vmem %s16, 16
    %8899 = vst [vmem:[%s8898] sm:$0xff] %v8892
    %v8900 = vld [vmem:[#allocation2] sm:$0xff]
    %v8901 = vld [vmem:[#allocation2 + $0x8] sm:$0xff]
    %v8902 = vld [vmem:[#allocation2 + $0x10] sm:$0xff]
    %v8903 = vld [vmem:[#allocation2 + $0x18] sm:$0xff]
    %v8904 = vld [vmem:[#allocation2 + $0x20] sm:$0xff]
    %v8905 = vld [vmem:[#allocation2 + $0x28] sm:$0xff]
    %v8906 = vld [vmem:[#allocation2 + $0x30] sm:$0xff]
    %v8907 = vld [vmem:[#allocation2 + $0x38] sm:$0xff]
    %v8908 = vpack.c.bf16 %v8901, %v8900
    %v8909 = vpack.c.bf16 %v8903, %v8902
    %v8910 = vpack.c.bf16 %v8905, %v8904
    %v8911 = vpack.c.bf16 %v8907, %v8906
    %v8912 = vld [vmem:[%s12] sm:$0xf]
    %v8913 = vld [vmem:[%s12 + $0x4] sm:$0xf]
    %v8914 = vld [vmem:[%s12 + $0x8] sm:$0xf]
    %v8915 = vld [vmem:[%s12 + $0xc] sm:$0xf]
    %v8916 = vld [vmem:[%s12 + $0x10] sm:$0xf]
    %v8917 = vld [vmem:[%s12 + $0x14] sm:$0xf]
    %v8918 = vld [vmem:[%s12 + $0x18] sm:$0xf]
    %v8919 = vld [vmem:[%s12 + $0x1c] sm:$0xf]
    %v8920 = vld [vmem:[%s12 + $0x20] sm:$0xf]
    %v8921 = vld [vmem:[%s12 + $0x24] sm:$0xf]
    %v8922 = vld [vmem:[%s12 + $0x28] sm:$0xf]
    %v8923 = vld [vmem:[%s12 + $0x2c] sm:$0xf]
    %v8924 = vld [vmem:[%s12 + $0x30] sm:$0xf]
    %v8925 = vld [vmem:[%s12 + $0x34] sm:$0xf]
    %v8926 = vld [vmem:[%s12 + $0x38] sm:$0xf]
    %v8927 = vld [vmem:[%s12 + $0x3c] sm:$0xf]
    %v8928 = vld [vmem:[%s13] sm:$0x1]
    %v8930 = vperm.slane %v8928, 0
    %v8948 = vunpack.c.l.b16 %v8912
    %v8949 = vunpack.c.l.b16 %v8913
    %v8950 = vunpack.c.l.b16 %v8914
    %v8951 = vunpack.c.l.b16 %v8915
    %v8952 = vunpack.c.l.b16 %v8916
    %v8953 = vunpack.c.l.b16 %v8917
    %v8954 = vunpack.c.l.b16 %v8918
    %v8955 = vunpack.c.l.b16 %v8919
    %v8956 = vunpack.c.l.b16 %v8920
    %v8957 = vunpack.c.l.b16 %v8921
    %v8958 = vunpack.c.l.b16 %v8922
    %v8959 = vunpack.c.l.b16 %v8923
    %v8960 = vunpack.c.l.b16 %v8924
    %v8961 = vunpack.c.l.b16 %v8925
    %v8962 = vunpack.c.l.b16 %v8926
    %v8963 = vunpack.c.l.b16 %v8927
    %v8964 = vpack.c.b16 %v8949, %v8948
    %v8965 = vpack.c.b16 %v8951, %v8950
    %v8966 = vpack.c.b16 %v8953, %v8952
    %v8967 = vpack.c.b16 %v8955, %v8954
    %v8968 = vpack.c.b16 %v8957, %v8956
    %v8969 = vpack.c.b16 %v8959, %v8958
    %v8970 = vpack.c.b16 %v8961, %v8960
    %v8971 = vpack.c.b16 %v8963, %v8962
    %8980 = vmatpush.bf16.msra.mxu0 %v8971
    %8981 = vmatpush.bf16.msra.mxu0 %v8970
    %8982 = vmatpush.bf16.msra.mxu0 %v8969
    %8983 = vmatpush.bf16.msra.mxu0 %v8968
    %8984 = vmatpush.bf16.msra.mxu0 %v8967
    %8985 = vmatpush.bf16.msra.mxu0 %v8966
    %8986 = vmatpush.bf16.msra.mxu0 %v8965
    %8987 = vmatpush.bf16.msra.mxu0 %v8964
    %8988 = vmatmul.bf16.gmra.mxu0 %v8908
    %v8989 = vpop.f32.mrf.mxu0
    %v8990 = vadd.f32 %v8930, %v8989
    %v8991 = vpop.f32.mrf.mxu0
    %v8992 = vadd.f32 %v8930, %v8991
    %8993 = vmatmul.bf16.gmra.mxu0 %v8909
    %v8994 = vpop.f32.mrf.mxu0
    %v8995 = vadd.f32 %v8930, %v8994
    %v8996 = vpop.f32.mrf.mxu0
    %v8997 = vadd.f32 %v8930, %v8996
    %8998 = vmatmul.bf16.gmra.mxu0 %v8910
    %v8999 = vpop.f32.mrf.mxu0
    %v9000 = vadd.f32 %v8930, %v8999
    %v9001 = vpop.f32.mrf.mxu0
    %v9002 = vadd.f32 %v8930, %v9001
    %9003 = vmatmul.bf16.gmra.mxu0 %v8911
    %v9004 = vpop.f32.mrf.mxu0
    %v9005 = vadd.f32 %v8930, %v9004
    %v9006 = vpop.f32.mrf.mxu0
    %v9007 = vadd.f32 %v8930, %v9006
    %9008 = vdwg.mxu0
    %9009 = vst [vmem:[%s14] sm:$0xff] %v8990
    %9010 = vst [vmem:[%s14 + $0x8] sm:$0xff] %v8992
    %9011 = vst [vmem:[%s14 + $0x10] sm:$0xff] %v8995
    %9012 = vst [vmem:[%s14 + $0x18] sm:$0xff] %v8997
    %9013 = vst [vmem:[%s14 + $0x20] sm:$0xff] %v9000
    %9014 = vst [vmem:[%s14 + $0x28] sm:$0xff] %v9002
    %9015 = vst [vmem:[%s14 + $0x30] sm:$0xff] %v9005
    %9016 = vst [vmem:[%s14 + $0x38] sm:$0xff] %v9007
    // Predicated region
    $region82: #{pitch_lstm_forward.1} parent=1 // pred_check
      _
    $region83: #{pitch_lstm_forward.1} parent=1 // pred_check_branch
      %9018 = sbr.rel (0) target = $region85
    $region84: #{pitch_lstm_forward.1} parent=1 // pred_region
      _
    $region85: #{pitch_lstm_forward.1} parent=1 // pred_fallthru
      _
    // Predicated region
    $region86: #{pitch_lstm_forward.1} parent=1 // pred_check
      _
    $region87: #{pitch_lstm_forward.1} parent=1 // pred_check_branch
      %9020 = sbr.rel (0) target = $region89
    $region88: #{pitch_lstm_forward.1} parent=1 // pred_region
      _
    $region89: #{pitch_lstm_forward.1} parent=1 // pred_fallthru
      _
    // Predicated region
    $region90: #{pitch_lstm_forward.1} parent=1 // pred_check
      _
    $region91: #{pitch_lstm_forward.1} parent=1 // pred_check_branch
      %9022 = sbr.rel (0) target = $region93
    $region92: #{pitch_lstm_forward.1} parent=1 // pred_region
      _
    $region93: #{pitch_lstm_forward.1} parent=1 // pred_fallthru
      _
    // Predicated region
    $region94: #{pitch_lstm_forward.1} parent=1 // pred_check
      _
    $region95: #{pitch_lstm_forward.1} parent=1 // pred_check_branch
      %9024 = sbr.rel (0) target = $region97
    $region96: #{pitch_lstm_forward.1} parent=1 // pred_region
      _
    $region97: #{pitch_lstm_forward.1} parent=1 // pred_fallthru
      _
    // Predicated region
    $region98: #{pitch_lstm_forward.1} parent=1 // pred_check
      _
    $region99: #{pitch_lstm_forward.1} parent=1 // pred_check_branch
      %9026 = sbr.rel (0) target = $region101
    $region100: #{pitch_lstm_forward.1} parent=1 // pred_region
      _
    $region101: #{pitch_lstm_forward.1} parent=1 // pred_fallthru
      _
    // Predicated region
    $region102: #{pitch_lstm_forward.1} parent=1 // pred_check
      _
    $region103: #{pitch_lstm_forward.1} parent=1 // pred_check_branch
      %9028 = sbr.rel (0) target = $region105
    $region104: #{pitch_lstm_forward.1} parent=1 // pred_region
      _
    $region105: #{pitch_lstm_forward.1} parent=1 // pred_fallthru
      _
    %9029 = vsyncpa [#allocation5], 1
    %9030 = vsyncpa [#allocation7], 1
    %9031 = vsyncpa [#allocation10], 1
    %9032 = vsyncpa [#allocation13], 1

</llo_original>
